<compile_context>
chip_gen: v7x
topology: tpu7x:2x2x1
jax: 0.10.0
libtpu: 0.0.40
codegen_flags: <defaults>
</compile_context>

<pallas_src>
import numpy as np
import jax
import jax.numpy as jnp
from jax import lax
from jax.experimental import pallas as pl
from jax.experimental.pallas import tpu as pltpu

WINDOW = 15
STEP = 5
IN_CH = 1
OUT_CH = 3
INPUT_SIZE = WINDOW * OUT_CH          # 45  (LSTM input size)
HIDDEN = WINDOW * OUT_CH * 2          # 90  (LSTM hidden size)
HID_PAD = 128                         # gates padded to one full 128-lane block
G4 = 4 * HID_PAD                      # 512 (all four gates, padded)
EPS = 1e-5
SLOPE = 0.1                           # LeakyReLU negative slope


# ------------------------------ fused Pallas kernel ---------------------------

def encoder_kernel(x_ref, m1a_ref, m1b_ref, m2a_ref, m2b_ref, m3a_ref, m3b_ref,
                   rep_ref, pones_ref, bng_ref, bnb_ref,
                   proj_ref, b0t_ref, wfused_ref, whh1_ref, b1_ref,
                   out_ref):
    n, l_len = x_ref.shape
    inv_count = 1.0 / float(n * l_len)
    pones = pones_ref[...]                      # (3L, 3L) per-channel averaging

    def lrelu(v):
        return jnp.maximum(v, SLOPE * v)

    def batchnorm(v, layer):
        # Training-mode BatchNorm1d over the (N, 3L) channel-stacked slab.
        gamma = bng_ref[layer:layer + 1, :]     # (1, 3L), channel-expanded
        beta = bnb_ref[layer:layer + 1, :]      # (1, 3L)
        mean = jnp.sum(jnp.dot(v, pones, preferred_element_type=jnp.float32),
                       axis=0, keepdims=True) * inv_count
        vc = v - mean
        var = jnp.sum(jnp.dot(vc * vc, pones, preferred_element_type=jnp.float32),
                      axis=0, keepdims=True) * inv_count
        return vc * (gamma * lax.rsqrt(var + EPS)) + beta

    def res_block(v, ma_ref, mb_ref, layer, identity):
        # conv-as-banded-matmul -> BN -> LeakyReLU -> conv -> BN -> +id -> LeakyReLU
        h = lrelu(batchnorm(jnp.dot(v, ma_ref[...],
                                    preferred_element_type=jnp.float32), layer))
        y = batchnorm(jnp.dot(h, mb_ref[...],
                              preferred_element_type=jnp.float32), layer + 1)
        return lrelu(y + identity)

    x = x_ref[...]                                                    # (N, L)
    idn = jnp.dot(x, rep_ref[...], preferred_element_type=jnp.float32)  # (N, 3L)
    y = res_block(x, m1a_ref, m1b_ref, 0, idn)
    y = res_block(y, m2a_ref, m2b_ref, 2, y)
    y = res_block(y, m3a_ref, m3b_ref, 4, y)

    # Window split + LSTM layer-0 input projection for every timestep at once.
    xg_all = jnp.dot(y, proj_ref[...],
                     preferred_element_type=jnp.float32) + b0t_ref[...]  # (N, T*512)
    t_steps = proj_ref.shape[1] // G4

    wfused = wfused_ref[...]                   # (128, 1024) = [Whh0 | Wih1]
    whh1 = whh1_ref[...]                       # (128, 512)
    b1 = b1_ref[...]                           # (1, 512)

    def sigmoid(v):                            # exact, routed through EUP tanh
        return 0.5 * jnp.tanh(0.5 * v) + 0.5

    def lstm_gates(g, c_prev):                 # 128-lane-aligned gate slices
        i_g = sigmoid(g[:, 0 * HID_PAD:1 * HID_PAD])
        f_g = sigmoid(g[:, 1 * HID_PAD:2 * HID_PAD])
        g_g = jnp.tanh(g[:, 2 * HID_PAD:3 * HID_PAD])
        o_g = sigmoid(g[:, 3 * HID_PAD:4 * HID_PAD])
        c_new = f_g * c_prev + i_g * g_g
        return o_g * jnp.tanh(c_new), c_new

    h0 = jnp.zeros((n, HID_PAD), jnp.float32)
    c0 = jnp.zeros((n, HID_PAD), jnp.float32)
    h1 = jnp.zeros((n, HID_PAD), jnp.float32)
    c1 = jnp.zeros((n, HID_PAD), jnp.float32)
    r0 = jnp.zeros((n, G4), jnp.float32)       # h0_{t-1} @ Whh0 (zero at t=0)

    for t in range(t_steps):                   # static unroll, T is small
        g0 = xg_all[:, t * G4:(t + 1) * G4] + r0
        h0, c0 = lstm_gates(g0, c0)
        fused = jnp.dot(h0, wfused, preferred_element_type=jnp.float32)   # (N, 1024)
        r0 = fused[:, :G4]                     # -> layer-0 recurrence of step t+1
        g1 = fused[:, G4:] + jnp.dot(h1, whh1,
                                     preferred_element_type=jnp.float32) + b1
        h1, c1 = lstm_gates(g1, c1)

    out_ref[...] = h1[:, :HIDDEN]


# -------------------------- weight preparation (amortized) --------------------

def prepare_params(params, length):
    """Turn PyTorch-layout params into kernel-ready matrices for sequence
    length `length`.  Depends only on the params (and L), so it is done once
    and amortized across forward calls."""
    L = length
    C = OUT_CH
    f32 = jnp.float32

    eye = jnp.eye(L, dtype=f32)
    # taps: y[l] = w0*x[l-1] + w1*x[l] + w2*x[l+1]  (zero padded at the ends)
    bands = jnp.stack([jnp.eye(L, k=1, dtype=f32), eye,
                       jnp.eye(L, k=-1, dtype=f32)], axis=0)        # (3, L, L)

    def conv_mat(w):                     # (cout, cin, 3) -> (cin*L, cout*L)
        cout, cin, _ = w.shape
        m = jnp.einsum("oik,kml->imol", w.astype(f32), bands)
        return m.reshape(cin * L, cout * L)

    rep = jnp.tile(eye, (1, C))                                     # (L, 3L)
    pones = jnp.kron(jnp.eye(C, dtype=f32), jnp.ones((L, L), f32))  # (3L, 3L)

    blks = ("block1", "block2", "block3")
    bn_g = jnp.stack([params[b][k] for b in blks for k in ("g1", "g2")])  # (6, 3)
    bn_b = jnp.stack([params[b][k] for b in blks for k in ("b1", "b2")])
    bn_g_full = jnp.repeat(bn_g.astype(f32), L, axis=1)             # (6, 3L)
    bn_b_full = jnp.repeat(bn_b.astype(f32), L, axis=1)

    H, HP = HIDDEN, HID_PAD

    def gate_cols(w):                    # (4H, Fin) -> (Fin, 4*HP), gate-padded
        cols = []
        for g in range(4):
            blk = w[g * H:(g + 1) * H, :].astype(f32).T             # (Fin, H)
            cols.append(jnp.pad(blk, ((0, 0), (0, HP - H))))
        return jnp.concatenate(cols, axis=1)

    def gate_bias(b_ih, b_hh):           # -> (1, 4*HP), gate-padded
        b = (b_ih + b_hh).astype(f32)
        parts = [jnp.pad(b[g * H:(g + 1) * H], (0, HP - H)) for g in range(4)]
        return jnp.concatenate(parts).reshape(1, 4 * HP)

    l = params["lstm"]
    wih0 = gate_cols(l["w_ih0"])                                    # (45, 512)
    whh0 = jnp.pad(gate_cols(l["w_hh0"]), ((0, HP - H), (0, 0)))    # (128, 512)
    wih1 = jnp.pad(gate_cols(l["w_ih1"]), ((0, HP - H), (0, 0)))    # (128, 512)
    whh1 = jnp.pad(gate_cols(l["w_hh1"]), ((0, HP - H), (0, 0)))    # (128, 512)
    wfused = jnp.concatenate([whh0, wih1], axis=1)                  # (128, 1024)
    b0 = gate_bias(l["b_ih0"], l["b_hh0"])                          # (1, 512)
    b1 = gate_bias(l["b_ih1"], l["b_hh1"])                          # (1, 512)

    # Window selector folded into the layer-0 input projection:
    # seq[t] @ Wih0 == Y @ (S[t] @ Wih0), so one matmul covers every timestep.
    Tn = (L - WINDOW) // STEP + 1
    S = np.zeros((Tn, C * L, C * WINDOW), np.float32)
    for t in range(Tn):
        for c in range(C):
            S[t, c * L + t * STEP:c * L + t * STEP + WINDOW,
              c * WINDOW:(c + 1) * WINDOW] = np.eye(WINDOW, dtype=np.float32)
    proj = jnp.einsum("tif,fg->itg", jnp.asarray(S), wih0)
    proj = proj.reshape(C * L, Tn * 4 * HP)                         # (3L, T*512)
    b0_tiled = jnp.tile(b0, (1, Tn))                                # (1, T*512)

    return dict(m1a=conv_mat(params["block1"]["w1"]),
                m1b=conv_mat(params["block1"]["w2"]),
                m2a=conv_mat(params["block2"]["w1"]),
                m2b=conv_mat(params["block2"]["w2"]),
                m3a=conv_mat(params["block3"]["w1"]),
                m3b=conv_mat(params["block3"]["w2"]),
                rep=rep, pones=pones,
                bn_g=bn_g_full, bn_b=bn_b_full,
                proj=proj, b0t=b0_tiled,
                wfused=wfused, whh1=whh1, b1=b1)


# ------------------------------- forward wrapper -------------------------------

def res_encoder_forward(x, kp):
    # x: (N, 1, L) float32, matching PyTorch Conv1d NCL input.
    N, cin, L = x.shape
    assert cin == IN_CH
    x2d = x[:, 0, :]

    vmem = pl.BlockSpec(memory_space=pltpu.MemorySpace.VMEM)
    args = (x2d, kp["m1a"], kp["m1b"], kp["m2a"], kp["m2b"], kp["m3a"], kp["m3b"],
            kp["rep"], kp["pones"], kp["bn_g"], kp["bn_b"],
            kp["proj"], kp["b0t"], kp["wfused"], kp["whh1"], kp["b1"])

    return pl.pallas_call(
        encoder_kernel,
        out_shape=jax.ShapeDtypeStruct((N, HIDDEN), jnp.float32),
        in_specs=[vmem] * len(args),
        out_specs=vmem,
    )(*args)                                                    # (N, 90) == output[-1]


# ------------------------------ pure-JAX reference ------------------------------

def _lrelu_ref(x):
    return jnp.where(x > 0, x, SLOPE * x)


def split_tensor(x, window, step):
    # x: (N, C, L) -> (T, N, C*window), time-major as PyTorch LSTM expects.
    N, C, L = x.shape
    T = (L - window) // step + 1
    wins = [x[:, :, t * step:t * step + window].reshape(N, C * window)
            for t in range(T)]
    return jnp.stack(wins, axis=0)


def _ref_forward(x, params):
    def conv(xx, w):
        return lax.conv_general_dilated(
            xx, w, window_strides=(1,), padding=((1, 1),),
            dimension_numbers=("NCH", "OIH", "NCH"))

    def bn(xx, g, b):
        m = jnp.mean(xx, axis=(0, 2), keepdims=True)
        v = jnp.mean((xx - m) ** 2, axis=(0, 2), keepdims=True)
        return (xx - m) * lax.rsqrt(v + EPS) * g[None, :, None] + b[None, :, None]

    def block(xx, p):
        h = _lrelu_ref(bn(conv(xx, p["w1"]), p["g1"], p["b1"]))
        y = bn(conv(h, p["w2"]), p["g2"], p["b2"])
        return _lrelu_ref(y + xx)

    y = block(x, params["block1"])
    y = block(y, params["block2"])
    y = block(y, params["block3"])
    seq = split_tensor(y, WINDOW, STEP)

    l = params["lstm"]
    N = x.shape[0]
    H = HIDDEN
    h0 = c0 = h1 = c1 = jnp.zeros((N, H), jnp.float32)

    def sigmoid(v):
        return 1.0 / (1.0 + jnp.exp(-v))

    def cell(xt, h, c, wih, whh, bih, bhh):
        g = xt @ wih.T + h @ whh.T + bih + bhh
        i = sigmoid(g[:, :H])
        f = sigmoid(g[:, H:2 * H])
        gg = jnp.tanh(g[:, 2 * H:3 * H])
        o = sigmoid(g[:, 3 * H:4 * H])
        c = f * c + i * gg
        return o * jnp.tanh(c), c

    for t in range(seq.shape[0]):
        h0, c0 = cell(seq[t], h0, c0, l["w_ih0"], l["w_hh0"], l["b_ih0"], l["b_hh0"])
        h1, c1 = cell(h0, h1, c1, l["w_ih1"], l["w_hh1"], l["b_ih1"], l["b_hh1"])
    return h1


# ----------------------------------- params -------------------------------------

def init_params(key):
    keys = iter(jax.random.split(key, 32))

    def nrm(shape, scale):
        return scale * jax.random.normal(next(keys), shape, dtype=jnp.float32)

    def block(cin, hid, cout):
        return dict(
            w1=nrm((hid, cin, 3), 0.4),
            g1=1.0 + nrm((hid,), 0.1),
            b1=nrm((hid,), 0.1),
            w2=nrm((cout, hid, 3), 0.4),
            g2=1.0 + nrm((cout,), 0.1),
            b2=nrm((cout,), 0.1))

    return dict(
        block1=block(IN_CH, OUT_CH, OUT_CH),
        block2=block(OUT_CH, OUT_CH, OUT_CH),
        block3=block(OUT_CH, OUT_CH, OUT_CH),
        lstm=dict(
            w_ih0=nrm((4 * HIDDEN, INPUT_SIZE), 0.1),
            w_hh0=nrm((4 * HIDDEN, HIDDEN), 0.1),
            b_ih0=nrm((4 * HIDDEN,), 0.1),
            b_hh0=nrm((4 * HIDDEN,), 0.1),
            w_ih1=nrm((4 * HIDDEN, HIDDEN), 0.1),
            w_hh1=nrm((4 * HIDDEN, HIDDEN), 0.1),
            b_ih1=nrm((4 * HIDDEN,), 0.1),
            b_hh1=nrm((4 * HIDDEN,), 0.1),
        ))


# ------------------------------------- main --------------------------------------

if __name__ == "__main__":
    key = jax.random.PRNGKey(0)
    kx, kp_key = jax.random.split(key)

    N, L = 2, 40                                          # 6 windows of 15, step 5
    x = jax.random.normal(kx, (N, IN_CH, L), dtype=jnp.float32)
    params = init_params(kp_key)

    kernel_params = prepare_params(params, L)             # one-time weight prep
    fwd = jax.jit(res_encoder_forward)

    out = fwd(x, kernel_params)
    out = jax.block_until_ready(out)

    ref = _ref_forward(x, params)
    assert out.shape == (N, HIDDEN)
    if not bool(jnp.allclose(out, ref, atol=1e-2, rtol=1e-2)):
        raise AssertionError("Pallas output does not match JAX reference")

    print("KERNEL_OK")
</pallas_src>

<mosaic_0001>
module attributes {stable_mosaic.version = 11 : i64} {
  func.func @encoder_kernel(%arg0: memref<2x40xf32, #tpu.memory_space<vmem>>, %arg1: memref<40x120xf32, #tpu.memory_space<vmem>>, %arg2: memref<120x120xf32, #tpu.memory_space<vmem>>, %arg3: memref<120x120xf32, #tpu.memory_space<vmem>>, %arg4: memref<120x120xf32, #tpu.memory_space<vmem>>, %arg5: memref<120x120xf32, #tpu.memory_space<vmem>>, %arg6: memref<120x120xf32, #tpu.memory_space<vmem>>, %arg7: memref<40x120xf32, #tpu.memory_space<vmem>>, %arg8: memref<120x120xf32, #tpu.memory_space<vmem>>, %arg9: memref<6x120xf32, #tpu.memory_space<vmem>>, %arg10: memref<6x120xf32, #tpu.memory_space<vmem>>, %arg11: memref<120x3072xf32, #tpu.memory_space<vmem>>, %arg12: memref<1x3072xf32, #tpu.memory_space<vmem>>, %arg13: memref<128x1024xf32, #tpu.memory_space<vmem>>, %arg14: memref<128x512xf32, #tpu.memory_space<vmem>>, %arg15: memref<1x512xf32, #tpu.memory_space<vmem>>, %arg16: memref<2x90xf32, #tpu.memory_space<vmem>>) attributes {dimension_semantics = [], scalar_prefetch = 0 : i64, scratch_operands = 0 : i64, tpu.core_type = #tpu.core_type<tc>} {
    %c0 = arith.constant 0 : index
    %c0_0 = arith.constant 0 : index
    %0 = vector.load %arg8[%c0, %c0_0] : memref<120x120xf32, #tpu.memory_space<vmem>>, vector<120x120xf32>
    %c0_1 = arith.constant 0 : index
    %c0_2 = arith.constant 0 : index
    %1 = vector.load %arg0[%c0_1, %c0_2] : memref<2x40xf32, #tpu.memory_space<vmem>>, vector<2x40xf32>
    %c0_3 = arith.constant 0 : index
    %c0_4 = arith.constant 0 : index
    %2 = vector.load %arg7[%c0_3, %c0_4] : memref<40x120xf32, #tpu.memory_space<vmem>>, vector<40x120xf32>
    %cst = arith.constant dense<0.000000e+00> : vector<2x120xf32>
    %3 = tpu.matmul %1, %2, %cst {dimension_numbers = #tpu.dot_dimension_numbers<[1], [0], [0], [1], [0, 0, 1, 1], [], []>} : vector<2x40xf32>, vector<40x120xf32>, vector<2x120xf32> -> vector<2x120xf32>
    %c0_5 = arith.constant 0 : index
    %c0_6 = arith.constant 0 : index
    %4 = vector.load %arg1[%c0_5, %c0_6] : memref<40x120xf32, #tpu.memory_space<vmem>>, vector<40x120xf32>
    %cst_7 = arith.constant dense<0.000000e+00> : vector<2x120xf32>
    %5 = tpu.matmul %1, %4, %cst_7 {dimension_numbers = #tpu.dot_dimension_numbers<[1], [0], [0], [1], [0, 0, 1, 1], [], []>} : vector<2x40xf32>, vector<40x120xf32>, vector<2x120xf32> -> vector<2x120xf32>
    %c0_8 = arith.constant 0 : index
    %c0_9 = arith.constant 0 : index
    %6 = vector.load %arg9[%c0_8, %c0_9] : memref<6x120xf32, #tpu.memory_space<vmem>>, vector<1x120xf32>
    %c0_10 = arith.constant 0 : index
    %c0_11 = arith.constant 0 : index
    %7 = vector.load %arg10[%c0_10, %c0_11] : memref<6x120xf32, #tpu.memory_space<vmem>>, vector<1x120xf32>
    %cst_12 = arith.constant dense<0.000000e+00> : vector<2x120xf32>
    %8 = tpu.matmul %5, %0, %cst_12 {dimension_numbers = #tpu.dot_dimension_numbers<[1], [0], [0], [1], [0, 0, 1, 1], [], []>} : vector<2x120xf32>, vector<120x120xf32>, vector<2x120xf32> -> vector<2x120xf32>
    %cst_13 = arith.constant dense<0.000000e+00> : vector<120xf32>
    %9 = vector.multi_reduction <add>, %8, %cst_13 [0] : vector<2x120xf32> to vector<120xf32>
    %10 = vector.shape_cast %9 : vector<120xf32> to vector<1x120xf32>
    %cst_14 = arith.constant 1.250000e-02 : f32
    %11 = vector.broadcast %cst_14 : f32 to vector<1x120xf32>
    %12 = arith.mulf %10, %11 : vector<1x120xf32>
    %13 = vector.broadcast %12 : vector<1x120xf32> to vector<2x120xf32>
    %14 = arith.subf %5, %13 : vector<2x120xf32>
    %15 = arith.mulf %14, %14 : vector<2x120xf32>
    %cst_15 = arith.constant dense<0.000000e+00> : vector<2x120xf32>
    %16 = tpu.matmul %15, %0, %cst_15 {dimension_numbers = #tpu.dot_dimension_numbers<[1], [0], [0], [1], [0, 0, 1, 1], [], []>} : vector<2x120xf32>, vector<120x120xf32>, vector<2x120xf32> -> vector<2x120xf32>
    %cst_16 = arith.constant dense<0.000000e+00> : vector<120xf32>
    %17 = vector.multi_reduction <add>, %16, %cst_16 [0] : vector<2x120xf32> to vector<120xf32>
    %18 = vector.shape_cast %17 : vector<120xf32> to vector<1x120xf32>
    %cst_17 = arith.constant 1.250000e-02 : f32
    %19 = vector.broadcast %cst_17 : f32 to vector<1x120xf32>
    %20 = arith.mulf %18, %19 : vector<1x120xf32>
    %cst_18 = arith.constant 9.99999974E-6 : f32
    %21 = vector.broadcast %cst_18 : f32 to vector<1x120xf32>
    %22 = arith.addf %20, %21 : vector<1x120xf32>
    %23 = math.rsqrt %22 : vector<1x120xf32>
    %24 = arith.mulf %6, %23 : vector<1x120xf32>
    %25 = vector.broadcast %24 : vector<1x120xf32> to vector<2x120xf32>
    %26 = arith.mulf %14, %25 : vector<2x120xf32>
    %27 = vector.broadcast %7 : vector<1x120xf32> to vector<2x120xf32>
    %28 = arith.addf %26, %27 : vector<2x120xf32>
    %cst_19 = arith.constant 1.000000e-01 : f32
    %29 = vector.broadcast %cst_19 : f32 to vector<2x120xf32>
    %30 = arith.mulf %29, %28 : vector<2x120xf32>
    %31 = arith.maximumf %28, %30 : vector<2x120xf32>
    %c0_20 = arith.constant 0 : index
    %c0_21 = arith.constant 0 : index
    %32 = vector.load %arg2[%c0_20, %c0_21] : memref<120x120xf32, #tpu.memory_space<vmem>>, vector<120x120xf32>
    %cst_22 = arith.constant dense<0.000000e+00> : vector<2x120xf32>
    %33 = tpu.matmul %31, %32, %cst_22 {dimension_numbers = #tpu.dot_dimension_numbers<[1], [0], [0], [1], [0, 0, 1, 1], [], []>} : vector<2x120xf32>, vector<120x120xf32>, vector<2x120xf32> -> vector<2x120xf32>
    %c1 = arith.constant 1 : index
    %c0_23 = arith.constant 0 : index
    %34 = vector.load %arg9[%c1, %c0_23] : memref<6x120xf32, #tpu.memory_space<vmem>>, vector<1x120xf32>
    %c1_24 = arith.constant 1 : index
    %c0_25 = arith.constant 0 : index
    %35 = vector.load %arg10[%c1_24, %c0_25] : memref<6x120xf32, #tpu.memory_space<vmem>>, vector<1x120xf32>
    %cst_26 = arith.constant dense<0.000000e+00> : vector<2x120xf32>
    %36 = tpu.matmul %33, %0, %cst_26 {dimension_numbers = #tpu.dot_dimension_numbers<[1], [0], [0], [1], [0, 0, 1, 1], [], []>} : vector<2x120xf32>, vector<120x120xf32>, vector<2x120xf32> -> vector<2x120xf32>
    %cst_27 = arith.constant dense<0.000000e+00> : vector<120xf32>
    %37 = vector.multi_reduction <add>, %36, %cst_27 [0] : vector<2x120xf32> to vector<120xf32>
    %38 = vector.shape_cast %37 : vector<120xf32> to vector<1x120xf32>
    %cst_28 = arith.constant 1.250000e-02 : f32
    %39 = vector.broadcast %cst_28 : f32 to vector<1x120xf32>
    %40 = arith.mulf %38, %39 : vector<1x120xf32>
    %41 = vector.broadcast %40 : vector<1x120xf32> to vector<2x120xf32>
    %42 = arith.subf %33, %41 : vector<2x120xf32>
    %43 = arith.mulf %42, %42 : vector<2x120xf32>
    %cst_29 = arith.constant dense<0.000000e+00> : vector<2x120xf32>
    %44 = tpu.matmul %43, %0, %cst_29 {dimension_numbers = #tpu.dot_dimension_numbers<[1], [0], [0], [1], [0, 0, 1, 1], [], []>} : vector<2x120xf32>, vector<120x120xf32>, vector<2x120xf32> -> vector<2x120xf32>
    %cst_30 = arith.constant dense<0.000000e+00> : vector<120xf32>
    %45 = vector.multi_reduction <add>, %44, %cst_30 [0] : vector<2x120xf32> to vector<120xf32>
    %46 = vector.shape_cast %45 : vector<120xf32> to vector<1x120xf32>
    %cst_31 = arith.constant 1.250000e-02 : f32
    %47 = vector.broadcast %cst_31 : f32 to vector<1x120xf32>
    %48 = arith.mulf %46, %47 : vector<1x120xf32>
    %cst_32 = arith.constant 9.99999974E-6 : f32
    %49 = vector.broadcast %cst_32 : f32 to vector<1x120xf32>
    %50 = arith.addf %48, %49 : vector<1x120xf32>
    %51 = math.rsqrt %50 : vector<1x120xf32>
    %52 = arith.mulf %34, %51 : vector<1x120xf32>
    %53 = vector.broadcast %52 : vector<1x120xf32> to vector<2x120xf32>
    %54 = arith.mulf %42, %53 : vector<2x120xf32>
    %55 = vector.broadcast %35 : vector<1x120xf32> to vector<2x120xf32>
    %56 = arith.addf %54, %55 : vector<2x120xf32>
    %57 = arith.addf %56, %3 : vector<2x120xf32>
    %cst_33 = arith.constant 1.000000e-01 : f32
    %58 = vector.broadcast %cst_33 : f32 to vector<2x120xf32>
    %59 = arith.mulf %58, %57 : vector<2x120xf32>
    %60 = arith.maximumf %57, %59 : vector<2x120xf32>
    %c0_34 = arith.constant 0 : index
    %c0_35 = arith.constant 0 : index
    %61 = vector.load %arg3[%c0_34, %c0_35] : memref<120x120xf32, #tpu.memory_space<vmem>>, vector<120x120xf32>
    %cst_36 = arith.constant dense<0.000000e+00> : vector<2x120xf32>
    %62 = tpu.matmul %60, %61, %cst_36 {dimension_numbers = #tpu.dot_dimension_numbers<[1], [0], [0], [1], [0, 0, 1, 1], [], []>} : vector<2x120xf32>, vector<120x120xf32>, vector<2x120xf32> -> vector<2x120xf32>
    %c2 = arith.constant 2 : index
    %c0_37 = arith.constant 0 : index
    %63 = vector.load %arg9[%c2, %c0_37] : memref<6x120xf32, #tpu.memory_space<vmem>>, vector<1x120xf32>
    %c2_38 = arith.constant 2 : index
    %c0_39 = arith.constant 0 : index
    %64 = vector.load %arg10[%c2_38, %c0_39] : memref<6x120xf32, #tpu.memory_space<vmem>>, vector<1x120xf32>
    %cst_40 = arith.constant dense<0.000000e+00> : vector<2x120xf32>
    %65 = tpu.matmul %62, %0, %cst_40 {dimension_numbers = #tpu.dot_dimension_numbers<[1], [0], [0], [1], [0, 0, 1, 1], [], []>} : vector<2x120xf32>, vector<120x120xf32>, vector<2x120xf32> -> vector<2x120xf32>
    %cst_41 = arith.constant dense<0.000000e+00> : vector<120xf32>
    %66 = vector.multi_reduction <add>, %65, %cst_41 [0] : vector<2x120xf32> to vector<120xf32>
    %67 = vector.shape_cast %66 : vector<120xf32> to vector<1x120xf32>
    %cst_42 = arith.constant 1.250000e-02 : f32
    %68 = vector.broadcast %cst_42 : f32 to vector<1x120xf32>
    %69 = arith.mulf %67, %68 : vector<1x120xf32>
    %70 = vector.broadcast %69 : vector<1x120xf32> to vector<2x120xf32>
    %71 = arith.subf %62, %70 : vector<2x120xf32>
    %72 = arith.mulf %71, %71 : vector<2x120xf32>
    %cst_43 = arith.constant dense<0.000000e+00> : vector<2x120xf32>
    %73 = tpu.matmul %72, %0, %cst_43 {dimension_numbers = #tpu.dot_dimension_numbers<[1], [0], [0], [1], [0, 0, 1, 1], [], []>} : vector<2x120xf32>, vector<120x120xf32>, vector<2x120xf32> -> vector<2x120xf32>
    %cst_44 = arith.constant dense<0.000000e+00> : vector<120xf32>
    %74 = vector.multi_reduction <add>, %73, %cst_44 [0] : vector<2x120xf32> to vector<120xf32>
    %75 = vector.shape_cast %74 : vector<120xf32> to vector<1x120xf32>
    %cst_45 = arith.constant 1.250000e-02 : f32
    %76 = vector.broadcast %cst_45 : f32 to vector<1x120xf32>
    %77 = arith.mulf %75, %76 : vector<1x120xf32>
    %cst_46 = arith.constant 9.99999974E-6 : f32
    %78 = vector.broadcast %cst_46 : f32 to vector<1x120xf32>
    %79 = arith.addf %77, %78 : vector<1x120xf32>
    %80 = math.rsqrt %79 : vector<1x120xf32>
    %81 = arith.mulf %63, %80 : vector<1x120xf32>
    %82 = vector.broadcast %81 : vector<1x120xf32> to vector<2x120xf32>
    %83 = arith.mulf %71, %82 : vector<2x120xf32>
    %84 = vector.broadcast %64 : vector<1x120xf32> to vector<2x120xf32>
    %85 = arith.addf %83, %84 : vector<2x120xf32>
    %cst_47 = arith.constant 1.000000e-01 : f32
    %86 = vector.broadcast %cst_47 : f32 to vector<2x120xf32>
    %87 = arith.mulf %86, %85 : vector<2x120xf32>
    %88 = arith.maximumf %85, %87 : vector<2x120xf32>
    %c0_48 = arith.constant 0 : index
    %c0_49 = arith.constant 0 : index
    %89 = vector.load %arg4[%c0_48, %c0_49] : memref<120x120xf32, #tpu.memory_space<vmem>>, vector<120x120xf32>
    %cst_50 = arith.constant dense<0.000000e+00> : vector<2x120xf32>
    %90 = tpu.matmul %88, %89, %cst_50 {dimension_numbers = #tpu.dot_dimension_numbers<[1], [0], [0], [1], [0, 0, 1, 1], [], []>} : vector<2x120xf32>, vector<120x120xf32>, vector<2x120xf32> -> vector<2x120xf32>
    %c3 = arith.constant 3 : index
    %c0_51 = arith.constant 0 : index
    %91 = vector.load %arg9[%c3, %c0_51] : memref<6x120xf32, #tpu.memory_space<vmem>>, vector<1x120xf32>
    %c3_52 = arith.constant 3 : index
    %c0_53 = arith.constant 0 : index
    %92 = vector.load %arg10[%c3_52, %c0_53] : memref<6x120xf32, #tpu.memory_space<vmem>>, vector<1x120xf32>
    %cst_54 = arith.constant dense<0.000000e+00> : vector<2x120xf32>
    %93 = tpu.matmul %90, %0, %cst_54 {dimension_numbers = #tpu.dot_dimension_numbers<[1], [0], [0], [1], [0, 0, 1, 1], [], []>} : vector<2x120xf32>, vector<120x120xf32>, vector<2x120xf32> -> vector<2x120xf32>
    %cst_55 = arith.constant dense<0.000000e+00> : vector<120xf32>
    %94 = vector.multi_reduction <add>, %93, %cst_55 [0] : vector<2x120xf32> to vector<120xf32>
    %95 = vector.shape_cast %94 : vector<120xf32> to vector<1x120xf32>
    %cst_56 = arith.constant 1.250000e-02 : f32
    %96 = vector.broadcast %cst_56 : f32 to vector<1x120xf32>
    %97 = arith.mulf %95, %96 : vector<1x120xf32>
    %98 = vector.broadcast %97 : vector<1x120xf32> to vector<2x120xf32>
    %99 = arith.subf %90, %98 : vector<2x120xf32>
    %100 = arith.mulf %99, %99 : vector<2x120xf32>
    %cst_57 = arith.constant dense<0.000000e+00> : vector<2x120xf32>
    %101 = tpu.matmul %100, %0, %cst_57 {dimension_numbers = #tpu.dot_dimension_numbers<[1], [0], [0], [1], [0, 0, 1, 1], [], []>} : vector<2x120xf32>, vector<120x120xf32>, vector<2x120xf32> -> vector<2x120xf32>
    %cst_58 = arith.constant dense<0.000000e+00> : vector<120xf32>
    %102 = vector.multi_reduction <add>, %101, %cst_58 [0] : vector<2x120xf32> to vector<120xf32>
    %103 = vector.shape_cast %102 : vector<120xf32> to vector<1x120xf32>
    %cst_59 = arith.constant 1.250000e-02 : f32
    %104 = vector.broadcast %cst_59 : f32 to vector<1x120xf32>
    %105 = arith.mulf %103, %104 : vector<1x120xf32>
    %cst_60 = arith.constant 9.99999974E-6 : f32
    %106 = vector.broadcast %cst_60 : f32 to vector<1x120xf32>
    %107 = arith.addf %105, %106 : vector<1x120xf32>
    %108 = math.rsqrt %107 : vector<1x120xf32>
    %109 = arith.mulf %91, %108 : vector<1x120xf32>
    %110 = vector.broadcast %109 : vector<1x120xf32> to vector<2x120xf32>
    %111 = arith.mulf %99, %110 : vector<2x120xf32>
    %112 = vector.broadcast %92 : vector<1x120xf32> to vector<2x120xf32>
    %113 = arith.addf %111, %112 : vector<2x120xf32>
    %114 = arith.addf %113, %60 : vector<2x120xf32>
    %cst_61 = arith.constant 1.000000e-01 : f32
    %115 = vector.broadcast %cst_61 : f32 to vector<2x120xf32>
    %116 = arith.mulf %115, %114 : vector<2x120xf32>
    %117 = arith.maximumf %114, %116 : vector<2x120xf32>
    %c0_62 = arith.constant 0 : index
    %c0_63 = arith.constant 0 : index
    %118 = vector.load %arg5[%c0_62, %c0_63] : memref<120x120xf32, #tpu.memory_space<vmem>>, vector<120x120xf32>
    %cst_64 = arith.constant dense<0.000000e+00> : vector<2x120xf32>
    %119 = tpu.matmul %117, %118, %cst_64 {dimension_numbers = #tpu.dot_dimension_numbers<[1], [0], [0], [1], [0, 0, 1, 1], [], []>} : vector<2x120xf32>, vector<120x120xf32>, vector<2x120xf32> -> vector<2x120xf32>
    %c4 = arith.constant 4 : index
    %c0_65 = arith.constant 0 : index
    %120 = vector.load %arg9[%c4, %c0_65] : memref<6x120xf32, #tpu.memory_space<vmem>>, vector<1x120xf32>
    %c4_66 = arith.constant 4 : index
    %c0_67 = arith.constant 0 : index
    %121 = vector.load %arg10[%c4_66, %c0_67] : memref<6x120xf32, #tpu.memory_space<vmem>>, vector<1x120xf32>
    %cst_68 = arith.constant dense<0.000000e+00> : vector<2x120xf32>
    %122 = tpu.matmul %119, %0, %cst_68 {dimension_numbers = #tpu.dot_dimension_numbers<[1], [0], [0], [1], [0, 0, 1, 1], [], []>} : vector<2x120xf32>, vector<120x120xf32>, vector<2x120xf32> -> vector<2x120xf32>
    %cst_69 = arith.constant dense<0.000000e+00> : vector<120xf32>
    %123 = vector.multi_reduction <add>, %122, %cst_69 [0] : vector<2x120xf32> to vector<120xf32>
    %124 = vector.shape_cast %123 : vector<120xf32> to vector<1x120xf32>
    %cst_70 = arith.constant 1.250000e-02 : f32
    %125 = vector.broadcast %cst_70 : f32 to vector<1x120xf32>
    %126 = arith.mulf %124, %125 : vector<1x120xf32>
    %127 = vector.broadcast %126 : vector<1x120xf32> to vector<2x120xf32>
    %128 = arith.subf %119, %127 : vector<2x120xf32>
    %129 = arith.mulf %128, %128 : vector<2x120xf32>
    %cst_71 = arith.constant dense<0.000000e+00> : vector<2x120xf32>
    %130 = tpu.matmul %129, %0, %cst_71 {dimension_numbers = #tpu.dot_dimension_numbers<[1], [0], [0], [1], [0, 0, 1, 1], [], []>} : vector<2x120xf32>, vector<120x120xf32>, vector<2x120xf32> -> vector<2x120xf32>
    %cst_72 = arith.constant dense<0.000000e+00> : vector<120xf32>
    %131 = vector.multi_reduction <add>, %130, %cst_72 [0] : vector<2x120xf32> to vector<120xf32>
    %132 = vector.shape_cast %131 : vector<120xf32> to vector<1x120xf32>
    %cst_73 = arith.constant 1.250000e-02 : f32
    %133 = vector.broadcast %cst_73 : f32 to vector<1x120xf32>
    %134 = arith.mulf %132, %133 : vector<1x120xf32>
    %cst_74 = arith.constant 9.99999974E-6 : f32
    %135 = vector.broadcast %cst_74 : f32 to vector<1x120xf32>
    %136 = arith.addf %134, %135 : vector<1x120xf32>
    %137 = math.rsqrt %136 : vector<1x120xf32>
    %138 = arith.mulf %120, %137 : vector<1x120xf32>
    %139 = vector.broadcast %138 : vector<1x120xf32> to vector<2x120xf32>
    %140 = arith.mulf %128, %139 : vector<2x120xf32>
    %141 = vector.broadcast %121 : vector<1x120xf32> to vector<2x120xf32>
    %142 = arith.addf %140, %141 : vector<2x120xf32>
    %cst_75 = arith.constant 1.000000e-01 : f32
    %143 = vector.broadcast %cst_75 : f32 to vector<2x120xf32>
    %144 = arith.mulf %143, %142 : vector<2x120xf32>
    %145 = arith.maximumf %142, %144 : vector<2x120xf32>
    %c0_76 = arith.constant 0 : index
    %c0_77 = arith.constant 0 : index
    %146 = vector.load %arg6[%c0_76, %c0_77] : memref<120x120xf32, #tpu.memory_space<vmem>>, vector<120x120xf32>
    %cst_78 = arith.constant dense<0.000000e+00> : vector<2x120xf32>
    %147 = tpu.matmul %145, %146, %cst_78 {dimension_numbers = #tpu.dot_dimension_numbers<[1], [0], [0], [1], [0, 0, 1, 1], [], []>} : vector<2x120xf32>, vector<120x120xf32>, vector<2x120xf32> -> vector<2x120xf32>
    %c5 = arith.constant 5 : index
    %c0_79 = arith.constant 0 : index
    %148 = vector.load %arg9[%c5, %c0_79] : memref<6x120xf32, #tpu.memory_space<vmem>>, vector<1x120xf32>
    %c5_80 = arith.constant 5 : index
    %c0_81 = arith.constant 0 : index
    %149 = vector.load %arg10[%c5_80, %c0_81] : memref<6x120xf32, #tpu.memory_space<vmem>>, vector<1x120xf32>
    %cst_82 = arith.constant dense<0.000000e+00> : vector<2x120xf32>
    %150 = tpu.matmul %147, %0, %cst_82 {dimension_numbers = #tpu.dot_dimension_numbers<[1], [0], [0], [1], [0, 0, 1, 1], [], []>} : vector<2x120xf32>, vector<120x120xf32>, vector<2x120xf32> -> vector<2x120xf32>
    %cst_83 = arith.constant dense<0.000000e+00> : vector<120xf32>
    %151 = vector.multi_reduction <add>, %150, %cst_83 [0] : vector<2x120xf32> to vector<120xf32>
    %152 = vector.shape_cast %151 : vector<120xf32> to vector<1x120xf32>
    %cst_84 = arith.constant 1.250000e-02 : f32
    %153 = vector.broadcast %cst_84 : f32 to vector<1x120xf32>
    %154 = arith.mulf %152, %153 : vector<1x120xf32>
    %155 = vector.broadcast %154 : vector<1x120xf32> to vector<2x120xf32>
    %156 = arith.subf %147, %155 : vector<2x120xf32>
    %157 = arith.mulf %156, %156 : vector<2x120xf32>
    %cst_85 = arith.constant dense<0.000000e+00> : vector<2x120xf32>
    %158 = tpu.matmul %157, %0, %cst_85 {dimension_numbers = #tpu.dot_dimension_numbers<[1], [0], [0], [1], [0, 0, 1, 1], [], []>} : vector<2x120xf32>, vector<120x120xf32>, vector<2x120xf32> -> vector<2x120xf32>
    %cst_86 = arith.constant dense<0.000000e+00> : vector<120xf32>
    %159 = vector.multi_reduction <add>, %158, %cst_86 [0] : vector<2x120xf32> to vector<120xf32>
    %160 = vector.shape_cast %159 : vector<120xf32> to vector<1x120xf32>
    %cst_87 = arith.constant 1.250000e-02 : f32
    %161 = vector.broadcast %cst_87 : f32 to vector<1x120xf32>
    %162 = arith.mulf %160, %161 : vector<1x120xf32>
    %cst_88 = arith.constant 9.99999974E-6 : f32
    %163 = vector.broadcast %cst_88 : f32 to vector<1x120xf32>
    %164 = arith.addf %162, %163 : vector<1x120xf32>
    %165 = math.rsqrt %164 : vector<1x120xf32>
    %166 = arith.mulf %148, %165 : vector<1x120xf32>
    %167 = vector.broadcast %166 : vector<1x120xf32> to vector<2x120xf32>
    %168 = arith.mulf %156, %167 : vector<2x120xf32>
    %169 = vector.broadcast %149 : vector<1x120xf32> to vector<2x120xf32>
    %170 = arith.addf %168, %169 : vector<2x120xf32>
    %171 = arith.addf %170, %117 : vector<2x120xf32>
    %cst_89 = arith.constant 1.000000e-01 : f32
    %172 = vector.broadcast %cst_89 : f32 to vector<2x120xf32>
    %173 = arith.mulf %172, %171 : vector<2x120xf32>
    %174 = arith.maximumf %171, %173 : vector<2x120xf32>
    %c0_90 = arith.constant 0 : index
    %c0_91 = arith.constant 0 : index
    %175 = vector.load %arg11[%c0_90, %c0_91] : memref<120x3072xf32, #tpu.memory_space<vmem>>, vector<120x3072xf32>
    %cst_92 = arith.constant dense<0.000000e+00> : vector<2x3072xf32>
    %176 = tpu.matmul %174, %175, %cst_92 {dimension_numbers = #tpu.dot_dimension_numbers<[1], [0], [0], [1], [0, 0, 1, 1], [], []>} : vector<2x120xf32>, vector<120x3072xf32>, vector<2x3072xf32> -> vector<2x3072xf32>
    %c0_93 = arith.constant 0 : index
    %c0_94 = arith.constant 0 : index
    %177 = vector.load %arg12[%c0_93, %c0_94] : memref<1x3072xf32, #tpu.memory_space<vmem>>, vector<1x3072xf32>
    %178 = vector.broadcast %177 : vector<1x3072xf32> to vector<2x3072xf32>
    %179 = arith.addf %176, %178 : vector<2x3072xf32>
    %c0_95 = arith.constant 0 : index
    %c0_96 = arith.constant 0 : index
    %180 = vector.load %arg13[%c0_95, %c0_96] : memref<128x1024xf32, #tpu.memory_space<vmem>>, vector<128x1024xf32>
    %c0_97 = arith.constant 0 : index
    %c0_98 = arith.constant 0 : index
    %181 = vector.load %arg14[%c0_97, %c0_98] : memref<128x512xf32, #tpu.memory_space<vmem>>, vector<128x512xf32>
    %c0_99 = arith.constant 0 : index
    %c0_100 = arith.constant 0 : index
    %182 = vector.load %arg15[%c0_99, %c0_100] : memref<1x512xf32, #tpu.memory_space<vmem>>, vector<1x512xf32>
    %cst_101 = arith.constant 0.000000e+00 : f32
    %183 = vector.broadcast %cst_101 : f32 to vector<2x128xf32>
    %cst_102 = arith.constant 0.000000e+00 : f32
    %184 = vector.broadcast %cst_102 : f32 to vector<2x128xf32>
    %cst_103 = arith.constant 0.000000e+00 : f32
    %185 = vector.broadcast %cst_103 : f32 to vector<2x128xf32>
    %cst_104 = arith.constant 0.000000e+00 : f32
    %186 = vector.broadcast %cst_104 : f32 to vector<2x512xf32>
    %187 = vector.extract_strided_slice %179 {offsets = [0, 0], sizes = [2, 512], strides = [1, 1]} : vector<2x3072xf32> to vector<2x512xf32>
    %188 = arith.addf %187, %186 : vector<2x512xf32>
    %189 = vector.extract_strided_slice %188 {offsets = [0, 0], sizes = [2, 128], strides = [1, 1]} : vector<2x512xf32> to vector<2x128xf32>
    %cst_105 = arith.constant 5.000000e-01 : f32
    %190 = vector.broadcast %cst_105 : f32 to vector<2x128xf32>
    %191 = arith.mulf %190, %189 : vector<2x128xf32>
    %192 = math.tanh %191 : vector<2x128xf32>
    %cst_106 = arith.constant 5.000000e-01 : f32
    %193 = vector.broadcast %cst_106 : f32 to vector<2x128xf32>
    %194 = arith.mulf %193, %192 : vector<2x128xf32>
    %cst_107 = arith.constant 5.000000e-01 : f32
    %195 = vector.broadcast %cst_107 : f32 to vector<2x128xf32>
    %196 = arith.addf %194, %195 : vector<2x128xf32>
    %197 = vector.extract_strided_slice %188 {offsets = [0, 128], sizes = [2, 128], strides = [1, 1]} : vector<2x512xf32> to vector<2x128xf32>
    %cst_108 = arith.constant 5.000000e-01 : f32
    %198 = vector.broadcast %cst_108 : f32 to vector<2x128xf32>
    %199 = arith.mulf %198, %197 : vector<2x128xf32>
    %200 = math.tanh %199 : vector<2x128xf32>
    %cst_109 = arith.constant 5.000000e-01 : f32
    %201 = vector.broadcast %cst_109 : f32 to vector<2x128xf32>
    %202 = arith.mulf %201, %200 : vector<2x128xf32>
    %cst_110 = arith.constant 5.000000e-01 : f32
    %203 = vector.broadcast %cst_110 : f32 to vector<2x128xf32>
    %204 = arith.addf %202, %203 : vector<2x128xf32>
    %205 = vector.extract_strided_slice %188 {offsets = [0, 256], sizes = [2, 128], strides = [1, 1]} : vector<2x512xf32> to vector<2x128xf32>
    %206 = math.tanh %205 : vector<2x128xf32>
    %207 = vector.extract_strided_slice %188 {offsets = [0, 384], sizes = [2, 128], strides = [1, 1]} : vector<2x512xf32> to vector<2x128xf32>
    %cst_111 = arith.constant 5.000000e-01 : f32
    %208 = vector.broadcast %cst_111 : f32 to vector<2x128xf32>
    %209 = arith.mulf %208, %207 : vector<2x128xf32>
    %210 = math.tanh %209 : vector<2x128xf32>
    %cst_112 = arith.constant 5.000000e-01 : f32
    %211 = vector.broadcast %cst_112 : f32 to vector<2x128xf32>
    %212 = arith.mulf %211, %210 : vector<2x128xf32>
    %cst_113 = arith.constant 5.000000e-01 : f32
    %213 = vector.broadcast %cst_113 : f32 to vector<2x128xf32>
    %214 = arith.addf %212, %213 : vector<2x128xf32>
    %215 = arith.mulf %204, %183 : vector<2x128xf32>
    %216 = arith.mulf %196, %206 : vector<2x128xf32>
    %217 = arith.addf %215, %216 : vector<2x128xf32>
    %218 = math.tanh %217 : vector<2x128xf32>
    %219 = arith.mulf %214, %218 : vector<2x128xf32>
    %cst_114 = arith.constant dense<0.000000e+00> : vector<2x1024xf32>
    %220 = tpu.matmul %219, %180, %cst_114 {dimension_numbers = #tpu.dot_dimension_numbers<[1], [0], [0], [1], [0, 0, 1, 1], [], []>} : vector<2x128xf32>, vector<128x1024xf32>, vector<2x1024xf32> -> vector<2x1024xf32>
    %221 = vector.extract_strided_slice %220 {offsets = [0, 0], sizes = [2, 512], strides = [1, 1]} : vector<2x1024xf32> to vector<2x512xf32>
    %222 = vector.extract_strided_slice %220 {offsets = [0, 512], sizes = [2, 512], strides = [1, 1]} : vector<2x1024xf32> to vector<2x512xf32>
    %cst_115 = arith.constant dense<0.000000e+00> : vector<2x512xf32>
    %223 = tpu.matmul %184, %181, %cst_115 {dimension_numbers = #tpu.dot_dimension_numbers<[1], [0], [0], [1], [0, 0, 1, 1], [], []>} : vector<2x128xf32>, vector<128x512xf32>, vector<2x512xf32> -> vector<2x512xf32>
    %224 = arith.addf %222, %223 : vector<2x512xf32>
    %225 = vector.broadcast %182 : vector<1x512xf32> to vector<2x512xf32>
    %226 = arith.addf %224, %225 : vector<2x512xf32>
    %227 = vector.extract_strided_slice %226 {offsets = [0, 0], sizes = [2, 128], strides = [1, 1]} : vector<2x512xf32> to vector<2x128xf32>
    %cst_116 = arith.constant 5.000000e-01 : f32
    %228 = vector.broadcast %cst_116 : f32 to vector<2x128xf32>
    %229 = arith.mulf %228, %227 : vector<2x128xf32>
    %230 = math.tanh %229 : vector<2x128xf32>
    %cst_117 = arith.constant 5.000000e-01 : f32
    %231 = vector.broadcast %cst_117 : f32 to vector<2x128xf32>
    %232 = arith.mulf %231, %230 : vector<2x128xf32>
    %cst_118 = arith.constant 5.000000e-01 : f32
    %233 = vector.broadcast %cst_118 : f32 to vector<2x128xf32>
    %234 = arith.addf %232, %233 : vector<2x128xf32>
    %235 = vector.extract_strided_slice %226 {offsets = [0, 128], sizes = [2, 128], strides = [1, 1]} : vector<2x512xf32> to vector<2x128xf32>
    %cst_119 = arith.constant 5.000000e-01 : f32
    %236 = vector.broadcast %cst_119 : f32 to vector<2x128xf32>
    %237 = arith.mulf %236, %235 : vector<2x128xf32>
    %238 = math.tanh %237 : vector<2x128xf32>
    %cst_120 = arith.constant 5.000000e-01 : f32
    %239 = vector.broadcast %cst_120 : f32 to vector<2x128xf32>
    %240 = arith.mulf %239, %238 : vector<2x128xf32>
    %cst_121 = arith.constant 5.000000e-01 : f32
    %241 = vector.broadcast %cst_121 : f32 to vector<2x128xf32>
    %242 = arith.addf %240, %241 : vector<2x128xf32>
    %243 = vector.extract_strided_slice %226 {offsets = [0, 256], sizes = [2, 128], strides = [1, 1]} : vector<2x512xf32> to vector<2x128xf32>
    %244 = math.tanh %243 : vector<2x128xf32>
    %245 = vector.extract_strided_slice %226 {offsets = [0, 384], sizes = [2, 128], strides = [1, 1]} : vector<2x512xf32> to vector<2x128xf32>
    %cst_122 = arith.constant 5.000000e-01 : f32
    %246 = vector.broadcast %cst_122 : f32 to vector<2x128xf32>
    %247 = arith.mulf %246, %245 : vector<2x128xf32>
    %248 = math.tanh %247 : vector<2x128xf32>
    %cst_123 = arith.constant 5.000000e-01 : f32
    %249 = vector.broadcast %cst_123 : f32 to vector<2x128xf32>
    %250 = arith.mulf %249, %248 : vector<2x128xf32>
    %cst_124 = arith.constant 5.000000e-01 : f32
    %251 = vector.broadcast %cst_124 : f32 to vector<2x128xf32>
    %252 = arith.addf %250, %251 : vector<2x128xf32>
    %253 = arith.mulf %242, %185 : vector<2x128xf32>
    %254 = arith.mulf %234, %244 : vector<2x128xf32>
    %255 = arith.addf %253, %254 : vector<2x128xf32>
    %256 = math.tanh %255 : vector<2x128xf32>
    %257 = arith.mulf %252, %256 : vector<2x128xf32>
    %258 = vector.extract_strided_slice %179 {offsets = [0, 512], sizes = [2, 512], strides = [1, 1]} : vector<2x3072xf32> to vector<2x512xf32>
    %259 = arith.addf %258, %221 : vector<2x512xf32>
    %260 = vector.extract_strided_slice %259 {offsets = [0, 0], sizes = [2, 128], strides = [1, 1]} : vector<2x512xf32> to vector<2x128xf32>
    %cst_125 = arith.constant 5.000000e-01 : f32
    %261 = vector.broadcast %cst_125 : f32 to vector<2x128xf32>
    %262 = arith.mulf %261, %260 : vector<2x128xf32>
    %263 = math.tanh %262 : vector<2x128xf32>
    %cst_126 = arith.constant 5.000000e-01 : f32
    %264 = vector.broadcast %cst_126 : f32 to vector<2x128xf32>
    %265 = arith.mulf %264, %263 : vector<2x128xf32>
    %cst_127 = arith.constant 5.000000e-01 : f32
    %266 = vector.broadcast %cst_127 : f32 to vector<2x128xf32>
    %267 = arith.addf %265, %266 : vector<2x128xf32>
    %268 = vector.extract_strided_slice %259 {offsets = [0, 128], sizes = [2, 128], strides = [1, 1]} : vector<2x512xf32> to vector<2x128xf32>
    %cst_128 = arith.constant 5.000000e-01 : f32
    %269 = vector.broadcast %cst_128 : f32 to vector<2x128xf32>
    %270 = arith.mulf %269, %268 : vector<2x128xf32>
    %271 = math.tanh %270 : vector<2x128xf32>
    %cst_129 = arith.constant 5.000000e-01 : f32
    %272 = vector.broadcast %cst_129 : f32 to vector<2x128xf32>
    %273 = arith.mulf %272, %271 : vector<2x128xf32>
    %cst_130 = arith.constant 5.000000e-01 : f32
    %274 = vector.broadcast %cst_130 : f32 to vector<2x128xf32>
    %275 = arith.addf %273, %274 : vector<2x128xf32>
    %276 = vector.extract_strided_slice %259 {offsets = [0, 256], sizes = [2, 128], strides = [1, 1]} : vector<2x512xf32> to vector<2x128xf32>
    %277 = math.tanh %276 : vector<2x128xf32>
    %278 = vector.extract_strided_slice %259 {offsets = [0, 384], sizes = [2, 128], strides = [1, 1]} : vector<2x512xf32> to vector<2x128xf32>
    %cst_131 = arith.constant 5.000000e-01 : f32
    %279 = vector.broadcast %cst_131 : f32 to vector<2x128xf32>
    %280 = arith.mulf %279, %278 : vector<2x128xf32>
    %281 = math.tanh %280 : vector<2x128xf32>
    %cst_132 = arith.constant 5.000000e-01 : f32
    %282 = vector.broadcast %cst_132 : f32 to vector<2x128xf32>
    %283 = arith.mulf %282, %281 : vector<2x128xf32>
    %cst_133 = arith.constant 5.000000e-01 : f32
    %284 = vector.broadcast %cst_133 : f32 to vector<2x128xf32>
    %285 = arith.addf %283, %284 : vector<2x128xf32>
    %286 = arith.mulf %275, %217 : vector<2x128xf32>
    %287 = arith.mulf %267, %277 : vector<2x128xf32>
    %288 = arith.addf %286, %287 : vector<2x128xf32>
    %289 = math.tanh %288 : vector<2x128xf32>
    %290 = arith.mulf %285, %289 : vector<2x128xf32>
    %cst_134 = arith.constant dense<0.000000e+00> : vector<2x1024xf32>
    %291 = tpu.matmul %290, %180, %cst_134 {dimension_numbers = #tpu.dot_dimension_numbers<[1], [0], [0], [1], [0, 0, 1, 1], [], []>} : vector<2x128xf32>, vector<128x1024xf32>, vector<2x1024xf32> -> vector<2x1024xf32>
    %292 = vector.extract_strided_slice %291 {offsets = [0, 0], sizes = [2, 512], strides = [1, 1]} : vector<2x1024xf32> to vector<2x512xf32>
    %293 = vector.extract_strided_slice %291 {offsets = [0, 512], sizes = [2, 512], strides = [1, 1]} : vector<2x1024xf32> to vector<2x512xf32>
    %cst_135 = arith.constant dense<0.000000e+00> : vector<2x512xf32>
    %294 = tpu.matmul %257, %181, %cst_135 {dimension_numbers = #tpu.dot_dimension_numbers<[1], [0], [0], [1], [0, 0, 1, 1], [], []>} : vector<2x128xf32>, vector<128x512xf32>, vector<2x512xf32> -> vector<2x512xf32>
    %295 = arith.addf %293, %294 : vector<2x512xf32>
    %296 = vector.broadcast %182 : vector<1x512xf32> to vector<2x512xf32>
    %297 = arith.addf %295, %296 : vector<2x512xf32>
    %298 = vector.extract_strided_slice %297 {offsets = [0, 0], sizes = [2, 128], strides = [1, 1]} : vector<2x512xf32> to vector<2x128xf32>
    %cst_136 = arith.constant 5.000000e-01 : f32
    %299 = vector.broadcast %cst_136 : f32 to vector<2x128xf32>
    %300 = arith.mulf %299, %298 : vector<2x128xf32>
    %301 = math.tanh %300 : vector<2x128xf32>
    %cst_137 = arith.constant 5.000000e-01 : f32
    %302 = vector.broadcast %cst_137 : f32 to vector<2x128xf32>
    %303 = arith.mulf %302, %301 : vector<2x128xf32>
    %cst_138 = arith.constant 5.000000e-01 : f32
    %304 = vector.broadcast %cst_138 : f32 to vector<2x128xf32>
    %305 = arith.addf %303, %304 : vector<2x128xf32>
    %306 = vector.extract_strided_slice %297 {offsets = [0, 128], sizes = [2, 128], strides = [1, 1]} : vector<2x512xf32> to vector<2x128xf32>
    %cst_139 = arith.constant 5.000000e-01 : f32
    %307 = vector.broadcast %cst_139 : f32 to vector<2x128xf32>
    %308 = arith.mulf %307, %306 : vector<2x128xf32>
    %309 = math.tanh %308 : vector<2x128xf32>
    %cst_140 = arith.constant 5.000000e-01 : f32
    %310 = vector.broadcast %cst_140 : f32 to vector<2x128xf32>
    %311 = arith.mulf %310, %309 : vector<2x128xf32>
    %cst_141 = arith.constant 5.000000e-01 : f32
    %312 = vector.broadcast %cst_141 : f32 to vector<2x128xf32>
    %313 = arith.addf %311, %312 : vector<2x128xf32>
    %314 = vector.extract_strided_slice %297 {offsets = [0, 256], sizes = [2, 128], strides = [1, 1]} : vector<2x512xf32> to vector<2x128xf32>
    %315 = math.tanh %314 : vector<2x128xf32>
    %316 = vector.extract_strided_slice %297 {offsets = [0, 384], sizes = [2, 128], strides = [1, 1]} : vector<2x512xf32> to vector<2x128xf32>
    %cst_142 = arith.constant 5.000000e-01 : f32
    %317 = vector.broadcast %cst_142 : f32 to vector<2x128xf32>
    %318 = arith.mulf %317, %316 : vector<2x128xf32>
    %319 = math.tanh %318 : vector<2x128xf32>
    %cst_143 = arith.constant 5.000000e-01 : f32
    %320 = vector.broadcast %cst_143 : f32 to vector<2x128xf32>
    %321 = arith.mulf %320, %319 : vector<2x128xf32>
    %cst_144 = arith.constant 5.000000e-01 : f32
    %322 = vector.broadcast %cst_144 : f32 to vector<2x128xf32>
    %323 = arith.addf %321, %322 : vector<2x128xf32>
    %324 = arith.mulf %313, %255 : vector<2x128xf32>
    %325 = arith.mulf %305, %315 : vector<2x128xf32>
    %326 = arith.addf %324, %325 : vector<2x128xf32>
    %327 = math.tanh %326 : vector<2x128xf32>
    %328 = arith.mulf %323, %327 : vector<2x128xf32>
    %329 = vector.extract_strided_slice %179 {offsets = [0, 1024], sizes = [2, 512], strides = [1, 1]} : vector<2x3072xf32> to vector<2x512xf32>
    %330 = arith.addf %329, %292 : vector<2x512xf32>
    %331 = vector.extract_strided_slice %330 {offsets = [0, 0], sizes = [2, 128], strides = [1, 1]} : vector<2x512xf32> to vector<2x128xf32>
    %cst_145 = arith.constant 5.000000e-01 : f32
    %332 = vector.broadcast %cst_145 : f32 to vector<2x128xf32>
    %333 = arith.mulf %332, %331 : vector<2x128xf32>
    %334 = math.tanh %333 : vector<2x128xf32>
    %cst_146 = arith.constant 5.000000e-01 : f32
    %335 = vector.broadcast %cst_146 : f32 to vector<2x128xf32>
    %336 = arith.mulf %335, %334 : vector<2x128xf32>
    %cst_147 = arith.constant 5.000000e-01 : f32
    %337 = vector.broadcast %cst_147 : f32 to vector<2x128xf32>
    %338 = arith.addf %336, %337 : vector<2x128xf32>
    %339 = vector.extract_strided_slice %330 {offsets = [0, 128], sizes = [2, 128], strides = [1, 1]} : vector<2x512xf32> to vector<2x128xf32>
    %cst_148 = arith.constant 5.000000e-01 : f32
    %340 = vector.broadcast %cst_148 : f32 to vector<2x128xf32>
    %341 = arith.mulf %340, %339 : vector<2x128xf32>
    %342 = math.tanh %341 : vector<2x128xf32>
    %cst_149 = arith.constant 5.000000e-01 : f32
    %343 = vector.broadcast %cst_149 : f32 to vector<2x128xf32>
    %344 = arith.mulf %343, %342 : vector<2x128xf32>
    %cst_150 = arith.constant 5.000000e-01 : f32
    %345 = vector.broadcast %cst_150 : f32 to vector<2x128xf32>
    %346 = arith.addf %344, %345 : vector<2x128xf32>
    %347 = vector.extract_strided_slice %330 {offsets = [0, 256], sizes = [2, 128], strides = [1, 1]} : vector<2x512xf32> to vector<2x128xf32>
    %348 = math.tanh %347 : vector<2x128xf32>
    %349 = vector.extract_strided_slice %330 {offsets = [0, 384], sizes = [2, 128], strides = [1, 1]} : vector<2x512xf32> to vector<2x128xf32>
    %cst_151 = arith.constant 5.000000e-01 : f32
    %350 = vector.broadcast %cst_151 : f32 to vector<2x128xf32>
    %351 = arith.mulf %350, %349 : vector<2x128xf32>
    %352 = math.tanh %351 : vector<2x128xf32>
    %cst_152 = arith.constant 5.000000e-01 : f32
    %353 = vector.broadcast %cst_152 : f32 to vector<2x128xf32>
    %354 = arith.mulf %353, %352 : vector<2x128xf32>
    %cst_153 = arith.constant 5.000000e-01 : f32
    %355 = vector.broadcast %cst_153 : f32 to vector<2x128xf32>
    %356 = arith.addf %354, %355 : vector<2x128xf32>
    %357 = arith.mulf %346, %288 : vector<2x128xf32>
    %358 = arith.mulf %338, %348 : vector<2x128xf32>
    %359 = arith.addf %357, %358 : vector<2x128xf32>
    %360 = math.tanh %359 : vector<2x128xf32>
    %361 = arith.mulf %356, %360 : vector<2x128xf32>
    %cst_154 = arith.constant dense<0.000000e+00> : vector<2x1024xf32>
    %362 = tpu.matmul %361, %180, %cst_154 {dimension_numbers = #tpu.dot_dimension_numbers<[1], [0], [0], [1], [0, 0, 1, 1], [], []>} : vector<2x128xf32>, vector<128x1024xf32>, vector<2x1024xf32> -> vector<2x1024xf32>
    %363 = vector.extract_strided_slice %362 {offsets = [0, 0], sizes = [2, 512], strides = [1, 1]} : vector<2x1024xf32> to vector<2x512xf32>
    %364 = vector.extract_strided_slice %362 {offsets = [0, 512], sizes = [2, 512], strides = [1, 1]} : vector<2x1024xf32> to vector<2x512xf32>
    %cst_155 = arith.constant dense<0.000000e+00> : vector<2x512xf32>
    %365 = tpu.matmul %328, %181, %cst_155 {dimension_numbers = #tpu.dot_dimension_numbers<[1], [0], [0], [1], [0, 0, 1, 1], [], []>} : vector<2x128xf32>, vector<128x512xf32>, vector<2x512xf32> -> vector<2x512xf32>
    %366 = arith.addf %364, %365 : vector<2x512xf32>
    %367 = vector.broadcast %182 : vector<1x512xf32> to vector<2x512xf32>
    %368 = arith.addf %366, %367 : vector<2x512xf32>
    %369 = vector.extract_strided_slice %368 {offsets = [0, 0], sizes = [2, 128], strides = [1, 1]} : vector<2x512xf32> to vector<2x128xf32>
    %cst_156 = arith.constant 5.000000e-01 : f32
    %370 = vector.broadcast %cst_156 : f32 to vector<2x128xf32>
    %371 = arith.mulf %370, %369 : vector<2x128xf32>
    %372 = math.tanh %371 : vector<2x128xf32>
    %cst_157 = arith.constant 5.000000e-01 : f32
    %373 = vector.broadcast %cst_157 : f32 to vector<2x128xf32>
    %374 = arith.mulf %373, %372 : vector<2x128xf32>
    %cst_158 = arith.constant 5.000000e-01 : f32
    %375 = vector.broadcast %cst_158 : f32 to vector<2x128xf32>
    %376 = arith.addf %374, %375 : vector<2x128xf32>
    %377 = vector.extract_strided_slice %368 {offsets = [0, 128], sizes = [2, 128], strides = [1, 1]} : vector<2x512xf32> to vector<2x128xf32>
    %cst_159 = arith.constant 5.000000e-01 : f32
    %378 = vector.broadcast %cst_159 : f32 to vector<2x128xf32>
    %379 = arith.mulf %378, %377 : vector<2x128xf32>
    %380 = math.tanh %379 : vector<2x128xf32>
    %cst_160 = arith.constant 5.000000e-01 : f32
    %381 = vector.broadcast %cst_160 : f32 to vector<2x128xf32>
    %382 = arith.mulf %381, %380 : vector<2x128xf32>
    %cst_161 = arith.constant 5.000000e-01 : f32
    %383 = vector.broadcast %cst_161 : f32 to vector<2x128xf32>
    %384 = arith.addf %382, %383 : vector<2x128xf32>
    %385 = vector.extract_strided_slice %368 {offsets = [0, 256], sizes = [2, 128], strides = [1, 1]} : vector<2x512xf32> to vector<2x128xf32>
    %386 = math.tanh %385 : vector<2x128xf32>
    %387 = vector.extract_strided_slice %368 {offsets = [0, 384], sizes = [2, 128], strides = [1, 1]} : vector<2x512xf32> to vector<2x128xf32>
    %cst_162 = arith.constant 5.000000e-01 : f32
    %388 = vector.broadcast %cst_162 : f32 to vector<2x128xf32>
    %389 = arith.mulf %388, %387 : vector<2x128xf32>
    %390 = math.tanh %389 : vector<2x128xf32>
    %cst_163 = arith.constant 5.000000e-01 : f32
    %391 = vector.broadcast %cst_163 : f32 to vector<2x128xf32>
    %392 = arith.mulf %391, %390 : vector<2x128xf32>
    %cst_164 = arith.constant 5.000000e-01 : f32
    %393 = vector.broadcast %cst_164 : f32 to vector<2x128xf32>
    %394 = arith.addf %392, %393 : vector<2x128xf32>
    %395 = arith.mulf %384, %326 : vector<2x128xf32>
    %396 = arith.mulf %376, %386 : vector<2x128xf32>
    %397 = arith.addf %395, %396 : vector<2x128xf32>
    %398 = math.tanh %397 : vector<2x128xf32>
    %399 = arith.mulf %394, %398 : vector<2x128xf32>
    %400 = vector.extract_strided_slice %179 {offsets = [0, 1536], sizes = [2, 512], strides = [1, 1]} : vector<2x3072xf32> to vector<2x512xf32>
    %401 = arith.addf %400, %363 : vector<2x512xf32>
    %402 = vector.extract_strided_slice %401 {offsets = [0, 0], sizes = [2, 128], strides = [1, 1]} : vector<2x512xf32> to vector<2x128xf32>
    %cst_165 = arith.constant 5.000000e-01 : f32
    %403 = vector.broadcast %cst_165 : f32 to vector<2x128xf32>
    %404 = arith.mulf %403, %402 : vector<2x128xf32>
    %405 = math.tanh %404 : vector<2x128xf32>
    %cst_166 = arith.constant 5.000000e-01 : f32
    %406 = vector.broadcast %cst_166 : f32 to vector<2x128xf32>
    %407 = arith.mulf %406, %405 : vector<2x128xf32>
    %cst_167 = arith.constant 5.000000e-01 : f32
    %408 = vector.broadcast %cst_167 : f32 to vector<2x128xf32>
    %409 = arith.addf %407, %408 : vector<2x128xf32>
    %410 = vector.extract_strided_slice %401 {offsets = [0, 128], sizes = [2, 128], strides = [1, 1]} : vector<2x512xf32> to vector<2x128xf32>
    %cst_168 = arith.constant 5.000000e-01 : f32
    %411 = vector.broadcast %cst_168 : f32 to vector<2x128xf32>
    %412 = arith.mulf %411, %410 : vector<2x128xf32>
    %413 = math.tanh %412 : vector<2x128xf32>
    %cst_169 = arith.constant 5.000000e-01 : f32
    %414 = vector.broadcast %cst_169 : f32 to vector<2x128xf32>
    %415 = arith.mulf %414, %413 : vector<2x128xf32>
    %cst_170 = arith.constant 5.000000e-01 : f32
    %416 = vector.broadcast %cst_170 : f32 to vector<2x128xf32>
    %417 = arith.addf %415, %416 : vector<2x128xf32>
    %418 = vector.extract_strided_slice %401 {offsets = [0, 256], sizes = [2, 128], strides = [1, 1]} : vector<2x512xf32> to vector<2x128xf32>
    %419 = math.tanh %418 : vector<2x128xf32>
    %420 = vector.extract_strided_slice %401 {offsets = [0, 384], sizes = [2, 128], strides = [1, 1]} : vector<2x512xf32> to vector<2x128xf32>
    %cst_171 = arith.constant 5.000000e-01 : f32
    %421 = vector.broadcast %cst_171 : f32 to vector<2x128xf32>
    %422 = arith.mulf %421, %420 : vector<2x128xf32>
    %423 = math.tanh %422 : vector<2x128xf32>
    %cst_172 = arith.constant 5.000000e-01 : f32
    %424 = vector.broadcast %cst_172 : f32 to vector<2x128xf32>
    %425 = arith.mulf %424, %423 : vector<2x128xf32>
    %cst_173 = arith.constant 5.000000e-01 : f32
    %426 = vector.broadcast %cst_173 : f32 to vector<2x128xf32>
    %427 = arith.addf %425, %426 : vector<2x128xf32>
    %428 = arith.mulf %417, %359 : vector<2x128xf32>
    %429 = arith.mulf %409, %419 : vector<2x128xf32>
    %430 = arith.addf %428, %429 : vector<2x128xf32>
    %431 = math.tanh %430 : vector<2x128xf32>
    %432 = arith.mulf %427, %431 : vector<2x128xf32>
    %cst_174 = arith.constant dense<0.000000e+00> : vector<2x1024xf32>
    %433 = tpu.matmul %432, %180, %cst_174 {dimension_numbers = #tpu.dot_dimension_numbers<[1], [0], [0], [1], [0, 0, 1, 1], [], []>} : vector<2x128xf32>, vector<128x1024xf32>, vector<2x1024xf32> -> vector<2x1024xf32>
    %434 = vector.extract_strided_slice %433 {offsets = [0, 0], sizes = [2, 512], strides = [1, 1]} : vector<2x1024xf32> to vector<2x512xf32>
    %435 = vector.extract_strided_slice %433 {offsets = [0, 512], sizes = [2, 512], strides = [1, 1]} : vector<2x1024xf32> to vector<2x512xf32>
    %cst_175 = arith.constant dense<0.000000e+00> : vector<2x512xf32>
    %436 = tpu.matmul %399, %181, %cst_175 {dimension_numbers = #tpu.dot_dimension_numbers<[1], [0], [0], [1], [0, 0, 1, 1], [], []>} : vector<2x128xf32>, vector<128x512xf32>, vector<2x512xf32> -> vector<2x512xf32>
    %437 = arith.addf %435, %436 : vector<2x512xf32>
    %438 = vector.broadcast %182 : vector<1x512xf32> to vector<2x512xf32>
    %439 = arith.addf %437, %438 : vector<2x512xf32>
    %440 = vector.extract_strided_slice %439 {offsets = [0, 0], sizes = [2, 128], strides = [1, 1]} : vector<2x512xf32> to vector<2x128xf32>
    %cst_176 = arith.constant 5.000000e-01 : f32
    %441 = vector.broadcast %cst_176 : f32 to vector<2x128xf32>
    %442 = arith.mulf %441, %440 : vector<2x128xf32>
    %443 = math.tanh %442 : vector<2x128xf32>
    %cst_177 = arith.constant 5.000000e-01 : f32
    %444 = vector.broadcast %cst_177 : f32 to vector<2x128xf32>
    %445 = arith.mulf %444, %443 : vector<2x128xf32>
    %cst_178 = arith.constant 5.000000e-01 : f32
    %446 = vector.broadcast %cst_178 : f32 to vector<2x128xf32>
    %447 = arith.addf %445, %446 : vector<2x128xf32>
    %448 = vector.extract_strided_slice %439 {offsets = [0, 128], sizes = [2, 128], strides = [1, 1]} : vector<2x512xf32> to vector<2x128xf32>
    %cst_179 = arith.constant 5.000000e-01 : f32
    %449 = vector.broadcast %cst_179 : f32 to vector<2x128xf32>
    %450 = arith.mulf %449, %448 : vector<2x128xf32>
    %451 = math.tanh %450 : vector<2x128xf32>
    %cst_180 = arith.constant 5.000000e-01 : f32
    %452 = vector.broadcast %cst_180 : f32 to vector<2x128xf32>
    %453 = arith.mulf %452, %451 : vector<2x128xf32>
    %cst_181 = arith.constant 5.000000e-01 : f32
    %454 = vector.broadcast %cst_181 : f32 to vector<2x128xf32>
    %455 = arith.addf %453, %454 : vector<2x128xf32>
    %456 = vector.extract_strided_slice %439 {offsets = [0, 256], sizes = [2, 128], strides = [1, 1]} : vector<2x512xf32> to vector<2x128xf32>
    %457 = math.tanh %456 : vector<2x128xf32>
    %458 = vector.extract_strided_slice %439 {offsets = [0, 384], sizes = [2, 128], strides = [1, 1]} : vector<2x512xf32> to vector<2x128xf32>
    %cst_182 = arith.constant 5.000000e-01 : f32
    %459 = vector.broadcast %cst_182 : f32 to vector<2x128xf32>
    %460 = arith.mulf %459, %458 : vector<2x128xf32>
    %461 = math.tanh %460 : vector<2x128xf32>
    %cst_183 = arith.constant 5.000000e-01 : f32
    %462 = vector.broadcast %cst_183 : f32 to vector<2x128xf32>
    %463 = arith.mulf %462, %461 : vector<2x128xf32>
    %cst_184 = arith.constant 5.000000e-01 : f32
    %464 = vector.broadcast %cst_184 : f32 to vector<2x128xf32>
    %465 = arith.addf %463, %464 : vector<2x128xf32>
    %466 = arith.mulf %455, %397 : vector<2x128xf32>
    %467 = arith.mulf %447, %457 : vector<2x128xf32>
    %468 = arith.addf %466, %467 : vector<2x128xf32>
    %469 = math.tanh %468 : vector<2x128xf32>
    %470 = arith.mulf %465, %469 : vector<2x128xf32>
    %471 = vector.extract_strided_slice %179 {offsets = [0, 2048], sizes = [2, 512], strides = [1, 1]} : vector<2x3072xf32> to vector<2x512xf32>
    %472 = arith.addf %471, %434 : vector<2x512xf32>
    %473 = vector.extract_strided_slice %472 {offsets = [0, 0], sizes = [2, 128], strides = [1, 1]} : vector<2x512xf32> to vector<2x128xf32>
    %cst_185 = arith.constant 5.000000e-01 : f32
    %474 = vector.broadcast %cst_185 : f32 to vector<2x128xf32>
    %475 = arith.mulf %474, %473 : vector<2x128xf32>
    %476 = math.tanh %475 : vector<2x128xf32>
    %cst_186 = arith.constant 5.000000e-01 : f32
    %477 = vector.broadcast %cst_186 : f32 to vector<2x128xf32>
    %478 = arith.mulf %477, %476 : vector<2x128xf32>
    %cst_187 = arith.constant 5.000000e-01 : f32
    %479 = vector.broadcast %cst_187 : f32 to vector<2x128xf32>
    %480 = arith.addf %478, %479 : vector<2x128xf32>
    %481 = vector.extract_strided_slice %472 {offsets = [0, 128], sizes = [2, 128], strides = [1, 1]} : vector<2x512xf32> to vector<2x128xf32>
    %cst_188 = arith.constant 5.000000e-01 : f32
    %482 = vector.broadcast %cst_188 : f32 to vector<2x128xf32>
    %483 = arith.mulf %482, %481 : vector<2x128xf32>
    %484 = math.tanh %483 : vector<2x128xf32>
    %cst_189 = arith.constant 5.000000e-01 : f32
    %485 = vector.broadcast %cst_189 : f32 to vector<2x128xf32>
    %486 = arith.mulf %485, %484 : vector<2x128xf32>
    %cst_190 = arith.constant 5.000000e-01 : f32
    %487 = vector.broadcast %cst_190 : f32 to vector<2x128xf32>
    %488 = arith.addf %486, %487 : vector<2x128xf32>
    %489 = vector.extract_strided_slice %472 {offsets = [0, 256], sizes = [2, 128], strides = [1, 1]} : vector<2x512xf32> to vector<2x128xf32>
    %490 = math.tanh %489 : vector<2x128xf32>
    %491 = vector.extract_strided_slice %472 {offsets = [0, 384], sizes = [2, 128], strides = [1, 1]} : vector<2x512xf32> to vector<2x128xf32>
    %cst_191 = arith.constant 5.000000e-01 : f32
    %492 = vector.broadcast %cst_191 : f32 to vector<2x128xf32>
    %493 = arith.mulf %492, %491 : vector<2x128xf32>
    %494 = math.tanh %493 : vector<2x128xf32>
    %cst_192 = arith.constant 5.000000e-01 : f32
    %495 = vector.broadcast %cst_192 : f32 to vector<2x128xf32>
    %496 = arith.mulf %495, %494 : vector<2x128xf32>
    %cst_193 = arith.constant 5.000000e-01 : f32
    %497 = vector.broadcast %cst_193 : f32 to vector<2x128xf32>
    %498 = arith.addf %496, %497 : vector<2x128xf32>
    %499 = arith.mulf %488, %430 : vector<2x128xf32>
    %500 = arith.mulf %480, %490 : vector<2x128xf32>
    %501 = arith.addf %499, %500 : vector<2x128xf32>
    %502 = math.tanh %501 : vector<2x128xf32>
    %503 = arith.mulf %498, %502 : vector<2x128xf32>
    %cst_194 = arith.constant dense<0.000000e+00> : vector<2x1024xf32>
    %504 = tpu.matmul %503, %180, %cst_194 {dimension_numbers = #tpu.dot_dimension_numbers<[1], [0], [0], [1], [0, 0, 1, 1], [], []>} : vector<2x128xf32>, vector<128x1024xf32>, vector<2x1024xf32> -> vector<2x1024xf32>
    %505 = vector.extract_strided_slice %504 {offsets = [0, 0], sizes = [2, 512], strides = [1, 1]} : vector<2x1024xf32> to vector<2x512xf32>
    %506 = vector.extract_strided_slice %504 {offsets = [0, 512], sizes = [2, 512], strides = [1, 1]} : vector<2x1024xf32> to vector<2x512xf32>
    %cst_195 = arith.constant dense<0.000000e+00> : vector<2x512xf32>
    %507 = tpu.matmul %470, %181, %cst_195 {dimension_numbers = #tpu.dot_dimension_numbers<[1], [0], [0], [1], [0, 0, 1, 1], [], []>} : vector<2x128xf32>, vector<128x512xf32>, vector<2x512xf32> -> vector<2x512xf32>
    %508 = arith.addf %506, %507 : vector<2x512xf32>
    %509 = vector.broadcast %182 : vector<1x512xf32> to vector<2x512xf32>
    %510 = arith.addf %508, %509 : vector<2x512xf32>
    %511 = vector.extract_strided_slice %510 {offsets = [0, 0], sizes = [2, 128], strides = [1, 1]} : vector<2x512xf32> to vector<2x128xf32>
    %cst_196 = arith.constant 5.000000e-01 : f32
    %512 = vector.broadcast %cst_196 : f32 to vector<2x128xf32>
    %513 = arith.mulf %512, %511 : vector<2x128xf32>
    %514 = math.tanh %513 : vector<2x128xf32>
    %cst_197 = arith.constant 5.000000e-01 : f32
    %515 = vector.broadcast %cst_197 : f32 to vector<2x128xf32>
    %516 = arith.mulf %515, %514 : vector<2x128xf32>
    %cst_198 = arith.constant 5.000000e-01 : f32
    %517 = vector.broadcast %cst_198 : f32 to vector<2x128xf32>
    %518 = arith.addf %516, %517 : vector<2x128xf32>
    %519 = vector.extract_strided_slice %510 {offsets = [0, 128], sizes = [2, 128], strides = [1, 1]} : vector<2x512xf32> to vector<2x128xf32>
    %cst_199 = arith.constant 5.000000e-01 : f32
    %520 = vector.broadcast %cst_199 : f32 to vector<2x128xf32>
    %521 = arith.mulf %520, %519 : vector<2x128xf32>
    %522 = math.tanh %521 : vector<2x128xf32>
    %cst_200 = arith.constant 5.000000e-01 : f32
    %523 = vector.broadcast %cst_200 : f32 to vector<2x128xf32>
    %524 = arith.mulf %523, %522 : vector<2x128xf32>
    %cst_201 = arith.constant 5.000000e-01 : f32
    %525 = vector.broadcast %cst_201 : f32 to vector<2x128xf32>
    %526 = arith.addf %524, %525 : vector<2x128xf32>
    %527 = vector.extract_strided_slice %510 {offsets = [0, 256], sizes = [2, 128], strides = [1, 1]} : vector<2x512xf32> to vector<2x128xf32>
    %528 = math.tanh %527 : vector<2x128xf32>
    %529 = vector.extract_strided_slice %510 {offsets = [0, 384], sizes = [2, 128], strides = [1, 1]} : vector<2x512xf32> to vector<2x128xf32>
    %cst_202 = arith.constant 5.000000e-01 : f32
    %530 = vector.broadcast %cst_202 : f32 to vector<2x128xf32>
    %531 = arith.mulf %530, %529 : vector<2x128xf32>
    %532 = math.tanh %531 : vector<2x128xf32>
    %cst_203 = arith.constant 5.000000e-01 : f32
    %533 = vector.broadcast %cst_203 : f32 to vector<2x128xf32>
    %534 = arith.mulf %533, %532 : vector<2x128xf32>
    %cst_204 = arith.constant 5.000000e-01 : f32
    %535 = vector.broadcast %cst_204 : f32 to vector<2x128xf32>
    %536 = arith.addf %534, %535 : vector<2x128xf32>
    %537 = arith.mulf %526, %468 : vector<2x128xf32>
    %538 = arith.mulf %518, %528 : vector<2x128xf32>
    %539 = arith.addf %537, %538 : vector<2x128xf32>
    %540 = math.tanh %539 : vector<2x128xf32>
    %541 = arith.mulf %536, %540 : vector<2x128xf32>
    %542 = vector.extract_strided_slice %179 {offsets = [0, 2560], sizes = [2, 512], strides = [1, 1]} : vector<2x3072xf32> to vector<2x512xf32>
    %543 = arith.addf %542, %505 : vector<2x512xf32>
    %544 = vector.extract_strided_slice %543 {offsets = [0, 0], sizes = [2, 128], strides = [1, 1]} : vector<2x512xf32> to vector<2x128xf32>
    %cst_205 = arith.constant 5.000000e-01 : f32
    %545 = vector.broadcast %cst_205 : f32 to vector<2x128xf32>
    %546 = arith.mulf %545, %544 : vector<2x128xf32>
    %547 = math.tanh %546 : vector<2x128xf32>
    %cst_206 = arith.constant 5.000000e-01 : f32
    %548 = vector.broadcast %cst_206 : f32 to vector<2x128xf32>
    %549 = arith.mulf %548, %547 : vector<2x128xf32>
    %cst_207 = arith.constant 5.000000e-01 : f32
    %550 = vector.broadcast %cst_207 : f32 to vector<2x128xf32>
    %551 = arith.addf %549, %550 : vector<2x128xf32>
    %552 = vector.extract_strided_slice %543 {offsets = [0, 128], sizes = [2, 128], strides = [1, 1]} : vector<2x512xf32> to vector<2x128xf32>
    %cst_208 = arith.constant 5.000000e-01 : f32
    %553 = vector.broadcast %cst_208 : f32 to vector<2x128xf32>
    %554 = arith.mulf %553, %552 : vector<2x128xf32>
    %555 = math.tanh %554 : vector<2x128xf32>
    %cst_209 = arith.constant 5.000000e-01 : f32
    %556 = vector.broadcast %cst_209 : f32 to vector<2x128xf32>
    %557 = arith.mulf %556, %555 : vector<2x128xf32>
    %cst_210 = arith.constant 5.000000e-01 : f32
    %558 = vector.broadcast %cst_210 : f32 to vector<2x128xf32>
    %559 = arith.addf %557, %558 : vector<2x128xf32>
    %560 = vector.extract_strided_slice %543 {offsets = [0, 256], sizes = [2, 128], strides = [1, 1]} : vector<2x512xf32> to vector<2x128xf32>
    %561 = math.tanh %560 : vector<2x128xf32>
    %562 = vector.extract_strided_slice %543 {offsets = [0, 384], sizes = [2, 128], strides = [1, 1]} : vector<2x512xf32> to vector<2x128xf32>
    %cst_211 = arith.constant 5.000000e-01 : f32
    %563 = vector.broadcast %cst_211 : f32 to vector<2x128xf32>
    %564 = arith.mulf %563, %562 : vector<2x128xf32>
    %565 = math.tanh %564 : vector<2x128xf32>
    %cst_212 = arith.constant 5.000000e-01 : f32
    %566 = vector.broadcast %cst_212 : f32 to vector<2x128xf32>
    %567 = arith.mulf %566, %565 : vector<2x128xf32>
    %cst_213 = arith.constant 5.000000e-01 : f32
    %568 = vector.broadcast %cst_213 : f32 to vector<2x128xf32>
    %569 = arith.addf %567, %568 : vector<2x128xf32>
    %570 = arith.mulf %559, %501 : vector<2x128xf32>
    %571 = arith.mulf %551, %561 : vector<2x128xf32>
    %572 = arith.addf %570, %571 : vector<2x128xf32>
    %573 = math.tanh %572 : vector<2x128xf32>
    %574 = arith.mulf %569, %573 : vector<2x128xf32>
    %cst_214 = arith.constant dense<0.000000e+00> : vector<2x1024xf32>
    %575 = tpu.matmul %574, %180, %cst_214 {dimension_numbers = #tpu.dot_dimension_numbers<[1], [0], [0], [1], [0, 0, 1, 1], [], []>} : vector<2x128xf32>, vector<128x1024xf32>, vector<2x1024xf32> -> vector<2x1024xf32>
    %576 = vector.extract_strided_slice %575 {offsets = [0, 512], sizes = [2, 512], strides = [1, 1]} : vector<2x1024xf32> to vector<2x512xf32>
    %cst_215 = arith.constant dense<0.000000e+00> : vector<2x512xf32>
    %577 = tpu.matmul %541, %181, %cst_215 {dimension_numbers = #tpu.dot_dimension_numbers<[1], [0], [0], [1], [0, 0, 1, 1], [], []>} : vector<2x128xf32>, vector<128x512xf32>, vector<2x512xf32> -> vector<2x512xf32>
    %578 = arith.addf %576, %577 : vector<2x512xf32>
    %579 = vector.broadcast %182 : vector<1x512xf32> to vector<2x512xf32>
    %580 = arith.addf %578, %579 : vector<2x512xf32>
    %581 = vector.extract_strided_slice %580 {offsets = [0, 0], sizes = [2, 128], strides = [1, 1]} : vector<2x512xf32> to vector<2x128xf32>
    %cst_216 = arith.constant 5.000000e-01 : f32
    %582 = vector.broadcast %cst_216 : f32 to vector<2x128xf32>
    %583 = arith.mulf %582, %581 : vector<2x128xf32>
    %584 = math.tanh %583 : vector<2x128xf32>
    %cst_217 = arith.constant 5.000000e-01 : f32
    %585 = vector.broadcast %cst_217 : f32 to vector<2x128xf32>
    %586 = arith.mulf %585, %584 : vector<2x128xf32>
    %cst_218 = arith.constant 5.000000e-01 : f32
    %587 = vector.broadcast %cst_218 : f32 to vector<2x128xf32>
    %588 = arith.addf %586, %587 : vector<2x128xf32>
    %589 = vector.extract_strided_slice %580 {offsets = [0, 128], sizes = [2, 128], strides = [1, 1]} : vector<2x512xf32> to vector<2x128xf32>
    %cst_219 = arith.constant 5.000000e-01 : f32
    %590 = vector.broadcast %cst_219 : f32 to vector<2x128xf32>
    %591 = arith.mulf %590, %589 : vector<2x128xf32>
    %592 = math.tanh %591 : vector<2x128xf32>
    %cst_220 = arith.constant 5.000000e-01 : f32
    %593 = vector.broadcast %cst_220 : f32 to vector<2x128xf32>
    %594 = arith.mulf %593, %592 : vector<2x128xf32>
    %cst_221 = arith.constant 5.000000e-01 : f32
    %595 = vector.broadcast %cst_221 : f32 to vector<2x128xf32>
    %596 = arith.addf %594, %595 : vector<2x128xf32>
    %597 = vector.extract_strided_slice %580 {offsets = [0, 256], sizes = [2, 128], strides = [1, 1]} : vector<2x512xf32> to vector<2x128xf32>
    %598 = math.tanh %597 : vector<2x128xf32>
    %599 = vector.extract_strided_slice %580 {offsets = [0, 384], sizes = [2, 128], strides = [1, 1]} : vector<2x512xf32> to vector<2x128xf32>
    %cst_222 = arith.constant 5.000000e-01 : f32
    %600 = vector.broadcast %cst_222 : f32 to vector<2x128xf32>
    %601 = arith.mulf %600, %599 : vector<2x128xf32>
    %602 = math.tanh %601 : vector<2x128xf32>
    %cst_223 = arith.constant 5.000000e-01 : f32
    %603 = vector.broadcast %cst_223 : f32 to vector<2x128xf32>
    %604 = arith.mulf %603, %602 : vector<2x128xf32>
    %cst_224 = arith.constant 5.000000e-01 : f32
    %605 = vector.broadcast %cst_224 : f32 to vector<2x128xf32>
    %606 = arith.addf %604, %605 : vector<2x128xf32>
    %607 = arith.mulf %596, %539 : vector<2x128xf32>
    %608 = arith.mulf %588, %598 : vector<2x128xf32>
    %609 = arith.addf %607, %608 : vector<2x128xf32>
    %610 = math.tanh %609 : vector<2x128xf32>
    %611 = arith.mulf %606, %610 : vector<2x128xf32>
    %612 = vector.extract_strided_slice %611 {offsets = [0, 0], sizes = [2, 90], strides = [1, 1]} : vector<2x128xf32> to vector<2x90xf32>
    %c0_225 = arith.constant 0 : index
    %c0_226 = arith.constant 0 : index
    %613 = vector.load %arg16[%c0_225, %c0_226] : memref<2x90xf32, #tpu.memory_space<vmem>>, vector<2x90xf32>
    tpu.vector_store %arg16[%c0_225, %c0_226], %612 {strides = array<i32>} : memref<2x90xf32, #tpu.memory_space<vmem>>, vector<2x90xf32>,
    return
  }
}

</mosaic_0001>

<llo_original>
// kernel: res_encoder_forward.1
$region0: #{res_encoder_forward.1}
  #allocation0 [shape = 'u32[]', space=smem, size = 0x4, offset = 0x4, fixed_abs, tag = 'smem constant byte address 0x4 - core index']
  #allocation1 [shape = 'u32[144,128]{1,0:T(1,128)}', space=vmem, size = 0x12000, scoped, tag = 'internal scratch']
  %s0 = inlined_call_operand.hbm [shape: f32[2,40], index: 0, kind: input, shape index: {}]
  %s1 = inlined_call_operand.hbm [shape: f32[40,120], index: 1, kind: input, shape index: {}]
  %s2 = inlined_call_operand.hbm [shape: f32[120,120], index: 2, kind: input, shape index: {}]
  %s3 = inlined_call_operand.hbm [shape: f32[120,120], index: 3, kind: input, shape index: {}]
  %s4 = inlined_call_operand.hbm [shape: f32[120,120], index: 4, kind: input, shape index: {}]
  %s5 = inlined_call_operand.hbm [shape: f32[120,120], index: 5, kind: input, shape index: {}]
  %s6 = inlined_call_operand.hbm [shape: f32[120,120], index: 6, kind: input, shape index: {}]
  %s7 = inlined_call_operand.hbm [shape: f32[40,120], index: 7, kind: input, shape index: {}]
  %s8 = inlined_call_operand.hbm [shape: f32[120,120], index: 8, kind: input, shape index: {}]
  %s9 = inlined_call_operand.hbm [shape: f32[6,120], index: 9, kind: input, shape index: {}]
  %s10 = inlined_call_operand.hbm [shape: f32[6,120], index: 10, kind: input, shape index: {}]
  %s11 = inlined_call_operand.hbm [shape: f32[120,3072], index: 11, kind: input, shape index: {}]
  %s12 = inlined_call_operand.hbm [shape: f32[1,3072], index: 12, kind: input, shape index: {}]
  %s13 = inlined_call_operand.hbm [shape: f32[128,1024], index: 13, kind: input, shape index: {}]
  %s14 = inlined_call_operand.hbm [shape: f32[128,512], index: 14, kind: input, shape index: {}]
  %s15 = inlined_call_operand.hbm [shape: f32[1,512], index: 15, kind: input, shape index: {}]
  %s16 = inlined_call_operand.hbm [shape: f32[2,90], index: 16, kind: output, shape index: {}]
  %s17 = sld [smem:[#allocation0]]
  $region138: #{res_encoder_forward.1} parent=0
    _
  %s19 = ssub.s32 1, %s17
  %s20 = scalar_select 0, %s19, %s17
  $region1: #{res_encoder_forward.1} parent=0
    #allocation2 [shape = 'u8[1024]{0}', space=vmem, size = 0x400, scoped, tag = 'input window, operand 0, single buffered']
    #allocation3 [shape = 's32[1]{0}', space=sflag, size = 0x4, scoped, tag = 'scoped memory for res_encoder_forward.1']
    #allocation4 [shape = 's32[1]{0}', space=sflag, size = 0x4, scoped, tag = 'scoped memory for res_encoder_forward.1']
    #allocation5 [shape = 'u8[20480]{0}', space=vmem, size = 0x5000, scoped, tag = 'input window, operand 1, single buffered']
    #allocation6 [shape = 's32[1]{0}', space=sflag, size = 0x4, scoped, tag = 'scoped memory for res_encoder_forward.1']
    #allocation7 [shape = 'u8[61440]{0}', space=vmem, size = 0xf000, scoped, tag = 'input window, operand 2, single buffered']
    #allocation8 [shape = 'u8[61440]{0}', space=vmem, size = 0xf000, scoped, tag = 'input window, operand 3, single buffered']
    #allocation9 [shape = 's32[1]{0}', space=sflag, size = 0x4, scoped, tag = 'scoped memory for res_encoder_forward.1']
    #allocation10 [shape = 'u8[61440]{0}', space=vmem, size = 0xf000, scoped, tag = 'input window, operand 4, single buffered']
    #allocation11 [shape = 'u8[61440]{0}', space=vmem, size = 0xf000, scoped, tag = 'input window, operand 5, single buffered']
    #allocation12 [shape = 's32[1]{0}', space=sflag, size = 0x4, scoped, tag = 'scoped memory for res_encoder_forward.1']
    #allocation13 [shape = 'u8[61440]{0}', space=vmem, size = 0xf000, scoped, tag = 'input window, operand 6, single buffered']
    #allocation14 [shape = 'u8[20480]{0}', space=vmem, size = 0x5000, scoped, tag = 'input window, operand 7, single buffered']
    #allocation15 [shape = 's32[1]{0}', space=sflag, size = 0x4, scoped, tag = 'scoped memory for res_encoder_forward.1']
    #allocation16 [shape = 'u8[61440]{0}', space=vmem, size = 0xf000, scoped, tag = 'input window, operand 8, single buffered']
    #allocation17 [shape = 'u8[4096]{0}', space=vmem, size = 0x1000, scoped, tag = 'input window, operand 9, single buffered']
    #allocation18 [shape = 's32[1]{0}', space=sflag, size = 0x4, scoped, tag = 'scoped memory for res_encoder_forward.1']
    #allocation19 [shape = 'u8[4096]{0}', space=vmem, size = 0x1000, scoped, tag = 'input window, operand 10, single buffered']
    #allocation20 [shape = 'u8[1474560]{0}', space=vmem, size = 0x168000, scoped, tag = 'input window, operand 11, single buffered']
    #allocation21 [shape = 's32[1]{0}', space=sflag, size = 0x4, scoped, tag = 'scoped memory for res_encoder_forward.1']
    #allocation22 [shape = 'u8[12288]{0}', space=vmem, size = 0x3000, scoped, tag = 'input window, operand 12, single buffered']
    #allocation23 [shape = 'u8[524288]{0}', space=vmem, size = 0x80000, scoped, tag = 'input window, operand 13, single buffered']
    #allocation24 [shape = 's32[1]{0}', space=sflag, size = 0x4, scoped, tag = 'scoped memory for res_encoder_forward.1']
    #allocation25 [shape = 'u8[262144]{0}', space=vmem, size = 0x40000, scoped, tag = 'input window, operand 14, single buffered']
    #allocation26 [shape = 'u8[2048]{0}', space=vmem, size = 0x800, scoped, tag = 'input window, operand 15, single buffered']
    #allocation27 [shape = 's32[1]{0}', space=sflag, size = 0x4, scoped, tag = 'scoped memory for res_encoder_forward.1']
    #allocation28 [shape = 'u8[1024]{0}', space=vmem, size = 0x400, scoped, tag = 'output window, operand 0, single buffered']
    %21 = vsyncpa [#allocation3], 0
    %22 = vsyncpa [#allocation6], 0
    %23 = vsyncpa [#allocation9], 0
    %24 = vsyncpa [#allocation12], 0
    %25 = vsyncpa [#allocation15], 0
    %26 = vsyncpa [#allocation18], 0
    %27 = vsyncpa [#allocation21], 0
    %28 = vsyncpa [#allocation24], 0
    %29 = vsyncpa [#allocation27], 0
    %30 = vsyncpa [#allocation4], 0
    // Predicated region
    $region2: #{res_encoder_forward.1} parent=1 // pred_check
      _
    $region3: #{res_encoder_forward.1} parent=1 // pred_check_branch
      %32 = sbr.rel (0) target = $region5
    $region4: #{res_encoder_forward.1} parent=1 // pred_region
      %s34 = ssub.s32 32, 32
      %35 = vsyncadd [#allocation3], %s34
      %s37 = sshll.u32 [#allocation2], 4
      %s38 = int_to_ptr.vmem [resolvable:$true] %s37
      %40 = dma.hbm_to_vmem [thread:$0]  %s0, 32, %s38, [#allocation3]
    $region5: #{res_encoder_forward.1} parent=1 // pred_fallthru
      _
    // Predicated region
    $region6: #{res_encoder_forward.1} parent=1 // pred_check
      _
    $region7: #{res_encoder_forward.1} parent=1 // pred_check_branch
      %42 = sbr.rel (0) target = $region9
    $region8: #{res_encoder_forward.1} parent=1 // pred_region
      %s44 = ssub.s32 640, 640
      %45 = vsyncadd [#allocation6], %s44
      %s46 = sshll.u32 [#allocation5], 4
      %s47 = int_to_ptr.vmem [resolvable:$true] %s46
      %52 = dma.hbm_to_vmem [thread:$0]  %s1, 640, %s47, [#allocation6], 128, 128, 8
    $region9: #{res_encoder_forward.1} parent=1 // pred_fallthru
      _
    // Predicated region
    $region10: #{res_encoder_forward.1} parent=1 // pred_check
      _
    $region11: #{res_encoder_forward.1} parent=1 // pred_check_branch
      %54 = sbr.rel (0) target = $region13
    $region12: #{res_encoder_forward.1} parent=1 // pred_region
      %s56 = ssub.s32 1920, 1920
      %57 = vsyncadd [#allocation6], %s56
      %s58 = sshll.u32 [#allocation7], 4
      %s59 = int_to_ptr.vmem [resolvable:$true] %s58
      %64 = dma.hbm_to_vmem [thread:$0]  %s2, 1920, %s59, [#allocation6], 128, 128, 8
    $region13: #{res_encoder_forward.1} parent=1 // pred_fallthru
      _
    // Predicated region
    $region14: #{res_encoder_forward.1} parent=1 // pred_check
      _
    $region15: #{res_encoder_forward.1} parent=1 // pred_check_branch
      %66 = sbr.rel (0) target = $region17
    $region16: #{res_encoder_forward.1} parent=1 // pred_region
      %s68 = ssub.s32 1920, 1920
      %69 = vsyncadd [#allocation9], %s68
      %s70 = sshll.u32 [#allocation8], 4
      %s71 = int_to_ptr.vmem [resolvable:$true] %s70
      %76 = dma.hbm_to_vmem [thread:$0]  %s3, 1920, %s71, [#allocation9], 128, 128, 8
    $region17: #{res_encoder_forward.1} parent=1 // pred_fallthru
      _
    // Predicated region
    $region18: #{res_encoder_forward.1} parent=1 // pred_check
      _
    $region19: #{res_encoder_forward.1} parent=1 // pred_check_branch
      %78 = sbr.rel (0) target = $region21
    $region20: #{res_encoder_forward.1} parent=1 // pred_region
      %s80 = ssub.s32 1920, 1920
      %81 = vsyncadd [#allocation9], %s80
      %s82 = sshll.u32 [#allocation10], 4
      %s83 = int_to_ptr.vmem [resolvable:$true] %s82
      %88 = dma.hbm_to_vmem [thread:$0]  %s4, 1920, %s83, [#allocation9], 128, 128, 8
    $region21: #{res_encoder_forward.1} parent=1 // pred_fallthru
      _
    // Predicated region
    $region22: #{res_encoder_forward.1} parent=1 // pred_check
      _
    $region23: #{res_encoder_forward.1} parent=1 // pred_check_branch
      %90 = sbr.rel (0) target = $region25
    $region24: #{res_encoder_forward.1} parent=1 // pred_region
      %s92 = ssub.s32 1920, 1920
      %93 = vsyncadd [#allocation12], %s92
      %s94 = sshll.u32 [#allocation11], 4
      %s95 = int_to_ptr.vmem [resolvable:$true] %s94
      %100 = dma.hbm_to_vmem [thread:$0]  %s5, 1920, %s95, [#allocation12], 128, 128, 8
    $region25: #{res_encoder_forward.1} parent=1 // pred_fallthru
      _
    // Predicated region
    $region26: #{res_encoder_forward.1} parent=1 // pred_check
      _
    $region27: #{res_encoder_forward.1} parent=1 // pred_check_branch
      %102 = sbr.rel (0) target = $region29
    $region28: #{res_encoder_forward.1} parent=1 // pred_region
      %s104 = ssub.s32 1920, 1920
      %105 = vsyncadd [#allocation12], %s104
      %s106 = sshll.u32 [#allocation13], 4
      %s107 = int_to_ptr.vmem [resolvable:$true] %s106
      %112 = dma.hbm_to_vmem [thread:$0]  %s6, 1920, %s107, [#allocation12], 128, 128, 8
    $region29: #{res_encoder_forward.1} parent=1 // pred_fallthru
      _
    // Predicated region
    $region30: #{res_encoder_forward.1} parent=1 // pred_check
      _
    $region31: #{res_encoder_forward.1} parent=1 // pred_check_branch
      %114 = sbr.rel (0) target = $region33
    $region32: #{res_encoder_forward.1} parent=1 // pred_region
      %s116 = ssub.s32 640, 640
      %117 = vsyncadd [#allocation15], %s116
      %s118 = sshll.u32 [#allocation14], 4
      %s119 = int_to_ptr.vmem [resolvable:$true] %s118
      %124 = dma.hbm_to_vmem [thread:$0]  %s7, 640, %s119, [#allocation15], 128, 128, 8
    $region33: #{res_encoder_forward.1} parent=1 // pred_fallthru
      _
    // Predicated region
    $region34: #{res_encoder_forward.1} parent=1 // pred_check
      _
    $region35: #{res_encoder_forward.1} parent=1 // pred_check_branch
      %126 = sbr.rel (0) target = $region37
    $region36: #{res_encoder_forward.1} parent=1 // pred_region
      %s128 = ssub.s32 1920, 1920
      %129 = vsyncadd [#allocation15], %s128
      %s130 = sshll.u32 [#allocation16], 4
      %s131 = int_to_ptr.vmem [resolvable:$true] %s130
      %136 = dma.hbm_to_vmem [thread:$0]  %s8, 1920, %s131, [#allocation15], 128, 128, 8
    $region37: #{res_encoder_forward.1} parent=1 // pred_fallthru
      _
    // Predicated region
    $region38: #{res_encoder_forward.1} parent=1 // pred_check
      _
    $region39: #{res_encoder_forward.1} parent=1 // pred_check_branch
      %138 = sbr.rel (0) target = $region41
    $region40: #{res_encoder_forward.1} parent=1 // pred_region
      %s140 = ssub.s32 128, 128
      %141 = vsyncadd [#allocation18], %s140
      %s143 = sshll.u32 [#allocation17], 4
      %s144 = int_to_ptr.vmem [resolvable:$true] %s143
      %146 = dma.hbm_to_vmem [thread:$0]  %s9, 128, %s144, [#allocation18]
    $region41: #{res_encoder_forward.1} parent=1 // pred_fallthru
      _
    // Predicated region
    $region42: #{res_encoder_forward.1} parent=1 // pred_check
      _
    $region43: #{res_encoder_forward.1} parent=1 // pred_check_branch
      %148 = sbr.rel (0) target = $region45
    $region44: #{res_encoder_forward.1} parent=1 // pred_region
      %s150 = ssub.s32 128, 128
      %151 = vsyncadd [#allocation18], %s150
      %s153 = sshll.u32 [#allocation19], 4
      %s154 = int_to_ptr.vmem [resolvable:$true] %s153
      %156 = dma.hbm_to_vmem [thread:$0]  %s10, 128, %s154, [#allocation18]
    $region45: #{res_encoder_forward.1} parent=1 // pred_fallthru
      _
    // Predicated region
    $region46: #{res_encoder_forward.1} parent=1 // pred_check
      _
    $region47: #{res_encoder_forward.1} parent=1 // pred_check_branch
      %158 = sbr.rel (0) target = $region49
    $region48: #{res_encoder_forward.1} parent=1 // pred_region
      %s160 = ssub.s32 46080, 46080
      %161 = vsyncadd [#allocation21], %s160
      %s162 = sshll.u32 [#allocation20], 4
      %s163 = int_to_ptr.vmem [resolvable:$true] %s162
      %168 = dma.hbm_to_vmem [thread:$0]  %s11, 46080, %s163, [#allocation21], 3072, 3072, 192
    $region49: #{res_encoder_forward.1} parent=1 // pred_fallthru
      _
    // Predicated region
    $region50: #{res_encoder_forward.1} parent=1 // pred_check
      _
    $region51: #{res_encoder_forward.1} parent=1 // pred_check_branch
      %170 = sbr.rel (0) target = $region53
    $region52: #{res_encoder_forward.1} parent=1 // pred_region
      %s172 = ssub.s32 384, 384
      %173 = vsyncadd [#allocation21], %s172
      %s175 = sshll.u32 [#allocation22], 4
      %s176 = int_to_ptr.vmem [resolvable:$true] %s175
      %178 = dma.hbm_to_vmem [thread:$0]  %s12, 384, %s176, [#allocation21]
    $region53: #{res_encoder_forward.1} parent=1 // pred_fallthru
      _
    // Predicated region
    $region54: #{res_encoder_forward.1} parent=1 // pred_check
      _
    $region55: #{res_encoder_forward.1} parent=1 // pred_check_branch
      %180 = sbr.rel (0) target = $region57
    $region56: #{res_encoder_forward.1} parent=1 // pred_region
      %s182 = ssub.s32 16384, 16384
      %183 = vsyncadd [#allocation24], %s182
      %s184 = sshll.u32 [#allocation23], 4
      %s185 = int_to_ptr.vmem [resolvable:$true] %s184
      %190 = dma.hbm_to_vmem [thread:$0]  %s13, 16384, %s185, [#allocation24], 1024, 1024, 64
    $region57: #{res_encoder_forward.1} parent=1 // pred_fallthru
      _
    // Predicated region
    $region58: #{res_encoder_forward.1} parent=1 // pred_check
      _
    $region59: #{res_encoder_forward.1} parent=1 // pred_check_branch
      %192 = sbr.rel (0) target = $region61
    $region60: #{res_encoder_forward.1} parent=1 // pred_region
      %s194 = ssub.s32 8192, 8192
      %195 = vsyncadd [#allocation24], %s194
      %s196 = sshll.u32 [#allocation25], 4
      %s197 = int_to_ptr.vmem [resolvable:$true] %s196
      %202 = dma.hbm_to_vmem [thread:$0]  %s14, 8192, %s197, [#allocation24], 512, 512, 32
    $region61: #{res_encoder_forward.1} parent=1 // pred_fallthru
      _
    // Predicated region
    $region62: #{res_encoder_forward.1} parent=1 // pred_check
      _
    $region63: #{res_encoder_forward.1} parent=1 // pred_check_branch
      %204 = sbr.rel (0) target = $region65
    $region64: #{res_encoder_forward.1} parent=1 // pred_region
      %s206 = ssub.s32 64, 64
      %207 = vsyncadd [#allocation27], %s206
      %s209 = sshll.u32 [#allocation26], 4
      %s210 = int_to_ptr.vmem [resolvable:$true] %s209
      %212 = dma.hbm_to_vmem [thread:$0]  %s15, 64, %s210, [#allocation27]
    $region65: #{res_encoder_forward.1} parent=1 // pred_fallthru
      _
    // Predicated region
    $region66: #{res_encoder_forward.1} parent=1 // pred_check
      _
    $region67: #{res_encoder_forward.1} parent=1 // pred_check_branch
      %214 = sbr.rel (0) target = $region69
    $region68: #{res_encoder_forward.1} parent=1 // pred_region
      %215 = dma.done [#allocation3], 32
    $region69: #{res_encoder_forward.1} parent=1 // pred_fallthru
      _
    // Predicated region
    $region70: #{res_encoder_forward.1} parent=1 // pred_check
      _
    $region71: #{res_encoder_forward.1} parent=1 // pred_check_branch
      %217 = sbr.rel (0) target = $region73
    $region72: #{res_encoder_forward.1} parent=1 // pred_region
      %218 = dma.done [#allocation6], 640
    $region73: #{res_encoder_forward.1} parent=1 // pred_fallthru
      _
    // Predicated region
    $region74: #{res_encoder_forward.1} parent=1 // pred_check
      _
    $region75: #{res_encoder_forward.1} parent=1 // pred_check_branch
      %220 = sbr.rel (0) target = $region77
    $region76: #{res_encoder_forward.1} parent=1 // pred_region
      %221 = dma.done [#allocation6], 1920
    $region77: #{res_encoder_forward.1} parent=1 // pred_fallthru
      _
    // Predicated region
    $region78: #{res_encoder_forward.1} parent=1 // pred_check
      _
    $region79: #{res_encoder_forward.1} parent=1 // pred_check_branch
      %223 = sbr.rel (0) target = $region81
    $region80: #{res_encoder_forward.1} parent=1 // pred_region
      %224 = dma.done [#allocation9], 1920
    $region81: #{res_encoder_forward.1} parent=1 // pred_fallthru
      _
    // Predicated region
    $region82: #{res_encoder_forward.1} parent=1 // pred_check
      _
    $region83: #{res_encoder_forward.1} parent=1 // pred_check_branch
      %226 = sbr.rel (0) target = $region85
    $region84: #{res_encoder_forward.1} parent=1 // pred_region
      %227 = dma.done [#allocation9], 1920
    $region85: #{res_encoder_forward.1} parent=1 // pred_fallthru
      _
    // Predicated region
    $region86: #{res_encoder_forward.1} parent=1 // pred_check
      _
    $region87: #{res_encoder_forward.1} parent=1 // pred_check_branch
      %229 = sbr.rel (0) target = $region89
    $region88: #{res_encoder_forward.1} parent=1 // pred_region
      %230 = dma.done [#allocation12], 1920
    $region89: #{res_encoder_forward.1} parent=1 // pred_fallthru
      _
    // Predicated region
    $region90: #{res_encoder_forward.1} parent=1 // pred_check
      _
    $region91: #{res_encoder_forward.1} parent=1 // pred_check_branch
      %232 = sbr.rel (0) target = $region93
    $region92: #{res_encoder_forward.1} parent=1 // pred_region
      %233 = dma.done [#allocation12], 1920
    $region93: #{res_encoder_forward.1} parent=1 // pred_fallthru
      _
    // Predicated region
    $region94: #{res_encoder_forward.1} parent=1 // pred_check
      _
    $region95: #{res_encoder_forward.1} parent=1 // pred_check_branch
      %235 = sbr.rel (0) target = $region97
    $region96: #{res_encoder_forward.1} parent=1 // pred_region
      %236 = dma.done [#allocation15], 640
    $region97: #{res_encoder_forward.1} parent=1 // pred_fallthru
      _
    // Predicated region
    $region98: #{res_encoder_forward.1} parent=1 // pred_check
      _
    $region99: #{res_encoder_forward.1} parent=1 // pred_check_branch
      %238 = sbr.rel (0) target = $region101
    $region100: #{res_encoder_forward.1} parent=1 // pred_region
      %239 = dma.done [#allocation15], 1920
    $region101: #{res_encoder_forward.1} parent=1 // pred_fallthru
      _
    // Predicated region
    $region102: #{res_encoder_forward.1} parent=1 // pred_check
      _
    $region103: #{res_encoder_forward.1} parent=1 // pred_check_branch
      %241 = sbr.rel (0) target = $region105
    $region104: #{res_encoder_forward.1} parent=1 // pred_region
      %242 = dma.done [#allocation18], 128
    $region105: #{res_encoder_forward.1} parent=1 // pred_fallthru
      _
    // Predicated region
    $region106: #{res_encoder_forward.1} parent=1 // pred_check
      _
    $region107: #{res_encoder_forward.1} parent=1 // pred_check_branch
      %244 = sbr.rel (0) target = $region109
    $region108: #{res_encoder_forward.1} parent=1 // pred_region
      %245 = dma.done [#allocation18], 128
    $region109: #{res_encoder_forward.1} parent=1 // pred_fallthru
      _
    // Predicated region
    $region110: #{res_encoder_forward.1} parent=1 // pred_check
      _
    $region111: #{res_encoder_forward.1} parent=1 // pred_check_branch
      %247 = sbr.rel (0) target = $region113
    $region112: #{res_encoder_forward.1} parent=1 // pred_region
      %248 = dma.done [#allocation21], 46080
    $region113: #{res_encoder_forward.1} parent=1 // pred_fallthru
      _
    // Predicated region
    $region114: #{res_encoder_forward.1} parent=1 // pred_check
      _
    $region115: #{res_encoder_forward.1} parent=1 // pred_check_branch
      %250 = sbr.rel (0) target = $region117
    $region116: #{res_encoder_forward.1} parent=1 // pred_region
      %251 = dma.done [#allocation21], 384
    $region117: #{res_encoder_forward.1} parent=1 // pred_fallthru
      _
    // Predicated region
    $region118: #{res_encoder_forward.1} parent=1 // pred_check
      _
    $region119: #{res_encoder_forward.1} parent=1 // pred_check_branch
      %253 = sbr.rel (0) target = $region121
    $region120: #{res_encoder_forward.1} parent=1 // pred_region
      %254 = dma.done [#allocation24], 16384
    $region121: #{res_encoder_forward.1} parent=1 // pred_fallthru
      _
    // Predicated region
    $region122: #{res_encoder_forward.1} parent=1 // pred_check
      _
    $region123: #{res_encoder_forward.1} parent=1 // pred_check_branch
      %256 = sbr.rel (0) target = $region125
    $region124: #{res_encoder_forward.1} parent=1 // pred_region
      %257 = dma.done [#allocation24], 8192
    $region125: #{res_encoder_forward.1} parent=1 // pred_fallthru
      _
    // Predicated region
    $region126: #{res_encoder_forward.1} parent=1 // pred_check
      _
    $region127: #{res_encoder_forward.1} parent=1 // pred_check_branch
      %259 = sbr.rel (0) target = $region129
    $region128: #{res_encoder_forward.1} parent=1 // pred_region
      %260 = dma.done [#allocation27], 64
    $region129: #{res_encoder_forward.1} parent=1 // pred_fallthru
      _
    %v261 = vld [vmem:[#allocation16] sm:$0xff]
    %v262 = vld [vmem:[#allocation16 + $0x8] sm:$0xff]
    %v263 = vld [vmem:[#allocation16 + $0x10] sm:$0xff]
    %v264 = vld [vmem:[#allocation16 + $0x18] sm:$0xff]
    %v265 = vld [vmem:[#allocation16 + $0x20] sm:$0xff]
    %v266 = vld [vmem:[#allocation16 + $0x28] sm:$0xff]
    %v267 = vld [vmem:[#allocation16 + $0x30] sm:$0xff]
    %v268 = vld [vmem:[#allocation16 + $0x38] sm:$0xff]
    %v269 = vld [vmem:[#allocation16 + $0x40] sm:$0xff]
    %v270 = vld [vmem:[#allocation16 + $0x48] sm:$0xff]
    %v271 = vld [vmem:[#allocation16 + $0x50] sm:$0xff]
    %v272 = vld [vmem:[#allocation16 + $0x58] sm:$0xff]
    %v273 = vld [vmem:[#allocation16 + $0x60] sm:$0xff]
    %v274 = vld [vmem:[#allocation16 + $0x68] sm:$0xff]
    %v275 = vld [vmem:[#allocation16 + $0x70] sm:$0xff]
    %v276 = vld [vmem:[#allocation2] sm:$0x3]
    %v277 = vld [vmem:[#allocation14] sm:$0xff]
    %v278 = vld [vmem:[#allocation14 + $0x8] sm:$0xff]
    %v279 = vld [vmem:[#allocation14 + $0x10] sm:$0xff]
    %v280 = vld [vmem:[#allocation14 + $0x18] sm:$0xff]
    %v281 = vld [vmem:[#allocation14 + $0x20] sm:$0xff]
    %vm282 = vcmask 326656
    %v284 = vsel %vm282, %v276, 0
    %286 = vmatprep.subr.mxu0 0.0
    %287 = vmatpush1.msra.mxu0 %v277
    %288 = vmatprep.subr.mxu0 0.0
    %289 = vmatpush1.msra.mxu0 %v278
    %290 = vmatprep.subr.mxu0 0.0
    %291 = vmatpush1.msra.mxu0 %v279
    %292 = vmatprep.subr.mxu0 0.0
    %293 = vmatpush1.msra.mxu0 %v280
    %294 = vmatprep.subr.mxu0 0.0
    %295 = vmatpush1.msra.mxu0 %v281
    %296 = vmatprep.subr.mxu0 0.0
    %297 = vmatpush1.msra.mxu0 0.0
    %298 = vmatprep.subr.mxu0 0.0
    %299 = vmatpush1.msra.mxu0 0.0
    %300 = vmatprep.subr.mxu0 0.0
    %301 = vmatpush1.msra.mxu0 0.0
    %302 = vmatprep.subr.mxu0 0.0
    %303 = vmatpush1.msra.mxu0 0.0
    %304 = vmatprep.subr.mxu0 0.0
    %305 = vmatpush1.msra.mxu0 0.0
    %306 = vmatprep.subr.mxu0 0.0
    %307 = vmatpush1.msra.mxu0 0.0
    %308 = vmatprep.subr.mxu0 0.0
    %309 = vmatpush1.msra.mxu0 0.0
    %310 = vmatprep.subr.mxu0 0.0
    %311 = vmatpush1.msra.mxu0 0.0
    %312 = vmatprep.subr.mxu0 0.0
    %313 = vmatpush1.msra.mxu0 0.0
    %314 = vmatprep.subr.mxu0 0.0
    %315 = vmatpush1.msra.mxu0 0.0
    %316 = vmatprep.subr.mxu0 0.0
    %317 = vmatpush1.msra.mxu0 0.0
    %318 = vmatprep.subr.mxu0 0.0
    %319 = vmatpush1.msra.mxu0 0.0
    %320 = vmatprep.subr.mxu0 0.0
    %321 = vmatpush1.msra.mxu0 0.0
    %322 = vmatprep.subr.mxu0 0.0
    %323 = vmatpush1.msra.mxu0 0.0
    %324 = vmatprep.subr.mxu0 0.0
    %325 = vmatpush1.msra.mxu0 0.0
    %326 = vmatprep.subr.mxu0 0.0
    %327 = vmatpush1.msra.mxu0 0.0
    %328 = vmatprep.subr.mxu0 0.0
    %329 = vmatpush1.msra.mxu0 0.0
    %330 = vmatprep.subr.mxu0 0.0
    %331 = vmatpush1.msra.mxu0 0.0
    %332 = vmatprep.subr.mxu0 0.0
    %333 = vmatpush1.msra.mxu0 0.0
    %334 = vmatprep.subr.mxu0 0.0
    %335 = vmatpush1.msra.mxu0 0.0
    %336 = vmatprep.subr.mxu0 0.0
    %337 = vmatpush1.msra.mxu0 0.0
    %338 = vmatprep.subr.mxu0 0.0
    %339 = vmatpush1.msra.mxu0 0.0
    %340 = vmatprep.subr.mxu0 0.0
    %341 = vmatpush1.msra.mxu0 0.0
    %342 = vmatprep.subr.mxu0 0.0
    %343 = vmatpush1.msra.mxu0 0.0
    %344 = vmatprep.subr.mxu0 0.0
    %345 = vmatpush1.msra.mxu0 0.0
    %346 = vmatprep.subr.mxu0 0.0
    %347 = vmatpush1.msra.mxu0 0.0
    %348 = vmatprep.subr.mxu0 0.0
    %349 = vmatpush1.msra.mxu0 0.0
    %350 = vmatprep.mubr.f32.mxu0 0.0
    %351 = vmatmul.mubr.f32.gmra.mrb[0].mxu0 %v284
    %v352 = vpop.f32.mrb[0].mxu0
    %v353 = vadd.f32 0.0, %v352
    %v354 = vpop.f32.mrb[0].mxu0
    %355 = vdwg.mxu0
    %v356 = vld [vmem:[#allocation5] sm:$0xff]
    %v357 = vld [vmem:[#allocation5 + $0x8] sm:$0xff]
    %v358 = vld [vmem:[#allocation5 + $0x10] sm:$0xff]
    %v359 = vld [vmem:[#allocation5 + $0x18] sm:$0xff]
    %v360 = vld [vmem:[#allocation5 + $0x20] sm:$0xff]
    %361 = vmatprep.subr.mxu0 0.0
    %362 = vmatpush1.msra.mxu0 %v356
    %363 = vmatprep.subr.mxu0 0.0
    %364 = vmatpush1.msra.mxu0 %v357
    %365 = vmatprep.subr.mxu0 0.0
    %366 = vmatpush1.msra.mxu0 %v358
    %367 = vmatprep.subr.mxu0 0.0
    %368 = vmatpush1.msra.mxu0 %v359
    %369 = vmatprep.subr.mxu0 0.0
    %370 = vmatpush1.msra.mxu0 %v360
    %371 = vmatprep.subr.mxu0 0.0
    %372 = vmatpush1.msra.mxu0 0.0
    %373 = vmatprep.subr.mxu0 0.0
    %374 = vmatpush1.msra.mxu0 0.0
    %375 = vmatprep.subr.mxu0 0.0
    %376 = vmatpush1.msra.mxu0 0.0
    %377 = vmatprep.subr.mxu0 0.0
    %378 = vmatpush1.msra.mxu0 0.0
    %379 = vmatprep.subr.mxu0 0.0
    %380 = vmatpush1.msra.mxu0 0.0
    %381 = vmatprep.subr.mxu0 0.0
    %382 = vmatpush1.msra.mxu0 0.0
    %383 = vmatprep.subr.mxu0 0.0
    %384 = vmatpush1.msra.mxu0 0.0
    %385 = vmatprep.subr.mxu0 0.0
    %386 = vmatpush1.msra.mxu0 0.0
    %387 = vmatprep.subr.mxu0 0.0
    %388 = vmatpush1.msra.mxu0 0.0
    %389 = vmatprep.subr.mxu0 0.0
    %390 = vmatpush1.msra.mxu0 0.0
    %391 = vmatprep.subr.mxu0 0.0
    %392 = vmatpush1.msra.mxu0 0.0
    %393 = vmatprep.subr.mxu0 0.0
    %394 = vmatpush1.msra.mxu0 0.0
    %395 = vmatprep.subr.mxu0 0.0
    %396 = vmatpush1.msra.mxu0 0.0
    %397 = vmatprep.subr.mxu0 0.0
    %398 = vmatpush1.msra.mxu0 0.0
    %399 = vmatprep.subr.mxu0 0.0
    %400 = vmatpush1.msra.mxu0 0.0
    %401 = vmatprep.subr.mxu0 0.0
    %402 = vmatpush1.msra.mxu0 0.0
    %403 = vmatprep.subr.mxu0 0.0
    %404 = vmatpush1.msra.mxu0 0.0
    %405 = vmatprep.subr.mxu0 0.0
    %406 = vmatpush1.msra.mxu0 0.0
    %407 = vmatprep.subr.mxu0 0.0
    %408 = vmatpush1.msra.mxu0 0.0
    %409 = vmatprep.subr.mxu0 0.0
    %410 = vmatpush1.msra.mxu0 0.0
    %411 = vmatprep.subr.mxu0 0.0
    %412 = vmatpush1.msra.mxu0 0.0
    %413 = vmatprep.subr.mxu0 0.0
    %414 = vmatpush1.msra.mxu0 0.0
    %415 = vmatprep.subr.mxu0 0.0
    %416 = vmatpush1.msra.mxu0 0.0
    %417 = vmatprep.subr.mxu0 0.0
    %418 = vmatpush1.msra.mxu0 0.0
    %419 = vmatprep.subr.mxu0 0.0
    %420 = vmatpush1.msra.mxu0 0.0
    %421 = vmatprep.subr.mxu0 0.0
    %422 = vmatpush1.msra.mxu0 0.0
    %423 = vmatprep.subr.mxu0 0.0
    %424 = vmatpush1.msra.mxu0 0.0
    %425 = vmatprep.mubr.f32.mxu0 0.0
    %426 = vmatmul.mubr.f32.gmra.mrb[0].mxu0 %v284
    %v427 = vpop.f32.mrb[0].mxu0
    %v428 = vadd.f32 0.0, %v427
    %v429 = vpop.f32.mrb[0].mxu0
    %430 = vdwg.mxu0
    %v431 = vld [vmem:[#allocation17] sm:$0x1]
    %v432 = vld [vmem:[#allocation19] sm:$0x1]
    %vm433 = vcmask 982016
    %v435 = vsel %vm433, %v428, 0
    %437 = vmatprep.subr.mxu0 0.0
    %438 = vmatpush1.msra.mxu0 %v261
    %439 = vmatprep.subr.mxu0 0.0
    %440 = vmatpush1.msra.mxu0 %v262
    %441 = vmatprep.subr.mxu0 0.0
    %442 = vmatpush1.msra.mxu0 %v263
    %443 = vmatprep.subr.mxu0 0.0
    %444 = vmatpush1.msra.mxu0 %v264
    %445 = vmatprep.subr.mxu0 0.0
    %446 = vmatpush1.msra.mxu0 %v265
    %447 = vmatprep.subr.mxu0 0.0
    %448 = vmatpush1.msra.mxu0 %v266
    %449 = vmatprep.subr.mxu0 0.0
    %450 = vmatpush1.msra.mxu0 %v267
    %451 = vmatprep.subr.mxu0 0.0
    %452 = vmatpush1.msra.mxu0 %v268
    %453 = vmatprep.subr.mxu0 0.0
    %454 = vmatpush1.msra.mxu0 %v269
    %455 = vmatprep.subr.mxu0 0.0
    %456 = vmatpush1.msra.mxu0 %v270
    %457 = vmatprep.subr.mxu0 0.0
    %458 = vmatpush1.msra.mxu0 %v271
    %459 = vmatprep.subr.mxu0 0.0
    %460 = vmatpush1.msra.mxu0 %v272
    %461 = vmatprep.subr.mxu0 0.0
    %462 = vmatpush1.msra.mxu0 %v273
    %463 = vmatprep.subr.mxu0 0.0
    %464 = vmatpush1.msra.mxu0 %v274
    %465 = vmatprep.subr.mxu0 0.0
    %466 = vmatpush1.msra.mxu0 %v275
    %467 = vmatprep.subr.mxu0 0.0
    %468 = vmatpush1.msra.mxu0 0.0
    %469 = vmatprep.subr.mxu0 0.0
    %470 = vmatpush1.msra.mxu0 0.0
    %471 = vmatprep.subr.mxu0 0.0
    %472 = vmatpush1.msra.mxu0 0.0
    %473 = vmatprep.subr.mxu0 0.0
    %474 = vmatpush1.msra.mxu0 0.0
    %475 = vmatprep.subr.mxu0 0.0
    %476 = vmatpush1.msra.mxu0 0.0
    %477 = vmatprep.subr.mxu0 0.0
    %478 = vmatpush1.msra.mxu0 0.0
    %479 = vmatprep.subr.mxu0 0.0
    %480 = vmatpush1.msra.mxu0 0.0
    %481 = vmatprep.subr.mxu0 0.0
    %482 = vmatpush1.msra.mxu0 0.0
    %483 = vmatprep.subr.mxu0 0.0
    %484 = vmatpush1.msra.mxu0 0.0
    %485 = vmatprep.subr.mxu0 0.0
    %486 = vmatpush1.msra.mxu0 0.0
    %487 = vmatprep.subr.mxu0 0.0
    %488 = vmatpush1.msra.mxu0 0.0
    %489 = vmatprep.subr.mxu0 0.0
    %490 = vmatpush1.msra.mxu0 0.0
    %491 = vmatprep.subr.mxu0 0.0
    %492 = vmatpush1.msra.mxu0 0.0
    %493 = vmatprep.subr.mxu0 0.0
    %494 = vmatpush1.msra.mxu0 0.0
    %495 = vmatprep.subr.mxu0 0.0
    %496 = vmatpush1.msra.mxu0 0.0
    %497 = vmatprep.subr.mxu0 0.0
    %498 = vmatpush1.msra.mxu0 0.0
    %499 = vmatprep.subr.mxu0 0.0
    %500 = vmatpush1.msra.mxu0 0.0
    %501 = vmatprep.mubr.f32.mxu0 0.0
    %502 = vmatmul.mubr.f32.gmra.mrb[0].mxu0 %v435
    %v503 = vpop.f32.mrb[0].mxu0
    %v504 = vadd.f32 0.0, %v503
    %v505 = vpop.f32.mrb[0].mxu0
    %506 = vdwg.mxu0
    %vm507 = vcmask 975872
    %v508 = vsel %vm507, %v504, 0.0
    %v509 = vrot.slane %v508, 4
    %v510 = vadd.f32 %v508, %v509
    %v511 = vrot.slane %v510, 2
    %v512 = vadd.f32 %v510, %v511
    %v513 = vrot.slane %v512, 1
    %v514 = vadd.f32 %v512, %v513
    %v515 = vmul.f32 %v514, 0.0125
    %v516 = vsub.f32 %v428, %v515
    %v517 = vmul.f32 %v516, %v516
    %v519 = vsel %vm433, %v517, 0
    %521 = vmatprep.subr.mxu0 0.0
    %522 = vmatpush1.msra.mxu0 %v261
    %523 = vmatprep.subr.mxu0 0.0
    %524 = vmatpush1.msra.mxu0 %v262
    %525 = vmatprep.subr.mxu0 0.0
    %526 = vmatpush1.msra.mxu0 %v263
    %527 = vmatprep.subr.mxu0 0.0
    %528 = vmatpush1.msra.mxu0 %v264
    %529 = vmatprep.subr.mxu0 0.0
    %530 = vmatpush1.msra.mxu0 %v265
    %531 = vmatprep.subr.mxu0 0.0
    %532 = vmatpush1.msra.mxu0 %v266
    %533 = vmatprep.subr.mxu0 0.0
    %534 = vmatpush1.msra.mxu0 %v267
    %535 = vmatprep.subr.mxu0 0.0
    %536 = vmatpush1.msra.mxu0 %v268
    %537 = vmatprep.subr.mxu0 0.0
    %538 = vmatpush1.msra.mxu0 %v269
    %539 = vmatprep.subr.mxu0 0.0
    %540 = vmatpush1.msra.mxu0 %v270
    %541 = vmatprep.subr.mxu0 0.0
    %542 = vmatpush1.msra.mxu0 %v271
    %543 = vmatprep.subr.mxu0 0.0
    %544 = vmatpush1.msra.mxu0 %v272
    %545 = vmatprep.subr.mxu0 0.0
    %546 = vmatpush1.msra.mxu0 %v273
    %547 = vmatprep.subr.mxu0 0.0
    %548 = vmatpush1.msra.mxu0 %v274
    %549 = vmatprep.subr.mxu0 0.0
    %550 = vmatpush1.msra.mxu0 %v275
    %551 = vmatprep.subr.mxu0 0.0
    %552 = vmatpush1.msra.mxu0 0.0
    %553 = vmatprep.subr.mxu0 0.0
    %554 = vmatpush1.msra.mxu0 0.0
    %555 = vmatprep.subr.mxu0 0.0
    %556 = vmatpush1.msra.mxu0 0.0
    %557 = vmatprep.subr.mxu0 0.0
    %558 = vmatpush1.msra.mxu0 0.0
    %559 = vmatprep.subr.mxu0 0.0
    %560 = vmatpush1.msra.mxu0 0.0
    %561 = vmatprep.subr.mxu0 0.0
    %562 = vmatpush1.msra.mxu0 0.0
    %563 = vmatprep.subr.mxu0 0.0
    %564 = vmatpush1.msra.mxu0 0.0
    %565 = vmatprep.subr.mxu0 0.0
    %566 = vmatpush1.msra.mxu0 0.0
    %567 = vmatprep.subr.mxu0 0.0
    %568 = vmatpush1.msra.mxu0 0.0
    %569 = vmatprep.subr.mxu0 0.0
    %570 = vmatpush1.msra.mxu0 0.0
    %571 = vmatprep.subr.mxu0 0.0
    %572 = vmatpush1.msra.mxu0 0.0
    %573 = vmatprep.subr.mxu0 0.0
    %574 = vmatpush1.msra.mxu0 0.0
    %575 = vmatprep.subr.mxu0 0.0
    %576 = vmatpush1.msra.mxu0 0.0
    %577 = vmatprep.subr.mxu0 0.0
    %578 = vmatpush1.msra.mxu0 0.0
    %579 = vmatprep.subr.mxu0 0.0
    %580 = vmatpush1.msra.mxu0 0.0
    %581 = vmatprep.subr.mxu0 0.0
    %582 = vmatpush1.msra.mxu0 0.0
    %583 = vmatprep.subr.mxu0 0.0
    %584 = vmatpush1.msra.mxu0 0.0
    %585 = vmatprep.mubr.f32.mxu0 0.0
    %586 = vmatmul.mubr.f32.gmra.mrb[0].mxu0 %v519
    %v587 = vpop.f32.mrb[0].mxu0
    %v588 = vadd.f32 0.0, %v587
    %v589 = vpop.f32.mrb[0].mxu0
    %590 = vdwg.mxu0
    %v591 = vsel %vm507, %v588, 0.0
    %v592 = vrot.slane %v591, 4
    %v593 = vadd.f32 %v591, %v592
    %v594 = vrot.slane %v593, 2
    %v595 = vadd.f32 %v593, %v594
    %v596 = vrot.slane %v595, 1
    %v597 = vadd.f32 %v595, %v596
    %v598 = vmul.f32 %v597, 0.0125
    %v599 = vadd.f32 %v598, 1e-05
    %v600 = vrsqrt.pop %v599
    %v601 = vmul.f32 %v431, %v600
    %v602 = vlaneseq
    %v603 = vshrl.u32 %v602, 7
    %v604 = vsub.s32 0, %v603
    %v605 = vrot.slane %v601, %v604
    %v606 = vmul.f32 %v516, %v605
    %v607 = vlaneseq
    %v608 = vshrl.u32 %v607, 7
    %v609 = vsub.s32 0, %v608
    %v610 = vrot.slane %v432, %v609
    %v611 = vadd.f32 %v606, %v610
    %v612 = vmul.f32 %v611, 0.1
    %v613 = vmax.f32 %v611, %v612
    %v614 = vld [vmem:[#allocation7] sm:$0xff]
    %v615 = vld [vmem:[#allocation7 + $0x8] sm:$0xff]
    %v616 = vld [vmem:[#allocation7 + $0x10] sm:$0xff]
    %v617 = vld [vmem:[#allocation7 + $0x18] sm:$0xff]
    %v618 = vld [vmem:[#allocation7 + $0x20] sm:$0xff]
    %v619 = vld [vmem:[#allocation7 + $0x28] sm:$0xff]
    %v620 = vld [vmem:[#allocation7 + $0x30] sm:$0xff]
    %v621 = vld [vmem:[#allocation7 + $0x38] sm:$0xff]
    %v622 = vld [vmem:[#allocation7 + $0x40] sm:$0xff]
    %v623 = vld [vmem:[#allocation7 + $0x48] sm:$0xff]
    %v624 = vld [vmem:[#allocation7 + $0x50] sm:$0xff]
    %v625 = vld [vmem:[#allocation7 + $0x58] sm:$0xff]
    %v626 = vld [vmem:[#allocation7 + $0x60] sm:$0xff]
    %v627 = vld [vmem:[#allocation7 + $0x68] sm:$0xff]
    %v628 = vld [vmem:[#allocation7 + $0x70] sm:$0xff]
    %v630 = vsel %vm433, %v613, 0
    %632 = vmatprep.subr.mxu0 0.0
    %633 = vmatpush1.msra.mxu0 %v614
    %634 = vmatprep.subr.mxu0 0.0
    %635 = vmatpush1.msra.mxu0 %v615
    %636 = vmatprep.subr.mxu0 0.0
    %637 = vmatpush1.msra.mxu0 %v616
    %638 = vmatprep.subr.mxu0 0.0
    %639 = vmatpush1.msra.mxu0 %v617
    %640 = vmatprep.subr.mxu0 0.0
    %641 = vmatpush1.msra.mxu0 %v618
    %642 = vmatprep.subr.mxu0 0.0
    %643 = vmatpush1.msra.mxu0 %v619
    %644 = vmatprep.subr.mxu0 0.0
    %645 = vmatpush1.msra.mxu0 %v620
    %646 = vmatprep.subr.mxu0 0.0
    %647 = vmatpush1.msra.mxu0 %v621
    %648 = vmatprep.subr.mxu0 0.0
    %649 = vmatpush1.msra.mxu0 %v622
    %650 = vmatprep.subr.mxu0 0.0
    %651 = vmatpush1.msra.mxu0 %v623
    %652 = vmatprep.subr.mxu0 0.0
    %653 = vmatpush1.msra.mxu0 %v624
    %654 = vmatprep.subr.mxu0 0.0
    %655 = vmatpush1.msra.mxu0 %v625
    %656 = vmatprep.subr.mxu0 0.0
    %657 = vmatpush1.msra.mxu0 %v626
    %658 = vmatprep.subr.mxu0 0.0
    %659 = vmatpush1.msra.mxu0 %v627
    %660 = vmatprep.subr.mxu0 0.0
    %661 = vmatpush1.msra.mxu0 %v628
    %662 = vmatprep.subr.mxu0 0.0
    %663 = vmatpush1.msra.mxu0 0.0
    %664 = vmatprep.subr.mxu0 0.0
    %665 = vmatpush1.msra.mxu0 0.0
    %666 = vmatprep.subr.mxu0 0.0
    %667 = vmatpush1.msra.mxu0 0.0
    %668 = vmatprep.subr.mxu0 0.0
    %669 = vmatpush1.msra.mxu0 0.0
    %670 = vmatprep.subr.mxu0 0.0
    %671 = vmatpush1.msra.mxu0 0.0
    %672 = vmatprep.subr.mxu0 0.0
    %673 = vmatpush1.msra.mxu0 0.0
    %674 = vmatprep.subr.mxu0 0.0
    %675 = vmatpush1.msra.mxu0 0.0
    %676 = vmatprep.subr.mxu0 0.0
    %677 = vmatpush1.msra.mxu0 0.0
    %678 = vmatprep.subr.mxu0 0.0
    %679 = vmatpush1.msra.mxu0 0.0
    %680 = vmatprep.subr.mxu0 0.0
    %681 = vmatpush1.msra.mxu0 0.0
    %682 = vmatprep.subr.mxu0 0.0
    %683 = vmatpush1.msra.mxu0 0.0
    %684 = vmatprep.subr.mxu0 0.0
    %685 = vmatpush1.msra.mxu0 0.0
    %686 = vmatprep.subr.mxu0 0.0
    %687 = vmatpush1.msra.mxu0 0.0
    %688 = vmatprep.subr.mxu0 0.0
    %689 = vmatpush1.msra.mxu0 0.0
    %690 = vmatprep.subr.mxu0 0.0
    %691 = vmatpush1.msra.mxu0 0.0
    %692 = vmatprep.subr.mxu0 0.0
    %693 = vmatpush1.msra.mxu0 0.0
    %694 = vmatprep.subr.mxu0 0.0
    %695 = vmatpush1.msra.mxu0 0.0
    %696 = vmatprep.mubr.f32.mxu0 0.0
    %697 = vmatmul.mubr.f32.gmra.mrb[0].mxu0 %v630
    %v698 = vpop.f32.mrb[0].mxu0
    %v699 = vadd.f32 0.0, %v698
    %v700 = vpop.f32.mrb[0].mxu0
    %701 = vdwg.mxu0
    %v702 = vld [vmem:[#allocation17 + $0x1] sm:$0x1]
    %v703 = vld [vmem:[#allocation19 + $0x1] sm:$0x1]
    %v705 = vsel %vm433, %v699, 0
    %707 = vmatprep.subr.mxu0 0.0
    %708 = vmatpush1.msra.mxu0 %v261
    %709 = vmatprep.subr.mxu0 0.0
    %710 = vmatpush1.msra.mxu0 %v262
    %711 = vmatprep.subr.mxu0 0.0
    %712 = vmatpush1.msra.mxu0 %v263
    %713 = vmatprep.subr.mxu0 0.0
    %714 = vmatpush1.msra.mxu0 %v264
    %715 = vmatprep.subr.mxu0 0.0
    %716 = vmatpush1.msra.mxu0 %v265
    %717 = vmatprep.subr.mxu0 0.0
    %718 = vmatpush1.msra.mxu0 %v266
    %719 = vmatprep.subr.mxu0 0.0
    %720 = vmatpush1.msra.mxu0 %v267
    %721 = vmatprep.subr.mxu0 0.0
    %722 = vmatpush1.msra.mxu0 %v268
    %723 = vmatprep.subr.mxu0 0.0
    %724 = vmatpush1.msra.mxu0 %v269
    %725 = vmatprep.subr.mxu0 0.0
    %726 = vmatpush1.msra.mxu0 %v270
    %727 = vmatprep.subr.mxu0 0.0
    %728 = vmatpush1.msra.mxu0 %v271
    %729 = vmatprep.subr.mxu0 0.0
    %730 = vmatpush1.msra.mxu0 %v272
    %731 = vmatprep.subr.mxu0 0.0
    %732 = vmatpush1.msra.mxu0 %v273
    %733 = vmatprep.subr.mxu0 0.0
    %734 = vmatpush1.msra.mxu0 %v274
    %735 = vmatprep.subr.mxu0 0.0
    %736 = vmatpush1.msra.mxu0 %v275
    %737 = vmatprep.subr.mxu0 0.0
    %738 = vmatpush1.msra.mxu0 0.0
    %739 = vmatprep.subr.mxu0 0.0
    %740 = vmatpush1.msra.mxu0 0.0
    %741 = vmatprep.subr.mxu0 0.0
    %742 = vmatpush1.msra.mxu0 0.0
    %743 = vmatprep.subr.mxu0 0.0
    %744 = vmatpush1.msra.mxu0 0.0
    %745 = vmatprep.subr.mxu0 0.0
    %746 = vmatpush1.msra.mxu0 0.0
    %747 = vmatprep.subr.mxu0 0.0
    %748 = vmatpush1.msra.mxu0 0.0
    %749 = vmatprep.subr.mxu0 0.0
    %750 = vmatpush1.msra.mxu0 0.0
    %751 = vmatprep.subr.mxu0 0.0
    %752 = vmatpush1.msra.mxu0 0.0
    %753 = vmatprep.subr.mxu0 0.0
    %754 = vmatpush1.msra.mxu0 0.0
    %755 = vmatprep.subr.mxu0 0.0
    %756 = vmatpush1.msra.mxu0 0.0
    %757 = vmatprep.subr.mxu0 0.0
    %758 = vmatpush1.msra.mxu0 0.0
    %759 = vmatprep.subr.mxu0 0.0
    %760 = vmatpush1.msra.mxu0 0.0
    %761 = vmatprep.subr.mxu0 0.0
    %762 = vmatpush1.msra.mxu0 0.0
    %763 = vmatprep.subr.mxu0 0.0
    %764 = vmatpush1.msra.mxu0 0.0
    %765 = vmatprep.subr.mxu0 0.0
    %766 = vmatpush1.msra.mxu0 0.0
    %767 = vmatprep.subr.mxu0 0.0
    %768 = vmatpush1.msra.mxu0 0.0
    %769 = vmatprep.subr.mxu0 0.0
    %770 = vmatpush1.msra.mxu0 0.0
    %771 = vmatprep.mubr.f32.mxu0 0.0
    %772 = vmatmul.mubr.f32.gmra.mrb[0].mxu0 %v705
    %v773 = vpop.f32.mrb[0].mxu0
    %v774 = vadd.f32 0.0, %v773
    %v775 = vpop.f32.mrb[0].mxu0
    %776 = vdwg.mxu0
    %v777 = vsel %vm507, %v774, 0.0
    %v778 = vrot.slane %v777, 4
    %v779 = vadd.f32 %v777, %v778
    %v780 = vrot.slane %v779, 2
    %v781 = vadd.f32 %v779, %v780
    %v782 = vrot.slane %v781, 1
    %v783 = vadd.f32 %v781, %v782
    %v784 = vmul.f32 %v783, 0.0125
    %v785 = vsub.f32 %v699, %v784
    %v786 = vmul.f32 %v785, %v785
    %v788 = vsel %vm433, %v786, 0
    %790 = vmatprep.subr.mxu0 0.0
    %791 = vmatpush1.msra.mxu0 %v261
    %792 = vmatprep.subr.mxu0 0.0
    %793 = vmatpush1.msra.mxu0 %v262
    %794 = vmatprep.subr.mxu0 0.0
    %795 = vmatpush1.msra.mxu0 %v263
    %796 = vmatprep.subr.mxu0 0.0
    %797 = vmatpush1.msra.mxu0 %v264
    %798 = vmatprep.subr.mxu0 0.0
    %799 = vmatpush1.msra.mxu0 %v265
    %800 = vmatprep.subr.mxu0 0.0
    %801 = vmatpush1.msra.mxu0 %v266
    %802 = vmatprep.subr.mxu0 0.0
    %803 = vmatpush1.msra.mxu0 %v267
    %804 = vmatprep.subr.mxu0 0.0
    %805 = vmatpush1.msra.mxu0 %v268
    %806 = vmatprep.subr.mxu0 0.0
    %807 = vmatpush1.msra.mxu0 %v269
    %808 = vmatprep.subr.mxu0 0.0
    %809 = vmatpush1.msra.mxu0 %v270
    %810 = vmatprep.subr.mxu0 0.0
    %811 = vmatpush1.msra.mxu0 %v271
    %812 = vmatprep.subr.mxu0 0.0
    %813 = vmatpush1.msra.mxu0 %v272
    %814 = vmatprep.subr.mxu0 0.0
    %815 = vmatpush1.msra.mxu0 %v273
    %816 = vmatprep.subr.mxu0 0.0
    %817 = vmatpush1.msra.mxu0 %v274
    %818 = vmatprep.subr.mxu0 0.0
    %819 = vmatpush1.msra.mxu0 %v275
    %820 = vmatprep.subr.mxu0 0.0
    %821 = vmatpush1.msra.mxu0 0.0
    %822 = vmatprep.subr.mxu0 0.0
    %823 = vmatpush1.msra.mxu0 0.0
    %824 = vmatprep.subr.mxu0 0.0
    %825 = vmatpush1.msra.mxu0 0.0
    %826 = vmatprep.subr.mxu0 0.0
    %827 = vmatpush1.msra.mxu0 0.0
    %828 = vmatprep.subr.mxu0 0.0
    %829 = vmatpush1.msra.mxu0 0.0
    %830 = vmatprep.subr.mxu0 0.0
    %831 = vmatpush1.msra.mxu0 0.0
    %832 = vmatprep.subr.mxu0 0.0
    %833 = vmatpush1.msra.mxu0 0.0
    %834 = vmatprep.subr.mxu0 0.0
    %835 = vmatpush1.msra.mxu0 0.0
    %836 = vmatprep.subr.mxu0 0.0
    %837 = vmatpush1.msra.mxu0 0.0
    %838 = vmatprep.subr.mxu0 0.0
    %839 = vmatpush1.msra.mxu0 0.0
    %840 = vmatprep.subr.mxu0 0.0
    %841 = vmatpush1.msra.mxu0 0.0
    %842 = vmatprep.subr.mxu0 0.0
    %843 = vmatpush1.msra.mxu0 0.0
    %844 = vmatprep.subr.mxu0 0.0
    %845 = vmatpush1.msra.mxu0 0.0
    %846 = vmatprep.subr.mxu0 0.0
    %847 = vmatpush1.msra.mxu0 0.0
    %848 = vmatprep.subr.mxu0 0.0
    %849 = vmatpush1.msra.mxu0 0.0
    %850 = vmatprep.subr.mxu0 0.0
    %851 = vmatpush1.msra.mxu0 0.0
    %852 = vmatprep.subr.mxu0 0.0
    %853 = vmatpush1.msra.mxu0 0.0
    %854 = vmatprep.mubr.f32.mxu0 0.0
    %855 = vmatmul.mubr.f32.gmra.mrb[0].mxu0 %v788
    %v856 = vpop.f32.mrb[0].mxu0
    %v857 = vadd.f32 0.0, %v856
    %v858 = vpop.f32.mrb[0].mxu0
    %859 = vdwg.mxu0
    %v860 = vsel %vm507, %v857, 0.0
    %v861 = vrot.slane %v860, 4
    %v862 = vadd.f32 %v860, %v861
    %v863 = vrot.slane %v862, 2
    %v864 = vadd.f32 %v862, %v863
    %v865 = vrot.slane %v864, 1
    %v866 = vadd.f32 %v864, %v865
    %v867 = vmul.f32 %v866, 0.0125
    %v868 = vadd.f32 %v867, 1e-05
    %v869 = vrsqrt.pop %v868
    %v870 = vmul.f32 %v702, %v869
    %v871 = vlaneseq
    %v872 = vshrl.u32 %v871, 7
    %v873 = vsub.s32 0, %v872
    %v874 = vrot.slane %v870, %v873
    %v875 = vmul.f32 %v785, %v874
    %v876 = vlaneseq
    %v877 = vshrl.u32 %v876, 7
    %v878 = vsub.s32 0, %v877
    %v879 = vrot.slane %v703, %v878
    %v880 = vadd.f32 %v875, %v879
    %v881 = vadd.f32 %v880, %v353
    %v882 = vmul.f32 %v881, 0.1
    %v883 = vmax.f32 %v881, %v882
    %v884 = vld [vmem:[#allocation8] sm:$0xff]
    %v885 = vld [vmem:[#allocation8 + $0x8] sm:$0xff]
    %v886 = vld [vmem:[#allocation8 + $0x10] sm:$0xff]
    %v887 = vld [vmem:[#allocation8 + $0x18] sm:$0xff]
    %v888 = vld [vmem:[#allocation8 + $0x20] sm:$0xff]
    %v889 = vld [vmem:[#allocation8 + $0x28] sm:$0xff]
    %v890 = vld [vmem:[#allocation8 + $0x30] sm:$0xff]
    %v891 = vld [vmem:[#allocation8 + $0x38] sm:$0xff]
    %v892 = vld [vmem:[#allocation8 + $0x40] sm:$0xff]
    %v893 = vld [vmem:[#allocation8 + $0x48] sm:$0xff]
    %v894 = vld [vmem:[#allocation8 + $0x50] sm:$0xff]
    %v895 = vld [vmem:[#allocation8 + $0x58] sm:$0xff]
    %v896 = vld [vmem:[#allocation8 + $0x60] sm:$0xff]
    %v897 = vld [vmem:[#allocation8 + $0x68] sm:$0xff]
    %v898 = vld [vmem:[#allocation8 + $0x70] sm:$0xff]
    %v900 = vsel %vm433, %v883, 0
    %902 = vmatprep.subr.mxu0 0.0
    %903 = vmatpush1.msra.mxu0 %v884
    %904 = vmatprep.subr.mxu0 0.0
    %905 = vmatpush1.msra.mxu0 %v885
    %906 = vmatprep.subr.mxu0 0.0
    %907 = vmatpush1.msra.mxu0 %v886
    %908 = vmatprep.subr.mxu0 0.0
    %909 = vmatpush1.msra.mxu0 %v887
    %910 = vmatprep.subr.mxu0 0.0
    %911 = vmatpush1.msra.mxu0 %v888
    %912 = vmatprep.subr.mxu0 0.0
    %913 = vmatpush1.msra.mxu0 %v889
    %914 = vmatprep.subr.mxu0 0.0
    %915 = vmatpush1.msra.mxu0 %v890
    %916 = vmatprep.subr.mxu0 0.0
    %917 = vmatpush1.msra.mxu0 %v891
    %918 = vmatprep.subr.mxu0 0.0
    %919 = vmatpush1.msra.mxu0 %v892
    %920 = vmatprep.subr.mxu0 0.0
    %921 = vmatpush1.msra.mxu0 %v893
    %922 = vmatprep.subr.mxu0 0.0
    %923 = vmatpush1.msra.mxu0 %v894
    %924 = vmatprep.subr.mxu0 0.0
    %925 = vmatpush1.msra.mxu0 %v895
    %926 = vmatprep.subr.mxu0 0.0
    %927 = vmatpush1.msra.mxu0 %v896
    %928 = vmatprep.subr.mxu0 0.0
    %929 = vmatpush1.msra.mxu0 %v897
    %930 = vmatprep.subr.mxu0 0.0
    %931 = vmatpush1.msra.mxu0 %v898
    %932 = vmatprep.subr.mxu0 0.0
    %933 = vmatpush1.msra.mxu0 0.0
    %934 = vmatprep.subr.mxu0 0.0
    %935 = vmatpush1.msra.mxu0 0.0
    %936 = vmatprep.subr.mxu0 0.0
    %937 = vmatpush1.msra.mxu0 0.0
    %938 = vmatprep.subr.mxu0 0.0
    %939 = vmatpush1.msra.mxu0 0.0
    %940 = vmatprep.subr.mxu0 0.0
    %941 = vmatpush1.msra.mxu0 0.0
    %942 = vmatprep.subr.mxu0 0.0
    %943 = vmatpush1.msra.mxu0 0.0
    %944 = vmatprep.subr.mxu0 0.0
    %945 = vmatpush1.msra.mxu0 0.0
    %946 = vmatprep.subr.mxu0 0.0
    %947 = vmatpush1.msra.mxu0 0.0
    %948 = vmatprep.subr.mxu0 0.0
    %949 = vmatpush1.msra.mxu0 0.0
    %950 = vmatprep.subr.mxu0 0.0
    %951 = vmatpush1.msra.mxu0 0.0
    %952 = vmatprep.subr.mxu0 0.0
    %953 = vmatpush1.msra.mxu0 0.0
    %954 = vmatprep.subr.mxu0 0.0
    %955 = vmatpush1.msra.mxu0 0.0
    %956 = vmatprep.subr.mxu0 0.0
    %957 = vmatpush1.msra.mxu0 0.0
    %958 = vmatprep.subr.mxu0 0.0
    %959 = vmatpush1.msra.mxu0 0.0
    %960 = vmatprep.subr.mxu0 0.0
    %961 = vmatpush1.msra.mxu0 0.0
    %962 = vmatprep.subr.mxu0 0.0
    %963 = vmatpush1.msra.mxu0 0.0
    %964 = vmatprep.subr.mxu0 0.0
    %965 = vmatpush1.msra.mxu0 0.0
    %966 = vmatprep.mubr.f32.mxu0 0.0
    %967 = vmatmul.mubr.f32.gmra.mrb[0].mxu0 %v900
    %v968 = vpop.f32.mrb[0].mxu0
    %v969 = vadd.f32 0.0, %v968
    %v970 = vpop.f32.mrb[0].mxu0
    %971 = vdwg.mxu0
    %v972 = vld [vmem:[#allocation17 + $0x2] sm:$0x1]
    %v973 = vld [vmem:[#allocation19 + $0x2] sm:$0x1]
    %v975 = vsel %vm433, %v969, 0
    %977 = vmatprep.subr.mxu0 0.0
    %978 = vmatpush1.msra.mxu0 %v261
    %979 = vmatprep.subr.mxu0 0.0
    %980 = vmatpush1.msra.mxu0 %v262
    %981 = vmatprep.subr.mxu0 0.0
    %982 = vmatpush1.msra.mxu0 %v263
    %983 = vmatprep.subr.mxu0 0.0
    %984 = vmatpush1.msra.mxu0 %v264
    %985 = vmatprep.subr.mxu0 0.0
    %986 = vmatpush1.msra.mxu0 %v265
    %987 = vmatprep.subr.mxu0 0.0
    %988 = vmatpush1.msra.mxu0 %v266
    %989 = vmatprep.subr.mxu0 0.0
    %990 = vmatpush1.msra.mxu0 %v267
    %991 = vmatprep.subr.mxu0 0.0
    %992 = vmatpush1.msra.mxu0 %v268
    %993 = vmatprep.subr.mxu0 0.0
    %994 = vmatpush1.msra.mxu0 %v269
    %995 = vmatprep.subr.mxu0 0.0
    %996 = vmatpush1.msra.mxu0 %v270
    %997 = vmatprep.subr.mxu0 0.0
    %998 = vmatpush1.msra.mxu0 %v271
    %999 = vmatprep.subr.mxu0 0.0
    %1000 = vmatpush1.msra.mxu0 %v272
    %1001 = vmatprep.subr.mxu0 0.0
    %1002 = vmatpush1.msra.mxu0 %v273
    %1003 = vmatprep.subr.mxu0 0.0
    %1004 = vmatpush1.msra.mxu0 %v274
    %1005 = vmatprep.subr.mxu0 0.0
    %1006 = vmatpush1.msra.mxu0 %v275
    %1007 = vmatprep.subr.mxu0 0.0
    %1008 = vmatpush1.msra.mxu0 0.0
    %1009 = vmatprep.subr.mxu0 0.0
    %1010 = vmatpush1.msra.mxu0 0.0
    %1011 = vmatprep.subr.mxu0 0.0
    %1012 = vmatpush1.msra.mxu0 0.0
    %1013 = vmatprep.subr.mxu0 0.0
    %1014 = vmatpush1.msra.mxu0 0.0
    %1015 = vmatprep.subr.mxu0 0.0
    %1016 = vmatpush1.msra.mxu0 0.0
    %1017 = vmatprep.subr.mxu0 0.0
    %1018 = vmatpush1.msra.mxu0 0.0
    %1019 = vmatprep.subr.mxu0 0.0
    %1020 = vmatpush1.msra.mxu0 0.0
    %1021 = vmatprep.subr.mxu0 0.0
    %1022 = vmatpush1.msra.mxu0 0.0
    %1023 = vmatprep.subr.mxu0 0.0
    %1024 = vmatpush1.msra.mxu0 0.0
    %1025 = vmatprep.subr.mxu0 0.0
    %1026 = vmatpush1.msra.mxu0 0.0
    %1027 = vmatprep.subr.mxu0 0.0
    %1028 = vmatpush1.msra.mxu0 0.0
    %1029 = vmatprep.subr.mxu0 0.0
    %1030 = vmatpush1.msra.mxu0 0.0
    %1031 = vmatprep.subr.mxu0 0.0
    %1032 = vmatpush1.msra.mxu0 0.0
    %1033 = vmatprep.subr.mxu0 0.0
    %1034 = vmatpush1.msra.mxu0 0.0
    %1035 = vmatprep.subr.mxu0 0.0
    %1036 = vmatpush1.msra.mxu0 0.0
    %1037 = vmatprep.subr.mxu0 0.0
    %1038 = vmatpush1.msra.mxu0 0.0
    %1039 = vmatprep.subr.mxu0 0.0
    %1040 = vmatpush1.msra.mxu0 0.0
    %1041 = vmatprep.mubr.f32.mxu0 0.0
    %1042 = vmatmul.mubr.f32.gmra.mrb[0].mxu0 %v975
    %v1043 = vpop.f32.mrb[0].mxu0
    %v1044 = vadd.f32 0.0, %v1043
    %v1045 = vpop.f32.mrb[0].mxu0
    %1046 = vdwg.mxu0
    %v1047 = vsel %vm507, %v1044, 0.0
    %v1048 = vrot.slane %v1047, 4
    %v1049 = vadd.f32 %v1047, %v1048
    %v1050 = vrot.slane %v1049, 2
    %v1051 = vadd.f32 %v1049, %v1050
    %v1052 = vrot.slane %v1051, 1
    %v1053 = vadd.f32 %v1051, %v1052
    %v1054 = vmul.f32 %v1053, 0.0125
    %v1055 = vsub.f32 %v969, %v1054
    %v1056 = vmul.f32 %v1055, %v1055
    %v1058 = vsel %vm433, %v1056, 0
    %1060 = vmatprep.subr.mxu0 0.0
    %1061 = vmatpush1.msra.mxu0 %v261
    %1062 = vmatprep.subr.mxu0 0.0
    %1063 = vmatpush1.msra.mxu0 %v262
    %1064 = vmatprep.subr.mxu0 0.0
    %1065 = vmatpush1.msra.mxu0 %v263
    %1066 = vmatprep.subr.mxu0 0.0
    %1067 = vmatpush1.msra.mxu0 %v264
    %1068 = vmatprep.subr.mxu0 0.0
    %1069 = vmatpush1.msra.mxu0 %v265
    %1070 = vmatprep.subr.mxu0 0.0
    %1071 = vmatpush1.msra.mxu0 %v266
    %1072 = vmatprep.subr.mxu0 0.0
    %1073 = vmatpush1.msra.mxu0 %v267
    %1074 = vmatprep.subr.mxu0 0.0
    %1075 = vmatpush1.msra.mxu0 %v268
    %1076 = vmatprep.subr.mxu0 0.0
    %1077 = vmatpush1.msra.mxu0 %v269
    %1078 = vmatprep.subr.mxu0 0.0
    %1079 = vmatpush1.msra.mxu0 %v270
    %1080 = vmatprep.subr.mxu0 0.0
    %1081 = vmatpush1.msra.mxu0 %v271
    %1082 = vmatprep.subr.mxu0 0.0
    %1083 = vmatpush1.msra.mxu0 %v272
    %1084 = vmatprep.subr.mxu0 0.0
    %1085 = vmatpush1.msra.mxu0 %v273
    %1086 = vmatprep.subr.mxu0 0.0
    %1087 = vmatpush1.msra.mxu0 %v274
    %1088 = vmatprep.subr.mxu0 0.0
    %1089 = vmatpush1.msra.mxu0 %v275
    %1090 = vmatprep.subr.mxu0 0.0
    %1091 = vmatpush1.msra.mxu0 0.0
    %1092 = vmatprep.subr.mxu0 0.0
    %1093 = vmatpush1.msra.mxu0 0.0
    %1094 = vmatprep.subr.mxu0 0.0
    %1095 = vmatpush1.msra.mxu0 0.0
    %1096 = vmatprep.subr.mxu0 0.0
    %1097 = vmatpush1.msra.mxu0 0.0
    %1098 = vmatprep.subr.mxu0 0.0
    %1099 = vmatpush1.msra.mxu0 0.0
    %1100 = vmatprep.subr.mxu0 0.0
    %1101 = vmatpush1.msra.mxu0 0.0
    %1102 = vmatprep.subr.mxu0 0.0
    %1103 = vmatpush1.msra.mxu0 0.0
    %1104 = vmatprep.subr.mxu0 0.0
    %1105 = vmatpush1.msra.mxu0 0.0
    %1106 = vmatprep.subr.mxu0 0.0
    %1107 = vmatpush1.msra.mxu0 0.0
    %1108 = vmatprep.subr.mxu0 0.0
    %1109 = vmatpush1.msra.mxu0 0.0
    %1110 = vmatprep.subr.mxu0 0.0
    %1111 = vmatpush1.msra.mxu0 0.0
    %1112 = vmatprep.subr.mxu0 0.0
    %1113 = vmatpush1.msra.mxu0 0.0
    %1114 = vmatprep.subr.mxu0 0.0
    %1115 = vmatpush1.msra.mxu0 0.0
    %1116 = vmatprep.subr.mxu0 0.0
    %1117 = vmatpush1.msra.mxu0 0.0
    %1118 = vmatprep.subr.mxu0 0.0
    %1119 = vmatpush1.msra.mxu0 0.0
    %1120 = vmatprep.subr.mxu0 0.0
    %1121 = vmatpush1.msra.mxu0 0.0
    %1122 = vmatprep.subr.mxu0 0.0
    %1123 = vmatpush1.msra.mxu0 0.0
    %1124 = vmatprep.mubr.f32.mxu0 0.0
    %1125 = vmatmul.mubr.f32.gmra.mrb[0].mxu0 %v1058
    %v1126 = vpop.f32.mrb[0].mxu0
    %v1127 = vadd.f32 0.0, %v1126
    %v1128 = vpop.f32.mrb[0].mxu0
    %1129 = vdwg.mxu0
    %v1130 = vsel %vm507, %v1127, 0.0
    %v1131 = vrot.slane %v1130, 4
    %v1132 = vadd.f32 %v1130, %v1131
    %v1133 = vrot.slane %v1132, 2
    %v1134 = vadd.f32 %v1132, %v1133
    %v1135 = vrot.slane %v1134, 1
    %v1136 = vadd.f32 %v1134, %v1135
    %v1137 = vmul.f32 %v1136, 0.0125
    %v1138 = vadd.f32 %v1137, 1e-05
    %v1139 = vrsqrt.pop %v1138
    %v1140 = vmul.f32 %v972, %v1139
    %v1141 = vlaneseq
    %v1142 = vshrl.u32 %v1141, 7
    %v1143 = vsub.s32 0, %v1142
    %v1144 = vrot.slane %v1140, %v1143
    %v1145 = vmul.f32 %v1055, %v1144
    %v1146 = vlaneseq
    %v1147 = vshrl.u32 %v1146, 7
    %v1148 = vsub.s32 0, %v1147
    %v1149 = vrot.slane %v973, %v1148
    %v1150 = vadd.f32 %v1145, %v1149
    %v1151 = vmul.f32 %v1150, 0.1
    %v1152 = vmax.f32 %v1150, %v1151
    %v1153 = vld [vmem:[#allocation10] sm:$0xff]
    %v1154 = vld [vmem:[#allocation10 + $0x8] sm:$0xff]
    %v1155 = vld [vmem:[#allocation10 + $0x10] sm:$0xff]
    %v1156 = vld [vmem:[#allocation10 + $0x18] sm:$0xff]
    %v1157 = vld [vmem:[#allocation10 + $0x20] sm:$0xff]
    %v1158 = vld [vmem:[#allocation10 + $0x28] sm:$0xff]
    %v1159 = vld [vmem:[#allocation10 + $0x30] sm:$0xff]
    %v1160 = vld [vmem:[#allocation10 + $0x38] sm:$0xff]
    %v1161 = vld [vmem:[#allocation10 + $0x40] sm:$0xff]
    %v1162 = vld [vmem:[#allocation10 + $0x48] sm:$0xff]
    %v1163 = vld [vmem:[#allocation10 + $0x50] sm:$0xff]
    %v1164 = vld [vmem:[#allocation10 + $0x58] sm:$0xff]
    %v1165 = vld [vmem:[#allocation10 + $0x60] sm:$0xff]
    %v1166 = vld [vmem:[#allocation10 + $0x68] sm:$0xff]
    %v1167 = vld [vmem:[#allocation10 + $0x70] sm:$0xff]
    %v1169 = vsel %vm433, %v1152, 0
    %1171 = vmatprep.subr.mxu0 0.0
    %1172 = vmatpush1.msra.mxu0 %v1153
    %1173 = vmatprep.subr.mxu0 0.0
    %1174 = vmatpush1.msra.mxu0 %v1154
    %1175 = vmatprep.subr.mxu0 0.0
    %1176 = vmatpush1.msra.mxu0 %v1155
    %1177 = vmatprep.subr.mxu0 0.0
    %1178 = vmatpush1.msra.mxu0 %v1156
    %1179 = vmatprep.subr.mxu0 0.0
    %1180 = vmatpush1.msra.mxu0 %v1157
    %1181 = vmatprep.subr.mxu0 0.0
    %1182 = vmatpush1.msra.mxu0 %v1158
    %1183 = vmatprep.subr.mxu0 0.0
    %1184 = vmatpush1.msra.mxu0 %v1159
    %1185 = vmatprep.subr.mxu0 0.0
    %1186 = vmatpush1.msra.mxu0 %v1160
    %1187 = vmatprep.subr.mxu0 0.0
    %1188 = vmatpush1.msra.mxu0 %v1161
    %1189 = vmatprep.subr.mxu0 0.0
    %1190 = vmatpush1.msra.mxu0 %v1162
    %1191 = vmatprep.subr.mxu0 0.0
    %1192 = vmatpush1.msra.mxu0 %v1163
    %1193 = vmatprep.subr.mxu0 0.0
    %1194 = vmatpush1.msra.mxu0 %v1164
    %1195 = vmatprep.subr.mxu0 0.0
    %1196 = vmatpush1.msra.mxu0 %v1165
    %1197 = vmatprep.subr.mxu0 0.0
    %1198 = vmatpush1.msra.mxu0 %v1166
    %1199 = vmatprep.subr.mxu0 0.0
    %1200 = vmatpush1.msra.mxu0 %v1167
    %1201 = vmatprep.subr.mxu0 0.0
    %1202 = vmatpush1.msra.mxu0 0.0
    %1203 = vmatprep.subr.mxu0 0.0
    %1204 = vmatpush1.msra.mxu0 0.0
    %1205 = vmatprep.subr.mxu0 0.0
    %1206 = vmatpush1.msra.mxu0 0.0
    %1207 = vmatprep.subr.mxu0 0.0
    %1208 = vmatpush1.msra.mxu0 0.0
    %1209 = vmatprep.subr.mxu0 0.0
    %1210 = vmatpush1.msra.mxu0 0.0
    %1211 = vmatprep.subr.mxu0 0.0
    %1212 = vmatpush1.msra.mxu0 0.0
    %1213 = vmatprep.subr.mxu0 0.0
    %1214 = vmatpush1.msra.mxu0 0.0
    %1215 = vmatprep.subr.mxu0 0.0
    %1216 = vmatpush1.msra.mxu0 0.0
    %1217 = vmatprep.subr.mxu0 0.0
    %1218 = vmatpush1.msra.mxu0 0.0
    %1219 = vmatprep.subr.mxu0 0.0
    %1220 = vmatpush1.msra.mxu0 0.0
    %1221 = vmatprep.subr.mxu0 0.0
    %1222 = vmatpush1.msra.mxu0 0.0
    %1223 = vmatprep.subr.mxu0 0.0
    %1224 = vmatpush1.msra.mxu0 0.0
    %1225 = vmatprep.subr.mxu0 0.0
    %1226 = vmatpush1.msra.mxu0 0.0
    %1227 = vmatprep.subr.mxu0 0.0
    %1228 = vmatpush1.msra.mxu0 0.0
    %1229 = vmatprep.subr.mxu0 0.0
    %1230 = vmatpush1.msra.mxu0 0.0
    %1231 = vmatprep.subr.mxu0 0.0
    %1232 = vmatpush1.msra.mxu0 0.0
    %1233 = vmatprep.subr.mxu0 0.0
    %1234 = vmatpush1.msra.mxu0 0.0
    %1235 = vmatprep.mubr.f32.mxu0 0.0
    %1236 = vmatmul.mubr.f32.gmra.mrb[0].mxu0 %v1169
    %v1237 = vpop.f32.mrb[0].mxu0
    %v1238 = vadd.f32 0.0, %v1237
    %v1239 = vpop.f32.mrb[0].mxu0
    %1240 = vdwg.mxu0
    %v1241 = vld [vmem:[#allocation17 + $0x3] sm:$0x1]
    %v1242 = vld [vmem:[#allocation19 + $0x3] sm:$0x1]
    %v1244 = vsel %vm433, %v1238, 0
    %1246 = vmatprep.subr.mxu0 0.0
    %1247 = vmatpush1.msra.mxu0 %v261
    %1248 = vmatprep.subr.mxu0 0.0
    %1249 = vmatpush1.msra.mxu0 %v262
    %1250 = vmatprep.subr.mxu0 0.0
    %1251 = vmatpush1.msra.mxu0 %v263
    %1252 = vmatprep.subr.mxu0 0.0
    %1253 = vmatpush1.msra.mxu0 %v264
    %1254 = vmatprep.subr.mxu0 0.0
    %1255 = vmatpush1.msra.mxu0 %v265
    %1256 = vmatprep.subr.mxu0 0.0
    %1257 = vmatpush1.msra.mxu0 %v266
    %1258 = vmatprep.subr.mxu0 0.0
    %1259 = vmatpush1.msra.mxu0 %v267
    %1260 = vmatprep.subr.mxu0 0.0
    %1261 = vmatpush1.msra.mxu0 %v268
    %1262 = vmatprep.subr.mxu0 0.0
    %1263 = vmatpush1.msra.mxu0 %v269
    %1264 = vmatprep.subr.mxu0 0.0
    %1265 = vmatpush1.msra.mxu0 %v270
    %1266 = vmatprep.subr.mxu0 0.0
    %1267 = vmatpush1.msra.mxu0 %v271
    %1268 = vmatprep.subr.mxu0 0.0
    %1269 = vmatpush1.msra.mxu0 %v272
    %1270 = vmatprep.subr.mxu0 0.0
    %1271 = vmatpush1.msra.mxu0 %v273
    %1272 = vmatprep.subr.mxu0 0.0
    %1273 = vmatpush1.msra.mxu0 %v274
    %1274 = vmatprep.subr.mxu0 0.0
    %1275 = vmatpush1.msra.mxu0 %v275
    %1276 = vmatprep.subr.mxu0 0.0
    %1277 = vmatpush1.msra.mxu0 0.0
    %1278 = vmatprep.subr.mxu0 0.0
    %1279 = vmatpush1.msra.mxu0 0.0
    %1280 = vmatprep.subr.mxu0 0.0
    %1281 = vmatpush1.msra.mxu0 0.0
    %1282 = vmatprep.subr.mxu0 0.0
    %1283 = vmatpush1.msra.mxu0 0.0
    %1284 = vmatprep.subr.mxu0 0.0
    %1285 = vmatpush1.msra.mxu0 0.0
    %1286 = vmatprep.subr.mxu0 0.0
    %1287 = vmatpush1.msra.mxu0 0.0
    %1288 = vmatprep.subr.mxu0 0.0
    %1289 = vmatpush1.msra.mxu0 0.0
    %1290 = vmatprep.subr.mxu0 0.0
    %1291 = vmatpush1.msra.mxu0 0.0
    %1292 = vmatprep.subr.mxu0 0.0
    %1293 = vmatpush1.msra.mxu0 0.0
    %1294 = vmatprep.subr.mxu0 0.0
    %1295 = vmatpush1.msra.mxu0 0.0
    %1296 = vmatprep.subr.mxu0 0.0
    %1297 = vmatpush1.msra.mxu0 0.0
    %1298 = vmatprep.subr.mxu0 0.0
    %1299 = vmatpush1.msra.mxu0 0.0
    %1300 = vmatprep.subr.mxu0 0.0
    %1301 = vmatpush1.msra.mxu0 0.0
    %1302 = vmatprep.subr.mxu0 0.0
    %1303 = vmatpush1.msra.mxu0 0.0
    %1304 = vmatprep.subr.mxu0 0.0
    %1305 = vmatpush1.msra.mxu0 0.0
    %1306 = vmatprep.subr.mxu0 0.0
    %1307 = vmatpush1.msra.mxu0 0.0
    %1308 = vmatprep.subr.mxu0 0.0
    %1309 = vmatpush1.msra.mxu0 0.0
    %1310 = vmatprep.mubr.f32.mxu0 0.0
    %1311 = vmatmul.mubr.f32.gmra.mrb[0].mxu0 %v1244
    %v1312 = vpop.f32.mrb[0].mxu0
    %v1313 = vadd.f32 0.0, %v1312
    %v1314 = vpop.f32.mrb[0].mxu0
    %1315 = vdwg.mxu0
    %v1316 = vsel %vm507, %v1313, 0.0
    %v1317 = vrot.slane %v1316, 4
    %v1318 = vadd.f32 %v1316, %v1317
    %v1319 = vrot.slane %v1318, 2
    %v1320 = vadd.f32 %v1318, %v1319
    %v1321 = vrot.slane %v1320, 1
    %v1322 = vadd.f32 %v1320, %v1321
    %v1323 = vmul.f32 %v1322, 0.0125
    %v1324 = vsub.f32 %v1238, %v1323
    %v1325 = vmul.f32 %v1324, %v1324
    %v1327 = vsel %vm433, %v1325, 0
    %1329 = vmatprep.subr.mxu0 0.0
    %1330 = vmatpush1.msra.mxu0 %v261
    %1331 = vmatprep.subr.mxu0 0.0
    %1332 = vmatpush1.msra.mxu0 %v262
    %1333 = vmatprep.subr.mxu0 0.0
    %1334 = vmatpush1.msra.mxu0 %v263
    %1335 = vmatprep.subr.mxu0 0.0
    %1336 = vmatpush1.msra.mxu0 %v264
    %1337 = vmatprep.subr.mxu0 0.0
    %1338 = vmatpush1.msra.mxu0 %v265
    %1339 = vmatprep.subr.mxu0 0.0
    %1340 = vmatpush1.msra.mxu0 %v266
    %1341 = vmatprep.subr.mxu0 0.0
    %1342 = vmatpush1.msra.mxu0 %v267
    %1343 = vmatprep.subr.mxu0 0.0
    %1344 = vmatpush1.msra.mxu0 %v268
    %1345 = vmatprep.subr.mxu0 0.0
    %1346 = vmatpush1.msra.mxu0 %v269
    %1347 = vmatprep.subr.mxu0 0.0
    %1348 = vmatpush1.msra.mxu0 %v270
    %1349 = vmatprep.subr.mxu0 0.0
    %1350 = vmatpush1.msra.mxu0 %v271
    %1351 = vmatprep.subr.mxu0 0.0
    %1352 = vmatpush1.msra.mxu0 %v272
    %1353 = vmatprep.subr.mxu0 0.0
    %1354 = vmatpush1.msra.mxu0 %v273
    %1355 = vmatprep.subr.mxu0 0.0
    %1356 = vmatpush1.msra.mxu0 %v274
    %1357 = vmatprep.subr.mxu0 0.0
    %1358 = vmatpush1.msra.mxu0 %v275
    %1359 = vmatprep.subr.mxu0 0.0
    %1360 = vmatpush1.msra.mxu0 0.0
    %1361 = vmatprep.subr.mxu0 0.0
    %1362 = vmatpush1.msra.mxu0 0.0
    %1363 = vmatprep.subr.mxu0 0.0
    %1364 = vmatpush1.msra.mxu0 0.0
    %1365 = vmatprep.subr.mxu0 0.0
    %1366 = vmatpush1.msra.mxu0 0.0
    %1367 = vmatprep.subr.mxu0 0.0
    %1368 = vmatpush1.msra.mxu0 0.0
    %1369 = vmatprep.subr.mxu0 0.0
    %1370 = vmatpush1.msra.mxu0 0.0
    %1371 = vmatprep.subr.mxu0 0.0
    %1372 = vmatpush1.msra.mxu0 0.0
    %1373 = vmatprep.subr.mxu0 0.0
    %1374 = vmatpush1.msra.mxu0 0.0
    %1375 = vmatprep.subr.mxu0 0.0
    %1376 = vmatpush1.msra.mxu0 0.0
    %1377 = vmatprep.subr.mxu0 0.0
    %1378 = vmatpush1.msra.mxu0 0.0
    %1379 = vmatprep.subr.mxu0 0.0
    %1380 = vmatpush1.msra.mxu0 0.0
    %1381 = vmatprep.subr.mxu0 0.0
    %1382 = vmatpush1.msra.mxu0 0.0
    %1383 = vmatprep.subr.mxu0 0.0
    %1384 = vmatpush1.msra.mxu0 0.0
    %1385 = vmatprep.subr.mxu0 0.0
    %1386 = vmatpush1.msra.mxu0 0.0
    %1387 = vmatprep.subr.mxu0 0.0
    %1388 = vmatpush1.msra.mxu0 0.0
    %1389 = vmatprep.subr.mxu0 0.0
    %1390 = vmatpush1.msra.mxu0 0.0
    %1391 = vmatprep.subr.mxu0 0.0
    %1392 = vmatpush1.msra.mxu0 0.0
    %1393 = vmatprep.mubr.f32.mxu0 0.0
    %1394 = vmatmul.mubr.f32.gmra.mrb[0].mxu0 %v1327
    %v1395 = vpop.f32.mrb[0].mxu0
    %v1396 = vadd.f32 0.0, %v1395
    %v1397 = vpop.f32.mrb[0].mxu0
    %1398 = vdwg.mxu0
    %v1399 = vsel %vm507, %v1396, 0.0
    %v1400 = vrot.slane %v1399, 4
    %v1401 = vadd.f32 %v1399, %v1400
    %v1402 = vrot.slane %v1401, 2
    %v1403 = vadd.f32 %v1401, %v1402
    %v1404 = vrot.slane %v1403, 1
    %v1405 = vadd.f32 %v1403, %v1404
    %v1406 = vmul.f32 %v1405, 0.0125
    %v1407 = vadd.f32 %v1406, 1e-05
    %v1408 = vrsqrt.pop %v1407
    %v1409 = vmul.f32 %v1241, %v1408
    %v1410 = vlaneseq
    %v1411 = vshrl.u32 %v1410, 7
    %v1412 = vsub.s32 0, %v1411
    %v1413 = vrot.slane %v1409, %v1412
    %v1414 = vmul.f32 %v1324, %v1413
    %v1415 = vlaneseq
    %v1416 = vshrl.u32 %v1415, 7
    %v1417 = vsub.s32 0, %v1416
    %v1418 = vrot.slane %v1242, %v1417
    %v1419 = vadd.f32 %v1414, %v1418
    %v1420 = vadd.f32 %v1419, %v883
    %v1421 = vmul.f32 %v1420, 0.1
    %v1422 = vmax.f32 %v1420, %v1421
    %v1423 = vld [vmem:[#allocation11] sm:$0xff]
    %v1424 = vld [vmem:[#allocation11 + $0x8] sm:$0xff]
    %v1425 = vld [vmem:[#allocation11 + $0x10] sm:$0xff]
    %v1426 = vld [vmem:[#allocation11 + $0x18] sm:$0xff]
    %v1427 = vld [vmem:[#allocation11 + $0x20] sm:$0xff]
    %v1428 = vld [vmem:[#allocation11 + $0x28] sm:$0xff]
    %v1429 = vld [vmem:[#allocation11 + $0x30] sm:$0xff]
    %v1430 = vld [vmem:[#allocation11 + $0x38] sm:$0xff]
    %v1431 = vld [vmem:[#allocation11 + $0x40] sm:$0xff]
    %v1432 = vld [vmem:[#allocation11 + $0x48] sm:$0xff]
    %v1433 = vld [vmem:[#allocation11 + $0x50] sm:$0xff]
    %v1434 = vld [vmem:[#allocation11 + $0x58] sm:$0xff]
    %v1435 = vld [vmem:[#allocation11 + $0x60] sm:$0xff]
    %v1436 = vld [vmem:[#allocation11 + $0x68] sm:$0xff]
    %v1437 = vld [vmem:[#allocation11 + $0x70] sm:$0xff]
    %v1439 = vsel %vm433, %v1422, 0
    %1441 = vmatprep.subr.mxu0 0.0
    %1442 = vmatpush1.msra.mxu0 %v1423
    %1443 = vmatprep.subr.mxu0 0.0
    %1444 = vmatpush1.msra.mxu0 %v1424
    %1445 = vmatprep.subr.mxu0 0.0
    %1446 = vmatpush1.msra.mxu0 %v1425
    %1447 = vmatprep.subr.mxu0 0.0
    %1448 = vmatpush1.msra.mxu0 %v1426
    %1449 = vmatprep.subr.mxu0 0.0
    %1450 = vmatpush1.msra.mxu0 %v1427
    %1451 = vmatprep.subr.mxu0 0.0
    %1452 = vmatpush1.msra.mxu0 %v1428
    %1453 = vmatprep.subr.mxu0 0.0
    %1454 = vmatpush1.msra.mxu0 %v1429
    %1455 = vmatprep.subr.mxu0 0.0
    %1456 = vmatpush1.msra.mxu0 %v1430
    %1457 = vmatprep.subr.mxu0 0.0
    %1458 = vmatpush1.msra.mxu0 %v1431
    %1459 = vmatprep.subr.mxu0 0.0
    %1460 = vmatpush1.msra.mxu0 %v1432
    %1461 = vmatprep.subr.mxu0 0.0
    %1462 = vmatpush1.msra.mxu0 %v1433
    %1463 = vmatprep.subr.mxu0 0.0
    %1464 = vmatpush1.msra.mxu0 %v1434
    %1465 = vmatprep.subr.mxu0 0.0
    %1466 = vmatpush1.msra.mxu0 %v1435
    %1467 = vmatprep.subr.mxu0 0.0
    %1468 = vmatpush1.msra.mxu0 %v1436
    %1469 = vmatprep.subr.mxu0 0.0
    %1470 = vmatpush1.msra.mxu0 %v1437
    %1471 = vmatprep.subr.mxu0 0.0
    %1472 = vmatpush1.msra.mxu0 0.0
    %1473 = vmatprep.subr.mxu0 0.0
    %1474 = vmatpush1.msra.mxu0 0.0
    %1475 = vmatprep.subr.mxu0 0.0
    %1476 = vmatpush1.msra.mxu0 0.0
    %1477 = vmatprep.subr.mxu0 0.0
    %1478 = vmatpush1.msra.mxu0 0.0
    %1479 = vmatprep.subr.mxu0 0.0
    %1480 = vmatpush1.msra.mxu0 0.0
    %1481 = vmatprep.subr.mxu0 0.0
    %1482 = vmatpush1.msra.mxu0 0.0
    %1483 = vmatprep.subr.mxu0 0.0
    %1484 = vmatpush1.msra.mxu0 0.0
    %1485 = vmatprep.subr.mxu0 0.0
    %1486 = vmatpush1.msra.mxu0 0.0
    %1487 = vmatprep.subr.mxu0 0.0
    %1488 = vmatpush1.msra.mxu0 0.0
    %1489 = vmatprep.subr.mxu0 0.0
    %1490 = vmatpush1.msra.mxu0 0.0
    %1491 = vmatprep.subr.mxu0 0.0
    %1492 = vmatpush1.msra.mxu0 0.0
    %1493 = vmatprep.subr.mxu0 0.0
    %1494 = vmatpush1.msra.mxu0 0.0
    %1495 = vmatprep.subr.mxu0 0.0
    %1496 = vmatpush1.msra.mxu0 0.0
    %1497 = vmatprep.subr.mxu0 0.0
    %1498 = vmatpush1.msra.mxu0 0.0
    %1499 = vmatprep.subr.mxu0 0.0
    %1500 = vmatpush1.msra.mxu0 0.0
    %1501 = vmatprep.subr.mxu0 0.0
    %1502 = vmatpush1.msra.mxu0 0.0
    %1503 = vmatprep.subr.mxu0 0.0
    %1504 = vmatpush1.msra.mxu0 0.0
    %1505 = vmatprep.mubr.f32.mxu0 0.0
    %1506 = vmatmul.mubr.f32.gmra.mrb[0].mxu0 %v1439
    %v1507 = vpop.f32.mrb[0].mxu0
    %v1508 = vadd.f32 0.0, %v1507
    %v1509 = vpop.f32.mrb[0].mxu0
    %1510 = vdwg.mxu0
    %v1511 = vld [vmem:[#allocation17 + $0x4] sm:$0x1]
    %v1512 = vld [vmem:[#allocation19 + $0x4] sm:$0x1]
    %v1514 = vsel %vm433, %v1508, 0
    %1516 = vmatprep.subr.mxu0 0.0
    %1517 = vmatpush1.msra.mxu0 %v261
    %1518 = vmatprep.subr.mxu0 0.0
    %1519 = vmatpush1.msra.mxu0 %v262
    %1520 = vmatprep.subr.mxu0 0.0
    %1521 = vmatpush1.msra.mxu0 %v263
    %1522 = vmatprep.subr.mxu0 0.0
    %1523 = vmatpush1.msra.mxu0 %v264
    %1524 = vmatprep.subr.mxu0 0.0
    %1525 = vmatpush1.msra.mxu0 %v265
    %1526 = vmatprep.subr.mxu0 0.0
    %1527 = vmatpush1.msra.mxu0 %v266
    %1528 = vmatprep.subr.mxu0 0.0
    %1529 = vmatpush1.msra.mxu0 %v267
    %1530 = vmatprep.subr.mxu0 0.0
    %1531 = vmatpush1.msra.mxu0 %v268
    %1532 = vmatprep.subr.mxu0 0.0
    %1533 = vmatpush1.msra.mxu0 %v269
    %1534 = vmatprep.subr.mxu0 0.0
    %1535 = vmatpush1.msra.mxu0 %v270
    %1536 = vmatprep.subr.mxu0 0.0
    %1537 = vmatpush1.msra.mxu0 %v271
    %1538 = vmatprep.subr.mxu0 0.0
    %1539 = vmatpush1.msra.mxu0 %v272
    %1540 = vmatprep.subr.mxu0 0.0
    %1541 = vmatpush1.msra.mxu0 %v273
    %1542 = vmatprep.subr.mxu0 0.0
    %1543 = vmatpush1.msra.mxu0 %v274
    %1544 = vmatprep.subr.mxu0 0.0
    %1545 = vmatpush1.msra.mxu0 %v275
    %1546 = vmatprep.subr.mxu0 0.0
    %1547 = vmatpush1.msra.mxu0 0.0
    %1548 = vmatprep.subr.mxu0 0.0
    %1549 = vmatpush1.msra.mxu0 0.0
    %1550 = vmatprep.subr.mxu0 0.0
    %1551 = vmatpush1.msra.mxu0 0.0
    %1552 = vmatprep.subr.mxu0 0.0
    %1553 = vmatpush1.msra.mxu0 0.0
    %1554 = vmatprep.subr.mxu0 0.0
    %1555 = vmatpush1.msra.mxu0 0.0
    %1556 = vmatprep.subr.mxu0 0.0
    %1557 = vmatpush1.msra.mxu0 0.0
    %1558 = vmatprep.subr.mxu0 0.0
    %1559 = vmatpush1.msra.mxu0 0.0
    %1560 = vmatprep.subr.mxu0 0.0
    %1561 = vmatpush1.msra.mxu0 0.0
    %1562 = vmatprep.subr.mxu0 0.0
    %1563 = vmatpush1.msra.mxu0 0.0
    %1564 = vmatprep.subr.mxu0 0.0
    %1565 = vmatpush1.msra.mxu0 0.0
    %1566 = vmatprep.subr.mxu0 0.0
    %1567 = vmatpush1.msra.mxu0 0.0
    %1568 = vmatprep.subr.mxu0 0.0
    %1569 = vmatpush1.msra.mxu0 0.0
    %1570 = vmatprep.subr.mxu0 0.0
    %1571 = vmatpush1.msra.mxu0 0.0
    %1572 = vmatprep.subr.mxu0 0.0
    %1573 = vmatpush1.msra.mxu0 0.0
    %1574 = vmatprep.subr.mxu0 0.0
    %1575 = vmatpush1.msra.mxu0 0.0
    %1576 = vmatprep.subr.mxu0 0.0
    %1577 = vmatpush1.msra.mxu0 0.0
    %1578 = vmatprep.subr.mxu0 0.0
    %1579 = vmatpush1.msra.mxu0 0.0
    %1580 = vmatprep.mubr.f32.mxu0 0.0
    %1581 = vmatmul.mubr.f32.gmra.mrb[0].mxu0 %v1514
    %v1582 = vpop.f32.mrb[0].mxu0
    %v1583 = vadd.f32 0.0, %v1582
    %v1584 = vpop.f32.mrb[0].mxu0
    %1585 = vdwg.mxu0
    %v1586 = vsel %vm507, %v1583, 0.0
    %v1587 = vrot.slane %v1586, 4
    %v1588 = vadd.f32 %v1586, %v1587
    %v1589 = vrot.slane %v1588, 2
    %v1590 = vadd.f32 %v1588, %v1589
    %v1591 = vrot.slane %v1590, 1
    %v1592 = vadd.f32 %v1590, %v1591
    %v1593 = vmul.f32 %v1592, 0.0125
    %v1594 = vsub.f32 %v1508, %v1593
    %v1595 = vmul.f32 %v1594, %v1594
    %v1597 = vsel %vm433, %v1595, 0
    %1599 = vmatprep.subr.mxu0 0.0
    %1600 = vmatpush1.msra.mxu0 %v261
    %1601 = vmatprep.subr.mxu0 0.0
    %1602 = vmatpush1.msra.mxu0 %v262
    %1603 = vmatprep.subr.mxu0 0.0
    %1604 = vmatpush1.msra.mxu0 %v263
    %1605 = vmatprep.subr.mxu0 0.0
    %1606 = vmatpush1.msra.mxu0 %v264
    %1607 = vmatprep.subr.mxu0 0.0
    %1608 = vmatpush1.msra.mxu0 %v265
    %1609 = vmatprep.subr.mxu0 0.0
    %1610 = vmatpush1.msra.mxu0 %v266
    %1611 = vmatprep.subr.mxu0 0.0
    %1612 = vmatpush1.msra.mxu0 %v267
    %1613 = vmatprep.subr.mxu0 0.0
    %1614 = vmatpush1.msra.mxu0 %v268
    %1615 = vmatprep.subr.mxu0 0.0
    %1616 = vmatpush1.msra.mxu0 %v269
    %1617 = vmatprep.subr.mxu0 0.0
    %1618 = vmatpush1.msra.mxu0 %v270
    %1619 = vmatprep.subr.mxu0 0.0
    %1620 = vmatpush1.msra.mxu0 %v271
    %1621 = vmatprep.subr.mxu0 0.0
    %1622 = vmatpush1.msra.mxu0 %v272
    %1623 = vmatprep.subr.mxu0 0.0
    %1624 = vmatpush1.msra.mxu0 %v273
    %1625 = vmatprep.subr.mxu0 0.0
    %1626 = vmatpush1.msra.mxu0 %v274
    %1627 = vmatprep.subr.mxu0 0.0
    %1628 = vmatpush1.msra.mxu0 %v275
    %1629 = vmatprep.subr.mxu0 0.0
    %1630 = vmatpush1.msra.mxu0 0.0
    %1631 = vmatprep.subr.mxu0 0.0
    %1632 = vmatpush1.msra.mxu0 0.0
    %1633 = vmatprep.subr.mxu0 0.0
    %1634 = vmatpush1.msra.mxu0 0.0
    %1635 = vmatprep.subr.mxu0 0.0
    %1636 = vmatpush1.msra.mxu0 0.0
    %1637 = vmatprep.subr.mxu0 0.0
    %1638 = vmatpush1.msra.mxu0 0.0
    %1639 = vmatprep.subr.mxu0 0.0
    %1640 = vmatpush1.msra.mxu0 0.0
    %1641 = vmatprep.subr.mxu0 0.0
    %1642 = vmatpush1.msra.mxu0 0.0
    %1643 = vmatprep.subr.mxu0 0.0
    %1644 = vmatpush1.msra.mxu0 0.0
    %1645 = vmatprep.subr.mxu0 0.0
    %1646 = vmatpush1.msra.mxu0 0.0
    %1647 = vmatprep.subr.mxu0 0.0
    %1648 = vmatpush1.msra.mxu0 0.0
    %1649 = vmatprep.subr.mxu0 0.0
    %1650 = vmatpush1.msra.mxu0 0.0
    %1651 = vmatprep.subr.mxu0 0.0
    %1652 = vmatpush1.msra.mxu0 0.0
    %1653 = vmatprep.subr.mxu0 0.0
    %1654 = vmatpush1.msra.mxu0 0.0
    %1655 = vmatprep.subr.mxu0 0.0
    %1656 = vmatpush1.msra.mxu0 0.0
    %1657 = vmatprep.subr.mxu0 0.0
    %1658 = vmatpush1.msra.mxu0 0.0
    %1659 = vmatprep.subr.mxu0 0.0
    %1660 = vmatpush1.msra.mxu0 0.0
    %1661 = vmatprep.subr.mxu0 0.0
    %1662 = vmatpush1.msra.mxu0 0.0
    %1663 = vmatprep.mubr.f32.mxu0 0.0
    %1664 = vmatmul.mubr.f32.gmra.mrb[0].mxu0 %v1597
    %v1665 = vpop.f32.mrb[0].mxu0
    %v1666 = vadd.f32 0.0, %v1665
    %v1667 = vpop.f32.mrb[0].mxu0
    %1668 = vdwg.mxu0
    %v1669 = vsel %vm507, %v1666, 0.0
    %v1670 = vrot.slane %v1669, 4
    %v1671 = vadd.f32 %v1669, %v1670
    %v1672 = vrot.slane %v1671, 2
    %v1673 = vadd.f32 %v1671, %v1672
    %v1674 = vrot.slane %v1673, 1
    %v1675 = vadd.f32 %v1673, %v1674
    %v1676 = vmul.f32 %v1675, 0.0125
    %v1677 = vadd.f32 %v1676, 1e-05
    %v1678 = vrsqrt.pop %v1677
    %v1679 = vmul.f32 %v1511, %v1678
    %v1680 = vlaneseq
    %v1681 = vshrl.u32 %v1680, 7
    %v1682 = vsub.s32 0, %v1681
    %v1683 = vrot.slane %v1679, %v1682
    %v1684 = vmul.f32 %v1594, %v1683
    %v1685 = vlaneseq
    %v1686 = vshrl.u32 %v1685, 7
    %v1687 = vsub.s32 0, %v1686
    %v1688 = vrot.slane %v1512, %v1687
    %v1689 = vadd.f32 %v1684, %v1688
    %v1690 = vmul.f32 %v1689, 0.1
    %v1691 = vmax.f32 %v1689, %v1690
    %v1692 = vld [vmem:[#allocation13] sm:$0xff]
    %v1693 = vld [vmem:[#allocation13 + $0x8] sm:$0xff]
    %v1694 = vld [vmem:[#allocation13 + $0x10] sm:$0xff]
    %v1695 = vld [vmem:[#allocation13 + $0x18] sm:$0xff]
    %v1696 = vld [vmem:[#allocation13 + $0x20] sm:$0xff]
    %v1697 = vld [vmem:[#allocation13 + $0x28] sm:$0xff]
    %v1698 = vld [vmem:[#allocation13 + $0x30] sm:$0xff]
    %v1699 = vld [vmem:[#allocation13 + $0x38] sm:$0xff]
    %v1700 = vld [vmem:[#allocation13 + $0x40] sm:$0xff]
    %v1701 = vld [vmem:[#allocation13 + $0x48] sm:$0xff]
    %v1702 = vld [vmem:[#allocation13 + $0x50] sm:$0xff]
    %v1703 = vld [vmem:[#allocation13 + $0x58] sm:$0xff]
    %v1704 = vld [vmem:[#allocation13 + $0x60] sm:$0xff]
    %v1705 = vld [vmem:[#allocation13 + $0x68] sm:$0xff]
    %v1706 = vld [vmem:[#allocation13 + $0x70] sm:$0xff]
    %v1708 = vsel %vm433, %v1691, 0
    %1710 = vmatprep.subr.mxu0 0.0
    %1711 = vmatpush1.msra.mxu0 %v1692
    %1712 = vmatprep.subr.mxu0 0.0
    %1713 = vmatpush1.msra.mxu0 %v1693
    %1714 = vmatprep.subr.mxu0 0.0
    %1715 = vmatpush1.msra.mxu0 %v1694
    %1716 = vmatprep.subr.mxu0 0.0
    %1717 = vmatpush1.msra.mxu0 %v1695
    %1718 = vmatprep.subr.mxu0 0.0
    %1719 = vmatpush1.msra.mxu0 %v1696
    %1720 = vmatprep.subr.mxu0 0.0
    %1721 = vmatpush1.msra.mxu0 %v1697
    %1722 = vmatprep.subr.mxu0 0.0
    %1723 = vmatpush1.msra.mxu0 %v1698
    %1724 = vmatprep.subr.mxu0 0.0
    %1725 = vmatpush1.msra.mxu0 %v1699
    %1726 = vmatprep.subr.mxu0 0.0
    %1727 = vmatpush1.msra.mxu0 %v1700
    %1728 = vmatprep.subr.mxu0 0.0
    %1729 = vmatpush1.msra.mxu0 %v1701
    %1730 = vmatprep.subr.mxu0 0.0
    %1731 = vmatpush1.msra.mxu0 %v1702
    %1732 = vmatprep.subr.mxu0 0.0
    %1733 = vmatpush1.msra.mxu0 %v1703
    %1734 = vmatprep.subr.mxu0 0.0
    %1735 = vmatpush1.msra.mxu0 %v1704
    %1736 = vmatprep.subr.mxu0 0.0
    %1737 = vmatpush1.msra.mxu0 %v1705
    %1738 = vmatprep.subr.mxu0 0.0
    %1739 = vmatpush1.msra.mxu0 %v1706
    %1740 = vmatprep.subr.mxu0 0.0
    %1741 = vmatpush1.msra.mxu0 0.0
    %1742 = vmatprep.subr.mxu0 0.0
    %1743 = vmatpush1.msra.mxu0 0.0
    %1744 = vmatprep.subr.mxu0 0.0
    %1745 = vmatpush1.msra.mxu0 0.0
    %1746 = vmatprep.subr.mxu0 0.0
    %1747 = vmatpush1.msra.mxu0 0.0
    %1748 = vmatprep.subr.mxu0 0.0
    %1749 = vmatpush1.msra.mxu0 0.0
    %1750 = vmatprep.subr.mxu0 0.0
    %1751 = vmatpush1.msra.mxu0 0.0
    %1752 = vmatprep.subr.mxu0 0.0
    %1753 = vmatpush1.msra.mxu0 0.0
    %1754 = vmatprep.subr.mxu0 0.0
    %1755 = vmatpush1.msra.mxu0 0.0
    %1756 = vmatprep.subr.mxu0 0.0
    %1757 = vmatpush1.msra.mxu0 0.0
    %1758 = vmatprep.subr.mxu0 0.0
    %1759 = vmatpush1.msra.mxu0 0.0
    %1760 = vmatprep.subr.mxu0 0.0
    %1761 = vmatpush1.msra.mxu0 0.0
    %1762 = vmatprep.subr.mxu0 0.0
    %1763 = vmatpush1.msra.mxu0 0.0
    %1764 = vmatprep.subr.mxu0 0.0
    %1765 = vmatpush1.msra.mxu0 0.0
    %1766 = vmatprep.subr.mxu0 0.0
    %1767 = vmatpush1.msra.mxu0 0.0
    %1768 = vmatprep.subr.mxu0 0.0
    %1769 = vmatpush1.msra.mxu0 0.0
    %1770 = vmatprep.subr.mxu0 0.0
    %1771 = vmatpush1.msra.mxu0 0.0
    %1772 = vmatprep.subr.mxu0 0.0
    %1773 = vmatpush1.msra.mxu0 0.0
    %1774 = vmatprep.mubr.f32.mxu0 0.0
    %1775 = vmatmul.mubr.f32.gmra.mrb[0].mxu0 %v1708
    %v1776 = vpop.f32.mrb[0].mxu0
    %v1777 = vadd.f32 0.0, %v1776
    %v1778 = vpop.f32.mrb[0].mxu0
    %1779 = vdwg.mxu0
    %v1780 = vld [vmem:[#allocation17 + $0x5] sm:$0x1]
    %v1781 = vld [vmem:[#allocation19 + $0x5] sm:$0x1]
    %v1783 = vsel %vm433, %v1777, 0
    %1785 = vmatprep.subr.mxu0 0.0
    %1786 = vmatpush1.msra.mxu0 %v261
    %1787 = vmatprep.subr.mxu0 0.0
    %1788 = vmatpush1.msra.mxu0 %v262
    %1789 = vmatprep.subr.mxu0 0.0
    %1790 = vmatpush1.msra.mxu0 %v263
    %1791 = vmatprep.subr.mxu0 0.0
    %1792 = vmatpush1.msra.mxu0 %v264
    %1793 = vmatprep.subr.mxu0 0.0
    %1794 = vmatpush1.msra.mxu0 %v265
    %1795 = vmatprep.subr.mxu0 0.0
    %1796 = vmatpush1.msra.mxu0 %v266
    %1797 = vmatprep.subr.mxu0 0.0
    %1798 = vmatpush1.msra.mxu0 %v267
    %1799 = vmatprep.subr.mxu0 0.0
    %1800 = vmatpush1.msra.mxu0 %v268
    %1801 = vmatprep.subr.mxu0 0.0
    %1802 = vmatpush1.msra.mxu0 %v269
    %1803 = vmatprep.subr.mxu0 0.0
    %1804 = vmatpush1.msra.mxu0 %v270
    %1805 = vmatprep.subr.mxu0 0.0
    %1806 = vmatpush1.msra.mxu0 %v271
    %1807 = vmatprep.subr.mxu0 0.0
    %1808 = vmatpush1.msra.mxu0 %v272
    %1809 = vmatprep.subr.mxu0 0.0
    %1810 = vmatpush1.msra.mxu0 %v273
    %1811 = vmatprep.subr.mxu0 0.0
    %1812 = vmatpush1.msra.mxu0 %v274
    %1813 = vmatprep.subr.mxu0 0.0
    %1814 = vmatpush1.msra.mxu0 %v275
    %1815 = vmatprep.subr.mxu0 0.0
    %1816 = vmatpush1.msra.mxu0 0.0
    %1817 = vmatprep.subr.mxu0 0.0
    %1818 = vmatpush1.msra.mxu0 0.0
    %1819 = vmatprep.subr.mxu0 0.0
    %1820 = vmatpush1.msra.mxu0 0.0
    %1821 = vmatprep.subr.mxu0 0.0
    %1822 = vmatpush1.msra.mxu0 0.0
    %1823 = vmatprep.subr.mxu0 0.0
    %1824 = vmatpush1.msra.mxu0 0.0
    %1825 = vmatprep.subr.mxu0 0.0
    %1826 = vmatpush1.msra.mxu0 0.0
    %1827 = vmatprep.subr.mxu0 0.0
    %1828 = vmatpush1.msra.mxu0 0.0
    %1829 = vmatprep.subr.mxu0 0.0
    %1830 = vmatpush1.msra.mxu0 0.0
    %1831 = vmatprep.subr.mxu0 0.0
    %1832 = vmatpush1.msra.mxu0 0.0
    %1833 = vmatprep.subr.mxu0 0.0
    %1834 = vmatpush1.msra.mxu0 0.0
    %1835 = vmatprep.subr.mxu0 0.0
    %1836 = vmatpush1.msra.mxu0 0.0
    %1837 = vmatprep.subr.mxu0 0.0
    %1838 = vmatpush1.msra.mxu0 0.0
    %1839 = vmatprep.subr.mxu0 0.0
    %1840 = vmatpush1.msra.mxu0 0.0
    %1841 = vmatprep.subr.mxu0 0.0
    %1842 = vmatpush1.msra.mxu0 0.0
    %1843 = vmatprep.subr.mxu0 0.0
    %1844 = vmatpush1.msra.mxu0 0.0
    %1845 = vmatprep.subr.mxu0 0.0
    %1846 = vmatpush1.msra.mxu0 0.0
    %1847 = vmatprep.subr.mxu0 0.0
    %1848 = vmatpush1.msra.mxu0 0.0
    %1849 = vmatprep.mubr.f32.mxu0 0.0
    %1850 = vmatmul.mubr.f32.gmra.mrb[0].mxu0 %v1783
    %v1851 = vpop.f32.mrb[0].mxu0
    %v1852 = vadd.f32 0.0, %v1851
    %v1853 = vpop.f32.mrb[0].mxu0
    %1854 = vdwg.mxu0
    %v1855 = vsel %vm507, %v1852, 0.0
    %v1856 = vrot.slane %v1855, 4
    %v1857 = vadd.f32 %v1855, %v1856
    %v1858 = vrot.slane %v1857, 2
    %v1859 = vadd.f32 %v1857, %v1858
    %v1860 = vrot.slane %v1859, 1
    %v1861 = vadd.f32 %v1859, %v1860
    %v1862 = vmul.f32 %v1861, 0.0125
    %v1863 = vsub.f32 %v1777, %v1862
    %v1864 = vmul.f32 %v1863, %v1863
    %v1866 = vsel %vm433, %v1864, 0
    %1868 = vmatprep.subr.mxu0 0.0
    %1869 = vmatpush1.msra.mxu0 %v261
    %1870 = vmatprep.subr.mxu0 0.0
    %1871 = vmatpush1.msra.mxu0 %v262
    %1872 = vmatprep.subr.mxu0 0.0
    %1873 = vmatpush1.msra.mxu0 %v263
    %1874 = vmatprep.subr.mxu0 0.0
    %1875 = vmatpush1.msra.mxu0 %v264
    %1876 = vmatprep.subr.mxu0 0.0
    %1877 = vmatpush1.msra.mxu0 %v265
    %1878 = vmatprep.subr.mxu0 0.0
    %1879 = vmatpush1.msra.mxu0 %v266
    %1880 = vmatprep.subr.mxu0 0.0
    %1881 = vmatpush1.msra.mxu0 %v267
    %1882 = vmatprep.subr.mxu0 0.0
    %1883 = vmatpush1.msra.mxu0 %v268
    %1884 = vmatprep.subr.mxu0 0.0
    %1885 = vmatpush1.msra.mxu0 %v269
    %1886 = vmatprep.subr.mxu0 0.0
    %1887 = vmatpush1.msra.mxu0 %v270
    %1888 = vmatprep.subr.mxu0 0.0
    %1889 = vmatpush1.msra.mxu0 %v271
    %1890 = vmatprep.subr.mxu0 0.0
    %1891 = vmatpush1.msra.mxu0 %v272
    %1892 = vmatprep.subr.mxu0 0.0
    %1893 = vmatpush1.msra.mxu0 %v273
    %1894 = vmatprep.subr.mxu0 0.0
    %1895 = vmatpush1.msra.mxu0 %v274
    %1896 = vmatprep.subr.mxu0 0.0
    %1897 = vmatpush1.msra.mxu0 %v275
    %1898 = vmatprep.subr.mxu0 0.0
    %1899 = vmatpush1.msra.mxu0 0.0
    %1900 = vmatprep.subr.mxu0 0.0
    %1901 = vmatpush1.msra.mxu0 0.0
    %1902 = vmatprep.subr.mxu0 0.0
    %1903 = vmatpush1.msra.mxu0 0.0
    %1904 = vmatprep.subr.mxu0 0.0
    %1905 = vmatpush1.msra.mxu0 0.0
    %1906 = vmatprep.subr.mxu0 0.0
    %1907 = vmatpush1.msra.mxu0 0.0
    %1908 = vmatprep.subr.mxu0 0.0
    %1909 = vmatpush1.msra.mxu0 0.0
    %1910 = vmatprep.subr.mxu0 0.0
    %1911 = vmatpush1.msra.mxu0 0.0
    %1912 = vmatprep.subr.mxu0 0.0
    %1913 = vmatpush1.msra.mxu0 0.0
    %1914 = vmatprep.subr.mxu0 0.0
    %1915 = vmatpush1.msra.mxu0 0.0
    %1916 = vmatprep.subr.mxu0 0.0
    %1917 = vmatpush1.msra.mxu0 0.0
    %1918 = vmatprep.subr.mxu0 0.0
    %1919 = vmatpush1.msra.mxu0 0.0
    %1920 = vmatprep.subr.mxu0 0.0
    %1921 = vmatpush1.msra.mxu0 0.0
    %1922 = vmatprep.subr.mxu0 0.0
    %1923 = vmatpush1.msra.mxu0 0.0
    %1924 = vmatprep.subr.mxu0 0.0
    %1925 = vmatpush1.msra.mxu0 0.0
    %1926 = vmatprep.subr.mxu0 0.0
    %1927 = vmatpush1.msra.mxu0 0.0
    %1928 = vmatprep.subr.mxu0 0.0
    %1929 = vmatpush1.msra.mxu0 0.0
    %1930 = vmatprep.subr.mxu0 0.0
    %1931 = vmatpush1.msra.mxu0 0.0
    %1932 = vmatprep.mubr.f32.mxu0 0.0
    %1933 = vmatmul.mubr.f32.gmra.mrb[0].mxu0 %v1866
    %v1934 = vpop.f32.mrb[0].mxu0
    %v1935 = vadd.f32 0.0, %v1934
    %v1936 = vpop.f32.mrb[0].mxu0
    %1937 = vdwg.mxu0
    %v1938 = vsel %vm507, %v1935, 0.0
    %v1939 = vrot.slane %v1938, 4
    %v1940 = vadd.f32 %v1938, %v1939
    %v1941 = vrot.slane %v1940, 2
    %v1942 = vadd.f32 %v1940, %v1941
    %v1943 = vrot.slane %v1942, 1
    %v1944 = vadd.f32 %v1942, %v1943
    %v1945 = vmul.f32 %v1944, 0.0125
    %v1946 = vadd.f32 %v1945, 1e-05
    %v1947 = vrsqrt.pop %v1946
    %v1948 = vmul.f32 %v1780, %v1947
    %v1949 = vlaneseq
    %v1950 = vshrl.u32 %v1949, 7
    %v1951 = vsub.s32 0, %v1950
    %v1952 = vrot.slane %v1948, %v1951
    %v1953 = vmul.f32 %v1863, %v1952
    %v1954 = vlaneseq
    %v1955 = vshrl.u32 %v1954, 7
    %v1956 = vsub.s32 0, %v1955
    %v1957 = vrot.slane %v1781, %v1956
    %v1958 = vadd.f32 %v1953, %v1957
    %v1959 = vadd.f32 %v1958, %v1422
    %v1960 = vmul.f32 %v1959, 0.1
    %v1961 = vmax.f32 %v1959, %v1960
    %v1962 = vld [vmem:[#allocation20] sm:$0xff]
    %v1963 = vld [vmem:[#allocation20 + $0x8] sm:$0xff]
    %v1964 = vld [vmem:[#allocation20 + $0x10] sm:$0xff]
    %v1965 = vld [vmem:[#allocation20 + $0x18] sm:$0xff]
    %v1966 = vld [vmem:[#allocation20 + $0x20] sm:$0xff]
    %v1967 = vld [vmem:[#allocation20 + $0x28] sm:$0xff]
    %v1968 = vld [vmem:[#allocation20 + $0x30] sm:$0xff]
    %v1969 = vld [vmem:[#allocation20 + $0x38] sm:$0xff]
    %v1970 = vld [vmem:[#allocation20 + $0x40] sm:$0xff]
    %v1971 = vld [vmem:[#allocation20 + $0x48] sm:$0xff]
    %v1972 = vld [vmem:[#allocation20 + $0x50] sm:$0xff]
    %v1973 = vld [vmem:[#allocation20 + $0x58] sm:$0xff]
    %v1974 = vld [vmem:[#allocation20 + $0x60] sm:$0xff]
    %v1975 = vld [vmem:[#allocation20 + $0x68] sm:$0xff]
    %v1976 = vld [vmem:[#allocation20 + $0x70] sm:$0xff]
    %v1977 = vld [vmem:[#allocation20 + $0x78] sm:$0xff]
    %v1978 = vld [vmem:[#allocation20 + $0x80] sm:$0xff]
    %v1979 = vld [vmem:[#allocation20 + $0x88] sm:$0xff]
    %v1980 = vld [vmem:[#allocation20 + $0x90] sm:$0xff]
    %v1981 = vld [vmem:[#allocation20 + $0x98] sm:$0xff]
    %v1982 = vld [vmem:[#allocation20 + $0xa0] sm:$0xff]
    %v1983 = vld [vmem:[#allocation20 + $0xa8] sm:$0xff]
    %v1984 = vld [vmem:[#allocation20 + $0xb0] sm:$0xff]
    %v1985 = vld [vmem:[#allocation20 + $0xb8] sm:$0xff]
    %v1986 = vld [vmem:[#allocation20 + $0xc0] sm:$0xff]
    %v1987 = vld [vmem:[#allocation20 + $0xc8] sm:$0xff]
    %v1988 = vld [vmem:[#allocation20 + $0xd0] sm:$0xff]
    %v1989 = vld [vmem:[#allocation20 + $0xd8] sm:$0xff]
    %v1990 = vld [vmem:[#allocation20 + $0xe0] sm:$0xff]
    %v1991 = vld [vmem:[#allocation20 + $0xe8] sm:$0xff]
    %v1992 = vld [vmem:[#allocation20 + $0xf0] sm:$0xff]
    %v1993 = vld [vmem:[#allocation20 + $0xf8] sm:$0xff]
    %v1994 = vld [vmem:[#allocation20 + $0x100] sm:$0xff]
    %v1995 = vld [vmem:[#allocation20 + $0x108] sm:$0xff]
    %v1996 = vld [vmem:[#allocation20 + $0x110] sm:$0xff]
    %v1997 = vld [vmem:[#allocation20 + $0x118] sm:$0xff]
    %v1998 = vld [vmem:[#allocation20 + $0x120] sm:$0xff]
    %v1999 = vld [vmem:[#allocation20 + $0x128] sm:$0xff]
    %v2000 = vld [vmem:[#allocation20 + $0x130] sm:$0xff]
    %v2001 = vld [vmem:[#allocation20 + $0x138] sm:$0xff]
    %v2002 = vld [vmem:[#allocation20 + $0x140] sm:$0xff]
    %v2003 = vld [vmem:[#allocation20 + $0x148] sm:$0xff]
    %v2004 = vld [vmem:[#allocation20 + $0x150] sm:$0xff]
    %v2005 = vld [vmem:[#allocation20 + $0x158] sm:$0xff]
    %v2006 = vld [vmem:[#allocation20 + $0x160] sm:$0xff]
    %v2007 = vld [vmem:[#allocation20 + $0x168] sm:$0xff]
    %v2008 = vld [vmem:[#allocation20 + $0x170] sm:$0xff]
    %v2009 = vld [vmem:[#allocation20 + $0x178] sm:$0xff]
    %v2010 = vld [vmem:[#allocation20 + $0x180] sm:$0xff]
    %v2011 = vld [vmem:[#allocation20 + $0x188] sm:$0xff]
    %v2012 = vld [vmem:[#allocation20 + $0x190] sm:$0xff]
    %v2013 = vld [vmem:[#allocation20 + $0x198] sm:$0xff]
    %v2014 = vld [vmem:[#allocation20 + $0x1a0] sm:$0xff]
    %v2015 = vld [vmem:[#allocation20 + $0x1a8] sm:$0xff]
    %v2016 = vld [vmem:[#allocation20 + $0x1b0] sm:$0xff]
    %v2017 = vld [vmem:[#allocation20 + $0x1b8] sm:$0xff]
    %v2018 = vld [vmem:[#allocation20 + $0x1c0] sm:$0xff]
    %v2019 = vld [vmem:[#allocation20 + $0x1c8] sm:$0xff]
    %v2020 = vld [vmem:[#allocation20 + $0x1d0] sm:$0xff]
    %v2021 = vld [vmem:[#allocation20 + $0x1d8] sm:$0xff]
    %v2022 = vld [vmem:[#allocation20 + $0x1e0] sm:$0xff]
    %v2023 = vld [vmem:[#allocation20 + $0x1e8] sm:$0xff]
    %v2024 = vld [vmem:[#allocation20 + $0x1f0] sm:$0xff]
    %v2025 = vld [vmem:[#allocation20 + $0x1f8] sm:$0xff]
    %v2026 = vld [vmem:[#allocation20 + $0x200] sm:$0xff]
    %v2027 = vld [vmem:[#allocation20 + $0x208] sm:$0xff]
    %v2028 = vld [vmem:[#allocation20 + $0x210] sm:$0xff]
    %v2029 = vld [vmem:[#allocation20 + $0x218] sm:$0xff]
    %v2030 = vld [vmem:[#allocation20 + $0x220] sm:$0xff]
    %v2031 = vld [vmem:[#allocation20 + $0x228] sm:$0xff]
    %v2032 = vld [vmem:[#allocation20 + $0x230] sm:$0xff]
    %v2033 = vld [vmem:[#allocation20 + $0x238] sm:$0xff]
    %v2034 = vld [vmem:[#allocation20 + $0x240] sm:$0xff]
    %v2035 = vld [vmem:[#allocation20 + $0x248] sm:$0xff]
    %v2036 = vld [vmem:[#allocation20 + $0x250] sm:$0xff]
    %v2037 = vld [vmem:[#allocation20 + $0x258] sm:$0xff]
    %v2038 = vld [vmem:[#allocation20 + $0x260] sm:$0xff]
    %v2039 = vld [vmem:[#allocation20 + $0x268] sm:$0xff]
    %v2040 = vld [vmem:[#allocation20 + $0x270] sm:$0xff]
    %v2041 = vld [vmem:[#allocation20 + $0x278] sm:$0xff]
    %v2042 = vld [vmem:[#allocation20 + $0x280] sm:$0xff]
    %v2043 = vld [vmem:[#allocation20 + $0x288] sm:$0xff]
    %v2044 = vld [vmem:[#allocation20 + $0x290] sm:$0xff]
    %v2045 = vld [vmem:[#allocation20 + $0x298] sm:$0xff]
    %v2046 = vld [vmem:[#allocation20 + $0x2a0] sm:$0xff]
    %v2047 = vld [vmem:[#allocation20 + $0x2a8] sm:$0xff]
    %v2048 = vld [vmem:[#allocation20 + $0x2b0] sm:$0xff]
    %v2049 = vld [vmem:[#allocation20 + $0x2b8] sm:$0xff]
    %v2050 = vld [vmem:[#allocation20 + $0x2c0] sm:$0xff]
    %v2051 = vld [vmem:[#allocation20 + $0x2c8] sm:$0xff]
    %v2052 = vld [vmem:[#allocation20 + $0x2d0] sm:$0xff]
    %v2053 = vld [vmem:[#allocation20 + $0x2d8] sm:$0xff]
    %v2054 = vld [vmem:[#allocation20 + $0x2e0] sm:$0xff]
    %v2055 = vld [vmem:[#allocation20 + $0x2e8] sm:$0xff]
    %v2056 = vld [vmem:[#allocation20 + $0x2f0] sm:$0xff]
    %v2057 = vld [vmem:[#allocation20 + $0x2f8] sm:$0xff]
    %v2058 = vld [vmem:[#allocation20 + $0x300] sm:$0xff]
    %v2059 = vld [vmem:[#allocation20 + $0x308] sm:$0xff]
    %v2060 = vld [vmem:[#allocation20 + $0x310] sm:$0xff]
    %v2061 = vld [vmem:[#allocation20 + $0x318] sm:$0xff]
    %v2062 = vld [vmem:[#allocation20 + $0x320] sm:$0xff]
    %v2063 = vld [vmem:[#allocation20 + $0x328] sm:$0xff]
    %v2064 = vld [vmem:[#allocation20 + $0x330] sm:$0xff]
    %v2065 = vld [vmem:[#allocation20 + $0x338] sm:$0xff]
    %v2066 = vld [vmem:[#allocation20 + $0x340] sm:$0xff]
    %v2067 = vld [vmem:[#allocation20 + $0x348] sm:$0xff]
    %v2068 = vld [vmem:[#allocation20 + $0x350] sm:$0xff]
    %v2069 = vld [vmem:[#allocation20 + $0x358] sm:$0xff]
    %v2070 = vld [vmem:[#allocation20 + $0x360] sm:$0xff]
    %v2071 = vld [vmem:[#allocation20 + $0x368] sm:$0xff]
    %v2072 = vld [vmem:[#allocation20 + $0x370] sm:$0xff]
    %v2073 = vld [vmem:[#allocation20 + $0x378] sm:$0xff]
    %v2074 = vld [vmem:[#allocation20 + $0x380] sm:$0xff]
    %v2075 = vld [vmem:[#allocation20 + $0x388] sm:$0xff]
    %v2076 = vld [vmem:[#allocation20 + $0x390] sm:$0xff]
    %v2077 = vld [vmem:[#allocation20 + $0x398] sm:$0xff]
    %v2078 = vld [vmem:[#allocation20 + $0x3a0] sm:$0xff]
    %v2079 = vld [vmem:[#allocation20 + $0x3a8] sm:$0xff]
    %v2080 = vld [vmem:[#allocation20 + $0x3b0] sm:$0xff]
    %v2081 = vld [vmem:[#allocation20 + $0x3b8] sm:$0xff]
    %v2082 = vld [vmem:[#allocation20 + $0x3c0] sm:$0xff]
    %v2083 = vld [vmem:[#allocation20 + $0x3c8] sm:$0xff]
    %v2084 = vld [vmem:[#allocation20 + $0x3d0] sm:$0xff]
    %v2085 = vld [vmem:[#allocation20 + $0x3d8] sm:$0xff]
    %v2086 = vld [vmem:[#allocation20 + $0x3e0] sm:$0xff]
    %v2087 = vld [vmem:[#allocation20 + $0x3e8] sm:$0xff]
    %v2088 = vld [vmem:[#allocation20 + $0x3f0] sm:$0xff]
    %v2089 = vld [vmem:[#allocation20 + $0x3f8] sm:$0xff]
    %v2090 = vld [vmem:[#allocation20 + $0x400] sm:$0xff]
    %v2091 = vld [vmem:[#allocation20 + $0x408] sm:$0xff]
    %v2092 = vld [vmem:[#allocation20 + $0x410] sm:$0xff]
    %v2093 = vld [vmem:[#allocation20 + $0x418] sm:$0xff]
    %v2094 = vld [vmem:[#allocation20 + $0x420] sm:$0xff]
    %v2095 = vld [vmem:[#allocation20 + $0x428] sm:$0xff]
    %v2096 = vld [vmem:[#allocation20 + $0x430] sm:$0xff]
    %v2097 = vld [vmem:[#allocation20 + $0x438] sm:$0xff]
    %v2098 = vld [vmem:[#allocation20 + $0x440] sm:$0xff]
    %v2099 = vld [vmem:[#allocation20 + $0x448] sm:$0xff]
    %v2100 = vld [vmem:[#allocation20 + $0x450] sm:$0xff]
    %v2101 = vld [vmem:[#allocation20 + $0x458] sm:$0xff]
    %v2102 = vld [vmem:[#allocation20 + $0x460] sm:$0xff]
    %v2103 = vld [vmem:[#allocation20 + $0x468] sm:$0xff]
    %v2104 = vld [vmem:[#allocation20 + $0x470] sm:$0xff]
    %v2105 = vld [vmem:[#allocation20 + $0x478] sm:$0xff]
    %v2106 = vld [vmem:[#allocation20 + $0x480] sm:$0xff]
    %v2107 = vld [vmem:[#allocation20 + $0x488] sm:$0xff]
    %v2108 = vld [vmem:[#allocation20 + $0x490] sm:$0xff]
    %v2109 = vld [vmem:[#allocation20 + $0x498] sm:$0xff]
    %v2110 = vld [vmem:[#allocation20 + $0x4a0] sm:$0xff]
    %v2111 = vld [vmem:[#allocation20 + $0x4a8] sm:$0xff]
    %v2112 = vld [vmem:[#allocation20 + $0x4b0] sm:$0xff]
    %v2113 = vld [vmem:[#allocation20 + $0x4b8] sm:$0xff]
    %v2114 = vld [vmem:[#allocation20 + $0x4c0] sm:$0xff]
    %v2115 = vld [vmem:[#allocation20 + $0x4c8] sm:$0xff]
    %v2116 = vld [vmem:[#allocation20 + $0x4d0] sm:$0xff]
    %v2117 = vld [vmem:[#allocation20 + $0x4d8] sm:$0xff]
    %v2118 = vld [vmem:[#allocation20 + $0x4e0] sm:$0xff]
    %v2119 = vld [vmem:[#allocation20 + $0x4e8] sm:$0xff]
    %v2120 = vld [vmem:[#allocation20 + $0x4f0] sm:$0xff]
    %v2121 = vld [vmem:[#allocation20 + $0x4f8] sm:$0xff]
    %v2122 = vld [vmem:[#allocation20 + $0x500] sm:$0xff]
    %v2123 = vld [vmem:[#allocation20 + $0x508] sm:$0xff]
    %v2124 = vld [vmem:[#allocation20 + $0x510] sm:$0xff]
    %v2125 = vld [vmem:[#allocation20 + $0x518] sm:$0xff]
    %v2126 = vld [vmem:[#allocation20 + $0x520] sm:$0xff]
    %v2127 = vld [vmem:[#allocation20 + $0x528] sm:$0xff]
    %v2128 = vld [vmem:[#allocation20 + $0x530] sm:$0xff]
    %v2129 = vld [vmem:[#allocation20 + $0x538] sm:$0xff]
    %v2130 = vld [vmem:[#allocation20 + $0x540] sm:$0xff]
    %v2131 = vld [vmem:[#allocation20 + $0x548] sm:$0xff]
    %v2132 = vld [vmem:[#allocation20 + $0x550] sm:$0xff]
    %v2133 = vld [vmem:[#allocation20 + $0x558] sm:$0xff]
    %v2134 = vld [vmem:[#allocation20 + $0x560] sm:$0xff]
    %v2135 = vld [vmem:[#allocation20 + $0x568] sm:$0xff]
    %v2136 = vld [vmem:[#allocation20 + $0x570] sm:$0xff]
    %v2137 = vld [vmem:[#allocation20 + $0x578] sm:$0xff]
    %v2138 = vld [vmem:[#allocation20 + $0x580] sm:$0xff]
    %v2139 = vld [vmem:[#allocation20 + $0x588] sm:$0xff]
    %v2140 = vld [vmem:[#allocation20 + $0x590] sm:$0xff]
    %v2141 = vld [vmem:[#allocation20 + $0x598] sm:$0xff]
    %v2142 = vld [vmem:[#allocation20 + $0x5a0] sm:$0xff]
    %v2143 = vld [vmem:[#allocation20 + $0x5a8] sm:$0xff]
    %v2144 = vld [vmem:[#allocation20 + $0x5b0] sm:$0xff]
    %v2145 = vld [vmem:[#allocation20 + $0x5b8] sm:$0xff]
    %v2146 = vld [vmem:[#allocation20 + $0x5c0] sm:$0xff]
    %v2147 = vld [vmem:[#allocation20 + $0x5c8] sm:$0xff]
    %v2148 = vld [vmem:[#allocation20 + $0x5d0] sm:$0xff]
    %v2149 = vld [vmem:[#allocation20 + $0x5d8] sm:$0xff]
    %v2150 = vld [vmem:[#allocation20 + $0x5e0] sm:$0xff]
    %v2151 = vld [vmem:[#allocation20 + $0x5e8] sm:$0xff]
    %v2152 = vld [vmem:[#allocation20 + $0x5f0] sm:$0xff]
    %v2153 = vld [vmem:[#allocation20 + $0x5f8] sm:$0xff]
    %v2154 = vld [vmem:[#allocation20 + $0x600] sm:$0xff]
    %v2155 = vld [vmem:[#allocation20 + $0x608] sm:$0xff]
    %v2156 = vld [vmem:[#allocation20 + $0x610] sm:$0xff]
    %v2157 = vld [vmem:[#allocation20 + $0x618] sm:$0xff]
    %v2158 = vld [vmem:[#allocation20 + $0x620] sm:$0xff]
    %v2159 = vld [vmem:[#allocation20 + $0x628] sm:$0xff]
    %v2160 = vld [vmem:[#allocation20 + $0x630] sm:$0xff]
    %v2161 = vld [vmem:[#allocation20 + $0x638] sm:$0xff]
    %v2162 = vld [vmem:[#allocation20 + $0x640] sm:$0xff]
    %v2163 = vld [vmem:[#allocation20 + $0x648] sm:$0xff]
    %v2164 = vld [vmem:[#allocation20 + $0x650] sm:$0xff]
    %v2165 = vld [vmem:[#allocation20 + $0x658] sm:$0xff]
    %v2166 = vld [vmem:[#allocation20 + $0x660] sm:$0xff]
    %v2167 = vld [vmem:[#allocation20 + $0x668] sm:$0xff]
    %v2168 = vld [vmem:[#allocation20 + $0x670] sm:$0xff]
    %v2169 = vld [vmem:[#allocation20 + $0x678] sm:$0xff]
    %v2170 = vld [vmem:[#allocation20 + $0x680] sm:$0xff]
    %v2171 = vld [vmem:[#allocation20 + $0x688] sm:$0xff]
    %v2172 = vld [vmem:[#allocation20 + $0x690] sm:$0xff]
    %v2173 = vld [vmem:[#allocation20 + $0x698] sm:$0xff]
    %v2174 = vld [vmem:[#allocation20 + $0x6a0] sm:$0xff]
    %v2175 = vld [vmem:[#allocation20 + $0x6a8] sm:$0xff]
    %v2176 = vld [vmem:[#allocation20 + $0x6b0] sm:$0xff]
    %v2177 = vld [vmem:[#allocation20 + $0x6b8] sm:$0xff]
    %v2178 = vld [vmem:[#allocation20 + $0x6c0] sm:$0xff]
    %v2179 = vld [vmem:[#allocation20 + $0x6c8] sm:$0xff]
    %v2180 = vld [vmem:[#allocation20 + $0x6d0] sm:$0xff]
    %v2181 = vld [vmem:[#allocation20 + $0x6d8] sm:$0xff]
    %v2182 = vld [vmem:[#allocation20 + $0x6e0] sm:$0xff]
    %v2183 = vld [vmem:[#allocation20 + $0x6e8] sm:$0xff]
    %v2184 = vld [vmem:[#allocation20 + $0x6f0] sm:$0xff]
    %v2185 = vld [vmem:[#allocation20 + $0x6f8] sm:$0xff]
    %v2186 = vld [vmem:[#allocation20 + $0x700] sm:$0xff]
    %v2187 = vld [vmem:[#allocation20 + $0x708] sm:$0xff]
    %v2188 = vld [vmem:[#allocation20 + $0x710] sm:$0xff]
    %v2189 = vld [vmem:[#allocation20 + $0x718] sm:$0xff]
    %v2190 = vld [vmem:[#allocation20 + $0x720] sm:$0xff]
    %v2191 = vld [vmem:[#allocation20 + $0x728] sm:$0xff]
    %v2192 = vld [vmem:[#allocation20 + $0x730] sm:$0xff]
    %v2193 = vld [vmem:[#allocation20 + $0x738] sm:$0xff]
    %v2194 = vld [vmem:[#allocation20 + $0x740] sm:$0xff]
    %v2195 = vld [vmem:[#allocation20 + $0x748] sm:$0xff]
    %v2196 = vld [vmem:[#allocation20 + $0x750] sm:$0xff]
    %v2197 = vld [vmem:[#allocation20 + $0x758] sm:$0xff]
    %v2198 = vld [vmem:[#allocation20 + $0x760] sm:$0xff]
    %v2199 = vld [vmem:[#allocation20 + $0x768] sm:$0xff]
    %v2200 = vld [vmem:[#allocation20 + $0x770] sm:$0xff]
    %v2201 = vld [vmem:[#allocation20 + $0x778] sm:$0xff]
    %v2202 = vld [vmem:[#allocation20 + $0x780] sm:$0xff]
    %v2203 = vld [vmem:[#allocation20 + $0x788] sm:$0xff]
    %v2204 = vld [vmem:[#allocation20 + $0x790] sm:$0xff]
    %v2205 = vld [vmem:[#allocation20 + $0x798] sm:$0xff]
    %v2206 = vld [vmem:[#allocation20 + $0x7a0] sm:$0xff]
    %v2207 = vld [vmem:[#allocation20 + $0x7a8] sm:$0xff]
    %v2208 = vld [vmem:[#allocation20 + $0x7b0] sm:$0xff]
    %v2209 = vld [vmem:[#allocation20 + $0x7b8] sm:$0xff]
    %v2210 = vld [vmem:[#allocation20 + $0x7c0] sm:$0xff]
    %v2211 = vld [vmem:[#allocation20 + $0x7c8] sm:$0xff]
    %v2212 = vld [vmem:[#allocation20 + $0x7d0] sm:$0xff]
    %v2213 = vld [vmem:[#allocation20 + $0x7d8] sm:$0xff]
    %v2214 = vld [vmem:[#allocation20 + $0x7e0] sm:$0xff]
    %v2215 = vld [vmem:[#allocation20 + $0x7e8] sm:$0xff]
    %v2216 = vld [vmem:[#allocation20 + $0x7f0] sm:$0xff]
    %v2217 = vld [vmem:[#allocation20 + $0x7f8] sm:$0xff]
    %v2218 = vld [vmem:[#allocation20 + $0x800] sm:$0xff]
    %v2219 = vld [vmem:[#allocation20 + $0x808] sm:$0xff]
    %v2220 = vld [vmem:[#allocation20 + $0x810] sm:$0xff]
    %v2221 = vld [vmem:[#allocation20 + $0x818] sm:$0xff]
    %v2222 = vld [vmem:[#allocation20 + $0x820] sm:$0xff]
    %v2223 = vld [vmem:[#allocation20 + $0x828] sm:$0xff]
    %v2224 = vld [vmem:[#allocation20 + $0x830] sm:$0xff]
    %v2225 = vld [vmem:[#allocation20 + $0x838] sm:$0xff]
    %v2226 = vld [vmem:[#allocation20 + $0x840] sm:$0xff]
    %v2227 = vld [vmem:[#allocation20 + $0x848] sm:$0xff]
    %v2228 = vld [vmem:[#allocation20 + $0x850] sm:$0xff]
    %v2229 = vld [vmem:[#allocation20 + $0x858] sm:$0xff]
    %v2230 = vld [vmem:[#allocation20 + $0x860] sm:$0xff]
    %v2231 = vld [vmem:[#allocation20 + $0x868] sm:$0xff]
    %v2232 = vld [vmem:[#allocation20 + $0x870] sm:$0xff]
    %v2233 = vld [vmem:[#allocation20 + $0x878] sm:$0xff]
    %v2234 = vld [vmem:[#allocation20 + $0x880] sm:$0xff]
    %v2235 = vld [vmem:[#allocation20 + $0x888] sm:$0xff]
    %v2236 = vld [vmem:[#allocation20 + $0x890] sm:$0xff]
    %v2237 = vld [vmem:[#allocation20 + $0x898] sm:$0xff]
    %v2238 = vld [vmem:[#allocation20 + $0x8a0] sm:$0xff]
    %v2239 = vld [vmem:[#allocation20 + $0x8a8] sm:$0xff]
    %v2240 = vld [vmem:[#allocation20 + $0x8b0] sm:$0xff]
    %v2241 = vld [vmem:[#allocation20 + $0x8b8] sm:$0xff]
    %v2242 = vld [vmem:[#allocation20 + $0x8c0] sm:$0xff]
    %v2243 = vld [vmem:[#allocation20 + $0x8c8] sm:$0xff]
    %v2244 = vld [vmem:[#allocation20 + $0x8d0] sm:$0xff]
    %v2245 = vld [vmem:[#allocation20 + $0x8d8] sm:$0xff]
    %v2246 = vld [vmem:[#allocation20 + $0x8e0] sm:$0xff]
    %v2247 = vld [vmem:[#allocation20 + $0x8e8] sm:$0xff]
    %v2248 = vld [vmem:[#allocation20 + $0x8f0] sm:$0xff]
    %v2249 = vld [vmem:[#allocation20 + $0x8f8] sm:$0xff]
    %v2250 = vld [vmem:[#allocation20 + $0x900] sm:$0xff]
    %v2251 = vld [vmem:[#allocation20 + $0x908] sm:$0xff]
    %v2252 = vld [vmem:[#allocation20 + $0x910] sm:$0xff]
    %v2253 = vld [vmem:[#allocation20 + $0x918] sm:$0xff]
    %v2254 = vld [vmem:[#allocation20 + $0x920] sm:$0xff]
    %v2255 = vld [vmem:[#allocation20 + $0x928] sm:$0xff]
    %v2256 = vld [vmem:[#allocation20 + $0x930] sm:$0xff]
    %v2257 = vld [vmem:[#allocation20 + $0x938] sm:$0xff]
    %v2258 = vld [vmem:[#allocation20 + $0x940] sm:$0xff]
    %v2259 = vld [vmem:[#allocation20 + $0x948] sm:$0xff]
    %v2260 = vld [vmem:[#allocation20 + $0x950] sm:$0xff]
    %v2261 = vld [vmem:[#allocation20 + $0x958] sm:$0xff]
    %v2262 = vld [vmem:[#allocation20 + $0x960] sm:$0xff]
    %v2263 = vld [vmem:[#allocation20 + $0x968] sm:$0xff]
    %v2264 = vld [vmem:[#allocation20 + $0x970] sm:$0xff]
    %v2265 = vld [vmem:[#allocation20 + $0x978] sm:$0xff]
    %v2266 = vld [vmem:[#allocation20 + $0x980] sm:$0xff]
    %v2267 = vld [vmem:[#allocation20 + $0x988] sm:$0xff]
    %v2268 = vld [vmem:[#allocation20 + $0x990] sm:$0xff]
    %v2269 = vld [vmem:[#allocation20 + $0x998] sm:$0xff]
    %v2270 = vld [vmem:[#allocation20 + $0x9a0] sm:$0xff]
    %v2271 = vld [vmem:[#allocation20 + $0x9a8] sm:$0xff]
    %v2272 = vld [vmem:[#allocation20 + $0x9b0] sm:$0xff]
    %v2273 = vld [vmem:[#allocation20 + $0x9b8] sm:$0xff]
    %v2274 = vld [vmem:[#allocation20 + $0x9c0] sm:$0xff]
    %v2275 = vld [vmem:[#allocation20 + $0x9c8] sm:$0xff]
    %v2276 = vld [vmem:[#allocation20 + $0x9d0] sm:$0xff]
    %v2277 = vld [vmem:[#allocation20 + $0x9d8] sm:$0xff]
    %v2278 = vld [vmem:[#allocation20 + $0x9e0] sm:$0xff]
    %v2279 = vld [vmem:[#allocation20 + $0x9e8] sm:$0xff]
    %v2280 = vld [vmem:[#allocation20 + $0x9f0] sm:$0xff]
    %v2281 = vld [vmem:[#allocation20 + $0x9f8] sm:$0xff]
    %v2282 = vld [vmem:[#allocation20 + $0xa00] sm:$0xff]
    %v2283 = vld [vmem:[#allocation20 + $0xa08] sm:$0xff]
    %v2284 = vld [vmem:[#allocation20 + $0xa10] sm:$0xff]
    %v2285 = vld [vmem:[#allocation20 + $0xa18] sm:$0xff]
    %v2286 = vld [vmem:[#allocation20 + $0xa20] sm:$0xff]
    %v2287 = vld [vmem:[#allocation20 + $0xa28] sm:$0xff]
    %v2288 = vld [vmem:[#allocation20 + $0xa30] sm:$0xff]
    %v2289 = vld [vmem:[#allocation20 + $0xa38] sm:$0xff]
    %v2290 = vld [vmem:[#allocation20 + $0xa40] sm:$0xff]
    %v2291 = vld [vmem:[#allocation20 + $0xa48] sm:$0xff]
    %v2292 = vld [vmem:[#allocation20 + $0xa50] sm:$0xff]
    %v2293 = vld [vmem:[#allocation20 + $0xa58] sm:$0xff]
    %v2294 = vld [vmem:[#allocation20 + $0xa60] sm:$0xff]
    %v2295 = vld [vmem:[#allocation20 + $0xa68] sm:$0xff]
    %v2296 = vld [vmem:[#allocation20 + $0xa70] sm:$0xff]
    %v2297 = vld [vmem:[#allocation20 + $0xa78] sm:$0xff]
    %v2298 = vld [vmem:[#allocation20 + $0xa80] sm:$0xff]
    %v2299 = vld [vmem:[#allocation20 + $0xa88] sm:$0xff]
    %v2300 = vld [vmem:[#allocation20 + $0xa90] sm:$0xff]
    %v2301 = vld [vmem:[#allocation20 + $0xa98] sm:$0xff]
    %v2302 = vld [vmem:[#allocation20 + $0xaa0] sm:$0xff]
    %v2303 = vld [vmem:[#allocation20 + $0xaa8] sm:$0xff]
    %v2304 = vld [vmem:[#allocation20 + $0xab0] sm:$0xff]
    %v2305 = vld [vmem:[#allocation20 + $0xab8] sm:$0xff]
    %v2306 = vld [vmem:[#allocation20 + $0xac0] sm:$0xff]
    %v2307 = vld [vmem:[#allocation20 + $0xac8] sm:$0xff]
    %v2308 = vld [vmem:[#allocation20 + $0xad0] sm:$0xff]
    %v2309 = vld [vmem:[#allocation20 + $0xad8] sm:$0xff]
    %v2310 = vld [vmem:[#allocation20 + $0xae0] sm:$0xff]
    %v2311 = vld [vmem:[#allocation20 + $0xae8] sm:$0xff]
    %v2312 = vld [vmem:[#allocation20 + $0xaf0] sm:$0xff]
    %v2313 = vld [vmem:[#allocation20 + $0xaf8] sm:$0xff]
    %v2314 = vld [vmem:[#allocation20 + $0xb00] sm:$0xff]
    %v2315 = vld [vmem:[#allocation20 + $0xb08] sm:$0xff]
    %v2316 = vld [vmem:[#allocation20 + $0xb10] sm:$0xff]
    %v2317 = vld [vmem:[#allocation20 + $0xb18] sm:$0xff]
    %v2318 = vld [vmem:[#allocation20 + $0xb20] sm:$0xff]
    %v2319 = vld [vmem:[#allocation20 + $0xb28] sm:$0xff]
    %v2320 = vld [vmem:[#allocation20 + $0xb30] sm:$0xff]
    %v2321 = vld [vmem:[#allocation20 + $0xb38] sm:$0xff]
    %v2322 = vld [vmem:[#allocation22] sm:$0xff]
    %v2323 = vld [vmem:[#allocation22 + $0x8] sm:$0xff]
    %v2324 = vld [vmem:[#allocation22 + $0x10] sm:$0xff]
    %v2328 = vlaneseq
    %v2329 = vshrl.u32 %v2328, 7
    %v2330 = vsub.s32 0, %v2329
    %v2331 = vrot.slane %v2322, %v2330
    %v2332 = vlaneseq
    %v2333 = vshrl.u32 %v2332, 7
    %v2334 = vsub.s32 1, %v2333
    %v2335 = vrot.slane %v2322, %v2334
    %v2336 = vlaneseq
    %v2337 = vshrl.u32 %v2336, 7
    %v2338 = vsub.s32 2, %v2337
    %v2339 = vrot.slane %v2322, %v2338
    %v2340 = vlaneseq
    %v2341 = vshrl.u32 %v2340, 7
    %v2342 = vsub.s32 3, %v2341
    %v2343 = vrot.slane %v2322, %v2342
    %v2344 = vlaneseq
    %v2345 = vshrl.u32 %v2344, 7
    %v2346 = vsub.s32 4, %v2345
    %v2347 = vrot.slane %v2322, %v2346
    %v2348 = vlaneseq
    %v2349 = vshrl.u32 %v2348, 7
    %v2350 = vsub.s32 5, %v2349
    %v2351 = vrot.slane %v2322, %v2350
    %v2352 = vlaneseq
    %v2353 = vshrl.u32 %v2352, 7
    %v2354 = vsub.s32 6, %v2353
    %v2355 = vrot.slane %v2322, %v2354
    %v2356 = vlaneseq
    %v2357 = vshrl.u32 %v2356, 7
    %v2358 = vsub.s32 7, %v2357
    %v2359 = vrot.slane %v2322, %v2358
    %v2360 = vlaneseq
    %v2361 = vshrl.u32 %v2360, 7
    %v2362 = vsub.s32 0, %v2361
    %v2363 = vrot.slane %v2323, %v2362
    %v2364 = vlaneseq
    %v2365 = vshrl.u32 %v2364, 7
    %v2366 = vsub.s32 1, %v2365
    %v2367 = vrot.slane %v2323, %v2366
    %v2368 = vlaneseq
    %v2369 = vshrl.u32 %v2368, 7
    %v2370 = vsub.s32 2, %v2369
    %v2371 = vrot.slane %v2323, %v2370
    %v2372 = vlaneseq
    %v2373 = vshrl.u32 %v2372, 7
    %v2374 = vsub.s32 3, %v2373
    %v2375 = vrot.slane %v2323, %v2374
    %v2376 = vlaneseq
    %v2377 = vshrl.u32 %v2376, 7
    %v2378 = vsub.s32 4, %v2377
    %v2379 = vrot.slane %v2323, %v2378
    %v2380 = vlaneseq
    %v2381 = vshrl.u32 %v2380, 7
    %v2382 = vsub.s32 5, %v2381
    %v2383 = vrot.slane %v2323, %v2382
    %v2384 = vlaneseq
    %v2385 = vshrl.u32 %v2384, 7
    %v2386 = vsub.s32 6, %v2385
    %v2387 = vrot.slane %v2323, %v2386
    %v2388 = vlaneseq
    %v2389 = vshrl.u32 %v2388, 7
    %v2390 = vsub.s32 7, %v2389
    %v2391 = vrot.slane %v2323, %v2390
    %v2392 = vlaneseq
    %v2393 = vshrl.u32 %v2392, 7
    %v2394 = vsub.s32 0, %v2393
    %v2395 = vrot.slane %v2324, %v2394
    %v2396 = vlaneseq
    %v2397 = vshrl.u32 %v2396, 7
    %v2398 = vsub.s32 1, %v2397
    %v2399 = vrot.slane %v2324, %v2398
    %v2400 = vlaneseq
    %v2401 = vshrl.u32 %v2400, 7
    %v2402 = vsub.s32 2, %v2401
    %v2403 = vrot.slane %v2324, %v2402
    %v2404 = vlaneseq
    %v2405 = vshrl.u32 %v2404, 7
    %v2406 = vsub.s32 3, %v2405
    %v2407 = vrot.slane %v2324, %v2406
    %v2408 = vlaneseq
    %v2409 = vshrl.u32 %v2408, 7
    %v2410 = vsub.s32 4, %v2409
    %v2411 = vrot.slane %v2324, %v2410
    %v2412 = vlaneseq
    %v2413 = vshrl.u32 %v2412, 7
    %v2414 = vsub.s32 5, %v2413
    %v2415 = vrot.slane %v2324, %v2414
    %v2416 = vlaneseq
    %v2417 = vshrl.u32 %v2416, 7
    %v2418 = vsub.s32 6, %v2417
    %v2419 = vrot.slane %v2324, %v2418
    %v2420 = vlaneseq
    %v2421 = vshrl.u32 %v2420, 7
    %v2422 = vsub.s32 7, %v2421
    %v2423 = vrot.slane %v2324, %v2422
    %v2449 = vsel %vm433, %v1961, 0
    %2451 = vmatprep.subr.mxu0 %v1963
    %2452 = vmatpush1.msra.mxu0 %v1962
    %2453 = vmatprep.subr.mxu0 %v1987
    %2454 = vmatpush1.msra.mxu0 %v1986
    %2455 = vmatprep.subr.mxu0 %v2011
    %2456 = vmatpush1.msra.mxu0 %v2010
    %2457 = vmatprep.subr.mxu0 %v2035
    %2458 = vmatpush1.msra.mxu0 %v2034
    %2459 = vmatprep.subr.mxu0 %v2059
    %2460 = vmatpush1.msra.mxu0 %v2058
    %2461 = vmatprep.subr.mxu0 %v2083
    %2462 = vmatpush1.msra.mxu0 %v2082
    %2463 = vmatprep.subr.mxu0 %v2107
    %2464 = vmatpush1.msra.mxu0 %v2106
    %2465 = vmatprep.subr.mxu0 %v2131
    %2466 = vmatpush1.msra.mxu0 %v2130
    %2467 = vmatprep.subr.mxu0 %v2155
    %2468 = vmatpush1.msra.mxu0 %v2154
    %2469 = vmatprep.subr.mxu0 %v2179
    %2470 = vmatpush1.msra.mxu0 %v2178
    %2471 = vmatprep.subr.mxu0 %v2203
    %2472 = vmatpush1.msra.mxu0 %v2202
    %2473 = vmatprep.subr.mxu0 %v2227
    %2474 = vmatpush1.msra.mxu0 %v2226
    %2475 = vmatprep.subr.mxu0 %v2251
    %2476 = vmatpush1.msra.mxu0 %v2250
    %2477 = vmatprep.subr.mxu0 %v2275
    %2478 = vmatpush1.msra.mxu0 %v2274
    %2479 = vmatprep.subr.mxu0 %v2299
    %2480 = vmatpush1.msra.mxu0 %v2298
    %2481 = vmatprep.subr.mxu0 0.0
    %2482 = vmatpush1.msra.mxu0 0.0
    %2483 = vmatprep.subr.mxu0 0.0
    %2484 = vmatpush1.msra.mxu0 0.0
    %2485 = vmatprep.subr.mxu0 0.0
    %2486 = vmatpush1.msra.mxu0 0.0
    %2487 = vmatprep.subr.mxu0 0.0
    %2488 = vmatpush1.msra.mxu0 0.0
    %2489 = vmatprep.subr.mxu0 0.0
    %2490 = vmatpush1.msra.mxu0 0.0
    %2491 = vmatprep.subr.mxu0 0.0
    %2492 = vmatpush1.msra.mxu0 0.0
    %2493 = vmatprep.subr.mxu0 0.0
    %2494 = vmatpush1.msra.mxu0 0.0
    %2495 = vmatprep.subr.mxu0 0.0
    %2496 = vmatpush1.msra.mxu0 0.0
    %2497 = vmatprep.subr.mxu0 0.0
    %2498 = vmatpush1.msra.mxu0 0.0
    %2499 = vmatprep.subr.mxu0 0.0
    %2500 = vmatpush1.msra.mxu0 0.0
    %2501 = vmatprep.subr.mxu0 0.0
    %2502 = vmatpush1.msra.mxu0 0.0
    %2503 = vmatprep.subr.mxu0 0.0
    %2504 = vmatpush1.msra.mxu0 0.0
    %2505 = vmatprep.subr.mxu0 0.0
    %2506 = vmatpush1.msra.mxu0 0.0
    %2507 = vmatprep.subr.mxu0 0.0
    %2508 = vmatpush1.msra.mxu0 0.0
    %2509 = vmatprep.subr.mxu0 0.0
    %2510 = vmatpush1.msra.mxu0 0.0
    %2511 = vmatprep.subr.mxu0 0.0
    %2512 = vmatpush1.msra.mxu0 0.0
    %2513 = vmatprep.subr.mxu0 0.0
    %2514 = vmatpush1.msra.mxu0 0.0
    %2515 = vmatprep.mubr.f32.mxu0 0.0
    %2516 = vmatmul.mubr.f32.gmra.mrb[0].mxu0 %v2449
    %v2517 = vpop.f32.mrb[0].mxu0
    %v2518 = vadd.f32 %v2331, %v2517
    %v2519 = vpop.f32.mrb[0].mxu0
    %v2520 = vadd.f32 %v2335, %v2519
    %2521 = vdwg.mxu0
    %2522 = vmatprep.subr.mxu0 %v1965
    %2523 = vmatpush1.msra.mxu0 %v1964
    %2524 = vmatprep.subr.mxu0 %v1989
    %2525 = vmatpush1.msra.mxu0 %v1988
    %2526 = vmatprep.subr.mxu0 %v2013
    %2527 = vmatpush1.msra.mxu0 %v2012
    %2528 = vmatprep.subr.mxu0 %v2037
    %2529 = vmatpush1.msra.mxu0 %v2036
    %2530 = vmatprep.subr.mxu0 %v2061
    %2531 = vmatpush1.msra.mxu0 %v2060
    %2532 = vmatprep.subr.mxu0 %v2085
    %2533 = vmatpush1.msra.mxu0 %v2084
    %2534 = vmatprep.subr.mxu0 %v2109
    %2535 = vmatpush1.msra.mxu0 %v2108
    %2536 = vmatprep.subr.mxu0 %v2133
    %2537 = vmatpush1.msra.mxu0 %v2132
    %2538 = vmatprep.subr.mxu0 %v2157
    %2539 = vmatpush1.msra.mxu0 %v2156
    %2540 = vmatprep.subr.mxu0 %v2181
    %2541 = vmatpush1.msra.mxu0 %v2180
    %2542 = vmatprep.subr.mxu0 %v2205
    %2543 = vmatpush1.msra.mxu0 %v2204
    %2544 = vmatprep.subr.mxu0 %v2229
    %2545 = vmatpush1.msra.mxu0 %v2228
    %2546 = vmatprep.subr.mxu0 %v2253
    %2547 = vmatpush1.msra.mxu0 %v2252
    %2548 = vmatprep.subr.mxu0 %v2277
    %2549 = vmatpush1.msra.mxu0 %v2276
    %2550 = vmatprep.subr.mxu0 %v2301
    %2551 = vmatpush1.msra.mxu0 %v2300
    %2552 = vmatprep.subr.mxu0 0.0
    %2553 = vmatpush1.msra.mxu0 0.0
    %2554 = vmatprep.subr.mxu0 0.0
    %2555 = vmatpush1.msra.mxu0 0.0
    %2556 = vmatprep.subr.mxu0 0.0
    %2557 = vmatpush1.msra.mxu0 0.0
    %2558 = vmatprep.subr.mxu0 0.0
    %2559 = vmatpush1.msra.mxu0 0.0
    %2560 = vmatprep.subr.mxu0 0.0
    %2561 = vmatpush1.msra.mxu0 0.0
    %2562 = vmatprep.subr.mxu0 0.0
    %2563 = vmatpush1.msra.mxu0 0.0
    %2564 = vmatprep.subr.mxu0 0.0
    %2565 = vmatpush1.msra.mxu0 0.0
    %2566 = vmatprep.subr.mxu0 0.0
    %2567 = vmatpush1.msra.mxu0 0.0
    %2568 = vmatprep.subr.mxu0 0.0
    %2569 = vmatpush1.msra.mxu0 0.0
    %2570 = vmatprep.subr.mxu0 0.0
    %2571 = vmatpush1.msra.mxu0 0.0
    %2572 = vmatprep.subr.mxu0 0.0
    %2573 = vmatpush1.msra.mxu0 0.0
    %2574 = vmatprep.subr.mxu0 0.0
    %2575 = vmatpush1.msra.mxu0 0.0
    %2576 = vmatprep.subr.mxu0 0.0
    %2577 = vmatpush1.msra.mxu0 0.0
    %2578 = vmatprep.subr.mxu0 0.0
    %2579 = vmatpush1.msra.mxu0 0.0
    %2580 = vmatprep.subr.mxu0 0.0
    %2581 = vmatpush1.msra.mxu0 0.0
    %2582 = vmatprep.subr.mxu0 0.0
    %2583 = vmatpush1.msra.mxu0 0.0
    %2584 = vmatprep.subr.mxu0 0.0
    %2585 = vmatpush1.msra.mxu0 0.0
    %2586 = vmatprep.mubr.f32.mxu0 0.0
    %2587 = vmatmul.mubr.f32.gmra.mrb[0].mxu0 %v2449
    %v2588 = vpop.f32.mrb[0].mxu0
    %v2589 = vadd.f32 %v2339, %v2588
    %v2590 = vpop.f32.mrb[0].mxu0
    %v2591 = vadd.f32 %v2343, %v2590
    %2592 = vdwg.mxu0
    %2593 = vmatprep.subr.mxu0 %v1967
    %2594 = vmatpush1.msra.mxu0 %v1966
    %2595 = vmatprep.subr.mxu0 %v1991
    %2596 = vmatpush1.msra.mxu0 %v1990
    %2597 = vmatprep.subr.mxu0 %v2015
    %2598 = vmatpush1.msra.mxu0 %v2014
    %2599 = vmatprep.subr.mxu0 %v2039
    %2600 = vmatpush1.msra.mxu0 %v2038
    %2601 = vmatprep.subr.mxu0 %v2063
    %2602 = vmatpush1.msra.mxu0 %v2062
    %2603 = vmatprep.subr.mxu0 %v2087
    %2604 = vmatpush1.msra.mxu0 %v2086
    %2605 = vmatprep.subr.mxu0 %v2111
    %2606 = vmatpush1.msra.mxu0 %v2110
    %2607 = vmatprep.subr.mxu0 %v2135
    %2608 = vmatpush1.msra.mxu0 %v2134
    %2609 = vmatprep.subr.mxu0 %v2159
    %2610 = vmatpush1.msra.mxu0 %v2158
    %2611 = vmatprep.subr.mxu0 %v2183
    %2612 = vmatpush1.msra.mxu0 %v2182
    %2613 = vmatprep.subr.mxu0 %v2207
    %2614 = vmatpush1.msra.mxu0 %v2206
    %2615 = vmatprep.subr.mxu0 %v2231
    %2616 = vmatpush1.msra.mxu0 %v2230
    %2617 = vmatprep.subr.mxu0 %v2255
    %2618 = vmatpush1.msra.mxu0 %v2254
    %2619 = vmatprep.subr.mxu0 %v2279
    %2620 = vmatpush1.msra.mxu0 %v2278
    %2621 = vmatprep.subr.mxu0 %v2303
    %2622 = vmatpush1.msra.mxu0 %v2302
    %2623 = vmatprep.subr.mxu0 0.0
    %2624 = vmatpush1.msra.mxu0 0.0
    %2625 = vmatprep.subr.mxu0 0.0
    %2626 = vmatpush1.msra.mxu0 0.0
    %2627 = vmatprep.subr.mxu0 0.0
    %2628 = vmatpush1.msra.mxu0 0.0
    %2629 = vmatprep.subr.mxu0 0.0
    %2630 = vmatpush1.msra.mxu0 0.0
    %2631 = vmatprep.subr.mxu0 0.0
    %2632 = vmatpush1.msra.mxu0 0.0
    %2633 = vmatprep.subr.mxu0 0.0
    %2634 = vmatpush1.msra.mxu0 0.0
    %2635 = vmatprep.subr.mxu0 0.0
    %2636 = vmatpush1.msra.mxu0 0.0
    %2637 = vmatprep.subr.mxu0 0.0
    %2638 = vmatpush1.msra.mxu0 0.0
    %2639 = vmatprep.subr.mxu0 0.0
    %2640 = vmatpush1.msra.mxu0 0.0
    %2641 = vmatprep.subr.mxu0 0.0
    %2642 = vmatpush1.msra.mxu0 0.0
    %2643 = vmatprep.subr.mxu0 0.0
    %2644 = vmatpush1.msra.mxu0 0.0
    %2645 = vmatprep.subr.mxu0 0.0
    %2646 = vmatpush1.msra.mxu0 0.0
    %2647 = vmatprep.subr.mxu0 0.0
    %2648 = vmatpush1.msra.mxu0 0.0
    %2649 = vmatprep.subr.mxu0 0.0
    %2650 = vmatpush1.msra.mxu0 0.0
    %2651 = vmatprep.subr.mxu0 0.0
    %2652 = vmatpush1.msra.mxu0 0.0
    %2653 = vmatprep.subr.mxu0 0.0
    %2654 = vmatpush1.msra.mxu0 0.0
    %2655 = vmatprep.subr.mxu0 0.0
    %2656 = vmatpush1.msra.mxu0 0.0
    %2657 = vmatprep.mubr.f32.mxu0 0.0
    %2658 = vmatmul.mubr.f32.gmra.mrb[0].mxu0 %v2449
    %v2659 = vpop.f32.mrb[0].mxu0
    %v2660 = vadd.f32 %v2347, %v2659
    %v2661 = vpop.f32.mrb[0].mxu0
    %v2662 = vadd.f32 %v2351, %v2661
    %2663 = vdwg.mxu0
    %2664 = vmatprep.subr.mxu0 %v1969
    %2665 = vmatpush1.msra.mxu0 %v1968
    %2666 = vmatprep.subr.mxu0 %v1993
    %2667 = vmatpush1.msra.mxu0 %v1992
    %2668 = vmatprep.subr.mxu0 %v2017
    %2669 = vmatpush1.msra.mxu0 %v2016
    %2670 = vmatprep.subr.mxu0 %v2041
    %2671 = vmatpush1.msra.mxu0 %v2040
    %2672 = vmatprep.subr.mxu0 %v2065
    %2673 = vmatpush1.msra.mxu0 %v2064
    %2674 = vmatprep.subr.mxu0 %v2089
    %2675 = vmatpush1.msra.mxu0 %v2088
    %2676 = vmatprep.subr.mxu0 %v2113
    %2677 = vmatpush1.msra.mxu0 %v2112
    %2678 = vmatprep.subr.mxu0 %v2137
    %2679 = vmatpush1.msra.mxu0 %v2136
    %2680 = vmatprep.subr.mxu0 %v2161
    %2681 = vmatpush1.msra.mxu0 %v2160
    %2682 = vmatprep.subr.mxu0 %v2185
    %2683 = vmatpush1.msra.mxu0 %v2184
    %2684 = vmatprep.subr.mxu0 %v2209
    %2685 = vmatpush1.msra.mxu0 %v2208
    %2686 = vmatprep.subr.mxu0 %v2233
    %2687 = vmatpush1.msra.mxu0 %v2232
    %2688 = vmatprep.subr.mxu0 %v2257
    %2689 = vmatpush1.msra.mxu0 %v2256
    %2690 = vmatprep.subr.mxu0 %v2281
    %2691 = vmatpush1.msra.mxu0 %v2280
    %2692 = vmatprep.subr.mxu0 %v2305
    %2693 = vmatpush1.msra.mxu0 %v2304
    %2694 = vmatprep.subr.mxu0 0.0
    %2695 = vmatpush1.msra.mxu0 0.0
    %2696 = vmatprep.subr.mxu0 0.0
    %2697 = vmatpush1.msra.mxu0 0.0
    %2698 = vmatprep.subr.mxu0 0.0
    %2699 = vmatpush1.msra.mxu0 0.0
    %2700 = vmatprep.subr.mxu0 0.0
    %2701 = vmatpush1.msra.mxu0 0.0
    %2702 = vmatprep.subr.mxu0 0.0
    %2703 = vmatpush1.msra.mxu0 0.0
    %2704 = vmatprep.subr.mxu0 0.0
    %2705 = vmatpush1.msra.mxu0 0.0
    %2706 = vmatprep.subr.mxu0 0.0
    %2707 = vmatpush1.msra.mxu0 0.0
    %2708 = vmatprep.subr.mxu0 0.0
    %2709 = vmatpush1.msra.mxu0 0.0
    %2710 = vmatprep.subr.mxu0 0.0
    %2711 = vmatpush1.msra.mxu0 0.0
    %2712 = vmatprep.subr.mxu0 0.0
    %2713 = vmatpush1.msra.mxu0 0.0
    %2714 = vmatprep.subr.mxu0 0.0
    %2715 = vmatpush1.msra.mxu0 0.0
    %2716 = vmatprep.subr.mxu0 0.0
    %2717 = vmatpush1.msra.mxu0 0.0
    %2718 = vmatprep.subr.mxu0 0.0
    %2719 = vmatpush1.msra.mxu0 0.0
    %2720 = vmatprep.subr.mxu0 0.0
    %2721 = vmatpush1.msra.mxu0 0.0
    %2722 = vmatprep.subr.mxu0 0.0
    %2723 = vmatpush1.msra.mxu0 0.0
    %2724 = vmatprep.subr.mxu0 0.0
    %2725 = vmatpush1.msra.mxu0 0.0
    %2726 = vmatprep.subr.mxu0 0.0
    %2727 = vmatpush1.msra.mxu0 0.0
    %2728 = vmatprep.mubr.f32.mxu0 0.0
    %2729 = vmatmul.mubr.f32.gmra.mrb[0].mxu0 %v2449
    %v2730 = vpop.f32.mrb[0].mxu0
    %v2731 = vadd.f32 %v2355, %v2730
    %v2732 = vpop.f32.mrb[0].mxu0
    %v2733 = vadd.f32 %v2359, %v2732
    %2734 = vdwg.mxu0
    %2735 = vmatprep.subr.mxu0 %v1971
    %2736 = vmatpush1.msra.mxu0 %v1970
    %2737 = vmatprep.subr.mxu0 %v1995
    %2738 = vmatpush1.msra.mxu0 %v1994
    %2739 = vmatprep.subr.mxu0 %v2019
    %2740 = vmatpush1.msra.mxu0 %v2018
    %2741 = vmatprep.subr.mxu0 %v2043
    %2742 = vmatpush1.msra.mxu0 %v2042
    %2743 = vmatprep.subr.mxu0 %v2067
    %2744 = vmatpush1.msra.mxu0 %v2066
    %2745 = vmatprep.subr.mxu0 %v2091
    %2746 = vmatpush1.msra.mxu0 %v2090
    %2747 = vmatprep.subr.mxu0 %v2115
    %2748 = vmatpush1.msra.mxu0 %v2114
    %2749 = vmatprep.subr.mxu0 %v2139
    %2750 = vmatpush1.msra.mxu0 %v2138
    %2751 = vmatprep.subr.mxu0 %v2163
    %2752 = vmatpush1.msra.mxu0 %v2162
    %2753 = vmatprep.subr.mxu0 %v2187
    %2754 = vmatpush1.msra.mxu0 %v2186
    %2755 = vmatprep.subr.mxu0 %v2211
    %2756 = vmatpush1.msra.mxu0 %v2210
    %2757 = vmatprep.subr.mxu0 %v2235
    %2758 = vmatpush1.msra.mxu0 %v2234
    %2759 = vmatprep.subr.mxu0 %v2259
    %2760 = vmatpush1.msra.mxu0 %v2258
    %2761 = vmatprep.subr.mxu0 %v2283
    %2762 = vmatpush1.msra.mxu0 %v2282
    %2763 = vmatprep.subr.mxu0 %v2307
    %2764 = vmatpush1.msra.mxu0 %v2306
    %2765 = vmatprep.subr.mxu0 0.0
    %2766 = vmatpush1.msra.mxu0 0.0
    %2767 = vmatprep.subr.mxu0 0.0
    %2768 = vmatpush1.msra.mxu0 0.0
    %2769 = vmatprep.subr.mxu0 0.0
    %2770 = vmatpush1.msra.mxu0 0.0
    %2771 = vmatprep.subr.mxu0 0.0
    %2772 = vmatpush1.msra.mxu0 0.0
    %2773 = vmatprep.subr.mxu0 0.0
    %2774 = vmatpush1.msra.mxu0 0.0
    %2775 = vmatprep.subr.mxu0 0.0
    %2776 = vmatpush1.msra.mxu0 0.0
    %2777 = vmatprep.subr.mxu0 0.0
    %2778 = vmatpush1.msra.mxu0 0.0
    %2779 = vmatprep.subr.mxu0 0.0
    %2780 = vmatpush1.msra.mxu0 0.0
    %2781 = vmatprep.subr.mxu0 0.0
    %2782 = vmatpush1.msra.mxu0 0.0
    %2783 = vmatprep.subr.mxu0 0.0
    %2784 = vmatpush1.msra.mxu0 0.0
    %2785 = vmatprep.subr.mxu0 0.0
    %2786 = vmatpush1.msra.mxu0 0.0
    %2787 = vmatprep.subr.mxu0 0.0
    %2788 = vmatpush1.msra.mxu0 0.0
    %2789 = vmatprep.subr.mxu0 0.0
    %2790 = vmatpush1.msra.mxu0 0.0
    %2791 = vmatprep.subr.mxu0 0.0
    %2792 = vmatpush1.msra.mxu0 0.0
    %2793 = vmatprep.subr.mxu0 0.0
    %2794 = vmatpush1.msra.mxu0 0.0
    %2795 = vmatprep.subr.mxu0 0.0
    %2796 = vmatpush1.msra.mxu0 0.0
    %2797 = vmatprep.subr.mxu0 0.0
    %2798 = vmatpush1.msra.mxu0 0.0
    %2799 = vmatprep.mubr.f32.mxu0 0.0
    %2800 = vmatmul.mubr.f32.gmra.mrb[0].mxu0 %v2449
    %v2801 = vpop.f32.mrb[0].mxu0
    %v2802 = vadd.f32 %v2363, %v2801
    %v2803 = vpop.f32.mrb[0].mxu0
    %v2804 = vadd.f32 %v2367, %v2803
    %2805 = vdwg.mxu0
    %2806 = vmatprep.subr.mxu0 %v1973
    %2807 = vmatpush1.msra.mxu0 %v1972
    %2808 = vmatprep.subr.mxu0 %v1997
    %2809 = vmatpush1.msra.mxu0 %v1996
    %2810 = vmatprep.subr.mxu0 %v2021
    %2811 = vmatpush1.msra.mxu0 %v2020
    %2812 = vmatprep.subr.mxu0 %v2045
    %2813 = vmatpush1.msra.mxu0 %v2044
    %2814 = vmatprep.subr.mxu0 %v2069
    %2815 = vmatpush1.msra.mxu0 %v2068
    %2816 = vmatprep.subr.mxu0 %v2093
    %2817 = vmatpush1.msra.mxu0 %v2092
    %2818 = vmatprep.subr.mxu0 %v2117
    %2819 = vmatpush1.msra.mxu0 %v2116
    %2820 = vmatprep.subr.mxu0 %v2141
    %2821 = vmatpush1.msra.mxu0 %v2140
    %2822 = vmatprep.subr.mxu0 %v2165
    %2823 = vmatpush1.msra.mxu0 %v2164
    %2824 = vmatprep.subr.mxu0 %v2189
    %2825 = vmatpush1.msra.mxu0 %v2188
    %2826 = vmatprep.subr.mxu0 %v2213
    %2827 = vmatpush1.msra.mxu0 %v2212
    %2828 = vmatprep.subr.mxu0 %v2237
    %2829 = vmatpush1.msra.mxu0 %v2236
    %2830 = vmatprep.subr.mxu0 %v2261
    %2831 = vmatpush1.msra.mxu0 %v2260
    %2832 = vmatprep.subr.mxu0 %v2285
    %2833 = vmatpush1.msra.mxu0 %v2284
    %2834 = vmatprep.subr.mxu0 %v2309
    %2835 = vmatpush1.msra.mxu0 %v2308
    %2836 = vmatprep.subr.mxu0 0.0
    %2837 = vmatpush1.msra.mxu0 0.0
    %2838 = vmatprep.subr.mxu0 0.0
    %2839 = vmatpush1.msra.mxu0 0.0
    %2840 = vmatprep.subr.mxu0 0.0
    %2841 = vmatpush1.msra.mxu0 0.0
    %2842 = vmatprep.subr.mxu0 0.0
    %2843 = vmatpush1.msra.mxu0 0.0
    %2844 = vmatprep.subr.mxu0 0.0
    %2845 = vmatpush1.msra.mxu0 0.0
    %2846 = vmatprep.subr.mxu0 0.0
    %2847 = vmatpush1.msra.mxu0 0.0
    %2848 = vmatprep.subr.mxu0 0.0
    %2849 = vmatpush1.msra.mxu0 0.0
    %2850 = vmatprep.subr.mxu0 0.0
    %2851 = vmatpush1.msra.mxu0 0.0
    %2852 = vmatprep.subr.mxu0 0.0
    %2853 = vmatpush1.msra.mxu0 0.0
    %2854 = vmatprep.subr.mxu0 0.0
    %2855 = vmatpush1.msra.mxu0 0.0
    %2856 = vmatprep.subr.mxu0 0.0
    %2857 = vmatpush1.msra.mxu0 0.0
    %2858 = vmatprep.subr.mxu0 0.0
    %2859 = vmatpush1.msra.mxu0 0.0
    %2860 = vmatprep.subr.mxu0 0.0
    %2861 = vmatpush1.msra.mxu0 0.0
    %2862 = vmatprep.subr.mxu0 0.0
    %2863 = vmatpush1.msra.mxu0 0.0
    %2864 = vmatprep.subr.mxu0 0.0
    %2865 = vmatpush1.msra.mxu0 0.0
    %2866 = vmatprep.subr.mxu0 0.0
    %2867 = vmatpush1.msra.mxu0 0.0
    %2868 = vmatprep.subr.mxu0 0.0
    %2869 = vmatpush1.msra.mxu0 0.0
    %2870 = vmatprep.mubr.f32.mxu0 0.0
    %2871 = vmatmul.mubr.f32.gmra.mrb[0].mxu0 %v2449
    %v2872 = vpop.f32.mrb[0].mxu0
    %v2873 = vadd.f32 %v2371, %v2872
    %v2874 = vpop.f32.mrb[0].mxu0
    %v2875 = vadd.f32 %v2375, %v2874
    %2876 = vdwg.mxu0
    %2877 = vmatprep.subr.mxu0 %v1975
    %2878 = vmatpush1.msra.mxu0 %v1974
    %2879 = vmatprep.subr.mxu0 %v1999
    %2880 = vmatpush1.msra.mxu0 %v1998
    %2881 = vmatprep.subr.mxu0 %v2023
    %2882 = vmatpush1.msra.mxu0 %v2022
    %2883 = vmatprep.subr.mxu0 %v2047
    %2884 = vmatpush1.msra.mxu0 %v2046
    %2885 = vmatprep.subr.mxu0 %v2071
    %2886 = vmatpush1.msra.mxu0 %v2070
    %2887 = vmatprep.subr.mxu0 %v2095
    %2888 = vmatpush1.msra.mxu0 %v2094
    %2889 = vmatprep.subr.mxu0 %v2119
    %2890 = vmatpush1.msra.mxu0 %v2118
    %2891 = vmatprep.subr.mxu0 %v2143
    %2892 = vmatpush1.msra.mxu0 %v2142
    %2893 = vmatprep.subr.mxu0 %v2167
    %2894 = vmatpush1.msra.mxu0 %v2166
    %2895 = vmatprep.subr.mxu0 %v2191
    %2896 = vmatpush1.msra.mxu0 %v2190
    %2897 = vmatprep.subr.mxu0 %v2215
    %2898 = vmatpush1.msra.mxu0 %v2214
    %2899 = vmatprep.subr.mxu0 %v2239
    %2900 = vmatpush1.msra.mxu0 %v2238
    %2901 = vmatprep.subr.mxu0 %v2263
    %2902 = vmatpush1.msra.mxu0 %v2262
    %2903 = vmatprep.subr.mxu0 %v2287
    %2904 = vmatpush1.msra.mxu0 %v2286
    %2905 = vmatprep.subr.mxu0 %v2311
    %2906 = vmatpush1.msra.mxu0 %v2310
    %2907 = vmatprep.subr.mxu0 0.0
    %2908 = vmatpush1.msra.mxu0 0.0
    %2909 = vmatprep.subr.mxu0 0.0
    %2910 = vmatpush1.msra.mxu0 0.0
    %2911 = vmatprep.subr.mxu0 0.0
    %2912 = vmatpush1.msra.mxu0 0.0
    %2913 = vmatprep.subr.mxu0 0.0
    %2914 = vmatpush1.msra.mxu0 0.0
    %2915 = vmatprep.subr.mxu0 0.0
    %2916 = vmatpush1.msra.mxu0 0.0
    %2917 = vmatprep.subr.mxu0 0.0
    %2918 = vmatpush1.msra.mxu0 0.0
    %2919 = vmatprep.subr.mxu0 0.0
    %2920 = vmatpush1.msra.mxu0 0.0
    %2921 = vmatprep.subr.mxu0 0.0
    %2922 = vmatpush1.msra.mxu0 0.0
    %2923 = vmatprep.subr.mxu0 0.0
    %2924 = vmatpush1.msra.mxu0 0.0
    %2925 = vmatprep.subr.mxu0 0.0
    %2926 = vmatpush1.msra.mxu0 0.0
    %2927 = vmatprep.subr.mxu0 0.0
    %2928 = vmatpush1.msra.mxu0 0.0
    %2929 = vmatprep.subr.mxu0 0.0
    %2930 = vmatpush1.msra.mxu0 0.0
    %2931 = vmatprep.subr.mxu0 0.0
    %2932 = vmatpush1.msra.mxu0 0.0
    %2933 = vmatprep.subr.mxu0 0.0
    %2934 = vmatpush1.msra.mxu0 0.0
    %2935 = vmatprep.subr.mxu0 0.0
    %2936 = vmatpush1.msra.mxu0 0.0
    %2937 = vmatprep.subr.mxu0 0.0
    %2938 = vmatpush1.msra.mxu0 0.0
    %2939 = vmatprep.subr.mxu0 0.0
    %2940 = vmatpush1.msra.mxu0 0.0
    %2941 = vmatprep.mubr.f32.mxu0 0.0
    %2942 = vmatmul.mubr.f32.gmra.mrb[0].mxu0 %v2449
    %v2943 = vpop.f32.mrb[0].mxu0
    %v2944 = vadd.f32 %v2379, %v2943
    %v2945 = vpop.f32.mrb[0].mxu0
    %v2946 = vadd.f32 %v2383, %v2945
    %2947 = vdwg.mxu0
    %2948 = vmatprep.subr.mxu0 %v1977
    %2949 = vmatpush1.msra.mxu0 %v1976
    %2950 = vmatprep.subr.mxu0 %v2001
    %2951 = vmatpush1.msra.mxu0 %v2000
    %2952 = vmatprep.subr.mxu0 %v2025
    %2953 = vmatpush1.msra.mxu0 %v2024
    %2954 = vmatprep.subr.mxu0 %v2049
    %2955 = vmatpush1.msra.mxu0 %v2048
    %2956 = vmatprep.subr.mxu0 %v2073
    %2957 = vmatpush1.msra.mxu0 %v2072
    %2958 = vmatprep.subr.mxu0 %v2097
    %2959 = vmatpush1.msra.mxu0 %v2096
    %2960 = vmatprep.subr.mxu0 %v2121
    %2961 = vmatpush1.msra.mxu0 %v2120
    %2962 = vmatprep.subr.mxu0 %v2145
    %2963 = vmatpush1.msra.mxu0 %v2144
    %2964 = vmatprep.subr.mxu0 %v2169
    %2965 = vmatpush1.msra.mxu0 %v2168
    %2966 = vmatprep.subr.mxu0 %v2193
    %2967 = vmatpush1.msra.mxu0 %v2192
    %2968 = vmatprep.subr.mxu0 %v2217
    %2969 = vmatpush1.msra.mxu0 %v2216
    %2970 = vmatprep.subr.mxu0 %v2241
    %2971 = vmatpush1.msra.mxu0 %v2240
    %2972 = vmatprep.subr.mxu0 %v2265
    %2973 = vmatpush1.msra.mxu0 %v2264
    %2974 = vmatprep.subr.mxu0 %v2289
    %2975 = vmatpush1.msra.mxu0 %v2288
    %2976 = vmatprep.subr.mxu0 %v2313
    %2977 = vmatpush1.msra.mxu0 %v2312
    %2978 = vmatprep.subr.mxu0 0.0
    %2979 = vmatpush1.msra.mxu0 0.0
    %2980 = vmatprep.subr.mxu0 0.0
    %2981 = vmatpush1.msra.mxu0 0.0
    %2982 = vmatprep.subr.mxu0 0.0
    %2983 = vmatpush1.msra.mxu0 0.0
    %2984 = vmatprep.subr.mxu0 0.0
    %2985 = vmatpush1.msra.mxu0 0.0
    %2986 = vmatprep.subr.mxu0 0.0
    %2987 = vmatpush1.msra.mxu0 0.0
    %2988 = vmatprep.subr.mxu0 0.0
    %2989 = vmatpush1.msra.mxu0 0.0
    %2990 = vmatprep.subr.mxu0 0.0
    %2991 = vmatpush1.msra.mxu0 0.0
    %2992 = vmatprep.subr.mxu0 0.0
    %2993 = vmatpush1.msra.mxu0 0.0
    %2994 = vmatprep.subr.mxu0 0.0
    %2995 = vmatpush1.msra.mxu0 0.0
    %2996 = vmatprep.subr.mxu0 0.0
    %2997 = vmatpush1.msra.mxu0 0.0
    %2998 = vmatprep.subr.mxu0 0.0
    %2999 = vmatpush1.msra.mxu0 0.0
    %3000 = vmatprep.subr.mxu0 0.0
    %3001 = vmatpush1.msra.mxu0 0.0
    %3002 = vmatprep.subr.mxu0 0.0
    %3003 = vmatpush1.msra.mxu0 0.0
    %3004 = vmatprep.subr.mxu0 0.0
    %3005 = vmatpush1.msra.mxu0 0.0
    %3006 = vmatprep.subr.mxu0 0.0
    %3007 = vmatpush1.msra.mxu0 0.0
    %3008 = vmatprep.subr.mxu0 0.0
    %3009 = vmatpush1.msra.mxu0 0.0
    %3010 = vmatprep.subr.mxu0 0.0
    %3011 = vmatpush1.msra.mxu0 0.0
    %3012 = vmatprep.mubr.f32.mxu0 0.0
    %3013 = vmatmul.mubr.f32.gmra.mrb[0].mxu0 %v2449
    %v3014 = vpop.f32.mrb[0].mxu0
    %v3015 = vadd.f32 %v2387, %v3014
    %v3016 = vpop.f32.mrb[0].mxu0
    %v3017 = vadd.f32 %v2391, %v3016
    %3018 = vdwg.mxu0
    %3019 = vmatprep.subr.mxu0 %v1979
    %3020 = vmatpush1.msra.mxu0 %v1978
    %3021 = vmatprep.subr.mxu0 %v2003
    %3022 = vmatpush1.msra.mxu0 %v2002
    %3023 = vmatprep.subr.mxu0 %v2027
    %3024 = vmatpush1.msra.mxu0 %v2026
    %3025 = vmatprep.subr.mxu0 %v2051
    %3026 = vmatpush1.msra.mxu0 %v2050
    %3027 = vmatprep.subr.mxu0 %v2075
    %3028 = vmatpush1.msra.mxu0 %v2074
    %3029 = vmatprep.subr.mxu0 %v2099
    %3030 = vmatpush1.msra.mxu0 %v2098
    %3031 = vmatprep.subr.mxu0 %v2123
    %3032 = vmatpush1.msra.mxu0 %v2122
    %3033 = vmatprep.subr.mxu0 %v2147
    %3034 = vmatpush1.msra.mxu0 %v2146
    %3035 = vmatprep.subr.mxu0 %v2171
    %3036 = vmatpush1.msra.mxu0 %v2170
    %3037 = vmatprep.subr.mxu0 %v2195
    %3038 = vmatpush1.msra.mxu0 %v2194
    %3039 = vmatprep.subr.mxu0 %v2219
    %3040 = vmatpush1.msra.mxu0 %v2218
    %3041 = vmatprep.subr.mxu0 %v2243
    %3042 = vmatpush1.msra.mxu0 %v2242
    %3043 = vmatprep.subr.mxu0 %v2267
    %3044 = vmatpush1.msra.mxu0 %v2266
    %3045 = vmatprep.subr.mxu0 %v2291
    %3046 = vmatpush1.msra.mxu0 %v2290
    %3047 = vmatprep.subr.mxu0 %v2315
    %3048 = vmatpush1.msra.mxu0 %v2314
    %3049 = vmatprep.subr.mxu0 0.0
    %3050 = vmatpush1.msra.mxu0 0.0
    %3051 = vmatprep.subr.mxu0 0.0
    %3052 = vmatpush1.msra.mxu0 0.0
    %3053 = vmatprep.subr.mxu0 0.0
    %3054 = vmatpush1.msra.mxu0 0.0
    %3055 = vmatprep.subr.mxu0 0.0
    %3056 = vmatpush1.msra.mxu0 0.0
    %3057 = vmatprep.subr.mxu0 0.0
    %3058 = vmatpush1.msra.mxu0 0.0
    %3059 = vmatprep.subr.mxu0 0.0
    %3060 = vmatpush1.msra.mxu0 0.0
    %3061 = vmatprep.subr.mxu0 0.0
    %3062 = vmatpush1.msra.mxu0 0.0
    %3063 = vmatprep.subr.mxu0 0.0
    %3064 = vmatpush1.msra.mxu0 0.0
    %3065 = vmatprep.subr.mxu0 0.0
    %3066 = vmatpush1.msra.mxu0 0.0
    %3067 = vmatprep.subr.mxu0 0.0
    %3068 = vmatpush1.msra.mxu0 0.0
    %3069 = vmatprep.subr.mxu0 0.0
    %3070 = vmatpush1.msra.mxu0 0.0
    %3071 = vmatprep.subr.mxu0 0.0
    %3072 = vmatpush1.msra.mxu0 0.0
    %3073 = vmatprep.subr.mxu0 0.0
    %3074 = vmatpush1.msra.mxu0 0.0
    %3075 = vmatprep.subr.mxu0 0.0
    %3076 = vmatpush1.msra.mxu0 0.0
    %3077 = vmatprep.subr.mxu0 0.0
    %3078 = vmatpush1.msra.mxu0 0.0
    %3079 = vmatprep.subr.mxu0 0.0
    %3080 = vmatpush1.msra.mxu0 0.0
    %3081 = vmatprep.subr.mxu0 0.0
    %3082 = vmatpush1.msra.mxu0 0.0
    %3083 = vmatprep.mubr.f32.mxu0 0.0
    %3084 = vmatmul.mubr.f32.gmra.mrb[0].mxu0 %v2449
    %v3085 = vpop.f32.mrb[0].mxu0
    %v3086 = vadd.f32 %v2395, %v3085
    %v3087 = vpop.f32.mrb[0].mxu0
    %v3088 = vadd.f32 %v2399, %v3087
    %3089 = vdwg.mxu0
    %3090 = vmatprep.subr.mxu0 %v1981
    %3091 = vmatpush1.msra.mxu0 %v1980
    %3092 = vmatprep.subr.mxu0 %v2005
    %3093 = vmatpush1.msra.mxu0 %v2004
    %3094 = vmatprep.subr.mxu0 %v2029
    %3095 = vmatpush1.msra.mxu0 %v2028
    %3096 = vmatprep.subr.mxu0 %v2053
    %3097 = vmatpush1.msra.mxu0 %v2052
    %3098 = vmatprep.subr.mxu0 %v2077
    %3099 = vmatpush1.msra.mxu0 %v2076
    %3100 = vmatprep.subr.mxu0 %v2101
    %3101 = vmatpush1.msra.mxu0 %v2100
    %3102 = vmatprep.subr.mxu0 %v2125
    %3103 = vmatpush1.msra.mxu0 %v2124
    %3104 = vmatprep.subr.mxu0 %v2149
    %3105 = vmatpush1.msra.mxu0 %v2148
    %3106 = vmatprep.subr.mxu0 %v2173
    %3107 = vmatpush1.msra.mxu0 %v2172
    %3108 = vmatprep.subr.mxu0 %v2197
    %3109 = vmatpush1.msra.mxu0 %v2196
    %3110 = vmatprep.subr.mxu0 %v2221
    %3111 = vmatpush1.msra.mxu0 %v2220
    %3112 = vmatprep.subr.mxu0 %v2245
    %3113 = vmatpush1.msra.mxu0 %v2244
    %3114 = vmatprep.subr.mxu0 %v2269
    %3115 = vmatpush1.msra.mxu0 %v2268
    %3116 = vmatprep.subr.mxu0 %v2293
    %3117 = vmatpush1.msra.mxu0 %v2292
    %3118 = vmatprep.subr.mxu0 %v2317
    %3119 = vmatpush1.msra.mxu0 %v2316
    %3120 = vmatprep.subr.mxu0 0.0
    %3121 = vmatpush1.msra.mxu0 0.0
    %3122 = vmatprep.subr.mxu0 0.0
    %3123 = vmatpush1.msra.mxu0 0.0
    %3124 = vmatprep.subr.mxu0 0.0
    %3125 = vmatpush1.msra.mxu0 0.0
    %3126 = vmatprep.subr.mxu0 0.0
    %3127 = vmatpush1.msra.mxu0 0.0
    %3128 = vmatprep.subr.mxu0 0.0
    %3129 = vmatpush1.msra.mxu0 0.0
    %3130 = vmatprep.subr.mxu0 0.0
    %3131 = vmatpush1.msra.mxu0 0.0
    %3132 = vmatprep.subr.mxu0 0.0
    %3133 = vmatpush1.msra.mxu0 0.0
    %3134 = vmatprep.subr.mxu0 0.0
    %3135 = vmatpush1.msra.mxu0 0.0
    %3136 = vmatprep.subr.mxu0 0.0
    %3137 = vmatpush1.msra.mxu0 0.0
    %3138 = vmatprep.subr.mxu0 0.0
    %3139 = vmatpush1.msra.mxu0 0.0
    %3140 = vmatprep.subr.mxu0 0.0
    %3141 = vmatpush1.msra.mxu0 0.0
    %3142 = vmatprep.subr.mxu0 0.0
    %3143 = vmatpush1.msra.mxu0 0.0
    %3144 = vmatprep.subr.mxu0 0.0
    %3145 = vmatpush1.msra.mxu0 0.0
    %3146 = vmatprep.subr.mxu0 0.0
    %3147 = vmatpush1.msra.mxu0 0.0
    %3148 = vmatprep.subr.mxu0 0.0
    %3149 = vmatpush1.msra.mxu0 0.0
    %3150 = vmatprep.subr.mxu0 0.0
    %3151 = vmatpush1.msra.mxu0 0.0
    %3152 = vmatprep.subr.mxu0 0.0
    %3153 = vmatpush1.msra.mxu0 0.0
    %3154 = vmatprep.mubr.f32.mxu0 0.0
    %3155 = vmatmul.mubr.f32.gmra.mrb[0].mxu0 %v2449
    %v3156 = vpop.f32.mrb[0].mxu0
    %v3157 = vadd.f32 %v2403, %v3156
    %v3158 = vpop.f32.mrb[0].mxu0
    %v3159 = vadd.f32 %v2407, %v3158
    %3160 = vdwg.mxu0
    %3161 = vmatprep.subr.mxu0 %v1983
    %3162 = vmatpush1.msra.mxu0 %v1982
    %3163 = vmatprep.subr.mxu0 %v2007
    %3164 = vmatpush1.msra.mxu0 %v2006
    %3165 = vmatprep.subr.mxu0 %v2031
    %3166 = vmatpush1.msra.mxu0 %v2030
    %3167 = vmatprep.subr.mxu0 %v2055
    %3168 = vmatpush1.msra.mxu0 %v2054
    %3169 = vmatprep.subr.mxu0 %v2079
    %3170 = vmatpush1.msra.mxu0 %v2078
    %3171 = vmatprep.subr.mxu0 %v2103
    %3172 = vmatpush1.msra.mxu0 %v2102
    %3173 = vmatprep.subr.mxu0 %v2127
    %3174 = vmatpush1.msra.mxu0 %v2126
    %3175 = vmatprep.subr.mxu0 %v2151
    %3176 = vmatpush1.msra.mxu0 %v2150
    %3177 = vmatprep.subr.mxu0 %v2175
    %3178 = vmatpush1.msra.mxu0 %v2174
    %3179 = vmatprep.subr.mxu0 %v2199
    %3180 = vmatpush1.msra.mxu0 %v2198
    %3181 = vmatprep.subr.mxu0 %v2223
    %3182 = vmatpush1.msra.mxu0 %v2222
    %3183 = vmatprep.subr.mxu0 %v2247
    %3184 = vmatpush1.msra.mxu0 %v2246
    %3185 = vmatprep.subr.mxu0 %v2271
    %3186 = vmatpush1.msra.mxu0 %v2270
    %3187 = vmatprep.subr.mxu0 %v2295
    %3188 = vmatpush1.msra.mxu0 %v2294
    %3189 = vmatprep.subr.mxu0 %v2319
    %3190 = vmatpush1.msra.mxu0 %v2318
    %3191 = vmatprep.subr.mxu0 0.0
    %3192 = vmatpush1.msra.mxu0 0.0
    %3193 = vmatprep.subr.mxu0 0.0
    %3194 = vmatpush1.msra.mxu0 0.0
    %3195 = vmatprep.subr.mxu0 0.0
    %3196 = vmatpush1.msra.mxu0 0.0
    %3197 = vmatprep.subr.mxu0 0.0
    %3198 = vmatpush1.msra.mxu0 0.0
    %3199 = vmatprep.subr.mxu0 0.0
    %3200 = vmatpush1.msra.mxu0 0.0
    %3201 = vmatprep.subr.mxu0 0.0
    %3202 = vmatpush1.msra.mxu0 0.0
    %3203 = vmatprep.subr.mxu0 0.0
    %3204 = vmatpush1.msra.mxu0 0.0
    %3205 = vmatprep.subr.mxu0 0.0
    %3206 = vmatpush1.msra.mxu0 0.0
    %3207 = vmatprep.subr.mxu0 0.0
    %3208 = vmatpush1.msra.mxu0 0.0
    %3209 = vmatprep.subr.mxu0 0.0
    %3210 = vmatpush1.msra.mxu0 0.0
    %3211 = vmatprep.subr.mxu0 0.0
    %3212 = vmatpush1.msra.mxu0 0.0
    %3213 = vmatprep.subr.mxu0 0.0
    %3214 = vmatpush1.msra.mxu0 0.0
    %3215 = vmatprep.subr.mxu0 0.0
    %3216 = vmatpush1.msra.mxu0 0.0
    %3217 = vmatprep.subr.mxu0 0.0
    %3218 = vmatpush1.msra.mxu0 0.0
    %3219 = vmatprep.subr.mxu0 0.0
    %3220 = vmatpush1.msra.mxu0 0.0
    %3221 = vmatprep.subr.mxu0 0.0
    %3222 = vmatpush1.msra.mxu0 0.0
    %3223 = vmatprep.subr.mxu0 0.0
    %3224 = vmatpush1.msra.mxu0 0.0
    %3225 = vmatprep.mubr.f32.mxu0 0.0
    %3226 = vmatmul.mubr.f32.gmra.mrb[0].mxu0 %v2449
    %v3227 = vpop.f32.mrb[0].mxu0
    %v3228 = vadd.f32 %v2411, %v3227
    %v3229 = vpop.f32.mrb[0].mxu0
    %v3230 = vadd.f32 %v2415, %v3229
    %3231 = vdwg.mxu0
    %3232 = vmatprep.subr.mxu0 %v1985
    %3233 = vmatpush1.msra.mxu0 %v1984
    %3234 = vmatprep.subr.mxu0 %v2009
    %3235 = vmatpush1.msra.mxu0 %v2008
    %3236 = vmatprep.subr.mxu0 %v2033
    %3237 = vmatpush1.msra.mxu0 %v2032
    %3238 = vmatprep.subr.mxu0 %v2057
    %3239 = vmatpush1.msra.mxu0 %v2056
    %3240 = vmatprep.subr.mxu0 %v2081
    %3241 = vmatpush1.msra.mxu0 %v2080
    %3242 = vmatprep.subr.mxu0 %v2105
    %3243 = vmatpush1.msra.mxu0 %v2104
    %3244 = vmatprep.subr.mxu0 %v2129
    %3245 = vmatpush1.msra.mxu0 %v2128
    %3246 = vmatprep.subr.mxu0 %v2153
    %3247 = vmatpush1.msra.mxu0 %v2152
    %3248 = vmatprep.subr.mxu0 %v2177
    %3249 = vmatpush1.msra.mxu0 %v2176
    %3250 = vmatprep.subr.mxu0 %v2201
    %3251 = vmatpush1.msra.mxu0 %v2200
    %3252 = vmatprep.subr.mxu0 %v2225
    %3253 = vmatpush1.msra.mxu0 %v2224
    %3254 = vmatprep.subr.mxu0 %v2249
    %3255 = vmatpush1.msra.mxu0 %v2248
    %3256 = vmatprep.subr.mxu0 %v2273
    %3257 = vmatpush1.msra.mxu0 %v2272
    %3258 = vmatprep.subr.mxu0 %v2297
    %3259 = vmatpush1.msra.mxu0 %v2296
    %3260 = vmatprep.subr.mxu0 %v2321
    %3261 = vmatpush1.msra.mxu0 %v2320
    %3262 = vmatprep.subr.mxu0 0.0
    %3263 = vmatpush1.msra.mxu0 0.0
    %3264 = vmatprep.subr.mxu0 0.0
    %3265 = vmatpush1.msra.mxu0 0.0
    %3266 = vmatprep.subr.mxu0 0.0
    %3267 = vmatpush1.msra.mxu0 0.0
    %3268 = vmatprep.subr.mxu0 0.0
    %3269 = vmatpush1.msra.mxu0 0.0
    %3270 = vmatprep.subr.mxu0 0.0
    %3271 = vmatpush1.msra.mxu0 0.0
    %3272 = vmatprep.subr.mxu0 0.0
    %3273 = vmatpush1.msra.mxu0 0.0
    %3274 = vmatprep.subr.mxu0 0.0
    %3275 = vmatpush1.msra.mxu0 0.0
    %3276 = vmatprep.subr.mxu0 0.0
    %3277 = vmatpush1.msra.mxu0 0.0
    %3278 = vmatprep.subr.mxu0 0.0
    %3279 = vmatpush1.msra.mxu0 0.0
    %3280 = vmatprep.subr.mxu0 0.0
    %3281 = vmatpush1.msra.mxu0 0.0
    %3282 = vmatprep.subr.mxu0 0.0
    %3283 = vmatpush1.msra.mxu0 0.0
    %3284 = vmatprep.subr.mxu0 0.0
    %3285 = vmatpush1.msra.mxu0 0.0
    %3286 = vmatprep.subr.mxu0 0.0
    %3287 = vmatpush1.msra.mxu0 0.0
    %3288 = vmatprep.subr.mxu0 0.0
    %3289 = vmatpush1.msra.mxu0 0.0
    %3290 = vmatprep.subr.mxu0 0.0
    %3291 = vmatpush1.msra.mxu0 0.0
    %3292 = vmatprep.subr.mxu0 0.0
    %3293 = vmatpush1.msra.mxu0 0.0
    %3294 = vmatprep.subr.mxu0 0.0
    %3295 = vmatpush1.msra.mxu0 0.0
    %3296 = vmatprep.mubr.f32.mxu0 0.0
    %3297 = vmatmul.mubr.f32.gmra.mrb[0].mxu0 %v2449
    %v3298 = vpop.f32.mrb[0].mxu0
    %v3299 = vadd.f32 %v2419, %v3298
    %v3300 = vpop.f32.mrb[0].mxu0
    %v3301 = vadd.f32 %v2423, %v3300
    %3302 = vdwg.mxu0
    %v3303 = vld [vmem:[#allocation23] sm:$0xff]
    %v3304 = vld [vmem:[#allocation23 + $0x8] sm:$0xff]
    %v3305 = vld [vmem:[#allocation23 + $0x10] sm:$0xff]
    %v3306 = vld [vmem:[#allocation23 + $0x18] sm:$0xff]
    %v3307 = vld [vmem:[#allocation23 + $0x20] sm:$0xff]
    %v3308 = vld [vmem:[#allocation23 + $0x28] sm:$0xff]
    %v3309 = vld [vmem:[#allocation23 + $0x30] sm:$0xff]
    %v3310 = vld [vmem:[#allocation23 + $0x38] sm:$0xff]
    %v3311 = vld [vmem:[#allocation23 + $0x40] sm:$0xff]
    %v3312 = vld [vmem:[#allocation23 + $0x48] sm:$0xff]
    %v3313 = vld [vmem:[#allocation23 + $0x50] sm:$0xff]
    %v3314 = vld [vmem:[#allocation23 + $0x58] sm:$0xff]
    %v3315 = vld [vmem:[#allocation23 + $0x60] sm:$0xff]
    %v3316 = vld [vmem:[#allocation23 + $0x68] sm:$0xff]
    %v3317 = vld [vmem:[#allocation23 + $0x70] sm:$0xff]
    %v3318 = vld [vmem:[#allocation23 + $0x78] sm:$0xff]
    %v3319 = vld [vmem:[#allocation23 + $0x80] sm:$0xff]
    %v3320 = vld [vmem:[#allocation23 + $0x88] sm:$0xff]
    %v3321 = vld [vmem:[#allocation23 + $0x90] sm:$0xff]
    %v3322 = vld [vmem:[#allocation23 + $0x98] sm:$0xff]
    %v3323 = vld [vmem:[#allocation23 + $0xa0] sm:$0xff]
    %v3324 = vld [vmem:[#allocation23 + $0xa8] sm:$0xff]
    %v3325 = vld [vmem:[#allocation23 + $0xb0] sm:$0xff]
    %v3326 = vld [vmem:[#allocation23 + $0xb8] sm:$0xff]
    %v3327 = vld [vmem:[#allocation23 + $0xc0] sm:$0xff]
    %v3328 = vld [vmem:[#allocation23 + $0xc8] sm:$0xff]
    %v3329 = vld [vmem:[#allocation23 + $0xd0] sm:$0xff]
    %v3330 = vld [vmem:[#allocation23 + $0xd8] sm:$0xff]
    %v3331 = vld [vmem:[#allocation23 + $0xe0] sm:$0xff]
    %v3332 = vld [vmem:[#allocation23 + $0xe8] sm:$0xff]
    %v3333 = vld [vmem:[#allocation23 + $0xf0] sm:$0xff]
    %v3334 = vld [vmem:[#allocation23 + $0xf8] sm:$0xff]
    %v3335 = vld [vmem:[#allocation23 + $0x100] sm:$0xff]
    %v3336 = vld [vmem:[#allocation23 + $0x108] sm:$0xff]
    %v3337 = vld [vmem:[#allocation23 + $0x110] sm:$0xff]
    %v3338 = vld [vmem:[#allocation23 + $0x118] sm:$0xff]
    %v3339 = vld [vmem:[#allocation23 + $0x120] sm:$0xff]
    %v3340 = vld [vmem:[#allocation23 + $0x128] sm:$0xff]
    %v3341 = vld [vmem:[#allocation23 + $0x130] sm:$0xff]
    %v3342 = vld [vmem:[#allocation23 + $0x138] sm:$0xff]
    %v3343 = vld [vmem:[#allocation23 + $0x140] sm:$0xff]
    %v3344 = vld [vmem:[#allocation23 + $0x148] sm:$0xff]
    %v3345 = vld [vmem:[#allocation23 + $0x150] sm:$0xff]
    %v3346 = vld [vmem:[#allocation23 + $0x158] sm:$0xff]
    %v3347 = vld [vmem:[#allocation23 + $0x160] sm:$0xff]
    %v3348 = vld [vmem:[#allocation23 + $0x168] sm:$0xff]
    %v3349 = vld [vmem:[#allocation23 + $0x170] sm:$0xff]
    %v3350 = vld [vmem:[#allocation23 + $0x178] sm:$0xff]
    %v3351 = vld [vmem:[#allocation23 + $0x180] sm:$0xff]
    %v3352 = vld [vmem:[#allocation23 + $0x188] sm:$0xff]
    %v3353 = vld [vmem:[#allocation23 + $0x190] sm:$0xff]
    %v3354 = vld [vmem:[#allocation23 + $0x198] sm:$0xff]
    %v3355 = vld [vmem:[#allocation23 + $0x1a0] sm:$0xff]
    %v3356 = vld [vmem:[#allocation23 + $0x1a8] sm:$0xff]
    %v3357 = vld [vmem:[#allocation23 + $0x1b0] sm:$0xff]
    %v3358 = vld [vmem:[#allocation23 + $0x1b8] sm:$0xff]
    %v3359 = vld [vmem:[#allocation23 + $0x1c0] sm:$0xff]
    %v3360 = vld [vmem:[#allocation23 + $0x1c8] sm:$0xff]
    %v3361 = vld [vmem:[#allocation23 + $0x1d0] sm:$0xff]
    %v3362 = vld [vmem:[#allocation23 + $0x1d8] sm:$0xff]
    %v3363 = vld [vmem:[#allocation23 + $0x1e0] sm:$0xff]
    %v3364 = vld [vmem:[#allocation23 + $0x1e8] sm:$0xff]
    %v3365 = vld [vmem:[#allocation23 + $0x1f0] sm:$0xff]
    %v3366 = vld [vmem:[#allocation23 + $0x1f8] sm:$0xff]
    %v3367 = vld [vmem:[#allocation23 + $0x200] sm:$0xff]
    %v3368 = vld [vmem:[#allocation23 + $0x208] sm:$0xff]
    %v3369 = vld [vmem:[#allocation23 + $0x210] sm:$0xff]
    %v3370 = vld [vmem:[#allocation23 + $0x218] sm:$0xff]
    %v3371 = vld [vmem:[#allocation23 + $0x220] sm:$0xff]
    %v3372 = vld [vmem:[#allocation23 + $0x228] sm:$0xff]
    %v3373 = vld [vmem:[#allocation23 + $0x230] sm:$0xff]
    %v3374 = vld [vmem:[#allocation23 + $0x238] sm:$0xff]
    %v3375 = vld [vmem:[#allocation23 + $0x240] sm:$0xff]
    %v3376 = vld [vmem:[#allocation23 + $0x248] sm:$0xff]
    %v3377 = vld [vmem:[#allocation23 + $0x250] sm:$0xff]
    %v3378 = vld [vmem:[#allocation23 + $0x258] sm:$0xff]
    %v3379 = vld [vmem:[#allocation23 + $0x260] sm:$0xff]
    %v3380 = vld [vmem:[#allocation23 + $0x268] sm:$0xff]
    %v3381 = vld [vmem:[#allocation23 + $0x270] sm:$0xff]
    %v3382 = vld [vmem:[#allocation23 + $0x278] sm:$0xff]
    %v3383 = vld [vmem:[#allocation23 + $0x280] sm:$0xff]
    %v3384 = vld [vmem:[#allocation23 + $0x288] sm:$0xff]
    %v3385 = vld [vmem:[#allocation23 + $0x290] sm:$0xff]
    %v3386 = vld [vmem:[#allocation23 + $0x298] sm:$0xff]
    %v3387 = vld [vmem:[#allocation23 + $0x2a0] sm:$0xff]
    %v3388 = vld [vmem:[#allocation23 + $0x2a8] sm:$0xff]
    %v3389 = vld [vmem:[#allocation23 + $0x2b0] sm:$0xff]
    %v3390 = vld [vmem:[#allocation23 + $0x2b8] sm:$0xff]
    %v3391 = vld [vmem:[#allocation23 + $0x2c0] sm:$0xff]
    %v3392 = vld [vmem:[#allocation23 + $0x2c8] sm:$0xff]
    %v3393 = vld [vmem:[#allocation23 + $0x2d0] sm:$0xff]
    %v3394 = vld [vmem:[#allocation23 + $0x2d8] sm:$0xff]
    %v3395 = vld [vmem:[#allocation23 + $0x2e0] sm:$0xff]
    %v3396 = vld [vmem:[#allocation23 + $0x2e8] sm:$0xff]
    %v3397 = vld [vmem:[#allocation23 + $0x2f0] sm:$0xff]
    %v3398 = vld [vmem:[#allocation23 + $0x2f8] sm:$0xff]
    %v3399 = vld [vmem:[#allocation23 + $0x300] sm:$0xff]
    %v3400 = vld [vmem:[#allocation23 + $0x308] sm:$0xff]
    %v3401 = vld [vmem:[#allocation23 + $0x310] sm:$0xff]
    %v3402 = vld [vmem:[#allocation23 + $0x318] sm:$0xff]
    %v3403 = vld [vmem:[#allocation23 + $0x320] sm:$0xff]
    %v3404 = vld [vmem:[#allocation23 + $0x328] sm:$0xff]
    %v3405 = vld [vmem:[#allocation23 + $0x330] sm:$0xff]
    %v3406 = vld [vmem:[#allocation23 + $0x338] sm:$0xff]
    %v3407 = vld [vmem:[#allocation23 + $0x340] sm:$0xff]
    %v3408 = vld [vmem:[#allocation23 + $0x348] sm:$0xff]
    %v3409 = vld [vmem:[#allocation23 + $0x350] sm:$0xff]
    %v3410 = vld [vmem:[#allocation23 + $0x358] sm:$0xff]
    %v3411 = vld [vmem:[#allocation23 + $0x360] sm:$0xff]
    %v3412 = vld [vmem:[#allocation23 + $0x368] sm:$0xff]
    %v3413 = vld [vmem:[#allocation23 + $0x370] sm:$0xff]
    %v3414 = vld [vmem:[#allocation23 + $0x378] sm:$0xff]
    %v3415 = vld [vmem:[#allocation23 + $0x380] sm:$0xff]
    %v3416 = vld [vmem:[#allocation23 + $0x388] sm:$0xff]
    %v3417 = vld [vmem:[#allocation23 + $0x390] sm:$0xff]
    %v3418 = vld [vmem:[#allocation23 + $0x398] sm:$0xff]
    %v3419 = vld [vmem:[#allocation23 + $0x3a0] sm:$0xff]
    %v3420 = vld [vmem:[#allocation23 + $0x3a8] sm:$0xff]
    %v3421 = vld [vmem:[#allocation23 + $0x3b0] sm:$0xff]
    %v3422 = vld [vmem:[#allocation23 + $0x3b8] sm:$0xff]
    %v3423 = vld [vmem:[#allocation23 + $0x3c0] sm:$0xff]
    %v3424 = vld [vmem:[#allocation23 + $0x3c8] sm:$0xff]
    %v3425 = vld [vmem:[#allocation23 + $0x3d0] sm:$0xff]
    %v3426 = vld [vmem:[#allocation23 + $0x3d8] sm:$0xff]
    %v3427 = vld [vmem:[#allocation23 + $0x3e0] sm:$0xff]
    %v3428 = vld [vmem:[#allocation23 + $0x3e8] sm:$0xff]
    %v3429 = vld [vmem:[#allocation23 + $0x3f0] sm:$0xff]
    %v3430 = vld [vmem:[#allocation23 + $0x3f8] sm:$0xff]
    %v3431 = vld [vmem:[#allocation25] sm:$0xff]
    %v3432 = vld [vmem:[#allocation25 + $0x8] sm:$0xff]
    %v3433 = vld [vmem:[#allocation25 + $0x10] sm:$0xff]
    %v3434 = vld [vmem:[#allocation25 + $0x18] sm:$0xff]
    %v3435 = vld [vmem:[#allocation25 + $0x20] sm:$0xff]
    %v3436 = vld [vmem:[#allocation25 + $0x28] sm:$0xff]
    %v3437 = vld [vmem:[#allocation25 + $0x30] sm:$0xff]
    %v3438 = vld [vmem:[#allocation25 + $0x38] sm:$0xff]
    %v3439 = vld [vmem:[#allocation25 + $0x40] sm:$0xff]
    %v3440 = vld [vmem:[#allocation25 + $0x48] sm:$0xff]
    %v3441 = vld [vmem:[#allocation25 + $0x50] sm:$0xff]
    %v3442 = vld [vmem:[#allocation25 + $0x58] sm:$0xff]
    %v3443 = vld [vmem:[#allocation25 + $0x60] sm:$0xff]
    %v3444 = vld [vmem:[#allocation25 + $0x68] sm:$0xff]
    %v3445 = vld [vmem:[#allocation25 + $0x70] sm:$0xff]
    %v3446 = vld [vmem:[#allocation25 + $0x78] sm:$0xff]
    %v3447 = vld [vmem:[#allocation25 + $0x80] sm:$0xff]
    %v3448 = vld [vmem:[#allocation25 + $0x88] sm:$0xff]
    %v3449 = vld [vmem:[#allocation25 + $0x90] sm:$0xff]
    %v3450 = vld [vmem:[#allocation25 + $0x98] sm:$0xff]
    %v3451 = vld [vmem:[#allocation25 + $0xa0] sm:$0xff]
    %v3452 = vld [vmem:[#allocation25 + $0xa8] sm:$0xff]
    %v3453 = vld [vmem:[#allocation25 + $0xb0] sm:$0xff]
    %v3454 = vld [vmem:[#allocation25 + $0xb8] sm:$0xff]
    %v3455 = vld [vmem:[#allocation25 + $0xc0] sm:$0xff]
    %v3456 = vld [vmem:[#allocation25 + $0xc8] sm:$0xff]
    %v3457 = vld [vmem:[#allocation25 + $0xd0] sm:$0xff]
    %v3458 = vld [vmem:[#allocation25 + $0xd8] sm:$0xff]
    %v3459 = vld [vmem:[#allocation25 + $0xe0] sm:$0xff]
    %v3460 = vld [vmem:[#allocation25 + $0xe8] sm:$0xff]
    %v3461 = vld [vmem:[#allocation25 + $0xf0] sm:$0xff]
    %v3462 = vld [vmem:[#allocation25 + $0xf8] sm:$0xff]
    %v3463 = vld [vmem:[#allocation25 + $0x100] sm:$0xff]
    %v3464 = vld [vmem:[#allocation25 + $0x108] sm:$0xff]
    %v3465 = vld [vmem:[#allocation25 + $0x110] sm:$0xff]
    %v3466 = vld [vmem:[#allocation25 + $0x118] sm:$0xff]
    %v3467 = vld [vmem:[#allocation25 + $0x120] sm:$0xff]
    %v3468 = vld [vmem:[#allocation25 + $0x128] sm:$0xff]
    %v3469 = vld [vmem:[#allocation25 + $0x130] sm:$0xff]
    %v3470 = vld [vmem:[#allocation25 + $0x138] sm:$0xff]
    %v3471 = vld [vmem:[#allocation25 + $0x140] sm:$0xff]
    %v3472 = vld [vmem:[#allocation25 + $0x148] sm:$0xff]
    %v3473 = vld [vmem:[#allocation25 + $0x150] sm:$0xff]
    %v3474 = vld [vmem:[#allocation25 + $0x158] sm:$0xff]
    %v3475 = vld [vmem:[#allocation25 + $0x160] sm:$0xff]
    %v3476 = vld [vmem:[#allocation25 + $0x168] sm:$0xff]
    %v3477 = vld [vmem:[#allocation25 + $0x170] sm:$0xff]
    %v3478 = vld [vmem:[#allocation25 + $0x178] sm:$0xff]
    %v3479 = vld [vmem:[#allocation25 + $0x180] sm:$0xff]
    %v3480 = vld [vmem:[#allocation25 + $0x188] sm:$0xff]
    %v3481 = vld [vmem:[#allocation25 + $0x190] sm:$0xff]
    %v3482 = vld [vmem:[#allocation25 + $0x198] sm:$0xff]
    %v3483 = vld [vmem:[#allocation25 + $0x1a0] sm:$0xff]
    %v3484 = vld [vmem:[#allocation25 + $0x1a8] sm:$0xff]
    %v3485 = vld [vmem:[#allocation25 + $0x1b0] sm:$0xff]
    %v3486 = vld [vmem:[#allocation25 + $0x1b8] sm:$0xff]
    %v3487 = vld [vmem:[#allocation25 + $0x1c0] sm:$0xff]
    %v3488 = vld [vmem:[#allocation25 + $0x1c8] sm:$0xff]
    %v3489 = vld [vmem:[#allocation25 + $0x1d0] sm:$0xff]
    %v3490 = vld [vmem:[#allocation25 + $0x1d8] sm:$0xff]
    %v3491 = vld [vmem:[#allocation25 + $0x1e0] sm:$0xff]
    %v3492 = vld [vmem:[#allocation25 + $0x1e8] sm:$0xff]
    %v3493 = vld [vmem:[#allocation25 + $0x1f0] sm:$0xff]
    %v3494 = vld [vmem:[#allocation25 + $0x1f8] sm:$0xff]
    %v3495 = vld [vmem:[#allocation26] sm:$0xf]
    %v3496 = vadd.f32 %v2518, 0.0
    %v3497 = vadd.f32 %v2520, 0.0
    %v3498 = vadd.f32 %v2589, 0.0
    %v3499 = vadd.f32 %v2591, 0.0
    %v3500 = vmul.f32 %v3496, 0.5
    %v3501 = vtanh.pop %v3500
    %v3502 = vmul.f32 %v3501, 0.5
    %v3503 = vadd.f32 %v3502, 0.5
    %v3504 = vmul.f32 %v3497, 0.5
    %v3505 = vtanh.pop %v3504
    %v3506 = vmul.f32 %v3505, 0.5
    %v3507 = vadd.f32 %v3506, 0.5
    %v3508 = vtanh.pop %v3498
    %v3509 = vmul.f32 %v3499, 0.5
    %v3510 = vtanh.pop %v3509
    %v3511 = vmul.f32 %v3510, 0.5
    %v3512 = vadd.f32 %v3511, 0.5
    %v3513 = vmul.f32 %v3507, 0.0
    %v3514 = vmul.f32 %v3503, %v3508
    %v3515 = vadd.f32 %v3513, %v3514
    %v3516 = vtanh.pop %v3515
    %v3517 = vmul.f32 %v3512, %v3516
    %3518 = vmatprep.subr.mxu0 %v3304
    %3519 = vmatpush1.msra.mxu0 %v3303
    %3520 = vmatprep.subr.mxu0 %v3312
    %3521 = vmatpush1.msra.mxu0 %v3311
    %3522 = vmatprep.subr.mxu0 %v3320
    %3523 = vmatpush1.msra.mxu0 %v3319
    %3524 = vmatprep.subr.mxu0 %v3328
    %3525 = vmatpush1.msra.mxu0 %v3327
    %3526 = vmatprep.subr.mxu0 %v3336
    %3527 = vmatpush1.msra.mxu0 %v3335
    %3528 = vmatprep.subr.mxu0 %v3344
    %3529 = vmatpush1.msra.mxu0 %v3343
    %3530 = vmatprep.subr.mxu0 %v3352
    %3531 = vmatpush1.msra.mxu0 %v3351
    %3532 = vmatprep.subr.mxu0 %v3360
    %3533 = vmatpush1.msra.mxu0 %v3359
    %3534 = vmatprep.subr.mxu0 %v3368
    %3535 = vmatpush1.msra.mxu0 %v3367
    %3536 = vmatprep.subr.mxu0 %v3376
    %3537 = vmatpush1.msra.mxu0 %v3375
    %3538 = vmatprep.subr.mxu0 %v3384
    %3539 = vmatpush1.msra.mxu0 %v3383
    %3540 = vmatprep.subr.mxu0 %v3392
    %3541 = vmatpush1.msra.mxu0 %v3391
    %3542 = vmatprep.subr.mxu0 %v3400
    %3543 = vmatpush1.msra.mxu0 %v3399
    %3544 = vmatprep.subr.mxu0 %v3408
    %3545 = vmatpush1.msra.mxu0 %v3407
    %3546 = vmatprep.subr.mxu0 %v3416
    %3547 = vmatpush1.msra.mxu0 %v3415
    %3548 = vmatprep.subr.mxu0 %v3424
    %3549 = vmatpush1.msra.mxu0 %v3423
    %3550 = vmatprep.subr.mxu0 0.0
    %3551 = vmatpush1.msra.mxu0 0.0
    %3552 = vmatprep.subr.mxu0 0.0
    %3553 = vmatpush1.msra.mxu0 0.0
    %3554 = vmatprep.subr.mxu0 0.0
    %3555 = vmatpush1.msra.mxu0 0.0
    %3556 = vmatprep.subr.mxu0 0.0
    %3557 = vmatpush1.msra.mxu0 0.0
    %3558 = vmatprep.subr.mxu0 0.0
    %3559 = vmatpush1.msra.mxu0 0.0
    %3560 = vmatprep.subr.mxu0 0.0
    %3561 = vmatpush1.msra.mxu0 0.0
    %3562 = vmatprep.subr.mxu0 0.0
    %3563 = vmatpush1.msra.mxu0 0.0
    %3564 = vmatprep.subr.mxu0 0.0
    %3565 = vmatpush1.msra.mxu0 0.0
    %3566 = vmatprep.subr.mxu0 0.0
    %3567 = vmatpush1.msra.mxu0 0.0
    %3568 = vmatprep.subr.mxu0 0.0
    %3569 = vmatpush1.msra.mxu0 0.0
    %3570 = vmatprep.subr.mxu0 0.0
    %3571 = vmatpush1.msra.mxu0 0.0
    %3572 = vmatprep.subr.mxu0 0.0
    %3573 = vmatpush1.msra.mxu0 0.0
    %3574 = vmatprep.subr.mxu0 0.0
    %3575 = vmatpush1.msra.mxu0 0.0
    %3576 = vmatprep.subr.mxu0 0.0
    %3577 = vmatpush1.msra.mxu0 0.0
    %3578 = vmatprep.subr.mxu0 0.0
    %3579 = vmatpush1.msra.mxu0 0.0
    %3580 = vmatprep.subr.mxu0 0.0
    %3581 = vmatpush1.msra.mxu0 0.0
    %3582 = vmatprep.mubr.f32.mxu0 0.0
    %3583 = vmatmul.mubr.f32.gmra.mrb[0].mxu0 %v3517
    %v3584 = vpop.f32.mrb[0].mxu0
    %v3585 = vadd.f32 0.0, %v3584
    %v3586 = vpop.f32.mrb[0].mxu0
    %v3587 = vadd.f32 0.0, %v3586
    %3588 = vdwg.mxu0
    %3589 = vmatprep.subr.mxu0 %v3306
    %3590 = vmatpush1.msra.mxu0 %v3305
    %3591 = vmatprep.subr.mxu0 %v3314
    %3592 = vmatpush1.msra.mxu0 %v3313
    %3593 = vmatprep.subr.mxu0 %v3322
    %3594 = vmatpush1.msra.mxu0 %v3321
    %3595 = vmatprep.subr.mxu0 %v3330
    %3596 = vmatpush1.msra.mxu0 %v3329
    %3597 = vmatprep.subr.mxu0 %v3338
    %3598 = vmatpush1.msra.mxu0 %v3337
    %3599 = vmatprep.subr.mxu0 %v3346
    %3600 = vmatpush1.msra.mxu0 %v3345
    %3601 = vmatprep.subr.mxu0 %v3354
    %3602 = vmatpush1.msra.mxu0 %v3353
    %3603 = vmatprep.subr.mxu0 %v3362
    %3604 = vmatpush1.msra.mxu0 %v3361
    %3605 = vmatprep.subr.mxu0 %v3370
    %3606 = vmatpush1.msra.mxu0 %v3369
    %3607 = vmatprep.subr.mxu0 %v3378
    %3608 = vmatpush1.msra.mxu0 %v3377
    %3609 = vmatprep.subr.mxu0 %v3386
    %3610 = vmatpush1.msra.mxu0 %v3385
    %3611 = vmatprep.subr.mxu0 %v3394
    %3612 = vmatpush1.msra.mxu0 %v3393
    %3613 = vmatprep.subr.mxu0 %v3402
    %3614 = vmatpush1.msra.mxu0 %v3401
    %3615 = vmatprep.subr.mxu0 %v3410
    %3616 = vmatpush1.msra.mxu0 %v3409
    %3617 = vmatprep.subr.mxu0 %v3418
    %3618 = vmatpush1.msra.mxu0 %v3417
    %3619 = vmatprep.subr.mxu0 %v3426
    %3620 = vmatpush1.msra.mxu0 %v3425
    %3621 = vmatprep.subr.mxu0 0.0
    %3622 = vmatpush1.msra.mxu0 0.0
    %3623 = vmatprep.subr.mxu0 0.0
    %3624 = vmatpush1.msra.mxu0 0.0
    %3625 = vmatprep.subr.mxu0 0.0
    %3626 = vmatpush1.msra.mxu0 0.0
    %3627 = vmatprep.subr.mxu0 0.0
    %3628 = vmatpush1.msra.mxu0 0.0
    %3629 = vmatprep.subr.mxu0 0.0
    %3630 = vmatpush1.msra.mxu0 0.0
    %3631 = vmatprep.subr.mxu0 0.0
    %3632 = vmatpush1.msra.mxu0 0.0
    %3633 = vmatprep.subr.mxu0 0.0
    %3634 = vmatpush1.msra.mxu0 0.0
    %3635 = vmatprep.subr.mxu0 0.0
    %3636 = vmatpush1.msra.mxu0 0.0
    %3637 = vmatprep.subr.mxu0 0.0
    %3638 = vmatpush1.msra.mxu0 0.0
    %3639 = vmatprep.subr.mxu0 0.0
    %3640 = vmatpush1.msra.mxu0 0.0
    %3641 = vmatprep.subr.mxu0 0.0
    %3642 = vmatpush1.msra.mxu0 0.0
    %3643 = vmatprep.subr.mxu0 0.0
    %3644 = vmatpush1.msra.mxu0 0.0
    %3645 = vmatprep.subr.mxu0 0.0
    %3646 = vmatpush1.msra.mxu0 0.0
    %3647 = vmatprep.subr.mxu0 0.0
    %3648 = vmatpush1.msra.mxu0 0.0
    %3649 = vmatprep.subr.mxu0 0.0
    %3650 = vmatpush1.msra.mxu0 0.0
    %3651 = vmatprep.subr.mxu0 0.0
    %3652 = vmatpush1.msra.mxu0 0.0
    %3653 = vmatprep.mubr.f32.mxu0 0.0
    %3654 = vmatmul.mubr.f32.gmra.mrb[0].mxu0 %v3517
    %v3655 = vpop.f32.mrb[0].mxu0
    %v3656 = vadd.f32 0.0, %v3655
    %v3657 = vpop.f32.mrb[0].mxu0
    %v3658 = vadd.f32 0.0, %v3657
    %3659 = vdwg.mxu0
    %3660 = vmatprep.subr.mxu0 %v3308
    %3661 = vmatpush1.msra.mxu0 %v3307
    %3662 = vmatprep.subr.mxu0 %v3316
    %3663 = vmatpush1.msra.mxu0 %v3315
    %3664 = vmatprep.subr.mxu0 %v3324
    %3665 = vmatpush1.msra.mxu0 %v3323
    %3666 = vmatprep.subr.mxu0 %v3332
    %3667 = vmatpush1.msra.mxu0 %v3331
    %3668 = vmatprep.subr.mxu0 %v3340
    %3669 = vmatpush1.msra.mxu0 %v3339
    %3670 = vmatprep.subr.mxu0 %v3348
    %3671 = vmatpush1.msra.mxu0 %v3347
    %3672 = vmatprep.subr.mxu0 %v3356
    %3673 = vmatpush1.msra.mxu0 %v3355
    %3674 = vmatprep.subr.mxu0 %v3364
    %3675 = vmatpush1.msra.mxu0 %v3363
    %3676 = vmatprep.subr.mxu0 %v3372
    %3677 = vmatpush1.msra.mxu0 %v3371
    %3678 = vmatprep.subr.mxu0 %v3380
    %3679 = vmatpush1.msra.mxu0 %v3379
    %3680 = vmatprep.subr.mxu0 %v3388
    %3681 = vmatpush1.msra.mxu0 %v3387
    %3682 = vmatprep.subr.mxu0 %v3396
    %3683 = vmatpush1.msra.mxu0 %v3395
    %3684 = vmatprep.subr.mxu0 %v3404
    %3685 = vmatpush1.msra.mxu0 %v3403
    %3686 = vmatprep.subr.mxu0 %v3412
    %3687 = vmatpush1.msra.mxu0 %v3411
    %3688 = vmatprep.subr.mxu0 %v3420
    %3689 = vmatpush1.msra.mxu0 %v3419
    %3690 = vmatprep.subr.mxu0 %v3428
    %3691 = vmatpush1.msra.mxu0 %v3427
    %3692 = vmatprep.subr.mxu0 0.0
    %3693 = vmatpush1.msra.mxu0 0.0
    %3694 = vmatprep.subr.mxu0 0.0
    %3695 = vmatpush1.msra.mxu0 0.0
    %3696 = vmatprep.subr.mxu0 0.0
    %3697 = vmatpush1.msra.mxu0 0.0
    %3698 = vmatprep.subr.mxu0 0.0
    %3699 = vmatpush1.msra.mxu0 0.0
    %3700 = vmatprep.subr.mxu0 0.0
    %3701 = vmatpush1.msra.mxu0 0.0
    %3702 = vmatprep.subr.mxu0 0.0
    %3703 = vmatpush1.msra.mxu0 0.0
    %3704 = vmatprep.subr.mxu0 0.0
    %3705 = vmatpush1.msra.mxu0 0.0
    %3706 = vmatprep.subr.mxu0 0.0
    %3707 = vmatpush1.msra.mxu0 0.0
    %3708 = vmatprep.subr.mxu0 0.0
    %3709 = vmatpush1.msra.mxu0 0.0
    %3710 = vmatprep.subr.mxu0 0.0
    %3711 = vmatpush1.msra.mxu0 0.0
    %3712 = vmatprep.subr.mxu0 0.0
    %3713 = vmatpush1.msra.mxu0 0.0
    %3714 = vmatprep.subr.mxu0 0.0
    %3715 = vmatpush1.msra.mxu0 0.0
    %3716 = vmatprep.subr.mxu0 0.0
    %3717 = vmatpush1.msra.mxu0 0.0
    %3718 = vmatprep.subr.mxu0 0.0
    %3719 = vmatpush1.msra.mxu0 0.0
    %3720 = vmatprep.subr.mxu0 0.0
    %3721 = vmatpush1.msra.mxu0 0.0
    %3722 = vmatprep.subr.mxu0 0.0
    %3723 = vmatpush1.msra.mxu0 0.0
    %3724 = vmatprep.mubr.f32.mxu0 0.0
    %3725 = vmatmul.mubr.f32.gmra.mrb[0].mxu0 %v3517
    %v3726 = vpop.f32.mrb[0].mxu0
    %v3727 = vadd.f32 0.0, %v3726
    %v3728 = vpop.f32.mrb[0].mxu0
    %v3729 = vadd.f32 0.0, %v3728
    %3730 = vdwg.mxu0
    %3731 = vmatprep.subr.mxu0 %v3310
    %3732 = vmatpush1.msra.mxu0 %v3309
    %3733 = vmatprep.subr.mxu0 %v3318
    %3734 = vmatpush1.msra.mxu0 %v3317
    %3735 = vmatprep.subr.mxu0 %v3326
    %3736 = vmatpush1.msra.mxu0 %v3325
    %3737 = vmatprep.subr.mxu0 %v3334
    %3738 = vmatpush1.msra.mxu0 %v3333
    %3739 = vmatprep.subr.mxu0 %v3342
    %3740 = vmatpush1.msra.mxu0 %v3341
    %3741 = vmatprep.subr.mxu0 %v3350
    %3742 = vmatpush1.msra.mxu0 %v3349
    %3743 = vmatprep.subr.mxu0 %v3358
    %3744 = vmatpush1.msra.mxu0 %v3357
    %3745 = vmatprep.subr.mxu0 %v3366
    %3746 = vmatpush1.msra.mxu0 %v3365
    %3747 = vmatprep.subr.mxu0 %v3374
    %3748 = vmatpush1.msra.mxu0 %v3373
    %3749 = vmatprep.subr.mxu0 %v3382
    %3750 = vmatpush1.msra.mxu0 %v3381
    %3751 = vmatprep.subr.mxu0 %v3390
    %3752 = vmatpush1.msra.mxu0 %v3389
    %3753 = vmatprep.subr.mxu0 %v3398
    %3754 = vmatpush1.msra.mxu0 %v3397
    %3755 = vmatprep.subr.mxu0 %v3406
    %3756 = vmatpush1.msra.mxu0 %v3405
    %3757 = vmatprep.subr.mxu0 %v3414
    %3758 = vmatpush1.msra.mxu0 %v3413
    %3759 = vmatprep.subr.mxu0 %v3422
    %3760 = vmatpush1.msra.mxu0 %v3421
    %3761 = vmatprep.subr.mxu0 %v3430
    %3762 = vmatpush1.msra.mxu0 %v3429
    %3763 = vmatprep.subr.mxu0 0.0
    %3764 = vmatpush1.msra.mxu0 0.0
    %3765 = vmatprep.subr.mxu0 0.0
    %3766 = vmatpush1.msra.mxu0 0.0
    %3767 = vmatprep.subr.mxu0 0.0
    %3768 = vmatpush1.msra.mxu0 0.0
    %3769 = vmatprep.subr.mxu0 0.0
    %3770 = vmatpush1.msra.mxu0 0.0
    %3771 = vmatprep.subr.mxu0 0.0
    %3772 = vmatpush1.msra.mxu0 0.0
    %3773 = vmatprep.subr.mxu0 0.0
    %3774 = vmatpush1.msra.mxu0 0.0
    %3775 = vmatprep.subr.mxu0 0.0
    %3776 = vmatpush1.msra.mxu0 0.0
    %3777 = vmatprep.subr.mxu0 0.0
    %3778 = vmatpush1.msra.mxu0 0.0
    %3779 = vmatprep.subr.mxu0 0.0
    %3780 = vmatpush1.msra.mxu0 0.0
    %3781 = vmatprep.subr.mxu0 0.0
    %3782 = vmatpush1.msra.mxu0 0.0
    %3783 = vmatprep.subr.mxu0 0.0
    %3784 = vmatpush1.msra.mxu0 0.0
    %3785 = vmatprep.subr.mxu0 0.0
    %3786 = vmatpush1.msra.mxu0 0.0
    %3787 = vmatprep.subr.mxu0 0.0
    %3788 = vmatpush1.msra.mxu0 0.0
    %3789 = vmatprep.subr.mxu0 0.0
    %3790 = vmatpush1.msra.mxu0 0.0
    %3791 = vmatprep.subr.mxu0 0.0
    %3792 = vmatpush1.msra.mxu0 0.0
    %3793 = vmatprep.subr.mxu0 0.0
    %3794 = vmatpush1.msra.mxu0 0.0
    %3795 = vmatprep.mubr.f32.mxu0 0.0
    %3796 = vmatmul.mubr.f32.gmra.mrb[0].mxu0 %v3517
    %v3797 = vpop.f32.mrb[0].mxu0
    %v3798 = vadd.f32 0.0, %v3797
    %v3799 = vpop.f32.mrb[0].mxu0
    %v3800 = vadd.f32 0.0, %v3799
    %3801 = vdwg.mxu0
    %3802 = vmatprep.subr.mxu0 %v3432
    %3803 = vmatpush1.msra.mxu0 %v3431
    %3804 = vmatprep.subr.mxu0 %v3436
    %3805 = vmatpush1.msra.mxu0 %v3435
    %3806 = vmatprep.subr.mxu0 %v3440
    %3807 = vmatpush1.msra.mxu0 %v3439
    %3808 = vmatprep.subr.mxu0 %v3444
    %3809 = vmatpush1.msra.mxu0 %v3443
    %3810 = vmatprep.subr.mxu0 %v3448
    %3811 = vmatpush1.msra.mxu0 %v3447
    %3812 = vmatprep.subr.mxu0 %v3452
    %3813 = vmatpush1.msra.mxu0 %v3451
    %3814 = vmatprep.subr.mxu0 %v3456
    %3815 = vmatpush1.msra.mxu0 %v3455
    %3816 = vmatprep.subr.mxu0 %v3460
    %3817 = vmatpush1.msra.mxu0 %v3459
    %3818 = vmatprep.subr.mxu0 %v3464
    %3819 = vmatpush1.msra.mxu0 %v3463
    %3820 = vmatprep.subr.mxu0 %v3468
    %3821 = vmatpush1.msra.mxu0 %v3467
    %3822 = vmatprep.subr.mxu0 %v3472
    %3823 = vmatpush1.msra.mxu0 %v3471
    %3824 = vmatprep.subr.mxu0 %v3476
    %3825 = vmatpush1.msra.mxu0 %v3475
    %3826 = vmatprep.subr.mxu0 %v3480
    %3827 = vmatpush1.msra.mxu0 %v3479
    %3828 = vmatprep.subr.mxu0 %v3484
    %3829 = vmatpush1.msra.mxu0 %v3483
    %3830 = vmatprep.subr.mxu0 %v3488
    %3831 = vmatpush1.msra.mxu0 %v3487
    %3832 = vmatprep.subr.mxu0 %v3492
    %3833 = vmatpush1.msra.mxu0 %v3491
    %3834 = vmatprep.subr.mxu0 0.0
    %3835 = vmatpush1.msra.mxu0 0.0
    %3836 = vmatprep.subr.mxu0 0.0
    %3837 = vmatpush1.msra.mxu0 0.0
    %3838 = vmatprep.subr.mxu0 0.0
    %3839 = vmatpush1.msra.mxu0 0.0
    %3840 = vmatprep.subr.mxu0 0.0
    %3841 = vmatpush1.msra.mxu0 0.0
    %3842 = vmatprep.subr.mxu0 0.0
    %3843 = vmatpush1.msra.mxu0 0.0
    %3844 = vmatprep.subr.mxu0 0.0
    %3845 = vmatpush1.msra.mxu0 0.0
    %3846 = vmatprep.subr.mxu0 0.0
    %3847 = vmatpush1.msra.mxu0 0.0
    %3848 = vmatprep.subr.mxu0 0.0
    %3849 = vmatpush1.msra.mxu0 0.0
    %3850 = vmatprep.subr.mxu0 0.0
    %3851 = vmatpush1.msra.mxu0 0.0
    %3852 = vmatprep.subr.mxu0 0.0
    %3853 = vmatpush1.msra.mxu0 0.0
    %3854 = vmatprep.subr.mxu0 0.0
    %3855 = vmatpush1.msra.mxu0 0.0
    %3856 = vmatprep.subr.mxu0 0.0
    %3857 = vmatpush1.msra.mxu0 0.0
    %3858 = vmatprep.subr.mxu0 0.0
    %3859 = vmatpush1.msra.mxu0 0.0
    %3860 = vmatprep.subr.mxu0 0.0
    %3861 = vmatpush1.msra.mxu0 0.0
    %3862 = vmatprep.subr.mxu0 0.0
    %3863 = vmatpush1.msra.mxu0 0.0
    %3864 = vmatprep.subr.mxu0 0.0
    %3865 = vmatpush1.msra.mxu0 0.0
    %3866 = vmatprep.mubr.f32.mxu0 0.0
    %3867 = vmatmul.mubr.f32.gmra.mrb[0].mxu0 0.0
    %v3868 = vpop.f32.mrb[0].mxu0
    %v3869 = vadd.f32 0.0, %v3868
    %v3870 = vpop.f32.mrb[0].mxu0
    %v3871 = vadd.f32 0.0, %v3870
    %3872 = vdwg.mxu0
    %3873 = vmatprep.subr.mxu0 %v3434
    %3874 = vmatpush1.msra.mxu0 %v3433
    %3875 = vmatprep.subr.mxu0 %v3438
    %3876 = vmatpush1.msra.mxu0 %v3437
    %3877 = vmatprep.subr.mxu0 %v3442
    %3878 = vmatpush1.msra.mxu0 %v3441
    %3879 = vmatprep.subr.mxu0 %v3446
    %3880 = vmatpush1.msra.mxu0 %v3445
    %3881 = vmatprep.subr.mxu0 %v3450
    %3882 = vmatpush1.msra.mxu0 %v3449
    %3883 = vmatprep.subr.mxu0 %v3454
    %3884 = vmatpush1.msra.mxu0 %v3453
    %3885 = vmatprep.subr.mxu0 %v3458
    %3886 = vmatpush1.msra.mxu0 %v3457
    %3887 = vmatprep.subr.mxu0 %v3462
    %3888 = vmatpush1.msra.mxu0 %v3461
    %3889 = vmatprep.subr.mxu0 %v3466
    %3890 = vmatpush1.msra.mxu0 %v3465
    %3891 = vmatprep.subr.mxu0 %v3470
    %3892 = vmatpush1.msra.mxu0 %v3469
    %3893 = vmatprep.subr.mxu0 %v3474
    %3894 = vmatpush1.msra.mxu0 %v3473
    %3895 = vmatprep.subr.mxu0 %v3478
    %3896 = vmatpush1.msra.mxu0 %v3477
    %3897 = vmatprep.subr.mxu0 %v3482
    %3898 = vmatpush1.msra.mxu0 %v3481
    %3899 = vmatprep.subr.mxu0 %v3486
    %3900 = vmatpush1.msra.mxu0 %v3485
    %3901 = vmatprep.subr.mxu0 %v3490
    %3902 = vmatpush1.msra.mxu0 %v3489
    %3903 = vmatprep.subr.mxu0 %v3494
    %3904 = vmatpush1.msra.mxu0 %v3493
    %3905 = vmatprep.subr.mxu0 0.0
    %3906 = vmatpush1.msra.mxu0 0.0
    %3907 = vmatprep.subr.mxu0 0.0
    %3908 = vmatpush1.msra.mxu0 0.0
    %3909 = vmatprep.subr.mxu0 0.0
    %3910 = vmatpush1.msra.mxu0 0.0
    %3911 = vmatprep.subr.mxu0 0.0
    %3912 = vmatpush1.msra.mxu0 0.0
    %3913 = vmatprep.subr.mxu0 0.0
    %3914 = vmatpush1.msra.mxu0 0.0
    %3915 = vmatprep.subr.mxu0 0.0
    %3916 = vmatpush1.msra.mxu0 0.0
    %3917 = vmatprep.subr.mxu0 0.0
    %3918 = vmatpush1.msra.mxu0 0.0
    %3919 = vmatprep.subr.mxu0 0.0
    %3920 = vmatpush1.msra.mxu0 0.0
    %3921 = vmatprep.subr.mxu0 0.0
    %3922 = vmatpush1.msra.mxu0 0.0
    %3923 = vmatprep.subr.mxu0 0.0
    %3924 = vmatpush1.msra.mxu0 0.0
    %3925 = vmatprep.subr.mxu0 0.0
    %3926 = vmatpush1.msra.mxu0 0.0
    %3927 = vmatprep.subr.mxu0 0.0
    %3928 = vmatpush1.msra.mxu0 0.0
    %3929 = vmatprep.subr.mxu0 0.0
    %3930 = vmatpush1.msra.mxu0 0.0
    %3931 = vmatprep.subr.mxu0 0.0
    %3932 = vmatpush1.msra.mxu0 0.0
    %3933 = vmatprep.subr.mxu0 0.0
    %3934 = vmatpush1.msra.mxu0 0.0
    %3935 = vmatprep.subr.mxu0 0.0
    %3936 = vmatpush1.msra.mxu0 0.0
    %3937 = vmatprep.mubr.f32.mxu0 0.0
    %3938 = vmatmul.mubr.f32.gmra.mrb[0].mxu0 0.0
    %v3939 = vpop.f32.mrb[0].mxu0
    %v3940 = vadd.f32 0.0, %v3939
    %v3941 = vpop.f32.mrb[0].mxu0
    %v3942 = vadd.f32 0.0, %v3941
    %3943 = vdwg.mxu0
    %v3944 = vadd.f32 %v3727, %v3869
    %v3945 = vadd.f32 %v3729, %v3871
    %v3946 = vadd.f32 %v3798, %v3940
    %v3947 = vadd.f32 %v3800, %v3942
    %v3949 = vlaneseq
    %v3950 = vshrl.u32 %v3949, 7
    %v3951 = vsub.s32 0, %v3950
    %v3952 = vrot.slane %v3495, %v3951
    %v3953 = vlaneseq
    %v3954 = vshrl.u32 %v3953, 7
    %v3955 = vsub.s32 1, %v3954
    %v3956 = vrot.slane %v3495, %v3955
    %v3957 = vlaneseq
    %v3958 = vshrl.u32 %v3957, 7
    %v3959 = vsub.s32 2, %v3958
    %v3960 = vrot.slane %v3495, %v3959
    %v3961 = vlaneseq
    %v3962 = vshrl.u32 %v3961, 7
    %v3963 = vsub.s32 3, %v3962
    %v3964 = vrot.slane %v3495, %v3963
    %v3969 = vadd.f32 %v3944, %v3952
    %v3970 = vadd.f32 %v3945, %v3956
    %v3971 = vadd.f32 %v3946, %v3960
    %v3972 = vadd.f32 %v3947, %v3964
    %v3973 = vmul.f32 %v3969, 0.5
    %v3974 = vtanh.pop %v3973
    %v3975 = vmul.f32 %v3974, 0.5
    %v3976 = vadd.f32 %v3975, 0.5
    %v3977 = vmul.f32 %v3970, 0.5
    %v3978 = vtanh.pop %v3977
    %v3979 = vmul.f32 %v3978, 0.5
    %v3980 = vadd.f32 %v3979, 0.5
    %v3981 = vtanh.pop %v3971
    %v3982 = vmul.f32 %v3972, 0.5
    %v3983 = vtanh.pop %v3982
    %v3984 = vmul.f32 %v3983, 0.5
    %v3985 = vadd.f32 %v3984, 0.5
    %v3986 = vmul.f32 %v3980, 0.0
    %v3987 = vmul.f32 %v3976, %v3981
    %v3988 = vadd.f32 %v3986, %v3987
    %v3989 = vtanh.pop %v3988
    %v3990 = vmul.f32 %v3985, %v3989
    %v3991 = vadd.f32 %v2660, %v3585
    %v3992 = vadd.f32 %v2662, %v3587
    %v3993 = vadd.f32 %v2731, %v3656
    %v3994 = vadd.f32 %v2733, %v3658
    %v3995 = vmul.f32 %v3991, 0.5
    %v3996 = vtanh.pop %v3995
    %v3997 = vmul.f32 %v3996, 0.5
    %v3998 = vadd.f32 %v3997, 0.5
    %v3999 = vmul.f32 %v3992, 0.5
    %v4000 = vtanh.pop %v3999
    %v4001 = vmul.f32 %v4000, 0.5
    %v4002 = vadd.f32 %v4001, 0.5
    %v4003 = vtanh.pop %v3993
    %v4004 = vmul.f32 %v3994, 0.5
    %v4005 = vtanh.pop %v4004
    %v4006 = vmul.f32 %v4005, 0.5
    %v4007 = vadd.f32 %v4006, 0.5
    %v4008 = vmul.f32 %v4002, %v3515
    %v4009 = vmul.f32 %v3998, %v4003
    %v4010 = vadd.f32 %v4008, %v4009
    %v4011 = vtanh.pop %v4010
    %v4012 = vmul.f32 %v4007, %v4011
    %4013 = vmatprep.subr.mxu0 %v3304
    %4014 = vmatpush1.msra.mxu0 %v3303
    %4015 = vmatprep.subr.mxu0 %v3312
    %4016 = vmatpush1.msra.mxu0 %v3311
    %4017 = vmatprep.subr.mxu0 %v3320
    %4018 = vmatpush1.msra.mxu0 %v3319
    %4019 = vmatprep.subr.mxu0 %v3328
    %4020 = vmatpush1.msra.mxu0 %v3327
    %4021 = vmatprep.subr.mxu0 %v3336
    %4022 = vmatpush1.msra.mxu0 %v3335
    %4023 = vmatprep.subr.mxu0 %v3344
    %4024 = vmatpush1.msra.mxu0 %v3343
    %4025 = vmatprep.subr.mxu0 %v3352
    %4026 = vmatpush1.msra.mxu0 %v3351
    %4027 = vmatprep.subr.mxu0 %v3360
    %4028 = vmatpush1.msra.mxu0 %v3359
    %4029 = vmatprep.subr.mxu0 %v3368
    %4030 = vmatpush1.msra.mxu0 %v3367
    %4031 = vmatprep.subr.mxu0 %v3376
    %4032 = vmatpush1.msra.mxu0 %v3375
    %4033 = vmatprep.subr.mxu0 %v3384
    %4034 = vmatpush1.msra.mxu0 %v3383
    %4035 = vmatprep.subr.mxu0 %v3392
    %4036 = vmatpush1.msra.mxu0 %v3391
    %4037 = vmatprep.subr.mxu0 %v3400
    %4038 = vmatpush1.msra.mxu0 %v3399
    %4039 = vmatprep.subr.mxu0 %v3408
    %4040 = vmatpush1.msra.mxu0 %v3407
    %4041 = vmatprep.subr.mxu0 %v3416
    %4042 = vmatpush1.msra.mxu0 %v3415
    %4043 = vmatprep.subr.mxu0 %v3424
    %4044 = vmatpush1.msra.mxu0 %v3423
    %4045 = vmatprep.subr.mxu0 0.0
    %4046 = vmatpush1.msra.mxu0 0.0
    %4047 = vmatprep.subr.mxu0 0.0
    %4048 = vmatpush1.msra.mxu0 0.0
    %4049 = vmatprep.subr.mxu0 0.0
    %4050 = vmatpush1.msra.mxu0 0.0
    %4051 = vmatprep.subr.mxu0 0.0
    %4052 = vmatpush1.msra.mxu0 0.0
    %4053 = vmatprep.subr.mxu0 0.0
    %4054 = vmatpush1.msra.mxu0 0.0
    %4055 = vmatprep.subr.mxu0 0.0
    %4056 = vmatpush1.msra.mxu0 0.0
    %4057 = vmatprep.subr.mxu0 0.0
    %4058 = vmatpush1.msra.mxu0 0.0
    %4059 = vmatprep.subr.mxu0 0.0
    %4060 = vmatpush1.msra.mxu0 0.0
    %4061 = vmatprep.subr.mxu0 0.0
    %4062 = vmatpush1.msra.mxu0 0.0
    %4063 = vmatprep.subr.mxu0 0.0
    %4064 = vmatpush1.msra.mxu0 0.0
    %4065 = vmatprep.subr.mxu0 0.0
    %4066 = vmatpush1.msra.mxu0 0.0
    %4067 = vmatprep.subr.mxu0 0.0
    %4068 = vmatpush1.msra.mxu0 0.0
    %4069 = vmatprep.subr.mxu0 0.0
    %4070 = vmatpush1.msra.mxu0 0.0
    %4071 = vmatprep.subr.mxu0 0.0
    %4072 = vmatpush1.msra.mxu0 0.0
    %4073 = vmatprep.subr.mxu0 0.0
    %4074 = vmatpush1.msra.mxu0 0.0
    %4075 = vmatprep.subr.mxu0 0.0
    %4076 = vmatpush1.msra.mxu0 0.0
    %4077 = vmatprep.mubr.f32.mxu0 0.0
    %4078 = vmatmul.mubr.f32.gmra.mrb[0].mxu0 %v4012
    %v4079 = vpop.f32.mrb[0].mxu0
    %v4080 = vadd.f32 0.0, %v4079
    %v4081 = vpop.f32.mrb[0].mxu0
    %v4082 = vadd.f32 0.0, %v4081
    %4083 = vdwg.mxu0
    %4084 = vmatprep.subr.mxu0 %v3306
    %4085 = vmatpush1.msra.mxu0 %v3305
    %4086 = vmatprep.subr.mxu0 %v3314
    %4087 = vmatpush1.msra.mxu0 %v3313
    %4088 = vmatprep.subr.mxu0 %v3322
    %4089 = vmatpush1.msra.mxu0 %v3321
    %4090 = vmatprep.subr.mxu0 %v3330
    %4091 = vmatpush1.msra.mxu0 %v3329
    %4092 = vmatprep.subr.mxu0 %v3338
    %4093 = vmatpush1.msra.mxu0 %v3337
    %4094 = vmatprep.subr.mxu0 %v3346
    %4095 = vmatpush1.msra.mxu0 %v3345
    %4096 = vmatprep.subr.mxu0 %v3354
    %4097 = vmatpush1.msra.mxu0 %v3353
    %4098 = vmatprep.subr.mxu0 %v3362
    %4099 = vmatpush1.msra.mxu0 %v3361
    %4100 = vmatprep.subr.mxu0 %v3370
    %4101 = vmatpush1.msra.mxu0 %v3369
    %4102 = vmatprep.subr.mxu0 %v3378
    %4103 = vmatpush1.msra.mxu0 %v3377
    %4104 = vmatprep.subr.mxu0 %v3386
    %4105 = vmatpush1.msra.mxu0 %v3385
    %4106 = vmatprep.subr.mxu0 %v3394
    %4107 = vmatpush1.msra.mxu0 %v3393
    %4108 = vmatprep.subr.mxu0 %v3402
    %4109 = vmatpush1.msra.mxu0 %v3401
    %4110 = vmatprep.subr.mxu0 %v3410
    %4111 = vmatpush1.msra.mxu0 %v3409
    %4112 = vmatprep.subr.mxu0 %v3418
    %4113 = vmatpush1.msra.mxu0 %v3417
    %4114 = vmatprep.subr.mxu0 %v3426
    %4115 = vmatpush1.msra.mxu0 %v3425
    %4116 = vmatprep.subr.mxu0 0.0
    %4117 = vmatpush1.msra.mxu0 0.0
    %4118 = vmatprep.subr.mxu0 0.0
    %4119 = vmatpush1.msra.mxu0 0.0
    %4120 = vmatprep.subr.mxu0 0.0
    %4121 = vmatpush1.msra.mxu0 0.0
    %4122 = vmatprep.subr.mxu0 0.0
    %4123 = vmatpush1.msra.mxu0 0.0
    %4124 = vmatprep.subr.mxu0 0.0
    %4125 = vmatpush1.msra.mxu0 0.0
    %4126 = vmatprep.subr.mxu0 0.0
    %4127 = vmatpush1.msra.mxu0 0.0
    %4128 = vmatprep.subr.mxu0 0.0
    %4129 = vmatpush1.msra.mxu0 0.0
    %4130 = vmatprep.subr.mxu0 0.0
    %4131 = vmatpush1.msra.mxu0 0.0
    %4132 = vmatprep.subr.mxu0 0.0
    %4133 = vmatpush1.msra.mxu0 0.0
    %4134 = vmatprep.subr.mxu0 0.0
    %4135 = vmatpush1.msra.mxu0 0.0
    %4136 = vmatprep.subr.mxu0 0.0
    %4137 = vmatpush1.msra.mxu0 0.0
    %4138 = vmatprep.subr.mxu0 0.0
    %4139 = vmatpush1.msra.mxu0 0.0
    %4140 = vmatprep.subr.mxu0 0.0
    %4141 = vmatpush1.msra.mxu0 0.0
    %4142 = vmatprep.subr.mxu0 0.0
    %4143 = vmatpush1.msra.mxu0 0.0
    %4144 = vmatprep.subr.mxu0 0.0
    %4145 = vmatpush1.msra.mxu0 0.0
    %4146 = vmatprep.subr.mxu0 0.0
    %4147 = vmatpush1.msra.mxu0 0.0
    %4148 = vmatprep.mubr.f32.mxu0 0.0
    %4149 = vmatmul.mubr.f32.gmra.mrb[0].mxu0 %v4012
    %v4150 = vpop.f32.mrb[0].mxu0
    %v4151 = vadd.f32 0.0, %v4150
    %v4152 = vpop.f32.mrb[0].mxu0
    %v4153 = vadd.f32 0.0, %v4152
    %4154 = vdwg.mxu0
    %4155 = vmatprep.subr.mxu0 %v3308
    %4156 = vmatpush1.msra.mxu0 %v3307
    %4157 = vmatprep.subr.mxu0 %v3316
    %4158 = vmatpush1.msra.mxu0 %v3315
    %4159 = vmatprep.subr.mxu0 %v3324
    %4160 = vmatpush1.msra.mxu0 %v3323
    %4161 = vmatprep.subr.mxu0 %v3332
    %4162 = vmatpush1.msra.mxu0 %v3331
    %4163 = vmatprep.subr.mxu0 %v3340
    %4164 = vmatpush1.msra.mxu0 %v3339
    %4165 = vmatprep.subr.mxu0 %v3348
    %4166 = vmatpush1.msra.mxu0 %v3347
    %4167 = vmatprep.subr.mxu0 %v3356
    %4168 = vmatpush1.msra.mxu0 %v3355
    %4169 = vmatprep.subr.mxu0 %v3364
    %4170 = vmatpush1.msra.mxu0 %v3363
    %4171 = vmatprep.subr.mxu0 %v3372
    %4172 = vmatpush1.msra.mxu0 %v3371
    %4173 = vmatprep.subr.mxu0 %v3380
    %4174 = vmatpush1.msra.mxu0 %v3379
    %4175 = vmatprep.subr.mxu0 %v3388
    %4176 = vmatpush1.msra.mxu0 %v3387
    %4177 = vmatprep.subr.mxu0 %v3396
    %4178 = vmatpush1.msra.mxu0 %v3395
    %4179 = vmatprep.subr.mxu0 %v3404
    %4180 = vmatpush1.msra.mxu0 %v3403
    %4181 = vmatprep.subr.mxu0 %v3412
    %4182 = vmatpush1.msra.mxu0 %v3411
    %4183 = vmatprep.subr.mxu0 %v3420
    %4184 = vmatpush1.msra.mxu0 %v3419
    %4185 = vmatprep.subr.mxu0 %v3428
    %4186 = vmatpush1.msra.mxu0 %v3427
    %4187 = vmatprep.subr.mxu0 0.0
    %4188 = vmatpush1.msra.mxu0 0.0
    %4189 = vmatprep.subr.mxu0 0.0
    %4190 = vmatpush1.msra.mxu0 0.0
    %4191 = vmatprep.subr.mxu0 0.0
    %4192 = vmatpush1.msra.mxu0 0.0
    %4193 = vmatprep.subr.mxu0 0.0
    %4194 = vmatpush1.msra.mxu0 0.0
    %4195 = vmatprep.subr.mxu0 0.0
    %4196 = vmatpush1.msra.mxu0 0.0
    %4197 = vmatprep.subr.mxu0 0.0
    %4198 = vmatpush1.msra.mxu0 0.0
    %4199 = vmatprep.subr.mxu0 0.0
    %4200 = vmatpush1.msra.mxu0 0.0
    %4201 = vmatprep.subr.mxu0 0.0
    %4202 = vmatpush1.msra.mxu0 0.0
    %4203 = vmatprep.subr.mxu0 0.0
    %4204 = vmatpush1.msra.mxu0 0.0
    %4205 = vmatprep.subr.mxu0 0.0
    %4206 = vmatpush1.msra.mxu0 0.0
    %4207 = vmatprep.subr.mxu0 0.0
    %4208 = vmatpush1.msra.mxu0 0.0
    %4209 = vmatprep.subr.mxu0 0.0
    %4210 = vmatpush1.msra.mxu0 0.0
    %4211 = vmatprep.subr.mxu0 0.0
    %4212 = vmatpush1.msra.mxu0 0.0
    %4213 = vmatprep.subr.mxu0 0.0
    %4214 = vmatpush1.msra.mxu0 0.0
    %4215 = vmatprep.subr.mxu0 0.0
    %4216 = vmatpush1.msra.mxu0 0.0
    %4217 = vmatprep.subr.mxu0 0.0
    %4218 = vmatpush1.msra.mxu0 0.0
    %4219 = vmatprep.mubr.f32.mxu0 0.0
    %4220 = vmatmul.mubr.f32.gmra.mrb[0].mxu0 %v4012
    %v4221 = vpop.f32.mrb[0].mxu0
    %v4222 = vadd.f32 0.0, %v4221
    %v4223 = vpop.f32.mrb[0].mxu0
    %v4224 = vadd.f32 0.0, %v4223
    %4225 = vdwg.mxu0
    %4226 = vmatprep.subr.mxu0 %v3310
    %4227 = vmatpush1.msra.mxu0 %v3309
    %4228 = vmatprep.subr.mxu0 %v3318
    %4229 = vmatpush1.msra.mxu0 %v3317
    %4230 = vmatprep.subr.mxu0 %v3326
    %4231 = vmatpush1.msra.mxu0 %v3325
    %4232 = vmatprep.subr.mxu0 %v3334
    %4233 = vmatpush1.msra.mxu0 %v3333
    %4234 = vmatprep.subr.mxu0 %v3342
    %4235 = vmatpush1.msra.mxu0 %v3341
    %4236 = vmatprep.subr.mxu0 %v3350
    %4237 = vmatpush1.msra.mxu0 %v3349
    %4238 = vmatprep.subr.mxu0 %v3358
    %4239 = vmatpush1.msra.mxu0 %v3357
    %4240 = vmatprep.subr.mxu0 %v3366
    %4241 = vmatpush1.msra.mxu0 %v3365
    %4242 = vmatprep.subr.mxu0 %v3374
    %4243 = vmatpush1.msra.mxu0 %v3373
    %4244 = vmatprep.subr.mxu0 %v3382
    %4245 = vmatpush1.msra.mxu0 %v3381
    %4246 = vmatprep.subr.mxu0 %v3390
    %4247 = vmatpush1.msra.mxu0 %v3389
    %4248 = vmatprep.subr.mxu0 %v3398
    %4249 = vmatpush1.msra.mxu0 %v3397
    %4250 = vmatprep.subr.mxu0 %v3406
    %4251 = vmatpush1.msra.mxu0 %v3405
    %4252 = vmatprep.subr.mxu0 %v3414
    %4253 = vmatpush1.msra.mxu0 %v3413
    %4254 = vmatprep.subr.mxu0 %v3422
    %4255 = vmatpush1.msra.mxu0 %v3421
    %4256 = vmatprep.subr.mxu0 %v3430
    %4257 = vmatpush1.msra.mxu0 %v3429
    %4258 = vmatprep.subr.mxu0 0.0
    %4259 = vmatpush1.msra.mxu0 0.0
    %4260 = vmatprep.subr.mxu0 0.0
    %4261 = vmatpush1.msra.mxu0 0.0
    %4262 = vmatprep.subr.mxu0 0.0
    %4263 = vmatpush1.msra.mxu0 0.0
    %4264 = vmatprep.subr.mxu0 0.0
    %4265 = vmatpush1.msra.mxu0 0.0
    %4266 = vmatprep.subr.mxu0 0.0
    %4267 = vmatpush1.msra.mxu0 0.0
    %4268 = vmatprep.subr.mxu0 0.0
    %4269 = vmatpush1.msra.mxu0 0.0
    %4270 = vmatprep.subr.mxu0 0.0
    %4271 = vmatpush1.msra.mxu0 0.0
    %4272 = vmatprep.subr.mxu0 0.0
    %4273 = vmatpush1.msra.mxu0 0.0
    %4274 = vmatprep.subr.mxu0 0.0
    %4275 = vmatpush1.msra.mxu0 0.0
    %4276 = vmatprep.subr.mxu0 0.0
    %4277 = vmatpush1.msra.mxu0 0.0
    %4278 = vmatprep.subr.mxu0 0.0
    %4279 = vmatpush1.msra.mxu0 0.0
    %4280 = vmatprep.subr.mxu0 0.0
    %4281 = vmatpush1.msra.mxu0 0.0
    %4282 = vmatprep.subr.mxu0 0.0
    %4283 = vmatpush1.msra.mxu0 0.0
    %4284 = vmatprep.subr.mxu0 0.0
    %4285 = vmatpush1.msra.mxu0 0.0
    %4286 = vmatprep.subr.mxu0 0.0
    %4287 = vmatpush1.msra.mxu0 0.0
    %4288 = vmatprep.subr.mxu0 0.0
    %4289 = vmatpush1.msra.mxu0 0.0
    %4290 = vmatprep.mubr.f32.mxu0 0.0
    %4291 = vmatmul.mubr.f32.gmra.mrb[0].mxu0 %v4012
    %v4292 = vpop.f32.mrb[0].mxu0
    %v4293 = vadd.f32 0.0, %v4292
    %v4294 = vpop.f32.mrb[0].mxu0
    %v4295 = vadd.f32 0.0, %v4294
    %4296 = vdwg.mxu0
    %4297 = vmatprep.subr.mxu0 %v3432
    %4298 = vmatpush1.msra.mxu0 %v3431
    %4299 = vmatprep.subr.mxu0 %v3436
    %4300 = vmatpush1.msra.mxu0 %v3435
    %4301 = vmatprep.subr.mxu0 %v3440
    %4302 = vmatpush1.msra.mxu0 %v3439
    %4303 = vmatprep.subr.mxu0 %v3444
    %4304 = vmatpush1.msra.mxu0 %v3443
    %4305 = vmatprep.subr.mxu0 %v3448
    %4306 = vmatpush1.msra.mxu0 %v3447
    %4307 = vmatprep.subr.mxu0 %v3452
    %4308 = vmatpush1.msra.mxu0 %v3451
    %4309 = vmatprep.subr.mxu0 %v3456
    %4310 = vmatpush1.msra.mxu0 %v3455
    %4311 = vmatprep.subr.mxu0 %v3460
    %4312 = vmatpush1.msra.mxu0 %v3459
    %4313 = vmatprep.subr.mxu0 %v3464
    %4314 = vmatpush1.msra.mxu0 %v3463
    %4315 = vmatprep.subr.mxu0 %v3468
    %4316 = vmatpush1.msra.mxu0 %v3467
    %4317 = vmatprep.subr.mxu0 %v3472
    %4318 = vmatpush1.msra.mxu0 %v3471
    %4319 = vmatprep.subr.mxu0 %v3476
    %4320 = vmatpush1.msra.mxu0 %v3475
    %4321 = vmatprep.subr.mxu0 %v3480
    %4322 = vmatpush1.msra.mxu0 %v3479
    %4323 = vmatprep.subr.mxu0 %v3484
    %4324 = vmatpush1.msra.mxu0 %v3483
    %4325 = vmatprep.subr.mxu0 %v3488
    %4326 = vmatpush1.msra.mxu0 %v3487
    %4327 = vmatprep.subr.mxu0 %v3492
    %4328 = vmatpush1.msra.mxu0 %v3491
    %4329 = vmatprep.subr.mxu0 0.0
    %4330 = vmatpush1.msra.mxu0 0.0
    %4331 = vmatprep.subr.mxu0 0.0
    %4332 = vmatpush1.msra.mxu0 0.0
    %4333 = vmatprep.subr.mxu0 0.0
    %4334 = vmatpush1.msra.mxu0 0.0
    %4335 = vmatprep.subr.mxu0 0.0
    %4336 = vmatpush1.msra.mxu0 0.0
    %4337 = vmatprep.subr.mxu0 0.0
    %4338 = vmatpush1.msra.mxu0 0.0
    %4339 = vmatprep.subr.mxu0 0.0
    %4340 = vmatpush1.msra.mxu0 0.0
    %4341 = vmatprep.subr.mxu0 0.0
    %4342 = vmatpush1.msra.mxu0 0.0
    %4343 = vmatprep.subr.mxu0 0.0
    %4344 = vmatpush1.msra.mxu0 0.0
    %4345 = vmatprep.subr.mxu0 0.0
    %4346 = vmatpush1.msra.mxu0 0.0
    %4347 = vmatprep.subr.mxu0 0.0
    %4348 = vmatpush1.msra.mxu0 0.0
    %4349 = vmatprep.subr.mxu0 0.0
    %4350 = vmatpush1.msra.mxu0 0.0
    %4351 = vmatprep.subr.mxu0 0.0
    %4352 = vmatpush1.msra.mxu0 0.0
    %4353 = vmatprep.subr.mxu0 0.0
    %4354 = vmatpush1.msra.mxu0 0.0
    %4355 = vmatprep.subr.mxu0 0.0
    %4356 = vmatpush1.msra.mxu0 0.0
    %4357 = vmatprep.subr.mxu0 0.0
    %4358 = vmatpush1.msra.mxu0 0.0
    %4359 = vmatprep.subr.mxu0 0.0
    %4360 = vmatpush1.msra.mxu0 0.0
    %4361 = vmatprep.mubr.f32.mxu0 0.0
    %4362 = vmatmul.mubr.f32.gmra.mrb[0].mxu0 %v3990
    %v4363 = vpop.f32.mrb[0].mxu0
    %v4364 = vadd.f32 0.0, %v4363
    %v4365 = vpop.f32.mrb[0].mxu0
    %v4366 = vadd.f32 0.0, %v4365
    %4367 = vdwg.mxu0
    %4368 = vmatprep.subr.mxu0 %v3434
    %4369 = vmatpush1.msra.mxu0 %v3433
    %4370 = vmatprep.subr.mxu0 %v3438
    %4371 = vmatpush1.msra.mxu0 %v3437
    %4372 = vmatprep.subr.mxu0 %v3442
    %4373 = vmatpush1.msra.mxu0 %v3441
    %4374 = vmatprep.subr.mxu0 %v3446
    %4375 = vmatpush1.msra.mxu0 %v3445
    %4376 = vmatprep.subr.mxu0 %v3450
    %4377 = vmatpush1.msra.mxu0 %v3449
    %4378 = vmatprep.subr.mxu0 %v3454
    %4379 = vmatpush1.msra.mxu0 %v3453
    %4380 = vmatprep.subr.mxu0 %v3458
    %4381 = vmatpush1.msra.mxu0 %v3457
    %4382 = vmatprep.subr.mxu0 %v3462
    %4383 = vmatpush1.msra.mxu0 %v3461
    %4384 = vmatprep.subr.mxu0 %v3466
    %4385 = vmatpush1.msra.mxu0 %v3465
    %4386 = vmatprep.subr.mxu0 %v3470
    %4387 = vmatpush1.msra.mxu0 %v3469
    %4388 = vmatprep.subr.mxu0 %v3474
    %4389 = vmatpush1.msra.mxu0 %v3473
    %4390 = vmatprep.subr.mxu0 %v3478
    %4391 = vmatpush1.msra.mxu0 %v3477
    %4392 = vmatprep.subr.mxu0 %v3482
    %4393 = vmatpush1.msra.mxu0 %v3481
    %4394 = vmatprep.subr.mxu0 %v3486
    %4395 = vmatpush1.msra.mxu0 %v3485
    %4396 = vmatprep.subr.mxu0 %v3490
    %4397 = vmatpush1.msra.mxu0 %v3489
    %4398 = vmatprep.subr.mxu0 %v3494
    %4399 = vmatpush1.msra.mxu0 %v3493
    %4400 = vmatprep.subr.mxu0 0.0
    %4401 = vmatpush1.msra.mxu0 0.0
    %4402 = vmatprep.subr.mxu0 0.0
    %4403 = vmatpush1.msra.mxu0 0.0
    %4404 = vmatprep.subr.mxu0 0.0
    %4405 = vmatpush1.msra.mxu0 0.0
    %4406 = vmatprep.subr.mxu0 0.0
    %4407 = vmatpush1.msra.mxu0 0.0
    %4408 = vmatprep.subr.mxu0 0.0
    %4409 = vmatpush1.msra.mxu0 0.0
    %4410 = vmatprep.subr.mxu0 0.0
    %4411 = vmatpush1.msra.mxu0 0.0
    %4412 = vmatprep.subr.mxu0 0.0
    %4413 = vmatpush1.msra.mxu0 0.0
    %4414 = vmatprep.subr.mxu0 0.0
    %4415 = vmatpush1.msra.mxu0 0.0
    %4416 = vmatprep.subr.mxu0 0.0
    %4417 = vmatpush1.msra.mxu0 0.0
    %4418 = vmatprep.subr.mxu0 0.0
    %4419 = vmatpush1.msra.mxu0 0.0
    %4420 = vmatprep.subr.mxu0 0.0
    %4421 = vmatpush1.msra.mxu0 0.0
    %4422 = vmatprep.subr.mxu0 0.0
    %4423 = vmatpush1.msra.mxu0 0.0
    %4424 = vmatprep.subr.mxu0 0.0
    %4425 = vmatpush1.msra.mxu0 0.0
    %4426 = vmatprep.subr.mxu0 0.0
    %4427 = vmatpush1.msra.mxu0 0.0
    %4428 = vmatprep.subr.mxu0 0.0
    %4429 = vmatpush1.msra.mxu0 0.0
    %4430 = vmatprep.subr.mxu0 0.0
    %4431 = vmatpush1.msra.mxu0 0.0
    %4432 = vmatprep.mubr.f32.mxu0 0.0
    %4433 = vmatmul.mubr.f32.gmra.mrb[0].mxu0 %v3990
    %v4434 = vpop.f32.mrb[0].mxu0
    %v4435 = vadd.f32 0.0, %v4434
    %v4436 = vpop.f32.mrb[0].mxu0
    %v4437 = vadd.f32 0.0, %v4436
    %4438 = vdwg.mxu0
    %v4439 = vadd.f32 %v4222, %v4364
    %v4440 = vadd.f32 %v4224, %v4366
    %v4441 = vadd.f32 %v4293, %v4435
    %v4442 = vadd.f32 %v4295, %v4437
    %v4443 = vadd.f32 %v4439, %v3952
    %v4444 = vadd.f32 %v4440, %v3956
    %v4445 = vadd.f32 %v4441, %v3960
    %v4446 = vadd.f32 %v4442, %v3964
    %v4447 = vmul.f32 %v4443, 0.5
    %v4448 = vtanh.pop %v4447
    %v4449 = vmul.f32 %v4448, 0.5
    %v4450 = vadd.f32 %v4449, 0.5
    %v4451 = vmul.f32 %v4444, 0.5
    %v4452 = vtanh.pop %v4451
    %v4453 = vmul.f32 %v4452, 0.5
    %v4454 = vadd.f32 %v4453, 0.5
    %v4455 = vtanh.pop %v4445
    %v4456 = vmul.f32 %v4446, 0.5
    %v4457 = vtanh.pop %v4456
    %v4458 = vmul.f32 %v4457, 0.5
    %v4459 = vadd.f32 %v4458, 0.5
    %v4460 = vmul.f32 %v4454, %v3988
    %v4461 = vmul.f32 %v4450, %v4455
    %v4462 = vadd.f32 %v4460, %v4461
    %v4463 = vtanh.pop %v4462
    %v4464 = vmul.f32 %v4459, %v4463
    %v4465 = vadd.f32 %v2802, %v4080
    %v4466 = vadd.f32 %v2804, %v4082
    %v4467 = vadd.f32 %v2873, %v4151
    %v4468 = vadd.f32 %v2875, %v4153
    %v4469 = vmul.f32 %v4465, 0.5
    %v4470 = vtanh.pop %v4469
    %v4471 = vmul.f32 %v4470, 0.5
    %v4472 = vadd.f32 %v4471, 0.5
    %v4473 = vmul.f32 %v4466, 0.5
    %v4474 = vtanh.pop %v4473
    %v4475 = vmul.f32 %v4474, 0.5
    %v4476 = vadd.f32 %v4475, 0.5
    %v4477 = vtanh.pop %v4467
    %v4478 = vmul.f32 %v4468, 0.5
    %v4479 = vtanh.pop %v4478
    %v4480 = vmul.f32 %v4479, 0.5
    %v4481 = vadd.f32 %v4480, 0.5
    %v4482 = vmul.f32 %v4476, %v4010
    %v4483 = vmul.f32 %v4472, %v4477
    %v4484 = vadd.f32 %v4482, %v4483
    %v4485 = vtanh.pop %v4484
    %v4486 = vmul.f32 %v4481, %v4485
    %4487 = vmatprep.subr.mxu0 %v3304
    %4488 = vmatpush1.msra.mxu0 %v3303
    %4489 = vmatprep.subr.mxu0 %v3312
    %4490 = vmatpush1.msra.mxu0 %v3311
    %4491 = vmatprep.subr.mxu0 %v3320
    %4492 = vmatpush1.msra.mxu0 %v3319
    %4493 = vmatprep.subr.mxu0 %v3328
    %4494 = vmatpush1.msra.mxu0 %v3327
    %4495 = vmatprep.subr.mxu0 %v3336
    %4496 = vmatpush1.msra.mxu0 %v3335
    %4497 = vmatprep.subr.mxu0 %v3344
    %4498 = vmatpush1.msra.mxu0 %v3343
    %4499 = vmatprep.subr.mxu0 %v3352
    %4500 = vmatpush1.msra.mxu0 %v3351
    %4501 = vmatprep.subr.mxu0 %v3360
    %4502 = vmatpush1.msra.mxu0 %v3359
    %4503 = vmatprep.subr.mxu0 %v3368
    %4504 = vmatpush1.msra.mxu0 %v3367
    %4505 = vmatprep.subr.mxu0 %v3376
    %4506 = vmatpush1.msra.mxu0 %v3375
    %4507 = vmatprep.subr.mxu0 %v3384
    %4508 = vmatpush1.msra.mxu0 %v3383
    %4509 = vmatprep.subr.mxu0 %v3392
    %4510 = vmatpush1.msra.mxu0 %v3391
    %4511 = vmatprep.subr.mxu0 %v3400
    %4512 = vmatpush1.msra.mxu0 %v3399
    %4513 = vmatprep.subr.mxu0 %v3408
    %4514 = vmatpush1.msra.mxu0 %v3407
    %4515 = vmatprep.subr.mxu0 %v3416
    %4516 = vmatpush1.msra.mxu0 %v3415
    %4517 = vmatprep.subr.mxu0 %v3424
    %4518 = vmatpush1.msra.mxu0 %v3423
    %4519 = vmatprep.subr.mxu0 0.0
    %4520 = vmatpush1.msra.mxu0 0.0
    %4521 = vmatprep.subr.mxu0 0.0
    %4522 = vmatpush1.msra.mxu0 0.0
    %4523 = vmatprep.subr.mxu0 0.0
    %4524 = vmatpush1.msra.mxu0 0.0
    %4525 = vmatprep.subr.mxu0 0.0
    %4526 = vmatpush1.msra.mxu0 0.0
    %4527 = vmatprep.subr.mxu0 0.0
    %4528 = vmatpush1.msra.mxu0 0.0
    %4529 = vmatprep.subr.mxu0 0.0
    %4530 = vmatpush1.msra.mxu0 0.0
    %4531 = vmatprep.subr.mxu0 0.0
    %4532 = vmatpush1.msra.mxu0 0.0
    %4533 = vmatprep.subr.mxu0 0.0
    %4534 = vmatpush1.msra.mxu0 0.0
    %4535 = vmatprep.subr.mxu0 0.0
    %4536 = vmatpush1.msra.mxu0 0.0
    %4537 = vmatprep.subr.mxu0 0.0
    %4538 = vmatpush1.msra.mxu0 0.0
    %4539 = vmatprep.subr.mxu0 0.0
    %4540 = vmatpush1.msra.mxu0 0.0
    %4541 = vmatprep.subr.mxu0 0.0
    %4542 = vmatpush1.msra.mxu0 0.0
    %4543 = vmatprep.subr.mxu0 0.0
    %4544 = vmatpush1.msra.mxu0 0.0
    %4545 = vmatprep.subr.mxu0 0.0
    %4546 = vmatpush1.msra.mxu0 0.0
    %4547 = vmatprep.subr.mxu0 0.0
    %4548 = vmatpush1.msra.mxu0 0.0
    %4549 = vmatprep.subr.mxu0 0.0
    %4550 = vmatpush1.msra.mxu0 0.0
    %4551 = vmatprep.mubr.f32.mxu0 0.0
    %4552 = vmatmul.mubr.f32.gmra.mrb[0].mxu0 %v4486
    %v4553 = vpop.f32.mrb[0].mxu0
    %v4554 = vadd.f32 0.0, %v4553
    %v4555 = vpop.f32.mrb[0].mxu0
    %v4556 = vadd.f32 0.0, %v4555
    %4557 = vdwg.mxu0
    %4558 = vmatprep.subr.mxu0 %v3306
    %4559 = vmatpush1.msra.mxu0 %v3305
    %4560 = vmatprep.subr.mxu0 %v3314
    %4561 = vmatpush1.msra.mxu0 %v3313
    %4562 = vmatprep.subr.mxu0 %v3322
    %4563 = vmatpush1.msra.mxu0 %v3321
    %4564 = vmatprep.subr.mxu0 %v3330
    %4565 = vmatpush1.msra.mxu0 %v3329
    %4566 = vmatprep.subr.mxu0 %v3338
    %4567 = vmatpush1.msra.mxu0 %v3337
    %4568 = vmatprep.subr.mxu0 %v3346
    %4569 = vmatpush1.msra.mxu0 %v3345
    %4570 = vmatprep.subr.mxu0 %v3354
    %4571 = vmatpush1.msra.mxu0 %v3353
    %4572 = vmatprep.subr.mxu0 %v3362
    %4573 = vmatpush1.msra.mxu0 %v3361
    %4574 = vmatprep.subr.mxu0 %v3370
    %4575 = vmatpush1.msra.mxu0 %v3369
    %4576 = vmatprep.subr.mxu0 %v3378
    %4577 = vmatpush1.msra.mxu0 %v3377
    %4578 = vmatprep.subr.mxu0 %v3386
    %4579 = vmatpush1.msra.mxu0 %v3385
    %4580 = vmatprep.subr.mxu0 %v3394
    %4581 = vmatpush1.msra.mxu0 %v3393
    %4582 = vmatprep.subr.mxu0 %v3402
    %4583 = vmatpush1.msra.mxu0 %v3401
    %4584 = vmatprep.subr.mxu0 %v3410
    %4585 = vmatpush1.msra.mxu0 %v3409
    %4586 = vmatprep.subr.mxu0 %v3418
    %4587 = vmatpush1.msra.mxu0 %v3417
    %4588 = vmatprep.subr.mxu0 %v3426
    %4589 = vmatpush1.msra.mxu0 %v3425
    %4590 = vmatprep.subr.mxu0 0.0
    %4591 = vmatpush1.msra.mxu0 0.0
    %4592 = vmatprep.subr.mxu0 0.0
    %4593 = vmatpush1.msra.mxu0 0.0
    %4594 = vmatprep.subr.mxu0 0.0
    %4595 = vmatpush1.msra.mxu0 0.0
    %4596 = vmatprep.subr.mxu0 0.0
    %4597 = vmatpush1.msra.mxu0 0.0
    %4598 = vmatprep.subr.mxu0 0.0
    %4599 = vmatpush1.msra.mxu0 0.0
    %4600 = vmatprep.subr.mxu0 0.0
    %4601 = vmatpush1.msra.mxu0 0.0
    %4602 = vmatprep.subr.mxu0 0.0
    %4603 = vmatpush1.msra.mxu0 0.0
    %4604 = vmatprep.subr.mxu0 0.0
    %4605 = vmatpush1.msra.mxu0 0.0
    %4606 = vmatprep.subr.mxu0 0.0
    %4607 = vmatpush1.msra.mxu0 0.0
    %4608 = vmatprep.subr.mxu0 0.0
    %4609 = vmatpush1.msra.mxu0 0.0
    %4610 = vmatprep.subr.mxu0 0.0
    %4611 = vmatpush1.msra.mxu0 0.0
    %4612 = vmatprep.subr.mxu0 0.0
    %4613 = vmatpush1.msra.mxu0 0.0
    %4614 = vmatprep.subr.mxu0 0.0
    %4615 = vmatpush1.msra.mxu0 0.0
    %4616 = vmatprep.subr.mxu0 0.0
    %4617 = vmatpush1.msra.mxu0 0.0
    %4618 = vmatprep.subr.mxu0 0.0
    %4619 = vmatpush1.msra.mxu0 0.0
    %4620 = vmatprep.subr.mxu0 0.0
    %4621 = vmatpush1.msra.mxu0 0.0
    %4622 = vmatprep.mubr.f32.mxu0 0.0
    %4623 = vmatmul.mubr.f32.gmra.mrb[0].mxu0 %v4486
    %v4624 = vpop.f32.mrb[0].mxu0
    %v4625 = vadd.f32 0.0, %v4624
    %v4626 = vpop.f32.mrb[0].mxu0
    %v4627 = vadd.f32 0.0, %v4626
    %4628 = vdwg.mxu0
    %4629 = vmatprep.subr.mxu0 %v3308
    %4630 = vmatpush1.msra.mxu0 %v3307
    %4631 = vmatprep.subr.mxu0 %v3316
    %4632 = vmatpush1.msra.mxu0 %v3315
    %4633 = vmatprep.subr.mxu0 %v3324
    %4634 = vmatpush1.msra.mxu0 %v3323
    %4635 = vmatprep.subr.mxu0 %v3332
    %4636 = vmatpush1.msra.mxu0 %v3331
    %4637 = vmatprep.subr.mxu0 %v3340
    %4638 = vmatpush1.msra.mxu0 %v3339
    %4639 = vmatprep.subr.mxu0 %v3348
    %4640 = vmatpush1.msra.mxu0 %v3347
    %4641 = vmatprep.subr.mxu0 %v3356
    %4642 = vmatpush1.msra.mxu0 %v3355
    %4643 = vmatprep.subr.mxu0 %v3364
    %4644 = vmatpush1.msra.mxu0 %v3363
    %4645 = vmatprep.subr.mxu0 %v3372
    %4646 = vmatpush1.msra.mxu0 %v3371
    %4647 = vmatprep.subr.mxu0 %v3380
    %4648 = vmatpush1.msra.mxu0 %v3379
    %4649 = vmatprep.subr.mxu0 %v3388
    %4650 = vmatpush1.msra.mxu0 %v3387
    %4651 = vmatprep.subr.mxu0 %v3396
    %4652 = vmatpush1.msra.mxu0 %v3395
    %4653 = vmatprep.subr.mxu0 %v3404
    %4654 = vmatpush1.msra.mxu0 %v3403
    %4655 = vmatprep.subr.mxu0 %v3412
    %4656 = vmatpush1.msra.mxu0 %v3411
    %4657 = vmatprep.subr.mxu0 %v3420
    %4658 = vmatpush1.msra.mxu0 %v3419
    %4659 = vmatprep.subr.mxu0 %v3428
    %4660 = vmatpush1.msra.mxu0 %v3427
    %4661 = vmatprep.subr.mxu0 0.0
    %4662 = vmatpush1.msra.mxu0 0.0
    %4663 = vmatprep.subr.mxu0 0.0
    %4664 = vmatpush1.msra.mxu0 0.0
    %4665 = vmatprep.subr.mxu0 0.0
    %4666 = vmatpush1.msra.mxu0 0.0
    %4667 = vmatprep.subr.mxu0 0.0
    %4668 = vmatpush1.msra.mxu0 0.0
    %4669 = vmatprep.subr.mxu0 0.0
    %4670 = vmatpush1.msra.mxu0 0.0
    %4671 = vmatprep.subr.mxu0 0.0
    %4672 = vmatpush1.msra.mxu0 0.0
    %4673 = vmatprep.subr.mxu0 0.0
    %4674 = vmatpush1.msra.mxu0 0.0
    %4675 = vmatprep.subr.mxu0 0.0
    %4676 = vmatpush1.msra.mxu0 0.0
    %4677 = vmatprep.subr.mxu0 0.0
    %4678 = vmatpush1.msra.mxu0 0.0
    %4679 = vmatprep.subr.mxu0 0.0
    %4680 = vmatpush1.msra.mxu0 0.0
    %4681 = vmatprep.subr.mxu0 0.0
    %4682 = vmatpush1.msra.mxu0 0.0
    %4683 = vmatprep.subr.mxu0 0.0
    %4684 = vmatpush1.msra.mxu0 0.0
    %4685 = vmatprep.subr.mxu0 0.0
    %4686 = vmatpush1.msra.mxu0 0.0
    %4687 = vmatprep.subr.mxu0 0.0
    %4688 = vmatpush1.msra.mxu0 0.0
    %4689 = vmatprep.subr.mxu0 0.0
    %4690 = vmatpush1.msra.mxu0 0.0
    %4691 = vmatprep.subr.mxu0 0.0
    %4692 = vmatpush1.msra.mxu0 0.0
    %4693 = vmatprep.mubr.f32.mxu0 0.0
    %4694 = vmatmul.mubr.f32.gmra.mrb[0].mxu0 %v4486
    %v4695 = vpop.f32.mrb[0].mxu0
    %v4696 = vadd.f32 0.0, %v4695
    %v4697 = vpop.f32.mrb[0].mxu0
    %v4698 = vadd.f32 0.0, %v4697
    %4699 = vdwg.mxu0
    %4700 = vmatprep.subr.mxu0 %v3310
    %4701 = vmatpush1.msra.mxu0 %v3309
    %4702 = vmatprep.subr.mxu0 %v3318
    %4703 = vmatpush1.msra.mxu0 %v3317
    %4704 = vmatprep.subr.mxu0 %v3326
    %4705 = vmatpush1.msra.mxu0 %v3325
    %4706 = vmatprep.subr.mxu0 %v3334
    %4707 = vmatpush1.msra.mxu0 %v3333
    %4708 = vmatprep.subr.mxu0 %v3342
    %4709 = vmatpush1.msra.mxu0 %v3341
    %4710 = vmatprep.subr.mxu0 %v3350
    %4711 = vmatpush1.msra.mxu0 %v3349
    %4712 = vmatprep.subr.mxu0 %v3358
    %4713 = vmatpush1.msra.mxu0 %v3357
    %4714 = vmatprep.subr.mxu0 %v3366
    %4715 = vmatpush1.msra.mxu0 %v3365
    %4716 = vmatprep.subr.mxu0 %v3374
    %4717 = vmatpush1.msra.mxu0 %v3373
    %4718 = vmatprep.subr.mxu0 %v3382
    %4719 = vmatpush1.msra.mxu0 %v3381
    %4720 = vmatprep.subr.mxu0 %v3390
    %4721 = vmatpush1.msra.mxu0 %v3389
    %4722 = vmatprep.subr.mxu0 %v3398
    %4723 = vmatpush1.msra.mxu0 %v3397
    %4724 = vmatprep.subr.mxu0 %v3406
    %4725 = vmatpush1.msra.mxu0 %v3405
    %4726 = vmatprep.subr.mxu0 %v3414
    %4727 = vmatpush1.msra.mxu0 %v3413
    %4728 = vmatprep.subr.mxu0 %v3422
    %4729 = vmatpush1.msra.mxu0 %v3421
    %4730 = vmatprep.subr.mxu0 %v3430
    %4731 = vmatpush1.msra.mxu0 %v3429
    %4732 = vmatprep.subr.mxu0 0.0
    %4733 = vmatpush1.msra.mxu0 0.0
    %4734 = vmatprep.subr.mxu0 0.0
    %4735 = vmatpush1.msra.mxu0 0.0
    %4736 = vmatprep.subr.mxu0 0.0
    %4737 = vmatpush1.msra.mxu0 0.0
    %4738 = vmatprep.subr.mxu0 0.0
    %4739 = vmatpush1.msra.mxu0 0.0
    %4740 = vmatprep.subr.mxu0 0.0
    %4741 = vmatpush1.msra.mxu0 0.0
    %4742 = vmatprep.subr.mxu0 0.0
    %4743 = vmatpush1.msra.mxu0 0.0
    %4744 = vmatprep.subr.mxu0 0.0
    %4745 = vmatpush1.msra.mxu0 0.0
    %4746 = vmatprep.subr.mxu0 0.0
    %4747 = vmatpush1.msra.mxu0 0.0
    %4748 = vmatprep.subr.mxu0 0.0
    %4749 = vmatpush1.msra.mxu0 0.0
    %4750 = vmatprep.subr.mxu0 0.0
    %4751 = vmatpush1.msra.mxu0 0.0
    %4752 = vmatprep.subr.mxu0 0.0
    %4753 = vmatpush1.msra.mxu0 0.0
    %4754 = vmatprep.subr.mxu0 0.0
    %4755 = vmatpush1.msra.mxu0 0.0
    %4756 = vmatprep.subr.mxu0 0.0
    %4757 = vmatpush1.msra.mxu0 0.0
    %4758 = vmatprep.subr.mxu0 0.0
    %4759 = vmatpush1.msra.mxu0 0.0
    %4760 = vmatprep.subr.mxu0 0.0
    %4761 = vmatpush1.msra.mxu0 0.0
    %4762 = vmatprep.subr.mxu0 0.0
    %4763 = vmatpush1.msra.mxu0 0.0
    %4764 = vmatprep.mubr.f32.mxu0 0.0
    %4765 = vmatmul.mubr.f32.gmra.mrb[0].mxu0 %v4486
    %v4766 = vpop.f32.mrb[0].mxu0
    %v4767 = vadd.f32 0.0, %v4766
    %v4768 = vpop.f32.mrb[0].mxu0
    %v4769 = vadd.f32 0.0, %v4768
    %4770 = vdwg.mxu0
    %4771 = vmatprep.subr.mxu0 %v3432
    %4772 = vmatpush1.msra.mxu0 %v3431
    %4773 = vmatprep.subr.mxu0 %v3436
    %4774 = vmatpush1.msra.mxu0 %v3435
    %4775 = vmatprep.subr.mxu0 %v3440
    %4776 = vmatpush1.msra.mxu0 %v3439
    %4777 = vmatprep.subr.mxu0 %v3444
    %4778 = vmatpush1.msra.mxu0 %v3443
    %4779 = vmatprep.subr.mxu0 %v3448
    %4780 = vmatpush1.msra.mxu0 %v3447
    %4781 = vmatprep.subr.mxu0 %v3452
    %4782 = vmatpush1.msra.mxu0 %v3451
    %4783 = vmatprep.subr.mxu0 %v3456
    %4784 = vmatpush1.msra.mxu0 %v3455
    %4785 = vmatprep.subr.mxu0 %v3460
    %4786 = vmatpush1.msra.mxu0 %v3459
    %4787 = vmatprep.subr.mxu0 %v3464
    %4788 = vmatpush1.msra.mxu0 %v3463
    %4789 = vmatprep.subr.mxu0 %v3468
    %4790 = vmatpush1.msra.mxu0 %v3467
    %4791 = vmatprep.subr.mxu0 %v3472
    %4792 = vmatpush1.msra.mxu0 %v3471
    %4793 = vmatprep.subr.mxu0 %v3476
    %4794 = vmatpush1.msra.mxu0 %v3475
    %4795 = vmatprep.subr.mxu0 %v3480
    %4796 = vmatpush1.msra.mxu0 %v3479
    %4797 = vmatprep.subr.mxu0 %v3484
    %4798 = vmatpush1.msra.mxu0 %v3483
    %4799 = vmatprep.subr.mxu0 %v3488
    %4800 = vmatpush1.msra.mxu0 %v3487
    %4801 = vmatprep.subr.mxu0 %v3492
    %4802 = vmatpush1.msra.mxu0 %v3491
    %4803 = vmatprep.subr.mxu0 0.0
    %4804 = vmatpush1.msra.mxu0 0.0
    %4805 = vmatprep.subr.mxu0 0.0
    %4806 = vmatpush1.msra.mxu0 0.0
    %4807 = vmatprep.subr.mxu0 0.0
    %4808 = vmatpush1.msra.mxu0 0.0
    %4809 = vmatprep.subr.mxu0 0.0
    %4810 = vmatpush1.msra.mxu0 0.0
    %4811 = vmatprep.subr.mxu0 0.0
    %4812 = vmatpush1.msra.mxu0 0.0
    %4813 = vmatprep.subr.mxu0 0.0
    %4814 = vmatpush1.msra.mxu0 0.0
    %4815 = vmatprep.subr.mxu0 0.0
    %4816 = vmatpush1.msra.mxu0 0.0
    %4817 = vmatprep.subr.mxu0 0.0
    %4818 = vmatpush1.msra.mxu0 0.0
    %4819 = vmatprep.subr.mxu0 0.0
    %4820 = vmatpush1.msra.mxu0 0.0
    %4821 = vmatprep.subr.mxu0 0.0
    %4822 = vmatpush1.msra.mxu0 0.0
    %4823 = vmatprep.subr.mxu0 0.0
    %4824 = vmatpush1.msra.mxu0 0.0
    %4825 = vmatprep.subr.mxu0 0.0
    %4826 = vmatpush1.msra.mxu0 0.0
    %4827 = vmatprep.subr.mxu0 0.0
    %4828 = vmatpush1.msra.mxu0 0.0
    %4829 = vmatprep.subr.mxu0 0.0
    %4830 = vmatpush1.msra.mxu0 0.0
    %4831 = vmatprep.subr.mxu0 0.0
    %4832 = vmatpush1.msra.mxu0 0.0
    %4833 = vmatprep.subr.mxu0 0.0
    %4834 = vmatpush1.msra.mxu0 0.0
    %4835 = vmatprep.mubr.f32.mxu0 0.0
    %4836 = vmatmul.mubr.f32.gmra.mrb[0].mxu0 %v4464
    %v4837 = vpop.f32.mrb[0].mxu0
    %v4838 = vadd.f32 0.0, %v4837
    %v4839 = vpop.f32.mrb[0].mxu0
    %v4840 = vadd.f32 0.0, %v4839
    %4841 = vdwg.mxu0
    %4842 = vmatprep.subr.mxu0 %v3434
    %4843 = vmatpush1.msra.mxu0 %v3433
    %4844 = vmatprep.subr.mxu0 %v3438
    %4845 = vmatpush1.msra.mxu0 %v3437
    %4846 = vmatprep.subr.mxu0 %v3442
    %4847 = vmatpush1.msra.mxu0 %v3441
    %4848 = vmatprep.subr.mxu0 %v3446
    %4849 = vmatpush1.msra.mxu0 %v3445
    %4850 = vmatprep.subr.mxu0 %v3450
    %4851 = vmatpush1.msra.mxu0 %v3449
    %4852 = vmatprep.subr.mxu0 %v3454
    %4853 = vmatpush1.msra.mxu0 %v3453
    %4854 = vmatprep.subr.mxu0 %v3458
    %4855 = vmatpush1.msra.mxu0 %v3457
    %4856 = vmatprep.subr.mxu0 %v3462
    %4857 = vmatpush1.msra.mxu0 %v3461
    %4858 = vmatprep.subr.mxu0 %v3466
    %4859 = vmatpush1.msra.mxu0 %v3465
    %4860 = vmatprep.subr.mxu0 %v3470
    %4861 = vmatpush1.msra.mxu0 %v3469
    %4862 = vmatprep.subr.mxu0 %v3474
    %4863 = vmatpush1.msra.mxu0 %v3473
    %4864 = vmatprep.subr.mxu0 %v3478
    %4865 = vmatpush1.msra.mxu0 %v3477
    %4866 = vmatprep.subr.mxu0 %v3482
    %4867 = vmatpush1.msra.mxu0 %v3481
    %4868 = vmatprep.subr.mxu0 %v3486
    %4869 = vmatpush1.msra.mxu0 %v3485
    %4870 = vmatprep.subr.mxu0 %v3490
    %4871 = vmatpush1.msra.mxu0 %v3489
    %4872 = vmatprep.subr.mxu0 %v3494
    %4873 = vmatpush1.msra.mxu0 %v3493
    %4874 = vmatprep.subr.mxu0 0.0
    %4875 = vmatpush1.msra.mxu0 0.0
    %4876 = vmatprep.subr.mxu0 0.0
    %4877 = vmatpush1.msra.mxu0 0.0
    %4878 = vmatprep.subr.mxu0 0.0
    %4879 = vmatpush1.msra.mxu0 0.0
    %4880 = vmatprep.subr.mxu0 0.0
    %4881 = vmatpush1.msra.mxu0 0.0
    %4882 = vmatprep.subr.mxu0 0.0
    %4883 = vmatpush1.msra.mxu0 0.0
    %4884 = vmatprep.subr.mxu0 0.0
    %4885 = vmatpush1.msra.mxu0 0.0
    %4886 = vmatprep.subr.mxu0 0.0
    %4887 = vmatpush1.msra.mxu0 0.0
    %4888 = vmatprep.subr.mxu0 0.0
    %4889 = vmatpush1.msra.mxu0 0.0
    %4890 = vmatprep.subr.mxu0 0.0
    %4891 = vmatpush1.msra.mxu0 0.0
    %4892 = vmatprep.subr.mxu0 0.0
    %4893 = vmatpush1.msra.mxu0 0.0
    %4894 = vmatprep.subr.mxu0 0.0
    %4895 = vmatpush1.msra.mxu0 0.0
    %4896 = vmatprep.subr.mxu0 0.0
    %4897 = vmatpush1.msra.mxu0 0.0
    %4898 = vmatprep.subr.mxu0 0.0
    %4899 = vmatpush1.msra.mxu0 0.0
    %4900 = vmatprep.subr.mxu0 0.0
    %4901 = vmatpush1.msra.mxu0 0.0
    %4902 = vmatprep.subr.mxu0 0.0
    %4903 = vmatpush1.msra.mxu0 0.0
    %4904 = vmatprep.subr.mxu0 0.0
    %4905 = vmatpush1.msra.mxu0 0.0
    %4906 = vmatprep.mubr.f32.mxu0 0.0
    %4907 = vmatmul.mubr.f32.gmra.mrb[0].mxu0 %v4464
    %v4908 = vpop.f32.mrb[0].mxu0
    %v4909 = vadd.f32 0.0, %v4908
    %v4910 = vpop.f32.mrb[0].mxu0
    %v4911 = vadd.f32 0.0, %v4910
    %4912 = vdwg.mxu0
    %v4913 = vadd.f32 %v4696, %v4838
    %v4914 = vadd.f32 %v4698, %v4840
    %v4915 = vadd.f32 %v4767, %v4909
    %v4916 = vadd.f32 %v4769, %v4911
    %v4917 = vadd.f32 %v4913, %v3952
    %v4918 = vadd.f32 %v4914, %v3956
    %v4919 = vadd.f32 %v4915, %v3960
    %v4920 = vadd.f32 %v4916, %v3964
    %v4921 = vmul.f32 %v4917, 0.5
    %v4922 = vtanh.pop %v4921
    %v4923 = vmul.f32 %v4922, 0.5
    %v4924 = vadd.f32 %v4923, 0.5
    %v4925 = vmul.f32 %v4918, 0.5
    %v4926 = vtanh.pop %v4925
    %v4927 = vmul.f32 %v4926, 0.5
    %v4928 = vadd.f32 %v4927, 0.5
    %v4929 = vtanh.pop %v4919
    %v4930 = vmul.f32 %v4920, 0.5
    %v4931 = vtanh.pop %v4930
    %v4932 = vmul.f32 %v4931, 0.5
    %v4933 = vadd.f32 %v4932, 0.5
    %v4934 = vmul.f32 %v4928, %v4462
    %v4935 = vmul.f32 %v4924, %v4929
    %v4936 = vadd.f32 %v4934, %v4935
    %v4937 = vtanh.pop %v4936
    %v4938 = vmul.f32 %v4933, %v4937
    %v4939 = vadd.f32 %v2944, %v4554
    %v4940 = vadd.f32 %v2946, %v4556
    %v4941 = vadd.f32 %v3015, %v4625
    %v4942 = vadd.f32 %v3017, %v4627
    %v4943 = vmul.f32 %v4939, 0.5
    %v4944 = vtanh.pop %v4943
    %v4945 = vmul.f32 %v4944, 0.5
    %v4946 = vadd.f32 %v4945, 0.5
    %v4947 = vmul.f32 %v4940, 0.5
    %v4948 = vtanh.pop %v4947
    %v4949 = vmul.f32 %v4948, 0.5
    %v4950 = vadd.f32 %v4949, 0.5
    %v4951 = vtanh.pop %v4941
    %v4952 = vmul.f32 %v4942, 0.5
    %v4953 = vtanh.pop %v4952
    %v4954 = vmul.f32 %v4953, 0.5
    %v4955 = vadd.f32 %v4954, 0.5
    %v4956 = vmul.f32 %v4950, %v4484
    %v4957 = vmul.f32 %v4946, %v4951
    %v4958 = vadd.f32 %v4956, %v4957
    %v4959 = vtanh.pop %v4958
    %v4960 = vmul.f32 %v4955, %v4959
    %4961 = vmatprep.subr.mxu0 %v3304
    %4962 = vmatpush1.msra.mxu0 %v3303
    %4963 = vmatprep.subr.mxu0 %v3312
    %4964 = vmatpush1.msra.mxu0 %v3311
    %4965 = vmatprep.subr.mxu0 %v3320
    %4966 = vmatpush1.msra.mxu0 %v3319
    %4967 = vmatprep.subr.mxu0 %v3328
    %4968 = vmatpush1.msra.mxu0 %v3327
    %4969 = vmatprep.subr.mxu0 %v3336
    %4970 = vmatpush1.msra.mxu0 %v3335
    %4971 = vmatprep.subr.mxu0 %v3344
    %4972 = vmatpush1.msra.mxu0 %v3343
    %4973 = vmatprep.subr.mxu0 %v3352
    %4974 = vmatpush1.msra.mxu0 %v3351
    %4975 = vmatprep.subr.mxu0 %v3360
    %4976 = vmatpush1.msra.mxu0 %v3359
    %4977 = vmatprep.subr.mxu0 %v3368
    %4978 = vmatpush1.msra.mxu0 %v3367
    %4979 = vmatprep.subr.mxu0 %v3376
    %4980 = vmatpush1.msra.mxu0 %v3375
    %4981 = vmatprep.subr.mxu0 %v3384
    %4982 = vmatpush1.msra.mxu0 %v3383
    %4983 = vmatprep.subr.mxu0 %v3392
    %4984 = vmatpush1.msra.mxu0 %v3391
    %4985 = vmatprep.subr.mxu0 %v3400
    %4986 = vmatpush1.msra.mxu0 %v3399
    %4987 = vmatprep.subr.mxu0 %v3408
    %4988 = vmatpush1.msra.mxu0 %v3407
    %4989 = vmatprep.subr.mxu0 %v3416
    %4990 = vmatpush1.msra.mxu0 %v3415
    %4991 = vmatprep.subr.mxu0 %v3424
    %4992 = vmatpush1.msra.mxu0 %v3423
    %4993 = vmatprep.subr.mxu0 0.0
    %4994 = vmatpush1.msra.mxu0 0.0
    %4995 = vmatprep.subr.mxu0 0.0
    %4996 = vmatpush1.msra.mxu0 0.0
    %4997 = vmatprep.subr.mxu0 0.0
    %4998 = vmatpush1.msra.mxu0 0.0
    %4999 = vmatprep.subr.mxu0 0.0
    %5000 = vmatpush1.msra.mxu0 0.0
    %5001 = vmatprep.subr.mxu0 0.0
    %5002 = vmatpush1.msra.mxu0 0.0
    %5003 = vmatprep.subr.mxu0 0.0
    %5004 = vmatpush1.msra.mxu0 0.0
    %5005 = vmatprep.subr.mxu0 0.0
    %5006 = vmatpush1.msra.mxu0 0.0
    %5007 = vmatprep.subr.mxu0 0.0
    %5008 = vmatpush1.msra.mxu0 0.0
    %5009 = vmatprep.subr.mxu0 0.0
    %5010 = vmatpush1.msra.mxu0 0.0
    %5011 = vmatprep.subr.mxu0 0.0
    %5012 = vmatpush1.msra.mxu0 0.0
    %5013 = vmatprep.subr.mxu0 0.0
    %5014 = vmatpush1.msra.mxu0 0.0
    %5015 = vmatprep.subr.mxu0 0.0
    %5016 = vmatpush1.msra.mxu0 0.0
    %5017 = vmatprep.subr.mxu0 0.0
    %5018 = vmatpush1.msra.mxu0 0.0
    %5019 = vmatprep.subr.mxu0 0.0
    %5020 = vmatpush1.msra.mxu0 0.0
    %5021 = vmatprep.subr.mxu0 0.0
    %5022 = vmatpush1.msra.mxu0 0.0
    %5023 = vmatprep.subr.mxu0 0.0
    %5024 = vmatpush1.msra.mxu0 0.0
    %5025 = vmatprep.mubr.f32.mxu0 0.0
    %5026 = vmatmul.mubr.f32.gmra.mrb[0].mxu0 %v4960
    %v5027 = vpop.f32.mrb[0].mxu0
    %v5028 = vadd.f32 0.0, %v5027
    %v5029 = vpop.f32.mrb[0].mxu0
    %v5030 = vadd.f32 0.0, %v5029
    %5031 = vdwg.mxu0
    %5032 = vmatprep.subr.mxu0 %v3306
    %5033 = vmatpush1.msra.mxu0 %v3305
    %5034 = vmatprep.subr.mxu0 %v3314
    %5035 = vmatpush1.msra.mxu0 %v3313
    %5036 = vmatprep.subr.mxu0 %v3322
    %5037 = vmatpush1.msra.mxu0 %v3321
    %5038 = vmatprep.subr.mxu0 %v3330
    %5039 = vmatpush1.msra.mxu0 %v3329
    %5040 = vmatprep.subr.mxu0 %v3338
    %5041 = vmatpush1.msra.mxu0 %v3337
    %5042 = vmatprep.subr.mxu0 %v3346
    %5043 = vmatpush1.msra.mxu0 %v3345
    %5044 = vmatprep.subr.mxu0 %v3354
    %5045 = vmatpush1.msra.mxu0 %v3353
    %5046 = vmatprep.subr.mxu0 %v3362
    %5047 = vmatpush1.msra.mxu0 %v3361
    %5048 = vmatprep.subr.mxu0 %v3370
    %5049 = vmatpush1.msra.mxu0 %v3369
    %5050 = vmatprep.subr.mxu0 %v3378
    %5051 = vmatpush1.msra.mxu0 %v3377
    %5052 = vmatprep.subr.mxu0 %v3386
    %5053 = vmatpush1.msra.mxu0 %v3385
    %5054 = vmatprep.subr.mxu0 %v3394
    %5055 = vmatpush1.msra.mxu0 %v3393
    %5056 = vmatprep.subr.mxu0 %v3402
    %5057 = vmatpush1.msra.mxu0 %v3401
    %5058 = vmatprep.subr.mxu0 %v3410
    %5059 = vmatpush1.msra.mxu0 %v3409
    %5060 = vmatprep.subr.mxu0 %v3418
    %5061 = vmatpush1.msra.mxu0 %v3417
    %5062 = vmatprep.subr.mxu0 %v3426
    %5063 = vmatpush1.msra.mxu0 %v3425
    %5064 = vmatprep.subr.mxu0 0.0
    %5065 = vmatpush1.msra.mxu0 0.0
    %5066 = vmatprep.subr.mxu0 0.0
    %5067 = vmatpush1.msra.mxu0 0.0
    %5068 = vmatprep.subr.mxu0 0.0
    %5069 = vmatpush1.msra.mxu0 0.0
    %5070 = vmatprep.subr.mxu0 0.0
    %5071 = vmatpush1.msra.mxu0 0.0
    %5072 = vmatprep.subr.mxu0 0.0
    %5073 = vmatpush1.msra.mxu0 0.0
    %5074 = vmatprep.subr.mxu0 0.0
    %5075 = vmatpush1.msra.mxu0 0.0
    %5076 = vmatprep.subr.mxu0 0.0
    %5077 = vmatpush1.msra.mxu0 0.0
    %5078 = vmatprep.subr.mxu0 0.0
    %5079 = vmatpush1.msra.mxu0 0.0
    %5080 = vmatprep.subr.mxu0 0.0
    %5081 = vmatpush1.msra.mxu0 0.0
    %5082 = vmatprep.subr.mxu0 0.0
    %5083 = vmatpush1.msra.mxu0 0.0
    %5084 = vmatprep.subr.mxu0 0.0
    %5085 = vmatpush1.msra.mxu0 0.0
    %5086 = vmatprep.subr.mxu0 0.0
    %5087 = vmatpush1.msra.mxu0 0.0
    %5088 = vmatprep.subr.mxu0 0.0
    %5089 = vmatpush1.msra.mxu0 0.0
    %5090 = vmatprep.subr.mxu0 0.0
    %5091 = vmatpush1.msra.mxu0 0.0
    %5092 = vmatprep.subr.mxu0 0.0
    %5093 = vmatpush1.msra.mxu0 0.0
    %5094 = vmatprep.subr.mxu0 0.0
    %5095 = vmatpush1.msra.mxu0 0.0
    %5096 = vmatprep.mubr.f32.mxu0 0.0
    %5097 = vmatmul.mubr.f32.gmra.mrb[0].mxu0 %v4960
    %v5098 = vpop.f32.mrb[0].mxu0
    %v5099 = vadd.f32 0.0, %v5098
    %v5100 = vpop.f32.mrb[0].mxu0
    %v5101 = vadd.f32 0.0, %v5100
    %5102 = vdwg.mxu0
    %5103 = vmatprep.subr.mxu0 %v3308
    %5104 = vmatpush1.msra.mxu0 %v3307
    %5105 = vmatprep.subr.mxu0 %v3316
    %5106 = vmatpush1.msra.mxu0 %v3315
    %5107 = vmatprep.subr.mxu0 %v3324
    %5108 = vmatpush1.msra.mxu0 %v3323
    %5109 = vmatprep.subr.mxu0 %v3332
    %5110 = vmatpush1.msra.mxu0 %v3331
    %5111 = vmatprep.subr.mxu0 %v3340
    %5112 = vmatpush1.msra.mxu0 %v3339
    %5113 = vmatprep.subr.mxu0 %v3348
    %5114 = vmatpush1.msra.mxu0 %v3347
    %5115 = vmatprep.subr.mxu0 %v3356
    %5116 = vmatpush1.msra.mxu0 %v3355
    %5117 = vmatprep.subr.mxu0 %v3364
    %5118 = vmatpush1.msra.mxu0 %v3363
    %5119 = vmatprep.subr.mxu0 %v3372
    %5120 = vmatpush1.msra.mxu0 %v3371
    %5121 = vmatprep.subr.mxu0 %v3380
    %5122 = vmatpush1.msra.mxu0 %v3379
    %5123 = vmatprep.subr.mxu0 %v3388
    %5124 = vmatpush1.msra.mxu0 %v3387
    %5125 = vmatprep.subr.mxu0 %v3396
    %5126 = vmatpush1.msra.mxu0 %v3395
    %5127 = vmatprep.subr.mxu0 %v3404
    %5128 = vmatpush1.msra.mxu0 %v3403
    %5129 = vmatprep.subr.mxu0 %v3412
    %5130 = vmatpush1.msra.mxu0 %v3411
    %5131 = vmatprep.subr.mxu0 %v3420
    %5132 = vmatpush1.msra.mxu0 %v3419
    %5133 = vmatprep.subr.mxu0 %v3428
    %5134 = vmatpush1.msra.mxu0 %v3427
    %5135 = vmatprep.subr.mxu0 0.0
    %5136 = vmatpush1.msra.mxu0 0.0
    %5137 = vmatprep.subr.mxu0 0.0
    %5138 = vmatpush1.msra.mxu0 0.0
    %5139 = vmatprep.subr.mxu0 0.0
    %5140 = vmatpush1.msra.mxu0 0.0
    %5141 = vmatprep.subr.mxu0 0.0
    %5142 = vmatpush1.msra.mxu0 0.0
    %5143 = vmatprep.subr.mxu0 0.0
    %5144 = vmatpush1.msra.mxu0 0.0
    %5145 = vmatprep.subr.mxu0 0.0
    %5146 = vmatpush1.msra.mxu0 0.0
    %5147 = vmatprep.subr.mxu0 0.0
    %5148 = vmatpush1.msra.mxu0 0.0
    %5149 = vmatprep.subr.mxu0 0.0
    %5150 = vmatpush1.msra.mxu0 0.0
    %5151 = vmatprep.subr.mxu0 0.0
    %5152 = vmatpush1.msra.mxu0 0.0
    %5153 = vmatprep.subr.mxu0 0.0
    %5154 = vmatpush1.msra.mxu0 0.0
    %5155 = vmatprep.subr.mxu0 0.0
    %5156 = vmatpush1.msra.mxu0 0.0
    %5157 = vmatprep.subr.mxu0 0.0
    %5158 = vmatpush1.msra.mxu0 0.0
    %5159 = vmatprep.subr.mxu0 0.0
    %5160 = vmatpush1.msra.mxu0 0.0
    %5161 = vmatprep.subr.mxu0 0.0
    %5162 = vmatpush1.msra.mxu0 0.0
    %5163 = vmatprep.subr.mxu0 0.0
    %5164 = vmatpush1.msra.mxu0 0.0
    %5165 = vmatprep.subr.mxu0 0.0
    %5166 = vmatpush1.msra.mxu0 0.0
    %5167 = vmatprep.mubr.f32.mxu0 0.0
    %5168 = vmatmul.mubr.f32.gmra.mrb[0].mxu0 %v4960
    %v5169 = vpop.f32.mrb[0].mxu0
    %v5170 = vadd.f32 0.0, %v5169
    %v5171 = vpop.f32.mrb[0].mxu0
    %v5172 = vadd.f32 0.0, %v5171
    %5173 = vdwg.mxu0
    %5174 = vmatprep.subr.mxu0 %v3310
    %5175 = vmatpush1.msra.mxu0 %v3309
    %5176 = vmatprep.subr.mxu0 %v3318
    %5177 = vmatpush1.msra.mxu0 %v3317
    %5178 = vmatprep.subr.mxu0 %v3326
    %5179 = vmatpush1.msra.mxu0 %v3325
    %5180 = vmatprep.subr.mxu0 %v3334
    %5181 = vmatpush1.msra.mxu0 %v3333
    %5182 = vmatprep.subr.mxu0 %v3342
    %5183 = vmatpush1.msra.mxu0 %v3341
    %5184 = vmatprep.subr.mxu0 %v3350
    %5185 = vmatpush1.msra.mxu0 %v3349
    %5186 = vmatprep.subr.mxu0 %v3358
    %5187 = vmatpush1.msra.mxu0 %v3357
    %5188 = vmatprep.subr.mxu0 %v3366
    %5189 = vmatpush1.msra.mxu0 %v3365
    %5190 = vmatprep.subr.mxu0 %v3374
    %5191 = vmatpush1.msra.mxu0 %v3373
    %5192 = vmatprep.subr.mxu0 %v3382
    %5193 = vmatpush1.msra.mxu0 %v3381
    %5194 = vmatprep.subr.mxu0 %v3390
    %5195 = vmatpush1.msra.mxu0 %v3389
    %5196 = vmatprep.subr.mxu0 %v3398
    %5197 = vmatpush1.msra.mxu0 %v3397
    %5198 = vmatprep.subr.mxu0 %v3406
    %5199 = vmatpush1.msra.mxu0 %v3405
    %5200 = vmatprep.subr.mxu0 %v3414
    %5201 = vmatpush1.msra.mxu0 %v3413
    %5202 = vmatprep.subr.mxu0 %v3422
    %5203 = vmatpush1.msra.mxu0 %v3421
    %5204 = vmatprep.subr.mxu0 %v3430
    %5205 = vmatpush1.msra.mxu0 %v3429
    %5206 = vmatprep.subr.mxu0 0.0
    %5207 = vmatpush1.msra.mxu0 0.0
    %5208 = vmatprep.subr.mxu0 0.0
    %5209 = vmatpush1.msra.mxu0 0.0
    %5210 = vmatprep.subr.mxu0 0.0
    %5211 = vmatpush1.msra.mxu0 0.0
    %5212 = vmatprep.subr.mxu0 0.0
    %5213 = vmatpush1.msra.mxu0 0.0
    %5214 = vmatprep.subr.mxu0 0.0
    %5215 = vmatpush1.msra.mxu0 0.0
    %5216 = vmatprep.subr.mxu0 0.0
    %5217 = vmatpush1.msra.mxu0 0.0
    %5218 = vmatprep.subr.mxu0 0.0
    %5219 = vmatpush1.msra.mxu0 0.0
    %5220 = vmatprep.subr.mxu0 0.0
    %5221 = vmatpush1.msra.mxu0 0.0
    %5222 = vmatprep.subr.mxu0 0.0
    %5223 = vmatpush1.msra.mxu0 0.0
    %5224 = vmatprep.subr.mxu0 0.0
    %5225 = vmatpush1.msra.mxu0 0.0
    %5226 = vmatprep.subr.mxu0 0.0
    %5227 = vmatpush1.msra.mxu0 0.0
    %5228 = vmatprep.subr.mxu0 0.0
    %5229 = vmatpush1.msra.mxu0 0.0
    %5230 = vmatprep.subr.mxu0 0.0
    %5231 = vmatpush1.msra.mxu0 0.0
    %5232 = vmatprep.subr.mxu0 0.0
    %5233 = vmatpush1.msra.mxu0 0.0
    %5234 = vmatprep.subr.mxu0 0.0
    %5235 = vmatpush1.msra.mxu0 0.0
    %5236 = vmatprep.subr.mxu0 0.0
    %5237 = vmatpush1.msra.mxu0 0.0
    %5238 = vmatprep.mubr.f32.mxu0 0.0
    %5239 = vmatmul.mubr.f32.gmra.mrb[0].mxu0 %v4960
    %v5240 = vpop.f32.mrb[0].mxu0
    %v5241 = vadd.f32 0.0, %v5240
    %v5242 = vpop.f32.mrb[0].mxu0
    %v5243 = vadd.f32 0.0, %v5242
    %5244 = vdwg.mxu0
    %5245 = vmatprep.subr.mxu0 %v3432
    %5246 = vmatpush1.msra.mxu0 %v3431
    %5247 = vmatprep.subr.mxu0 %v3436
    %5248 = vmatpush1.msra.mxu0 %v3435
    %5249 = vmatprep.subr.mxu0 %v3440
    %5250 = vmatpush1.msra.mxu0 %v3439
    %5251 = vmatprep.subr.mxu0 %v3444
    %5252 = vmatpush1.msra.mxu0 %v3443
    %5253 = vmatprep.subr.mxu0 %v3448
    %5254 = vmatpush1.msra.mxu0 %v3447
    %5255 = vmatprep.subr.mxu0 %v3452
    %5256 = vmatpush1.msra.mxu0 %v3451
    %5257 = vmatprep.subr.mxu0 %v3456
    %5258 = vmatpush1.msra.mxu0 %v3455
    %5259 = vmatprep.subr.mxu0 %v3460
    %5260 = vmatpush1.msra.mxu0 %v3459
    %5261 = vmatprep.subr.mxu0 %v3464
    %5262 = vmatpush1.msra.mxu0 %v3463
    %5263 = vmatprep.subr.mxu0 %v3468
    %5264 = vmatpush1.msra.mxu0 %v3467
    %5265 = vmatprep.subr.mxu0 %v3472
    %5266 = vmatpush1.msra.mxu0 %v3471
    %5267 = vmatprep.subr.mxu0 %v3476
    %5268 = vmatpush1.msra.mxu0 %v3475
    %5269 = vmatprep.subr.mxu0 %v3480
    %5270 = vmatpush1.msra.mxu0 %v3479
    %5271 = vmatprep.subr.mxu0 %v3484
    %5272 = vmatpush1.msra.mxu0 %v3483
    %5273 = vmatprep.subr.mxu0 %v3488
    %5274 = vmatpush1.msra.mxu0 %v3487
    %5275 = vmatprep.subr.mxu0 %v3492
    %5276 = vmatpush1.msra.mxu0 %v3491
    %5277 = vmatprep.subr.mxu0 0.0
    %5278 = vmatpush1.msra.mxu0 0.0
    %5279 = vmatprep.subr.mxu0 0.0
    %5280 = vmatpush1.msra.mxu0 0.0
    %5281 = vmatprep.subr.mxu0 0.0
    %5282 = vmatpush1.msra.mxu0 0.0
    %5283 = vmatprep.subr.mxu0 0.0
    %5284 = vmatpush1.msra.mxu0 0.0
    %5285 = vmatprep.subr.mxu0 0.0
    %5286 = vmatpush1.msra.mxu0 0.0
    %5287 = vmatprep.subr.mxu0 0.0
    %5288 = vmatpush1.msra.mxu0 0.0
    %5289 = vmatprep.subr.mxu0 0.0
    %5290 = vmatpush1.msra.mxu0 0.0
    %5291 = vmatprep.subr.mxu0 0.0
    %5292 = vmatpush1.msra.mxu0 0.0
    %5293 = vmatprep.subr.mxu0 0.0
    %5294 = vmatpush1.msra.mxu0 0.0
    %5295 = vmatprep.subr.mxu0 0.0
    %5296 = vmatpush1.msra.mxu0 0.0
    %5297 = vmatprep.subr.mxu0 0.0
    %5298 = vmatpush1.msra.mxu0 0.0
    %5299 = vmatprep.subr.mxu0 0.0
    %5300 = vmatpush1.msra.mxu0 0.0
    %5301 = vmatprep.subr.mxu0 0.0
    %5302 = vmatpush1.msra.mxu0 0.0
    %5303 = vmatprep.subr.mxu0 0.0
    %5304 = vmatpush1.msra.mxu0 0.0
    %5305 = vmatprep.subr.mxu0 0.0
    %5306 = vmatpush1.msra.mxu0 0.0
    %5307 = vmatprep.subr.mxu0 0.0
    %5308 = vmatpush1.msra.mxu0 0.0
    %5309 = vmatprep.mubr.f32.mxu0 0.0
    %5310 = vmatmul.mubr.f32.gmra.mrb[0].mxu0 %v4938
    %v5311 = vpop.f32.mrb[0].mxu0
    %v5312 = vadd.f32 0.0, %v5311
    %v5313 = vpop.f32.mrb[0].mxu0
    %v5314 = vadd.f32 0.0, %v5313
    %5315 = vdwg.mxu0
    %5316 = vmatprep.subr.mxu0 %v3434
    %5317 = vmatpush1.msra.mxu0 %v3433
    %5318 = vmatprep.subr.mxu0 %v3438
    %5319 = vmatpush1.msra.mxu0 %v3437
    %5320 = vmatprep.subr.mxu0 %v3442
    %5321 = vmatpush1.msra.mxu0 %v3441
    %5322 = vmatprep.subr.mxu0 %v3446
    %5323 = vmatpush1.msra.mxu0 %v3445
    %5324 = vmatprep.subr.mxu0 %v3450
    %5325 = vmatpush1.msra.mxu0 %v3449
    %5326 = vmatprep.subr.mxu0 %v3454
    %5327 = vmatpush1.msra.mxu0 %v3453
    %5328 = vmatprep.subr.mxu0 %v3458
    %5329 = vmatpush1.msra.mxu0 %v3457
    %5330 = vmatprep.subr.mxu0 %v3462
    %5331 = vmatpush1.msra.mxu0 %v3461
    %5332 = vmatprep.subr.mxu0 %v3466
    %5333 = vmatpush1.msra.mxu0 %v3465
    %5334 = vmatprep.subr.mxu0 %v3470
    %5335 = vmatpush1.msra.mxu0 %v3469
    %5336 = vmatprep.subr.mxu0 %v3474
    %5337 = vmatpush1.msra.mxu0 %v3473
    %5338 = vmatprep.subr.mxu0 %v3478
    %5339 = vmatpush1.msra.mxu0 %v3477
    %5340 = vmatprep.subr.mxu0 %v3482
    %5341 = vmatpush1.msra.mxu0 %v3481
    %5342 = vmatprep.subr.mxu0 %v3486
    %5343 = vmatpush1.msra.mxu0 %v3485
    %5344 = vmatprep.subr.mxu0 %v3490
    %5345 = vmatpush1.msra.mxu0 %v3489
    %5346 = vmatprep.subr.mxu0 %v3494
    %5347 = vmatpush1.msra.mxu0 %v3493
    %5348 = vmatprep.subr.mxu0 0.0
    %5349 = vmatpush1.msra.mxu0 0.0
    %5350 = vmatprep.subr.mxu0 0.0
    %5351 = vmatpush1.msra.mxu0 0.0
    %5352 = vmatprep.subr.mxu0 0.0
    %5353 = vmatpush1.msra.mxu0 0.0
    %5354 = vmatprep.subr.mxu0 0.0
    %5355 = vmatpush1.msra.mxu0 0.0
    %5356 = vmatprep.subr.mxu0 0.0
    %5357 = vmatpush1.msra.mxu0 0.0
    %5358 = vmatprep.subr.mxu0 0.0
    %5359 = vmatpush1.msra.mxu0 0.0
    %5360 = vmatprep.subr.mxu0 0.0
    %5361 = vmatpush1.msra.mxu0 0.0
    %5362 = vmatprep.subr.mxu0 0.0
    %5363 = vmatpush1.msra.mxu0 0.0
    %5364 = vmatprep.subr.mxu0 0.0
    %5365 = vmatpush1.msra.mxu0 0.0
    %5366 = vmatprep.subr.mxu0 0.0
    %5367 = vmatpush1.msra.mxu0 0.0
    %5368 = vmatprep.subr.mxu0 0.0
    %5369 = vmatpush1.msra.mxu0 0.0
    %5370 = vmatprep.subr.mxu0 0.0
    %5371 = vmatpush1.msra.mxu0 0.0
    %5372 = vmatprep.subr.mxu0 0.0
    %5373 = vmatpush1.msra.mxu0 0.0
    %5374 = vmatprep.subr.mxu0 0.0
    %5375 = vmatpush1.msra.mxu0 0.0
    %5376 = vmatprep.subr.mxu0 0.0
    %5377 = vmatpush1.msra.mxu0 0.0
    %5378 = vmatprep.subr.mxu0 0.0
    %5379 = vmatpush1.msra.mxu0 0.0
    %5380 = vmatprep.mubr.f32.mxu0 0.0
    %5381 = vmatmul.mubr.f32.gmra.mrb[0].mxu0 %v4938
    %v5382 = vpop.f32.mrb[0].mxu0
    %v5383 = vadd.f32 0.0, %v5382
    %v5384 = vpop.f32.mrb[0].mxu0
    %v5385 = vadd.f32 0.0, %v5384
    %5386 = vdwg.mxu0
    %v5387 = vadd.f32 %v5170, %v5312
    %v5388 = vadd.f32 %v5172, %v5314
    %v5389 = vadd.f32 %v5241, %v5383
    %v5390 = vadd.f32 %v5243, %v5385
    %v5391 = vadd.f32 %v5387, %v3952
    %v5392 = vadd.f32 %v5388, %v3956
    %v5393 = vadd.f32 %v5389, %v3960
    %v5394 = vadd.f32 %v5390, %v3964
    %v5395 = vmul.f32 %v5391, 0.5
    %v5396 = vtanh.pop %v5395
    %v5397 = vmul.f32 %v5396, 0.5
    %v5398 = vadd.f32 %v5397, 0.5
    %v5399 = vmul.f32 %v5392, 0.5
    %v5400 = vtanh.pop %v5399
    %v5401 = vmul.f32 %v5400, 0.5
    %v5402 = vadd.f32 %v5401, 0.5
    %v5403 = vtanh.pop %v5393
    %v5404 = vmul.f32 %v5394, 0.5
    %v5405 = vtanh.pop %v5404
    %v5406 = vmul.f32 %v5405, 0.5
    %v5407 = vadd.f32 %v5406, 0.5
    %v5408 = vmul.f32 %v5402, %v4936
    %v5409 = vmul.f32 %v5398, %v5403
    %v5410 = vadd.f32 %v5408, %v5409
    %v5411 = vtanh.pop %v5410
    %v5412 = vmul.f32 %v5407, %v5411
    %v5413 = vadd.f32 %v3086, %v5028
    %v5414 = vadd.f32 %v3088, %v5030
    %v5415 = vadd.f32 %v3157, %v5099
    %v5416 = vadd.f32 %v3159, %v5101
    %v5417 = vmul.f32 %v5413, 0.5
    %v5418 = vtanh.pop %v5417
    %v5419 = vmul.f32 %v5418, 0.5
    %v5420 = vadd.f32 %v5419, 0.5
    %v5421 = vmul.f32 %v5414, 0.5
    %v5422 = vtanh.pop %v5421
    %v5423 = vmul.f32 %v5422, 0.5
    %v5424 = vadd.f32 %v5423, 0.5
    %v5425 = vtanh.pop %v5415
    %v5426 = vmul.f32 %v5416, 0.5
    %v5427 = vtanh.pop %v5426
    %v5428 = vmul.f32 %v5427, 0.5
    %v5429 = vadd.f32 %v5428, 0.5
    %v5430 = vmul.f32 %v5424, %v4958
    %v5431 = vmul.f32 %v5420, %v5425
    %v5432 = vadd.f32 %v5430, %v5431
    %v5433 = vtanh.pop %v5432
    %v5434 = vmul.f32 %v5429, %v5433
    %5435 = vmatprep.subr.mxu0 %v3304
    %5436 = vmatpush1.msra.mxu0 %v3303
    %5437 = vmatprep.subr.mxu0 %v3312
    %5438 = vmatpush1.msra.mxu0 %v3311
    %5439 = vmatprep.subr.mxu0 %v3320
    %5440 = vmatpush1.msra.mxu0 %v3319
    %5441 = vmatprep.subr.mxu0 %v3328
    %5442 = vmatpush1.msra.mxu0 %v3327
    %5443 = vmatprep.subr.mxu0 %v3336
    %5444 = vmatpush1.msra.mxu0 %v3335
    %5445 = vmatprep.subr.mxu0 %v3344
    %5446 = vmatpush1.msra.mxu0 %v3343
    %5447 = vmatprep.subr.mxu0 %v3352
    %5448 = vmatpush1.msra.mxu0 %v3351
    %5449 = vmatprep.subr.mxu0 %v3360
    %5450 = vmatpush1.msra.mxu0 %v3359
    %5451 = vmatprep.subr.mxu0 %v3368
    %5452 = vmatpush1.msra.mxu0 %v3367
    %5453 = vmatprep.subr.mxu0 %v3376
    %5454 = vmatpush1.msra.mxu0 %v3375
    %5455 = vmatprep.subr.mxu0 %v3384
    %5456 = vmatpush1.msra.mxu0 %v3383
    %5457 = vmatprep.subr.mxu0 %v3392
    %5458 = vmatpush1.msra.mxu0 %v3391
    %5459 = vmatprep.subr.mxu0 %v3400
    %5460 = vmatpush1.msra.mxu0 %v3399
    %5461 = vmatprep.subr.mxu0 %v3408
    %5462 = vmatpush1.msra.mxu0 %v3407
    %5463 = vmatprep.subr.mxu0 %v3416
    %5464 = vmatpush1.msra.mxu0 %v3415
    %5465 = vmatprep.subr.mxu0 %v3424
    %5466 = vmatpush1.msra.mxu0 %v3423
    %5467 = vmatprep.subr.mxu0 0.0
    %5468 = vmatpush1.msra.mxu0 0.0
    %5469 = vmatprep.subr.mxu0 0.0
    %5470 = vmatpush1.msra.mxu0 0.0
    %5471 = vmatprep.subr.mxu0 0.0
    %5472 = vmatpush1.msra.mxu0 0.0
    %5473 = vmatprep.subr.mxu0 0.0
    %5474 = vmatpush1.msra.mxu0 0.0
    %5475 = vmatprep.subr.mxu0 0.0
    %5476 = vmatpush1.msra.mxu0 0.0
    %5477 = vmatprep.subr.mxu0 0.0
    %5478 = vmatpush1.msra.mxu0 0.0
    %5479 = vmatprep.subr.mxu0 0.0
    %5480 = vmatpush1.msra.mxu0 0.0
    %5481 = vmatprep.subr.mxu0 0.0
    %5482 = vmatpush1.msra.mxu0 0.0
    %5483 = vmatprep.subr.mxu0 0.0
    %5484 = vmatpush1.msra.mxu0 0.0
    %5485 = vmatprep.subr.mxu0 0.0
    %5486 = vmatpush1.msra.mxu0 0.0
    %5487 = vmatprep.subr.mxu0 0.0
    %5488 = vmatpush1.msra.mxu0 0.0
    %5489 = vmatprep.subr.mxu0 0.0
    %5490 = vmatpush1.msra.mxu0 0.0
    %5491 = vmatprep.subr.mxu0 0.0
    %5492 = vmatpush1.msra.mxu0 0.0
    %5493 = vmatprep.subr.mxu0 0.0
    %5494 = vmatpush1.msra.mxu0 0.0
    %5495 = vmatprep.subr.mxu0 0.0
    %5496 = vmatpush1.msra.mxu0 0.0
    %5497 = vmatprep.subr.mxu0 0.0
    %5498 = vmatpush1.msra.mxu0 0.0
    %5499 = vmatprep.mubr.f32.mxu0 0.0
    %5500 = vmatmul.mubr.f32.gmra.mrb[0].mxu0 %v5434
    %v5501 = vpop.f32.mrb[0].mxu0
    %v5502 = vadd.f32 0.0, %v5501
    %v5503 = vpop.f32.mrb[0].mxu0
    %v5504 = vadd.f32 0.0, %v5503
    %5505 = vdwg.mxu0
    %5506 = vmatprep.subr.mxu0 %v3306
    %5507 = vmatpush1.msra.mxu0 %v3305
    %5508 = vmatprep.subr.mxu0 %v3314
    %5509 = vmatpush1.msra.mxu0 %v3313
    %5510 = vmatprep.subr.mxu0 %v3322
    %5511 = vmatpush1.msra.mxu0 %v3321
    %5512 = vmatprep.subr.mxu0 %v3330
    %5513 = vmatpush1.msra.mxu0 %v3329
    %5514 = vmatprep.subr.mxu0 %v3338
    %5515 = vmatpush1.msra.mxu0 %v3337
    %5516 = vmatprep.subr.mxu0 %v3346
    %5517 = vmatpush1.msra.mxu0 %v3345
    %5518 = vmatprep.subr.mxu0 %v3354
    %5519 = vmatpush1.msra.mxu0 %v3353
    %5520 = vmatprep.subr.mxu0 %v3362
    %5521 = vmatpush1.msra.mxu0 %v3361
    %5522 = vmatprep.subr.mxu0 %v3370
    %5523 = vmatpush1.msra.mxu0 %v3369
    %5524 = vmatprep.subr.mxu0 %v3378
    %5525 = vmatpush1.msra.mxu0 %v3377
    %5526 = vmatprep.subr.mxu0 %v3386
    %5527 = vmatpush1.msra.mxu0 %v3385
    %5528 = vmatprep.subr.mxu0 %v3394
    %5529 = vmatpush1.msra.mxu0 %v3393
    %5530 = vmatprep.subr.mxu0 %v3402
    %5531 = vmatpush1.msra.mxu0 %v3401
    %5532 = vmatprep.subr.mxu0 %v3410
    %5533 = vmatpush1.msra.mxu0 %v3409
    %5534 = vmatprep.subr.mxu0 %v3418
    %5535 = vmatpush1.msra.mxu0 %v3417
    %5536 = vmatprep.subr.mxu0 %v3426
    %5537 = vmatpush1.msra.mxu0 %v3425
    %5538 = vmatprep.subr.mxu0 0.0
    %5539 = vmatpush1.msra.mxu0 0.0
    %5540 = vmatprep.subr.mxu0 0.0
    %5541 = vmatpush1.msra.mxu0 0.0
    %5542 = vmatprep.subr.mxu0 0.0
    %5543 = vmatpush1.msra.mxu0 0.0
    %5544 = vmatprep.subr.mxu0 0.0
    %5545 = vmatpush1.msra.mxu0 0.0
    %5546 = vmatprep.subr.mxu0 0.0
    %5547 = vmatpush1.msra.mxu0 0.0
    %5548 = vmatprep.subr.mxu0 0.0
    %5549 = vmatpush1.msra.mxu0 0.0
    %5550 = vmatprep.subr.mxu0 0.0
    %5551 = vmatpush1.msra.mxu0 0.0
    %5552 = vmatprep.subr.mxu0 0.0
    %5553 = vmatpush1.msra.mxu0 0.0
    %5554 = vmatprep.subr.mxu0 0.0
    %5555 = vmatpush1.msra.mxu0 0.0
    %5556 = vmatprep.subr.mxu0 0.0
    %5557 = vmatpush1.msra.mxu0 0.0
    %5558 = vmatprep.subr.mxu0 0.0
    %5559 = vmatpush1.msra.mxu0 0.0
    %5560 = vmatprep.subr.mxu0 0.0
    %5561 = vmatpush1.msra.mxu0 0.0
    %5562 = vmatprep.subr.mxu0 0.0
    %5563 = vmatpush1.msra.mxu0 0.0
    %5564 = vmatprep.subr.mxu0 0.0
    %5565 = vmatpush1.msra.mxu0 0.0
    %5566 = vmatprep.subr.mxu0 0.0
    %5567 = vmatpush1.msra.mxu0 0.0
    %5568 = vmatprep.subr.mxu0 0.0
    %5569 = vmatpush1.msra.mxu0 0.0
    %5570 = vmatprep.mubr.f32.mxu0 0.0
    %5571 = vmatmul.mubr.f32.gmra.mrb[0].mxu0 %v5434
    %v5572 = vpop.f32.mrb[0].mxu0
    %v5573 = vadd.f32 0.0, %v5572
    %v5574 = vpop.f32.mrb[0].mxu0
    %v5575 = vadd.f32 0.0, %v5574
    %5576 = vdwg.mxu0
    %5577 = vmatprep.subr.mxu0 %v3308
    %5578 = vmatpush1.msra.mxu0 %v3307
    %5579 = vmatprep.subr.mxu0 %v3316
    %5580 = vmatpush1.msra.mxu0 %v3315
    %5581 = vmatprep.subr.mxu0 %v3324
    %5582 = vmatpush1.msra.mxu0 %v3323
    %5583 = vmatprep.subr.mxu0 %v3332
    %5584 = vmatpush1.msra.mxu0 %v3331
    %5585 = vmatprep.subr.mxu0 %v3340
    %5586 = vmatpush1.msra.mxu0 %v3339
    %5587 = vmatprep.subr.mxu0 %v3348
    %5588 = vmatpush1.msra.mxu0 %v3347
    %5589 = vmatprep.subr.mxu0 %v3356
    %5590 = vmatpush1.msra.mxu0 %v3355
    %5591 = vmatprep.subr.mxu0 %v3364
    %5592 = vmatpush1.msra.mxu0 %v3363
    %5593 = vmatprep.subr.mxu0 %v3372
    %5594 = vmatpush1.msra.mxu0 %v3371
    %5595 = vmatprep.subr.mxu0 %v3380
    %5596 = vmatpush1.msra.mxu0 %v3379
    %5597 = vmatprep.subr.mxu0 %v3388
    %5598 = vmatpush1.msra.mxu0 %v3387
    %5599 = vmatprep.subr.mxu0 %v3396
    %5600 = vmatpush1.msra.mxu0 %v3395
    %5601 = vmatprep.subr.mxu0 %v3404
    %5602 = vmatpush1.msra.mxu0 %v3403
    %5603 = vmatprep.subr.mxu0 %v3412
    %5604 = vmatpush1.msra.mxu0 %v3411
    %5605 = vmatprep.subr.mxu0 %v3420
    %5606 = vmatpush1.msra.mxu0 %v3419
    %5607 = vmatprep.subr.mxu0 %v3428
    %5608 = vmatpush1.msra.mxu0 %v3427
    %5609 = vmatprep.subr.mxu0 0.0
    %5610 = vmatpush1.msra.mxu0 0.0
    %5611 = vmatprep.subr.mxu0 0.0
    %5612 = vmatpush1.msra.mxu0 0.0
    %5613 = vmatprep.subr.mxu0 0.0
    %5614 = vmatpush1.msra.mxu0 0.0
    %5615 = vmatprep.subr.mxu0 0.0
    %5616 = vmatpush1.msra.mxu0 0.0
    %5617 = vmatprep.subr.mxu0 0.0
    %5618 = vmatpush1.msra.mxu0 0.0
    %5619 = vmatprep.subr.mxu0 0.0
    %5620 = vmatpush1.msra.mxu0 0.0
    %5621 = vmatprep.subr.mxu0 0.0
    %5622 = vmatpush1.msra.mxu0 0.0
    %5623 = vmatprep.subr.mxu0 0.0
    %5624 = vmatpush1.msra.mxu0 0.0
    %5625 = vmatprep.subr.mxu0 0.0
    %5626 = vmatpush1.msra.mxu0 0.0
    %5627 = vmatprep.subr.mxu0 0.0
    %5628 = vmatpush1.msra.mxu0 0.0
    %5629 = vmatprep.subr.mxu0 0.0
    %5630 = vmatpush1.msra.mxu0 0.0
    %5631 = vmatprep.subr.mxu0 0.0
    %5632 = vmatpush1.msra.mxu0 0.0
    %5633 = vmatprep.subr.mxu0 0.0
    %5634 = vmatpush1.msra.mxu0 0.0
    %5635 = vmatprep.subr.mxu0 0.0
    %5636 = vmatpush1.msra.mxu0 0.0
    %5637 = vmatprep.subr.mxu0 0.0
    %5638 = vmatpush1.msra.mxu0 0.0
    %5639 = vmatprep.subr.mxu0 0.0
    %5640 = vmatpush1.msra.mxu0 0.0
    %5641 = vmatprep.mubr.f32.mxu0 0.0
    %5642 = vmatmul.mubr.f32.gmra.mrb[0].mxu0 %v5434
    %v5643 = vpop.f32.mrb[0].mxu0
    %v5644 = vadd.f32 0.0, %v5643
    %v5645 = vpop.f32.mrb[0].mxu0
    %v5646 = vadd.f32 0.0, %v5645
    %5647 = vdwg.mxu0
    %5648 = vmatprep.subr.mxu0 %v3310
    %5649 = vmatpush1.msra.mxu0 %v3309
    %5650 = vmatprep.subr.mxu0 %v3318
    %5651 = vmatpush1.msra.mxu0 %v3317
    %5652 = vmatprep.subr.mxu0 %v3326
    %5653 = vmatpush1.msra.mxu0 %v3325
    %5654 = vmatprep.subr.mxu0 %v3334
    %5655 = vmatpush1.msra.mxu0 %v3333
    %5656 = vmatprep.subr.mxu0 %v3342
    %5657 = vmatpush1.msra.mxu0 %v3341
    %5658 = vmatprep.subr.mxu0 %v3350
    %5659 = vmatpush1.msra.mxu0 %v3349
    %5660 = vmatprep.subr.mxu0 %v3358
    %5661 = vmatpush1.msra.mxu0 %v3357
    %5662 = vmatprep.subr.mxu0 %v3366
    %5663 = vmatpush1.msra.mxu0 %v3365
    %5664 = vmatprep.subr.mxu0 %v3374
    %5665 = vmatpush1.msra.mxu0 %v3373
    %5666 = vmatprep.subr.mxu0 %v3382
    %5667 = vmatpush1.msra.mxu0 %v3381
    %5668 = vmatprep.subr.mxu0 %v3390
    %5669 = vmatpush1.msra.mxu0 %v3389
    %5670 = vmatprep.subr.mxu0 %v3398
    %5671 = vmatpush1.msra.mxu0 %v3397
    %5672 = vmatprep.subr.mxu0 %v3406
    %5673 = vmatpush1.msra.mxu0 %v3405
    %5674 = vmatprep.subr.mxu0 %v3414
    %5675 = vmatpush1.msra.mxu0 %v3413
    %5676 = vmatprep.subr.mxu0 %v3422
    %5677 = vmatpush1.msra.mxu0 %v3421
    %5678 = vmatprep.subr.mxu0 %v3430
    %5679 = vmatpush1.msra.mxu0 %v3429
    %5680 = vmatprep.subr.mxu0 0.0
    %5681 = vmatpush1.msra.mxu0 0.0
    %5682 = vmatprep.subr.mxu0 0.0
    %5683 = vmatpush1.msra.mxu0 0.0
    %5684 = vmatprep.subr.mxu0 0.0
    %5685 = vmatpush1.msra.mxu0 0.0
    %5686 = vmatprep.subr.mxu0 0.0
    %5687 = vmatpush1.msra.mxu0 0.0
    %5688 = vmatprep.subr.mxu0 0.0
    %5689 = vmatpush1.msra.mxu0 0.0
    %5690 = vmatprep.subr.mxu0 0.0
    %5691 = vmatpush1.msra.mxu0 0.0
    %5692 = vmatprep.subr.mxu0 0.0
    %5693 = vmatpush1.msra.mxu0 0.0
    %5694 = vmatprep.subr.mxu0 0.0
    %5695 = vmatpush1.msra.mxu0 0.0
    %5696 = vmatprep.subr.mxu0 0.0
    %5697 = vmatpush1.msra.mxu0 0.0
    %5698 = vmatprep.subr.mxu0 0.0
    %5699 = vmatpush1.msra.mxu0 0.0
    %5700 = vmatprep.subr.mxu0 0.0
    %5701 = vmatpush1.msra.mxu0 0.0
    %5702 = vmatprep.subr.mxu0 0.0
    %5703 = vmatpush1.msra.mxu0 0.0
    %5704 = vmatprep.subr.mxu0 0.0
    %5705 = vmatpush1.msra.mxu0 0.0
    %5706 = vmatprep.subr.mxu0 0.0
    %5707 = vmatpush1.msra.mxu0 0.0
    %5708 = vmatprep.subr.mxu0 0.0
    %5709 = vmatpush1.msra.mxu0 0.0
    %5710 = vmatprep.subr.mxu0 0.0
    %5711 = vmatpush1.msra.mxu0 0.0
    %5712 = vmatprep.mubr.f32.mxu0 0.0
    %5713 = vmatmul.mubr.f32.gmra.mrb[0].mxu0 %v5434
    %v5714 = vpop.f32.mrb[0].mxu0
    %v5715 = vadd.f32 0.0, %v5714
    %v5716 = vpop.f32.mrb[0].mxu0
    %v5717 = vadd.f32 0.0, %v5716
    %5718 = vdwg.mxu0
    %5719 = vmatprep.subr.mxu0 %v3432
    %5720 = vmatpush1.msra.mxu0 %v3431
    %5721 = vmatprep.subr.mxu0 %v3436
    %5722 = vmatpush1.msra.mxu0 %v3435
    %5723 = vmatprep.subr.mxu0 %v3440
    %5724 = vmatpush1.msra.mxu0 %v3439
    %5725 = vmatprep.subr.mxu0 %v3444
    %5726 = vmatpush1.msra.mxu0 %v3443
    %5727 = vmatprep.subr.mxu0 %v3448
    %5728 = vmatpush1.msra.mxu0 %v3447
    %5729 = vmatprep.subr.mxu0 %v3452
    %5730 = vmatpush1.msra.mxu0 %v3451
    %5731 = vmatprep.subr.mxu0 %v3456
    %5732 = vmatpush1.msra.mxu0 %v3455
    %5733 = vmatprep.subr.mxu0 %v3460
    %5734 = vmatpush1.msra.mxu0 %v3459
    %5735 = vmatprep.subr.mxu0 %v3464
    %5736 = vmatpush1.msra.mxu0 %v3463
    %5737 = vmatprep.subr.mxu0 %v3468
    %5738 = vmatpush1.msra.mxu0 %v3467
    %5739 = vmatprep.subr.mxu0 %v3472
    %5740 = vmatpush1.msra.mxu0 %v3471
    %5741 = vmatprep.subr.mxu0 %v3476
    %5742 = vmatpush1.msra.mxu0 %v3475
    %5743 = vmatprep.subr.mxu0 %v3480
    %5744 = vmatpush1.msra.mxu0 %v3479
    %5745 = vmatprep.subr.mxu0 %v3484
    %5746 = vmatpush1.msra.mxu0 %v3483
    %5747 = vmatprep.subr.mxu0 %v3488
    %5748 = vmatpush1.msra.mxu0 %v3487
    %5749 = vmatprep.subr.mxu0 %v3492
    %5750 = vmatpush1.msra.mxu0 %v3491
    %5751 = vmatprep.subr.mxu0 0.0
    %5752 = vmatpush1.msra.mxu0 0.0
    %5753 = vmatprep.subr.mxu0 0.0
    %5754 = vmatpush1.msra.mxu0 0.0
    %5755 = vmatprep.subr.mxu0 0.0
    %5756 = vmatpush1.msra.mxu0 0.0
    %5757 = vmatprep.subr.mxu0 0.0
    %5758 = vmatpush1.msra.mxu0 0.0
    %5759 = vmatprep.subr.mxu0 0.0
    %5760 = vmatpush1.msra.mxu0 0.0
    %5761 = vmatprep.subr.mxu0 0.0
    %5762 = vmatpush1.msra.mxu0 0.0
    %5763 = vmatprep.subr.mxu0 0.0
    %5764 = vmatpush1.msra.mxu0 0.0
    %5765 = vmatprep.subr.mxu0 0.0
    %5766 = vmatpush1.msra.mxu0 0.0
    %5767 = vmatprep.subr.mxu0 0.0
    %5768 = vmatpush1.msra.mxu0 0.0
    %5769 = vmatprep.subr.mxu0 0.0
    %5770 = vmatpush1.msra.mxu0 0.0
    %5771 = vmatprep.subr.mxu0 0.0
    %5772 = vmatpush1.msra.mxu0 0.0
    %5773 = vmatprep.subr.mxu0 0.0
    %5774 = vmatpush1.msra.mxu0 0.0
    %5775 = vmatprep.subr.mxu0 0.0
    %5776 = vmatpush1.msra.mxu0 0.0
    %5777 = vmatprep.subr.mxu0 0.0
    %5778 = vmatpush1.msra.mxu0 0.0
    %5779 = vmatprep.subr.mxu0 0.0
    %5780 = vmatpush1.msra.mxu0 0.0
    %5781 = vmatprep.subr.mxu0 0.0
    %5782 = vmatpush1.msra.mxu0 0.0
    %5783 = vmatprep.mubr.f32.mxu0 0.0
    %5784 = vmatmul.mubr.f32.gmra.mrb[0].mxu0 %v5412
    %v5785 = vpop.f32.mrb[0].mxu0
    %v5786 = vadd.f32 0.0, %v5785
    %v5787 = vpop.f32.mrb[0].mxu0
    %v5788 = vadd.f32 0.0, %v5787
    %5789 = vdwg.mxu0
    %5790 = vmatprep.subr.mxu0 %v3434
    %5791 = vmatpush1.msra.mxu0 %v3433
    %5792 = vmatprep.subr.mxu0 %v3438
    %5793 = vmatpush1.msra.mxu0 %v3437
    %5794 = vmatprep.subr.mxu0 %v3442
    %5795 = vmatpush1.msra.mxu0 %v3441
    %5796 = vmatprep.subr.mxu0 %v3446
    %5797 = vmatpush1.msra.mxu0 %v3445
    %5798 = vmatprep.subr.mxu0 %v3450
    %5799 = vmatpush1.msra.mxu0 %v3449
    %5800 = vmatprep.subr.mxu0 %v3454
    %5801 = vmatpush1.msra.mxu0 %v3453
    %5802 = vmatprep.subr.mxu0 %v3458
    %5803 = vmatpush1.msra.mxu0 %v3457
    %5804 = vmatprep.subr.mxu0 %v3462
    %5805 = vmatpush1.msra.mxu0 %v3461
    %5806 = vmatprep.subr.mxu0 %v3466
    %5807 = vmatpush1.msra.mxu0 %v3465
    %5808 = vmatprep.subr.mxu0 %v3470
    %5809 = vmatpush1.msra.mxu0 %v3469
    %5810 = vmatprep.subr.mxu0 %v3474
    %5811 = vmatpush1.msra.mxu0 %v3473
    %5812 = vmatprep.subr.mxu0 %v3478
    %5813 = vmatpush1.msra.mxu0 %v3477
    %5814 = vmatprep.subr.mxu0 %v3482
    %5815 = vmatpush1.msra.mxu0 %v3481
    %5816 = vmatprep.subr.mxu0 %v3486
    %5817 = vmatpush1.msra.mxu0 %v3485
    %5818 = vmatprep.subr.mxu0 %v3490
    %5819 = vmatpush1.msra.mxu0 %v3489
    %5820 = vmatprep.subr.mxu0 %v3494
    %5821 = vmatpush1.msra.mxu0 %v3493
    %5822 = vmatprep.subr.mxu0 0.0
    %5823 = vmatpush1.msra.mxu0 0.0
    %5824 = vmatprep.subr.mxu0 0.0
    %5825 = vmatpush1.msra.mxu0 0.0
    %5826 = vmatprep.subr.mxu0 0.0
    %5827 = vmatpush1.msra.mxu0 0.0
    %5828 = vmatprep.subr.mxu0 0.0
    %5829 = vmatpush1.msra.mxu0 0.0
    %5830 = vmatprep.subr.mxu0 0.0
    %5831 = vmatpush1.msra.mxu0 0.0
    %5832 = vmatprep.subr.mxu0 0.0
    %5833 = vmatpush1.msra.mxu0 0.0
    %5834 = vmatprep.subr.mxu0 0.0
    %5835 = vmatpush1.msra.mxu0 0.0
    %5836 = vmatprep.subr.mxu0 0.0
    %5837 = vmatpush1.msra.mxu0 0.0
    %5838 = vmatprep.subr.mxu0 0.0
    %5839 = vmatpush1.msra.mxu0 0.0
    %5840 = vmatprep.subr.mxu0 0.0
    %5841 = vmatpush1.msra.mxu0 0.0
    %5842 = vmatprep.subr.mxu0 0.0
    %5843 = vmatpush1.msra.mxu0 0.0
    %5844 = vmatprep.subr.mxu0 0.0
    %5845 = vmatpush1.msra.mxu0 0.0
    %5846 = vmatprep.subr.mxu0 0.0
    %5847 = vmatpush1.msra.mxu0 0.0
    %5848 = vmatprep.subr.mxu0 0.0
    %5849 = vmatpush1.msra.mxu0 0.0
    %5850 = vmatprep.subr.mxu0 0.0
    %5851 = vmatpush1.msra.mxu0 0.0
    %5852 = vmatprep.subr.mxu0 0.0
    %5853 = vmatpush1.msra.mxu0 0.0
    %5854 = vmatprep.mubr.f32.mxu0 0.0
    %5855 = vmatmul.mubr.f32.gmra.mrb[0].mxu0 %v5412
    %v5856 = vpop.f32.mrb[0].mxu0
    %v5857 = vadd.f32 0.0, %v5856
    %v5858 = vpop.f32.mrb[0].mxu0
    %v5859 = vadd.f32 0.0, %v5858
    %5860 = vdwg.mxu0
    %v5861 = vadd.f32 %v5644, %v5786
    %v5862 = vadd.f32 %v5646, %v5788
    %v5863 = vadd.f32 %v5715, %v5857
    %v5864 = vadd.f32 %v5717, %v5859
    %v5865 = vadd.f32 %v5861, %v3952
    %v5866 = vadd.f32 %v5862, %v3956
    %v5867 = vadd.f32 %v5863, %v3960
    %v5868 = vadd.f32 %v5864, %v3964
    %v5869 = vmul.f32 %v5865, 0.5
    %v5870 = vtanh.pop %v5869
    %v5871 = vmul.f32 %v5870, 0.5
    %v5872 = vadd.f32 %v5871, 0.5
    %v5873 = vmul.f32 %v5866, 0.5
    %v5874 = vtanh.pop %v5873
    %v5875 = vmul.f32 %v5874, 0.5
    %v5876 = vadd.f32 %v5875, 0.5
    %v5877 = vtanh.pop %v5867
    %v5878 = vmul.f32 %v5868, 0.5
    %v5879 = vtanh.pop %v5878
    %v5880 = vmul.f32 %v5879, 0.5
    %v5881 = vadd.f32 %v5880, 0.5
    %v5882 = vmul.f32 %v5876, %v5410
    %v5883 = vmul.f32 %v5872, %v5877
    %v5884 = vadd.f32 %v5882, %v5883
    %v5885 = vtanh.pop %v5884
    %v5886 = vmul.f32 %v5881, %v5885
    %v5887 = vadd.f32 %v3228, %v5502
    %v5888 = vadd.f32 %v3230, %v5504
    %v5889 = vadd.f32 %v3299, %v5573
    %v5890 = vadd.f32 %v3301, %v5575
    %v5891 = vmul.f32 %v5887, 0.5
    %v5892 = vtanh.pop %v5891
    %v5893 = vmul.f32 %v5892, 0.5
    %v5894 = vadd.f32 %v5893, 0.5
    %v5895 = vmul.f32 %v5888, 0.5
    %v5896 = vtanh.pop %v5895
    %v5897 = vmul.f32 %v5896, 0.5
    %v5898 = vadd.f32 %v5897, 0.5
    %v5899 = vtanh.pop %v5889
    %v5900 = vmul.f32 %v5890, 0.5
    %v5901 = vtanh.pop %v5900
    %v5902 = vmul.f32 %v5901, 0.5
    %v5903 = vadd.f32 %v5902, 0.5
    %v5904 = vmul.f32 %v5898, %v5432
    %v5905 = vmul.f32 %v5894, %v5899
    %v5906 = vadd.f32 %v5904, %v5905
    %v5907 = vtanh.pop %v5906
    %v5908 = vmul.f32 %v5903, %v5907
    %5909 = vmatprep.subr.mxu0 %v3308
    %5910 = vmatpush1.msra.mxu0 %v3307
    %5911 = vmatprep.subr.mxu0 %v3316
    %5912 = vmatpush1.msra.mxu0 %v3315
    %5913 = vmatprep.subr.mxu0 %v3324
    %5914 = vmatpush1.msra.mxu0 %v3323
    %5915 = vmatprep.subr.mxu0 %v3332
    %5916 = vmatpush1.msra.mxu0 %v3331
    %5917 = vmatprep.subr.mxu0 %v3340
    %5918 = vmatpush1.msra.mxu0 %v3339
    %5919 = vmatprep.subr.mxu0 %v3348
    %5920 = vmatpush1.msra.mxu0 %v3347
    %5921 = vmatprep.subr.mxu0 %v3356
    %5922 = vmatpush1.msra.mxu0 %v3355
    %5923 = vmatprep.subr.mxu0 %v3364
    %5924 = vmatpush1.msra.mxu0 %v3363
    %5925 = vmatprep.subr.mxu0 %v3372
    %5926 = vmatpush1.msra.mxu0 %v3371
    %5927 = vmatprep.subr.mxu0 %v3380
    %5928 = vmatpush1.msra.mxu0 %v3379
    %5929 = vmatprep.subr.mxu0 %v3388
    %5930 = vmatpush1.msra.mxu0 %v3387
    %5931 = vmatprep.subr.mxu0 %v3396
    %5932 = vmatpush1.msra.mxu0 %v3395
    %5933 = vmatprep.subr.mxu0 %v3404
    %5934 = vmatpush1.msra.mxu0 %v3403
    %5935 = vmatprep.subr.mxu0 %v3412
    %5936 = vmatpush1.msra.mxu0 %v3411
    %5937 = vmatprep.subr.mxu0 %v3420
    %5938 = vmatpush1.msra.mxu0 %v3419
    %5939 = vmatprep.subr.mxu0 %v3428
    %5940 = vmatpush1.msra.mxu0 %v3427
    %5941 = vmatprep.subr.mxu0 0.0
    %5942 = vmatpush1.msra.mxu0 0.0
    %5943 = vmatprep.subr.mxu0 0.0
    %5944 = vmatpush1.msra.mxu0 0.0
    %5945 = vmatprep.subr.mxu0 0.0
    %5946 = vmatpush1.msra.mxu0 0.0
    %5947 = vmatprep.subr.mxu0 0.0
    %5948 = vmatpush1.msra.mxu0 0.0
    %5949 = vmatprep.subr.mxu0 0.0
    %5950 = vmatpush1.msra.mxu0 0.0
    %5951 = vmatprep.subr.mxu0 0.0
    %5952 = vmatpush1.msra.mxu0 0.0
    %5953 = vmatprep.subr.mxu0 0.0
    %5954 = vmatpush1.msra.mxu0 0.0
    %5955 = vmatprep.subr.mxu0 0.0
    %5956 = vmatpush1.msra.mxu0 0.0
    %5957 = vmatprep.subr.mxu0 0.0
    %5958 = vmatpush1.msra.mxu0 0.0
    %5959 = vmatprep.subr.mxu0 0.0
    %5960 = vmatpush1.msra.mxu0 0.0
    %5961 = vmatprep.subr.mxu0 0.0
    %5962 = vmatpush1.msra.mxu0 0.0
    %5963 = vmatprep.subr.mxu0 0.0
    %5964 = vmatpush1.msra.mxu0 0.0
    %5965 = vmatprep.subr.mxu0 0.0
    %5966 = vmatpush1.msra.mxu0 0.0
    %5967 = vmatprep.subr.mxu0 0.0
    %5968 = vmatpush1.msra.mxu0 0.0
    %5969 = vmatprep.subr.mxu0 0.0
    %5970 = vmatpush1.msra.mxu0 0.0
    %5971 = vmatprep.subr.mxu0 0.0
    %5972 = vmatpush1.msra.mxu0 0.0
    %5973 = vmatprep.mubr.f32.mxu0 0.0
    %5974 = vmatmul.mubr.f32.gmra.mrb[0].mxu0 %v5908
    %v5975 = vpop.f32.mrb[0].mxu0
    %v5976 = vadd.f32 0.0, %v5975
    %v5977 = vpop.f32.mrb[0].mxu0
    %v5978 = vadd.f32 0.0, %v5977
    %5979 = vdwg.mxu0
    %5980 = vmatprep.subr.mxu0 %v3310
    %5981 = vmatpush1.msra.mxu0 %v3309
    %5982 = vmatprep.subr.mxu0 %v3318
    %5983 = vmatpush1.msra.mxu0 %v3317
    %5984 = vmatprep.subr.mxu0 %v3326
    %5985 = vmatpush1.msra.mxu0 %v3325
    %5986 = vmatprep.subr.mxu0 %v3334
    %5987 = vmatpush1.msra.mxu0 %v3333
    %5988 = vmatprep.subr.mxu0 %v3342
    %5989 = vmatpush1.msra.mxu0 %v3341
    %5990 = vmatprep.subr.mxu0 %v3350
    %5991 = vmatpush1.msra.mxu0 %v3349
    %5992 = vmatprep.subr.mxu0 %v3358
    %5993 = vmatpush1.msra.mxu0 %v3357
    %5994 = vmatprep.subr.mxu0 %v3366
    %5995 = vmatpush1.msra.mxu0 %v3365
    %5996 = vmatprep.subr.mxu0 %v3374
    %5997 = vmatpush1.msra.mxu0 %v3373
    %5998 = vmatprep.subr.mxu0 %v3382
    %5999 = vmatpush1.msra.mxu0 %v3381
    %6000 = vmatprep.subr.mxu0 %v3390
    %6001 = vmatpush1.msra.mxu0 %v3389
    %6002 = vmatprep.subr.mxu0 %v3398
    %6003 = vmatpush1.msra.mxu0 %v3397
    %6004 = vmatprep.subr.mxu0 %v3406
    %6005 = vmatpush1.msra.mxu0 %v3405
    %6006 = vmatprep.subr.mxu0 %v3414
    %6007 = vmatpush1.msra.mxu0 %v3413
    %6008 = vmatprep.subr.mxu0 %v3422
    %6009 = vmatpush1.msra.mxu0 %v3421
    %6010 = vmatprep.subr.mxu0 %v3430
    %6011 = vmatpush1.msra.mxu0 %v3429
    %6012 = vmatprep.subr.mxu0 0.0
    %6013 = vmatpush1.msra.mxu0 0.0
    %6014 = vmatprep.subr.mxu0 0.0
    %6015 = vmatpush1.msra.mxu0 0.0
    %6016 = vmatprep.subr.mxu0 0.0
    %6017 = vmatpush1.msra.mxu0 0.0
    %6018 = vmatprep.subr.mxu0 0.0
    %6019 = vmatpush1.msra.mxu0 0.0
    %6020 = vmatprep.subr.mxu0 0.0
    %6021 = vmatpush1.msra.mxu0 0.0
    %6022 = vmatprep.subr.mxu0 0.0
    %6023 = vmatpush1.msra.mxu0 0.0
    %6024 = vmatprep.subr.mxu0 0.0
    %6025 = vmatpush1.msra.mxu0 0.0
    %6026 = vmatprep.subr.mxu0 0.0
    %6027 = vmatpush1.msra.mxu0 0.0
    %6028 = vmatprep.subr.mxu0 0.0
    %6029 = vmatpush1.msra.mxu0 0.0
    %6030 = vmatprep.subr.mxu0 0.0
    %6031 = vmatpush1.msra.mxu0 0.0
    %6032 = vmatprep.subr.mxu0 0.0
    %6033 = vmatpush1.msra.mxu0 0.0
    %6034 = vmatprep.subr.mxu0 0.0
    %6035 = vmatpush1.msra.mxu0 0.0
    %6036 = vmatprep.subr.mxu0 0.0
    %6037 = vmatpush1.msra.mxu0 0.0
    %6038 = vmatprep.subr.mxu0 0.0
    %6039 = vmatpush1.msra.mxu0 0.0
    %6040 = vmatprep.subr.mxu0 0.0
    %6041 = vmatpush1.msra.mxu0 0.0
    %6042 = vmatprep.subr.mxu0 0.0
    %6043 = vmatpush1.msra.mxu0 0.0
    %6044 = vmatprep.mubr.f32.mxu0 0.0
    %6045 = vmatmul.mubr.f32.gmra.mrb[0].mxu0 %v5908
    %v6046 = vpop.f32.mrb[0].mxu0
    %v6047 = vadd.f32 0.0, %v6046
    %v6048 = vpop.f32.mrb[0].mxu0
    %v6049 = vadd.f32 0.0, %v6048
    %6050 = vdwg.mxu0
    %6051 = vmatprep.subr.mxu0 %v3432
    %6052 = vmatpush1.msra.mxu0 %v3431
    %6053 = vmatprep.subr.mxu0 %v3436
    %6054 = vmatpush1.msra.mxu0 %v3435
    %6055 = vmatprep.subr.mxu0 %v3440
    %6056 = vmatpush1.msra.mxu0 %v3439
    %6057 = vmatprep.subr.mxu0 %v3444
    %6058 = vmatpush1.msra.mxu0 %v3443
    %6059 = vmatprep.subr.mxu0 %v3448
    %6060 = vmatpush1.msra.mxu0 %v3447
    %6061 = vmatprep.subr.mxu0 %v3452
    %6062 = vmatpush1.msra.mxu0 %v3451
    %6063 = vmatprep.subr.mxu0 %v3456
    %6064 = vmatpush1.msra.mxu0 %v3455
    %6065 = vmatprep.subr.mxu0 %v3460
    %6066 = vmatpush1.msra.mxu0 %v3459
    %6067 = vmatprep.subr.mxu0 %v3464
    %6068 = vmatpush1.msra.mxu0 %v3463
    %6069 = vmatprep.subr.mxu0 %v3468
    %6070 = vmatpush1.msra.mxu0 %v3467
    %6071 = vmatprep.subr.mxu0 %v3472
    %6072 = vmatpush1.msra.mxu0 %v3471
    %6073 = vmatprep.subr.mxu0 %v3476
    %6074 = vmatpush1.msra.mxu0 %v3475
    %6075 = vmatprep.subr.mxu0 %v3480
    %6076 = vmatpush1.msra.mxu0 %v3479
    %6077 = vmatprep.subr.mxu0 %v3484
    %6078 = vmatpush1.msra.mxu0 %v3483
    %6079 = vmatprep.subr.mxu0 %v3488
    %6080 = vmatpush1.msra.mxu0 %v3487
    %6081 = vmatprep.subr.mxu0 %v3492
    %6082 = vmatpush1.msra.mxu0 %v3491
    %6083 = vmatprep.subr.mxu0 0.0
    %6084 = vmatpush1.msra.mxu0 0.0
    %6085 = vmatprep.subr.mxu0 0.0
    %6086 = vmatpush1.msra.mxu0 0.0
    %6087 = vmatprep.subr.mxu0 0.0
    %6088 = vmatpush1.msra.mxu0 0.0
    %6089 = vmatprep.subr.mxu0 0.0
    %6090 = vmatpush1.msra.mxu0 0.0
    %6091 = vmatprep.subr.mxu0 0.0
    %6092 = vmatpush1.msra.mxu0 0.0
    %6093 = vmatprep.subr.mxu0 0.0
    %6094 = vmatpush1.msra.mxu0 0.0
    %6095 = vmatprep.subr.mxu0 0.0
    %6096 = vmatpush1.msra.mxu0 0.0
    %6097 = vmatprep.subr.mxu0 0.0
    %6098 = vmatpush1.msra.mxu0 0.0
    %6099 = vmatprep.subr.mxu0 0.0
    %6100 = vmatpush1.msra.mxu0 0.0
    %6101 = vmatprep.subr.mxu0 0.0
    %6102 = vmatpush1.msra.mxu0 0.0
    %6103 = vmatprep.subr.mxu0 0.0
    %6104 = vmatpush1.msra.mxu0 0.0
    %6105 = vmatprep.subr.mxu0 0.0
    %6106 = vmatpush1.msra.mxu0 0.0
    %6107 = vmatprep.subr.mxu0 0.0
    %6108 = vmatpush1.msra.mxu0 0.0
    %6109 = vmatprep.subr.mxu0 0.0
    %6110 = vmatpush1.msra.mxu0 0.0
    %6111 = vmatprep.subr.mxu0 0.0
    %6112 = vmatpush1.msra.mxu0 0.0
    %6113 = vmatprep.subr.mxu0 0.0
    %6114 = vmatpush1.msra.mxu0 0.0
    %6115 = vmatprep.mubr.f32.mxu0 0.0
    %6116 = vmatmul.mubr.f32.gmra.mrb[0].mxu0 %v5886
    %v6117 = vpop.f32.mrb[0].mxu0
    %v6118 = vadd.f32 0.0, %v6117
    %v6119 = vpop.f32.mrb[0].mxu0
    %v6120 = vadd.f32 0.0, %v6119
    %6121 = vdwg.mxu0
    %6122 = vmatprep.subr.mxu0 %v3434
    %6123 = vmatpush1.msra.mxu0 %v3433
    %6124 = vmatprep.subr.mxu0 %v3438
    %6125 = vmatpush1.msra.mxu0 %v3437
    %6126 = vmatprep.subr.mxu0 %v3442
    %6127 = vmatpush1.msra.mxu0 %v3441
    %6128 = vmatprep.subr.mxu0 %v3446
    %6129 = vmatpush1.msra.mxu0 %v3445
    %6130 = vmatprep.subr.mxu0 %v3450
    %6131 = vmatpush1.msra.mxu0 %v3449
    %6132 = vmatprep.subr.mxu0 %v3454
    %6133 = vmatpush1.msra.mxu0 %v3453
    %6134 = vmatprep.subr.mxu0 %v3458
    %6135 = vmatpush1.msra.mxu0 %v3457
    %6136 = vmatprep.subr.mxu0 %v3462
    %6137 = vmatpush1.msra.mxu0 %v3461
    %6138 = vmatprep.subr.mxu0 %v3466
    %6139 = vmatpush1.msra.mxu0 %v3465
    %6140 = vmatprep.subr.mxu0 %v3470
    %6141 = vmatpush1.msra.mxu0 %v3469
    %6142 = vmatprep.subr.mxu0 %v3474
    %6143 = vmatpush1.msra.mxu0 %v3473
    %6144 = vmatprep.subr.mxu0 %v3478
    %6145 = vmatpush1.msra.mxu0 %v3477
    %6146 = vmatprep.subr.mxu0 %v3482
    %6147 = vmatpush1.msra.mxu0 %v3481
    %6148 = vmatprep.subr.mxu0 %v3486
    %6149 = vmatpush1.msra.mxu0 %v3485
    %6150 = vmatprep.subr.mxu0 %v3490
    %6151 = vmatpush1.msra.mxu0 %v3489
    %6152 = vmatprep.subr.mxu0 %v3494
    %6153 = vmatpush1.msra.mxu0 %v3493
    %6154 = vmatprep.subr.mxu0 0.0
    %6155 = vmatpush1.msra.mxu0 0.0
    %6156 = vmatprep.subr.mxu0 0.0
    %6157 = vmatpush1.msra.mxu0 0.0
    %6158 = vmatprep.subr.mxu0 0.0
    %6159 = vmatpush1.msra.mxu0 0.0
    %6160 = vmatprep.subr.mxu0 0.0
    %6161 = vmatpush1.msra.mxu0 0.0
    %6162 = vmatprep.subr.mxu0 0.0
    %6163 = vmatpush1.msra.mxu0 0.0
    %6164 = vmatprep.subr.mxu0 0.0
    %6165 = vmatpush1.msra.mxu0 0.0
    %6166 = vmatprep.subr.mxu0 0.0
    %6167 = vmatpush1.msra.mxu0 0.0
    %6168 = vmatprep.subr.mxu0 0.0
    %6169 = vmatpush1.msra.mxu0 0.0
    %6170 = vmatprep.subr.mxu0 0.0
    %6171 = vmatpush1.msra.mxu0 0.0
    %6172 = vmatprep.subr.mxu0 0.0
    %6173 = vmatpush1.msra.mxu0 0.0
    %6174 = vmatprep.subr.mxu0 0.0
    %6175 = vmatpush1.msra.mxu0 0.0
    %6176 = vmatprep.subr.mxu0 0.0
    %6177 = vmatpush1.msra.mxu0 0.0
    %6178 = vmatprep.subr.mxu0 0.0
    %6179 = vmatpush1.msra.mxu0 0.0
    %6180 = vmatprep.subr.mxu0 0.0
    %6181 = vmatpush1.msra.mxu0 0.0
    %6182 = vmatprep.subr.mxu0 0.0
    %6183 = vmatpush1.msra.mxu0 0.0
    %6184 = vmatprep.subr.mxu0 0.0
    %6185 = vmatpush1.msra.mxu0 0.0
    %6186 = vmatprep.mubr.f32.mxu0 0.0
    %6187 = vmatmul.mubr.f32.gmra.mrb[0].mxu0 %v5886
    %v6188 = vpop.f32.mrb[0].mxu0
    %v6189 = vadd.f32 0.0, %v6188
    %v6190 = vpop.f32.mrb[0].mxu0
    %v6191 = vadd.f32 0.0, %v6190
    %6192 = vdwg.mxu0
    %v6193 = vadd.f32 %v5976, %v6118
    %v6194 = vadd.f32 %v5978, %v6120
    %v6195 = vadd.f32 %v6047, %v6189
    %v6196 = vadd.f32 %v6049, %v6191
    %v6197 = vadd.f32 %v6193, %v3952
    %v6198 = vadd.f32 %v6194, %v3956
    %v6199 = vadd.f32 %v6195, %v3960
    %v6200 = vadd.f32 %v6196, %v3964
    %v6201 = vmul.f32 %v6197, 0.5
    %v6202 = vtanh.pop %v6201
    %v6203 = vmul.f32 %v6202, 0.5
    %v6204 = vadd.f32 %v6203, 0.5
    %v6205 = vmul.f32 %v6198, 0.5
    %v6206 = vtanh.pop %v6205
    %v6207 = vmul.f32 %v6206, 0.5
    %v6208 = vadd.f32 %v6207, 0.5
    %v6209 = vtanh.pop %v6199
    %v6210 = vmul.f32 %v6200, 0.5
    %v6211 = vtanh.pop %v6210
    %v6212 = vmul.f32 %v6211, 0.5
    %v6213 = vadd.f32 %v6212, 0.5
    %v6214 = vmul.f32 %v6208, %v5884
    %v6215 = vmul.f32 %v6204, %v6209
    %v6216 = vadd.f32 %v6214, %v6215
    %v6217 = vtanh.pop %v6216
    %v6218 = vmul.f32 %v6213, %v6217
    %vm6219 = vcmask 730112
    %6220 = vst.msk [vmem:[#allocation28] sm:$0x3] %vm6219, %v6218
    // Predicated region
    $region130: #{res_encoder_forward.1} parent=1 // pred_check
      _
    $region131: #{res_encoder_forward.1} parent=1 // pred_check_branch
      %6222 = sbr.rel (0) target = $region133
    $region132: #{res_encoder_forward.1} parent=1 // pred_region
      %s6224 = ssub.s32 32, 32
      %6225 = vsyncadd [#allocation4], %s6224
      %s6227 = sshll.u32 [#allocation28], 4
      %s6228 = int_to_ptr.vmem [resolvable:$true] %s6227
      %6230 = dma.vmem_to_hbm [thread:$0]  %s6228, 32, %s16, [#allocation4]
    $region133: #{res_encoder_forward.1} parent=1 // pred_fallthru
      _
    // Predicated region
    $region134: #{res_encoder_forward.1} parent=1 // pred_check
      _
    $region135: #{res_encoder_forward.1} parent=1 // pred_check_branch
      %6232 = sbr.rel (0) target = $region137
    $region136: #{res_encoder_forward.1} parent=1 // pred_region
      %6233 = dma.done [#allocation4], 32
    $region137: #{res_encoder_forward.1} parent=1 // pred_fallthru
      _
    %6234 = vsyncpa [#allocation3], 1
    %6235 = vsyncpa [#allocation6], 1
    %6236 = vsyncpa [#allocation9], 1
    %6237 = vsyncpa [#allocation12], 1
    %6238 = vsyncpa [#allocation15], 1
    %6239 = vsyncpa [#allocation18], 1
    %6240 = vsyncpa [#allocation21], 1
    %6241 = vsyncpa [#allocation24], 1
    %6242 = vsyncpa [#allocation27], 1
    %6243 = vsyncpa [#allocation4], 1

</llo_original>
